<compile_context>
chip_gen: v7x
topology: tpu7x:2x2x1
jax: 0.10.0
libtpu: 0.0.40
codegen_flags: <defaults>
</compile_context>

<pallas_src>
import functools

import jax
import jax.numpy as jnp
from jax import lax
from jax.experimental import pallas as pl
from jax.experimental.pallas import tpu as pltpu


CFG = dict(
    vocab_size=100,
    hidden_size=32,
    num_heads=4,
    num_layers=4,          # >= 4 so "sum of last 4 encoder layers" is defined
    intermediate_size=64,
    max_position_embeddings=16,
    type_vocab_size=2,
    num_classes=5,
    pad_id=1,              # KoBERT vocab: '[PAD]' -> index 1
    layer_norm_eps=1e-12,
)
CLS_PAD = 128              # lane-dense classifier output (num_classes padded to 128)


# ----------------------------------------------------------------------------
# One fused kernel per batch block: embedding-LN + ALL encoder layers (static,
# fully unrolled in-kernel loop over VMEM-resident stacked weights) + sum of the
# last 4 layer outputs + classifier. Grid = (batch,) only.
# ----------------------------------------------------------------------------
def _fused_encoder_kernel(
    # inputs
    x_emb_ref, mask_ref, emb_g_ref, emb_b_ref,
    wqkv_ref, bqkv_ref, wo_ref, bo_ref, ln1_g_ref, ln1_b_ref,
    w1_ref, b1_ref, w2_ref, b2_ref, ln2_g_ref, ln2_b_ref,
    cls_w_ref, cls_b_ref,
    # output
    out_ref,
    *, num_heads, head_dim, num_layers, eps):
  S, H = x_emb_ref.shape

  def layernorm(h, g, b):
    mu = jnp.mean(h, axis=-1, keepdims=True)
    var = jnp.mean((h - mu) ** 2, axis=-1, keepdims=True)
    return (h - mu) * lax.rsqrt(var + eps) * g + b

  mask = mask_ref[0]                      # [1, S] additive key mask (0 / -1e4)
  scale = 1.0 / float(head_dim) ** 0.5

  # ---- embedding LayerNorm (residual stream lives in vregs from here on) -----
  x = layernorm(x_emb_ref[...], emb_g_ref[...], emb_b_ref[...])
  sum4 = jnp.zeros((S, H), jnp.float32)

  # ---- all encoder layers: static unrolled loop, weights indexed from VMEM ---
  for l in range(num_layers):
    # fused QKV projection; weight columns are HEAD-MAJOR: [q_h | k_h | v_h]
    qkv = jnp.dot(x, wqkv_ref[l], preferred_element_type=jnp.float32) + bqkv_ref[l]

    ctx_parts = []
    for h in range(num_heads):            # static loop, nH small
      c0 = h * 3 * head_dim
      qkv_h = qkv[:, c0:c0 + 3 * head_dim]            # one contiguous slice/head
      qh = qkv_h[:, :head_dim]                        # [S, D]
      kh = qkv_h[:, head_dim:2 * head_dim]            # [S, D]
      vh = qkv_h[:, 2 * head_dim:]                    # [S, D]
      # contract D on dim 1 of both operands — no explicit transpose of kh
      s = lax.dot_general(qh, kh, (((1,), (1,)), ((), ())),
                          preferred_element_type=jnp.float32) * scale  # [S, S]
      s = s + mask                                    # broadcast [1,S] -> [S,S]
      m = jnp.max(s, axis=-1, keepdims=True)
      p = jnp.exp(s - m)
      denom = jnp.sum(p, axis=-1, keepdims=True)
      p = p * pl.reciprocal(denom, approx=True)       # EUP divide
      ctx_parts.append(jnp.dot(p, vh, preferred_element_type=jnp.float32))
    ctx = jnp.concatenate(ctx_parts, axis=-1)         # [S, H], stays in registers

    attn_out = jnp.dot(ctx, wo_ref[l],
                       preferred_element_type=jnp.float32) + bo_ref[l]
    x1 = layernorm(attn_out + x, ln1_g_ref[l], ln1_b_ref[l])

    # feed-forward (exact erf GELU, matching BERT 'gelu')
    inter = jnp.dot(x1, w1_ref[l], preferred_element_type=jnp.float32) + b1_ref[l]
    inter = 0.5 * inter * (1.0 + lax.erf(inter * 0.7071067811865476))
    ffn = jnp.dot(inter, w2_ref[l], preferred_element_type=jnp.float32) + b2_ref[l]
    x = layernorm(ffn + x1, ln2_g_ref[l], ln2_b_ref[l])

    if l >= num_layers - 4:               # accumulate last-4 layer outputs
      sum4 = sum4 + x

  # ---- classifier on the summed layers (lane-dense padded output) -------------
  out_ref[...] = jnp.dot(sum4, cls_w_ref[...],
                         preferred_element_type=jnp.float32) + cls_b_ref[...]
  # TODO(synk): BertModel's pooled_output (tanh pooler) is unused by KobertOnly's
  # returned value, so it is intentionally not computed.


# ----------------------------------------------------------------------------
# Parameter init (stacked per-layer weights; wq|wk|wv fused head-major [H, 3H]).
# ----------------------------------------------------------------------------
def init_params(key, cfg):
  H = cfg["hidden_size"]
  I = cfg["intermediate_size"]
  L = cfg["num_layers"]
  C = cfg["num_classes"]
  CP = CLS_PAD

  def nrm(k, shape):
    return jax.random.normal(k, shape, jnp.float32) * 0.02

  keys = iter(jax.random.split(key, 16))
  p = {
      "word_emb": nrm(next(keys), (cfg["vocab_size"], H)),
      "pos_emb": nrm(next(keys), (cfg["max_position_embeddings"], H)),
      "type_emb": nrm(next(keys), (cfg["type_vocab_size"], H)),
      "emb_ln_g": jnp.ones((1, H), jnp.float32),
      "emb_ln_b": jnp.zeros((1, H), jnp.float32),
      # per-layer weights stacked on a leading layer axis; wqkv columns are
      # head-major ([q_h | k_h | v_h] per head), consumed as such by the kernel.
      "wqkv": nrm(next(keys), (L, H, 3 * H)),
      "bqkv": jnp.zeros((L, 1, 3 * H), jnp.float32),
      "wo": nrm(next(keys), (L, H, H)),
      "bo": jnp.zeros((L, 1, H), jnp.float32),
      "ln1_g": jnp.ones((L, 1, H), jnp.float32),
      "ln1_b": jnp.zeros((L, 1, H), jnp.float32),
      "w1": nrm(next(keys), (L, H, I)),
      "b1": jnp.zeros((L, 1, I), jnp.float32),
      "w2": nrm(next(keys), (L, I, H)),
      "b2": jnp.zeros((L, 1, H), jnp.float32),
      "ln2_g": jnp.ones((L, 1, H), jnp.float32),
      "ln2_b": jnp.zeros((L, 1, H), jnp.float32),
  }
  cls_w = nrm(next(keys), (H, C))
  cls_b = jnp.zeros((1, C), jnp.float32)
  p["cls_w_pad"] = jnp.zeros((H, CP), jnp.float32).at[:, :C].set(cls_w)
  p["cls_b_pad"] = jnp.zeros((1, CP), jnp.float32).at[:, :C].set(cls_b)
  return p


# ----------------------------------------------------------------------------
# Forward: embedding gather (glue) -> one fused Pallas call -> slice logits.
# ----------------------------------------------------------------------------
def kobert_only_forward(params, input_ids, token_type_ids=None):
  cfg = CFG
  B, S = input_ids.shape
  H = cfg["hidden_size"]
  I = cfg["intermediate_size"]
  L = cfg["num_layers"]
  nH = cfg["num_heads"]
  D = H // nH
  C = cfg["num_classes"]
  CP = CLS_PAD
  assert L >= 4 and S % 8 == 0

  if token_type_ids is None:
    token_type_ids = jnp.zeros_like(input_ids)

  # attention_mask = input_ids.ne(pad_id).float() -> additive (1-m)*-10000 key mask
  attention_mask = (input_ids != cfg["pad_id"]).astype(jnp.float32)
  add_mask = ((1.0 - attention_mask) * -10000.0).reshape(B, 1, S)

  # Embedding gathers kept as jnp glue (LayerNorm happens in-kernel).
  # TODO(synk): embedding gather has no clean tiny-shape Pallas equivalent; jnp.take glue.
  # TODO(synk): embedding / hidden / attention dropout are identity (eval mode).
  pos_ids = jnp.arange(S)
  x_emb = (jnp.take(params["word_emb"], input_ids, axis=0)
           + jnp.take(params["pos_emb"], pos_ids, axis=0)[None, :, :]
           + jnp.take(params["type_emb"], token_type_ids, axis=0)
           ).reshape(B * S, H).astype(jnp.float32)

  kernel = functools.partial(
      _fused_encoder_kernel,
      num_heads=nH, head_dim=D, num_layers=L, eps=cfg["layer_norm_eps"])

  # grid = (B,) only; all stacked weights use a constant index_map so Pallas
  # keeps them VMEM-resident across batch steps (no per-layer re-DMA).
  grid_spec = pltpu.PrefetchScalarGridSpec(
      num_scalar_prefetch=0,
      grid=(B,),
      in_specs=[
          pl.BlockSpec((S, H), lambda b: (b, 0)),               # x_emb   [B*S, H]
          pl.BlockSpec((1, 1, S), lambda b: (b, 0, 0)),         # mask    [B, 1, S]
          pl.BlockSpec((1, H), lambda b: (0, 0)),               # emb_ln_g
          pl.BlockSpec((1, H), lambda b: (0, 0)),               # emb_ln_b
          pl.BlockSpec((L, H, 3 * H), lambda b: (0, 0, 0)),     # wqkv (stacked)
          pl.BlockSpec((L, 1, 3 * H), lambda b: (0, 0, 0)),     # bqkv
          pl.BlockSpec((L, H, H), lambda b: (0, 0, 0)),         # wo
          pl.BlockSpec((L, 1, H), lambda b: (0, 0, 0)),         # bo
          pl.BlockSpec((L, 1, H), lambda b: (0, 0, 0)),         # ln1_g
          pl.BlockSpec((L, 1, H), lambda b: (0, 0, 0)),         # ln1_b
          pl.BlockSpec((L, H, I), lambda b: (0, 0, 0)),         # w1
          pl.BlockSpec((L, 1, I), lambda b: (0, 0, 0)),         # b1
          pl.BlockSpec((L, I, H), lambda b: (0, 0, 0)),         # w2
          pl.BlockSpec((L, 1, H), lambda b: (0, 0, 0)),         # b2
          pl.BlockSpec((L, 1, H), lambda b: (0, 0, 0)),         # ln2_g
          pl.BlockSpec((L, 1, H), lambda b: (0, 0, 0)),         # ln2_b
          pl.BlockSpec((H, CP), lambda b: (0, 0)),              # cls_w (padded)
          pl.BlockSpec((1, CP), lambda b: (0, 0)),              # cls_b (padded)
      ],
      out_specs=pl.BlockSpec((S, CP), lambda b: (b, 0)),        # lane-dense out
  )

  tag_padded = pl.pallas_call(
      kernel,
      out_shape=jax.ShapeDtypeStruct((B * S, CP), jnp.float32),
      grid_spec=grid_spec,
      compiler_params=pltpu.CompilerParams(
          dimension_semantics=("parallel",)),      # v7x: second TC takes half batch
  )(x_emb, add_mask, params["emb_ln_g"], params["emb_ln_b"],
    params["wqkv"], params["bqkv"], params["wo"], params["bo"],
    params["ln1_g"], params["ln1_b"],
    params["w1"], params["b1"], params["w2"], params["b2"],
    params["ln2_g"], params["ln2_b"],
    params["cls_w_pad"], params["cls_b_pad"])

  return tag_padded[:, :C].reshape(B, S, C)


# ----------------------------------------------------------------------------
if __name__ == "__main__":
  key = jax.random.PRNGKey(0)
  pkey, ikey = jax.random.split(key)

  params = init_params(pkey, CFG)

  B, S = 2, 8
  # deterministic token ids in [2, vocab); force a couple of PAD (=1) tokens
  input_ids = jax.random.randint(ikey, (B, S), 2, CFG["vocab_size"])
  input_ids = input_ids.at[0, -2:].set(CFG["pad_id"])
  input_ids = input_ids.at[1, -1:].set(CFG["pad_id"])
  token_type_ids = jnp.zeros((B, S), jnp.int32)

  fwd = jax.jit(kobert_only_forward)
  out = fwd(params, input_ids, token_type_ids)
  out = jax.block_until_ready(out)
  assert out.shape == (B, S, CFG["num_classes"])
  assert bool(jnp.all(jnp.isfinite(out)))
  print("KERNEL_OK")
</pallas_src>

<mosaic_0001>
module attributes {stable_mosaic.version = 11 : i64} {
  func.func @_fused_encoder_kernel(%arg0: i32, %arg1: memref<8x32xf32, #tpu.memory_space<vmem>>, %arg2: memref<1x1x8xf32, #tpu.memory_space<vmem>>, %arg3: memref<1x32xf32, #tpu.memory_space<vmem>>, %arg4: memref<1x32xf32, #tpu.memory_space<vmem>>, %arg5: memref<4x32x96xf32, #tpu.memory_space<vmem>>, %arg6: memref<4x1x96xf32, #tpu.memory_space<vmem>>, %arg7: memref<4x32x32xf32, #tpu.memory_space<vmem>>, %arg8: memref<4x1x32xf32, #tpu.memory_space<vmem>>, %arg9: memref<4x1x32xf32, #tpu.memory_space<vmem>>, %arg10: memref<4x1x32xf32, #tpu.memory_space<vmem>>, %arg11: memref<4x32x64xf32, #tpu.memory_space<vmem>>, %arg12: memref<4x1x64xf32, #tpu.memory_space<vmem>>, %arg13: memref<4x64x32xf32, #tpu.memory_space<vmem>>, %arg14: memref<4x1x32xf32, #tpu.memory_space<vmem>>, %arg15: memref<4x1x32xf32, #tpu.memory_space<vmem>>, %arg16: memref<4x1x32xf32, #tpu.memory_space<vmem>>, %arg17: memref<32x128xf32, #tpu.memory_space<vmem>>, %arg18: memref<1x128xf32, #tpu.memory_space<vmem>>, %arg19: memref<8x128xf32, #tpu.memory_space<vmem>>) attributes {dimension_semantics = [#tpu.dimension_semantics<parallel>], iteration_bounds = array<i64: 2>, scalar_prefetch = 0 : i64, scratch_operands = 0 : i64, tpu.core_type = #tpu.core_type<tc>, window_params = [{transform_indices = @transform_0, window_bounds = array<i64: 8, 32>}, {transform_indices = @transform_1, window_bounds = array<i64: 1, 1, 8>}, {pipeline_mode = #tpu.pipeline_mode<synchronous>, transform_indices = @transform_2, window_bounds = array<i64: 1, 32>}, {pipeline_mode = #tpu.pipeline_mode<synchronous>, transform_indices = @transform_3, window_bounds = array<i64: 1, 32>}, {pipeline_mode = #tpu.pipeline_mode<synchronous>, transform_indices = @transform_4, window_bounds = array<i64: 4, 32, 96>}, {pipeline_mode = #tpu.pipeline_mode<synchronous>, transform_indices = @transform_5, window_bounds = array<i64: 4, 1, 96>}, {pipeline_mode = #tpu.pipeline_mode<synchronous>, transform_indices = @transform_6, window_bounds = array<i64: 4, 32, 32>}, {pipeline_mode = #tpu.pipeline_mode<synchronous>, transform_indices = @transform_7, window_bounds = array<i64: 4, 1, 32>}, {pipeline_mode = #tpu.pipeline_mode<synchronous>, transform_indices = @transform_8, window_bounds = array<i64: 4, 1, 32>}, {pipeline_mode = #tpu.pipeline_mode<synchronous>, transform_indices = @transform_9, window_bounds = array<i64: 4, 1, 32>}, {pipeline_mode = #tpu.pipeline_mode<synchronous>, transform_indices = @transform_10, window_bounds = array<i64: 4, 32, 64>}, {pipeline_mode = #tpu.pipeline_mode<synchronous>, transform_indices = @transform_11, window_bounds = array<i64: 4, 1, 64>}, {pipeline_mode = #tpu.pipeline_mode<synchronous>, transform_indices = @transform_12, window_bounds = array<i64: 4, 64, 32>}, {pipeline_mode = #tpu.pipeline_mode<synchronous>, transform_indices = @transform_13, window_bounds = array<i64: 4, 1, 32>}, {pipeline_mode = #tpu.pipeline_mode<synchronous>, transform_indices = @transform_14, window_bounds = array<i64: 4, 1, 32>}, {pipeline_mode = #tpu.pipeline_mode<synchronous>, transform_indices = @transform_15, window_bounds = array<i64: 4, 1, 32>}, {pipeline_mode = #tpu.pipeline_mode<synchronous>, transform_indices = @transform_16, window_bounds = array<i64: 32, 128>}, {pipeline_mode = #tpu.pipeline_mode<synchronous>, transform_indices = @transform_17, window_bounds = array<i64: 1, 128>}, {transform_indices = @transform_18, window_bounds = array<i64: 8, 128>}]} {
    %c0 = arith.constant 0 : index
    %c0_0 = arith.constant 0 : index
    %c0_1 = arith.constant 0 : index
    %0 = vector.load %arg2[%c0, %c0_0, %c0_1] : memref<1x1x8xf32, #tpu.memory_space<vmem>>, vector<1x1x8xf32>
    %1 = vector.shape_cast %0 : vector<1x1x8xf32> to vector<1x8xf32>
    %c0_2 = arith.constant 0 : index
    %c0_3 = arith.constant 0 : index
    %2 = vector.load %arg1[%c0_2, %c0_3] : memref<8x32xf32, #tpu.memory_space<vmem>>, vector<8x32xf32>
    %c0_4 = arith.constant 0 : index
    %c0_5 = arith.constant 0 : index
    %3 = vector.load %arg3[%c0_4, %c0_5] : memref<1x32xf32, #tpu.memory_space<vmem>>, vector<1x32xf32>
    %c0_6 = arith.constant 0 : index
    %c0_7 = arith.constant 0 : index
    %4 = vector.load %arg4[%c0_6, %c0_7] : memref<1x32xf32, #tpu.memory_space<vmem>>, vector<1x32xf32>
    %cst = arith.constant dense<0.000000e+00> : vector<8xf32>
    %5 = vector.multi_reduction <add>, %2, %cst [1] : vector<8x32xf32> to vector<8xf32>
    %6 = vector.shape_cast %5 : vector<8xf32> to vector<8x1xf32>
    %cst_8 = arith.constant 3.200000e+01 : f32
    %7 = vector.broadcast %cst_8 : f32 to vector<8x1xf32>
    %8 = arith.divf %6, %7 : vector<8x1xf32>
    %9 = vector.broadcast %8 : vector<8x1xf32> to vector<8x32xf32>
    %10 = arith.subf %2, %9 : vector<8x32xf32>
    %11 = arith.mulf %10, %10 : vector<8x32xf32>
    %cst_9 = arith.constant dense<0.000000e+00> : vector<8xf32>
    %12 = vector.multi_reduction <add>, %11, %cst_9 [1] : vector<8x32xf32> to vector<8xf32>
    %13 = vector.shape_cast %12 : vector<8xf32> to vector<8x1xf32>
    %cst_10 = arith.constant 3.200000e+01 : f32
    %14 = vector.broadcast %cst_10 : f32 to vector<8x1xf32>
    %15 = arith.divf %13, %14 : vector<8x1xf32>
    %16 = vector.broadcast %8 : vector<8x1xf32> to vector<8x32xf32>
    %17 = arith.subf %2, %16 : vector<8x32xf32>
    %cst_11 = arith.constant 9.99999996E-13 : f32
    %18 = vector.broadcast %cst_11 : f32 to vector<8x1xf32>
    %19 = arith.addf %15, %18 : vector<8x1xf32>
    %20 = math.rsqrt %19 : vector<8x1xf32>
    %21 = vector.broadcast %20 : vector<8x1xf32> to vector<8x32xf32>
    %22 = arith.mulf %17, %21 : vector<8x32xf32>
    %23 = vector.broadcast %3 : vector<1x32xf32> to vector<8x32xf32>
    %24 = arith.mulf %22, %23 : vector<8x32xf32>
    %25 = vector.broadcast %4 : vector<1x32xf32> to vector<8x32xf32>
    %26 = arith.addf %24, %25 : vector<8x32xf32>
    %cst_12 = arith.constant 0.000000e+00 : f32
    %27 = vector.broadcast %cst_12 : f32 to vector<8x32xf32>
    %c0_13 = arith.constant 0 : index
    %c0_14 = arith.constant 0 : index
    %c0_15 = arith.constant 0 : index
    %28 = vector.load %arg5[%c0_13, %c0_14, %c0_15] : memref<4x32x96xf32, #tpu.memory_space<vmem>>, vector<1x32x96xf32>
    %29 = vector.shape_cast %28 : vector<1x32x96xf32> to vector<32x96xf32>
    %cst_16 = arith.constant dense<0.000000e+00> : vector<8x96xf32>
    %30 = tpu.matmul %26, %29, %cst_16 {dimension_numbers = #tpu.dot_dimension_numbers<[1], [0], [0], [1], [0, 0, 1, 1], [], []>} : vector<8x32xf32>, vector<32x96xf32>, vector<8x96xf32> -> vector<8x96xf32>
    %c0_17 = arith.constant 0 : index
    %c0_18 = arith.constant 0 : index
    %c0_19 = arith.constant 0 : index
    %31 = vector.load %arg6[%c0_17, %c0_18, %c0_19] : memref<4x1x96xf32, #tpu.memory_space<vmem>>, vector<1x1x96xf32>
    %32 = vector.shape_cast %31 : vector<1x1x96xf32> to vector<1x96xf32>
    %33 = vector.broadcast %32 : vector<1x96xf32> to vector<8x96xf32>
    %34 = arith.addf %30, %33 : vector<8x96xf32>
    %35 = vector.extract_strided_slice %34 {offsets = [0, 0], sizes = [8, 24], strides = [1, 1]} : vector<8x96xf32> to vector<8x24xf32>
    %36 = vector.extract_strided_slice %35 {offsets = [0, 0], sizes = [8, 8], strides = [1, 1]} : vector<8x24xf32> to vector<8x8xf32>
    %37 = vector.extract_strided_slice %35 {offsets = [0, 8], sizes = [8, 8], strides = [1, 1]} : vector<8x24xf32> to vector<8x8xf32>
    %38 = vector.extract_strided_slice %35 {offsets = [0, 16], sizes = [8, 8], strides = [1, 1]} : vector<8x24xf32> to vector<8x8xf32>
    %cst_20 = arith.constant dense<0.000000e+00> : vector<8x8xf32>
    %39 = tpu.matmul %36, %37, %cst_20 {dimension_numbers = #tpu.dot_dimension_numbers<[1], [1], [0], [0], [0, 0, 1, 0], [], []>} : vector<8x8xf32>, vector<8x8xf32>, vector<8x8xf32> -> vector<8x8xf32>
    %cst_21 = arith.constant 0.353553385 : f32
    %40 = vector.broadcast %cst_21 : f32 to vector<8x8xf32>
    %41 = arith.mulf %39, %40 : vector<8x8xf32>
    %42 = vector.broadcast %1 : vector<1x8xf32> to vector<8x8xf32>
    %43 = arith.addf %41, %42 : vector<8x8xf32>
    %cst_22 = arith.constant dense<0xFF800000> : vector<8xf32>
    %44 = vector.multi_reduction <maximumf>, %43, %cst_22 [1] : vector<8x8xf32> to vector<8xf32>
    %45 = vector.shape_cast %44 : vector<8xf32> to vector<8x1xf32>
    %46 = vector.broadcast %45 : vector<8x1xf32> to vector<8x8xf32>
    %47 = arith.subf %43, %46 : vector<8x8xf32>
    %48 = math.exp %47 : vector<8x8xf32>
    %cst_23 = arith.constant dense<0.000000e+00> : vector<8xf32>
    %49 = vector.multi_reduction <add>, %48, %cst_23 [1] : vector<8x8xf32> to vector<8xf32>
    %50 = vector.shape_cast %49 : vector<8xf32> to vector<8x1xf32>
    %51 = tpu.reciprocal %50 {approx = true} : vector<8x1xf32> -> vector<8x1xf32>
    %52 = vector.broadcast %51 : vector<8x1xf32> to vector<8x8xf32>
    %53 = arith.mulf %48, %52 : vector<8x8xf32>
    %cst_24 = arith.constant dense<0.000000e+00> : vector<8x8xf32>
    %54 = tpu.matmul %53, %38, %cst_24 {dimension_numbers = #tpu.dot_dimension_numbers<[1], [0], [0], [1], [0, 0, 1, 1], [], []>} : vector<8x8xf32>, vector<8x8xf32>, vector<8x8xf32> -> vector<8x8xf32>
    %55 = vector.extract_strided_slice %34 {offsets = [0, 24], sizes = [8, 24], strides = [1, 1]} : vector<8x96xf32> to vector<8x24xf32>
    %56 = vector.extract_strided_slice %55 {offsets = [0, 0], sizes = [8, 8], strides = [1, 1]} : vector<8x24xf32> to vector<8x8xf32>
    %57 = vector.extract_strided_slice %55 {offsets = [0, 8], sizes = [8, 8], strides = [1, 1]} : vector<8x24xf32> to vector<8x8xf32>
    %58 = vector.extract_strided_slice %55 {offsets = [0, 16], sizes = [8, 8], strides = [1, 1]} : vector<8x24xf32> to vector<8x8xf32>
    %cst_25 = arith.constant dense<0.000000e+00> : vector<8x8xf32>
    %59 = tpu.matmul %56, %57, %cst_25 {dimension_numbers = #tpu.dot_dimension_numbers<[1], [1], [0], [0], [0, 0, 1, 0], [], []>} : vector<8x8xf32>, vector<8x8xf32>, vector<8x8xf32> -> vector<8x8xf32>
    %cst_26 = arith.constant 0.353553385 : f32
    %60 = vector.broadcast %cst_26 : f32 to vector<8x8xf32>
    %61 = arith.mulf %59, %60 : vector<8x8xf32>
    %62 = vector.broadcast %1 : vector<1x8xf32> to vector<8x8xf32>
    %63 = arith.addf %61, %62 : vector<8x8xf32>
    %cst_27 = arith.constant dense<0xFF800000> : vector<8xf32>
    %64 = vector.multi_reduction <maximumf>, %63, %cst_27 [1] : vector<8x8xf32> to vector<8xf32>
    %65 = vector.shape_cast %64 : vector<8xf32> to vector<8x1xf32>
    %66 = vector.broadcast %65 : vector<8x1xf32> to vector<8x8xf32>
    %67 = arith.subf %63, %66 : vector<8x8xf32>
    %68 = math.exp %67 : vector<8x8xf32>
    %cst_28 = arith.constant dense<0.000000e+00> : vector<8xf32>
    %69 = vector.multi_reduction <add>, %68, %cst_28 [1] : vector<8x8xf32> to vector<8xf32>
    %70 = vector.shape_cast %69 : vector<8xf32> to vector<8x1xf32>
    %71 = tpu.reciprocal %70 {approx = true} : vector<8x1xf32> -> vector<8x1xf32>
    %72 = vector.broadcast %71 : vector<8x1xf32> to vector<8x8xf32>
    %73 = arith.mulf %68, %72 : vector<8x8xf32>
    %cst_29 = arith.constant dense<0.000000e+00> : vector<8x8xf32>
    %74 = tpu.matmul %73, %58, %cst_29 {dimension_numbers = #tpu.dot_dimension_numbers<[1], [0], [0], [1], [0, 0, 1, 1], [], []>} : vector<8x8xf32>, vector<8x8xf32>, vector<8x8xf32> -> vector<8x8xf32>
    %75 = vector.extract_strided_slice %34 {offsets = [0, 48], sizes = [8, 24], strides = [1, 1]} : vector<8x96xf32> to vector<8x24xf32>
    %76 = vector.extract_strided_slice %75 {offsets = [0, 0], sizes = [8, 8], strides = [1, 1]} : vector<8x24xf32> to vector<8x8xf32>
    %77 = vector.extract_strided_slice %75 {offsets = [0, 8], sizes = [8, 8], strides = [1, 1]} : vector<8x24xf32> to vector<8x8xf32>
    %78 = vector.extract_strided_slice %75 {offsets = [0, 16], sizes = [8, 8], strides = [1, 1]} : vector<8x24xf32> to vector<8x8xf32>
    %cst_30 = arith.constant dense<0.000000e+00> : vector<8x8xf32>
    %79 = tpu.matmul %76, %77, %cst_30 {dimension_numbers = #tpu.dot_dimension_numbers<[1], [1], [0], [0], [0, 0, 1, 0], [], []>} : vector<8x8xf32>, vector<8x8xf32>, vector<8x8xf32> -> vector<8x8xf32>
    %cst_31 = arith.constant 0.353553385 : f32
    %80 = vector.broadcast %cst_31 : f32 to vector<8x8xf32>
    %81 = arith.mulf %79, %80 : vector<8x8xf32>
    %82 = vector.broadcast %1 : vector<1x8xf32> to vector<8x8xf32>
    %83 = arith.addf %81, %82 : vector<8x8xf32>
    %cst_32 = arith.constant dense<0xFF800000> : vector<8xf32>
    %84 = vector.multi_reduction <maximumf>, %83, %cst_32 [1] : vector<8x8xf32> to vector<8xf32>
    %85 = vector.shape_cast %84 : vector<8xf32> to vector<8x1xf32>
    %86 = vector.broadcast %85 : vector<8x1xf32> to vector<8x8xf32>
    %87 = arith.subf %83, %86 : vector<8x8xf32>
    %88 = math.exp %87 : vector<8x8xf32>
    %cst_33 = arith.constant dense<0.000000e+00> : vector<8xf32>
    %89 = vector.multi_reduction <add>, %88, %cst_33 [1] : vector<8x8xf32> to vector<8xf32>
    %90 = vector.shape_cast %89 : vector<8xf32> to vector<8x1xf32>
    %91 = tpu.reciprocal %90 {approx = true} : vector<8x1xf32> -> vector<8x1xf32>
    %92 = vector.broadcast %91 : vector<8x1xf32> to vector<8x8xf32>
    %93 = arith.mulf %88, %92 : vector<8x8xf32>
    %cst_34 = arith.constant dense<0.000000e+00> : vector<8x8xf32>
    %94 = tpu.matmul %93, %78, %cst_34 {dimension_numbers = #tpu.dot_dimension_numbers<[1], [0], [0], [1], [0, 0, 1, 1], [], []>} : vector<8x8xf32>, vector<8x8xf32>, vector<8x8xf32> -> vector<8x8xf32>
    %95 = vector.extract_strided_slice %34 {offsets = [0, 72], sizes = [8, 24], strides = [1, 1]} : vector<8x96xf32> to vector<8x24xf32>
    %96 = vector.extract_strided_slice %95 {offsets = [0, 0], sizes = [8, 8], strides = [1, 1]} : vector<8x24xf32> to vector<8x8xf32>
    %97 = vector.extract_strided_slice %95 {offsets = [0, 8], sizes = [8, 8], strides = [1, 1]} : vector<8x24xf32> to vector<8x8xf32>
    %98 = vector.extract_strided_slice %95 {offsets = [0, 16], sizes = [8, 8], strides = [1, 1]} : vector<8x24xf32> to vector<8x8xf32>
    %cst_35 = arith.constant dense<0.000000e+00> : vector<8x8xf32>
    %99 = tpu.matmul %96, %97, %cst_35 {dimension_numbers = #tpu.dot_dimension_numbers<[1], [1], [0], [0], [0, 0, 1, 0], [], []>} : vector<8x8xf32>, vector<8x8xf32>, vector<8x8xf32> -> vector<8x8xf32>
    %cst_36 = arith.constant 0.353553385 : f32
    %100 = vector.broadcast %cst_36 : f32 to vector<8x8xf32>
    %101 = arith.mulf %99, %100 : vector<8x8xf32>
    %102 = vector.broadcast %1 : vector<1x8xf32> to vector<8x8xf32>
    %103 = arith.addf %101, %102 : vector<8x8xf32>
    %cst_37 = arith.constant dense<0xFF800000> : vector<8xf32>
    %104 = vector.multi_reduction <maximumf>, %103, %cst_37 [1] : vector<8x8xf32> to vector<8xf32>
    %105 = vector.shape_cast %104 : vector<8xf32> to vector<8x1xf32>
    %106 = vector.broadcast %105 : vector<8x1xf32> to vector<8x8xf32>
    %107 = arith.subf %103, %106 : vector<8x8xf32>
    %108 = math.exp %107 : vector<8x8xf32>
    %cst_38 = arith.constant dense<0.000000e+00> : vector<8xf32>
    %109 = vector.multi_reduction <add>, %108, %cst_38 [1] : vector<8x8xf32> to vector<8xf32>
    %110 = vector.shape_cast %109 : vector<8xf32> to vector<8x1xf32>
    %111 = tpu.reciprocal %110 {approx = true} : vector<8x1xf32> -> vector<8x1xf32>
    %112 = vector.broadcast %111 : vector<8x1xf32> to vector<8x8xf32>
    %113 = arith.mulf %108, %112 : vector<8x8xf32>
    %cst_39 = arith.constant dense<0.000000e+00> : vector<8x8xf32>
    %114 = tpu.matmul %113, %98, %cst_39 {dimension_numbers = #tpu.dot_dimension_numbers<[1], [0], [0], [1], [0, 0, 1, 1], [], []>} : vector<8x8xf32>, vector<8x8xf32>, vector<8x8xf32> -> vector<8x8xf32>
    %115 = tpu.concatenate %54, %74, %94, %114 in 1 : vector<8x8xf32>, vector<8x8xf32>, vector<8x8xf32>, vector<8x8xf32> -> vector<8x32xf32>
    %c0_40 = arith.constant 0 : index
    %c0_41 = arith.constant 0 : index
    %c0_42 = arith.constant 0 : index
    %116 = vector.load %arg7[%c0_40, %c0_41, %c0_42] : memref<4x32x32xf32, #tpu.memory_space<vmem>>, vector<1x32x32xf32>
    %117 = vector.shape_cast %116 : vector<1x32x32xf32> to vector<32x32xf32>
    %cst_43 = arith.constant dense<0.000000e+00> : vector<8x32xf32>
    %118 = tpu.matmul %115, %117, %cst_43 {dimension_numbers = #tpu.dot_dimension_numbers<[1], [0], [0], [1], [0, 0, 1, 1], [], []>} : vector<8x32xf32>, vector<32x32xf32>, vector<8x32xf32> -> vector<8x32xf32>
    %c0_44 = arith.constant 0 : index
    %c0_45 = arith.constant 0 : index
    %c0_46 = arith.constant 0 : index
    %119 = vector.load %arg8[%c0_44, %c0_45, %c0_46] : memref<4x1x32xf32, #tpu.memory_space<vmem>>, vector<1x1x32xf32>
    %120 = vector.shape_cast %119 : vector<1x1x32xf32> to vector<1x32xf32>
    %121 = vector.broadcast %120 : vector<1x32xf32> to vector<8x32xf32>
    %122 = arith.addf %118, %121 : vector<8x32xf32>
    %123 = arith.addf %122, %26 : vector<8x32xf32>
    %c0_47 = arith.constant 0 : index
    %c0_48 = arith.constant 0 : index
    %c0_49 = arith.constant 0 : index
    %124 = vector.load %arg9[%c0_47, %c0_48, %c0_49] : memref<4x1x32xf32, #tpu.memory_space<vmem>>, vector<1x1x32xf32>
    %125 = vector.shape_cast %124 : vector<1x1x32xf32> to vector<1x32xf32>
    %c0_50 = arith.constant 0 : index
    %c0_51 = arith.constant 0 : index
    %c0_52 = arith.constant 0 : index
    %126 = vector.load %arg10[%c0_50, %c0_51, %c0_52] : memref<4x1x32xf32, #tpu.memory_space<vmem>>, vector<1x1x32xf32>
    %127 = vector.shape_cast %126 : vector<1x1x32xf32> to vector<1x32xf32>
    %cst_53 = arith.constant dense<0.000000e+00> : vector<8xf32>
    %128 = vector.multi_reduction <add>, %123, %cst_53 [1] : vector<8x32xf32> to vector<8xf32>
    %129 = vector.shape_cast %128 : vector<8xf32> to vector<8x1xf32>
    %cst_54 = arith.constant 3.200000e+01 : f32
    %130 = vector.broadcast %cst_54 : f32 to vector<8x1xf32>
    %131 = arith.divf %129, %130 : vector<8x1xf32>
    %132 = vector.broadcast %131 : vector<8x1xf32> to vector<8x32xf32>
    %133 = arith.subf %123, %132 : vector<8x32xf32>
    %134 = arith.mulf %133, %133 : vector<8x32xf32>
    %cst_55 = arith.constant dense<0.000000e+00> : vector<8xf32>
    %135 = vector.multi_reduction <add>, %134, %cst_55 [1] : vector<8x32xf32> to vector<8xf32>
    %136 = vector.shape_cast %135 : vector<8xf32> to vector<8x1xf32>
    %cst_56 = arith.constant 3.200000e+01 : f32
    %137 = vector.broadcast %cst_56 : f32 to vector<8x1xf32>
    %138 = arith.divf %136, %137 : vector<8x1xf32>
    %139 = vector.broadcast %131 : vector<8x1xf32> to vector<8x32xf32>
    %140 = arith.subf %123, %139 : vector<8x32xf32>
    %cst_57 = arith.constant 9.99999996E-13 : f32
    %141 = vector.broadcast %cst_57 : f32 to vector<8x1xf32>
    %142 = arith.addf %138, %141 : vector<8x1xf32>
    %143 = math.rsqrt %142 : vector<8x1xf32>
    %144 = vector.broadcast %143 : vector<8x1xf32> to vector<8x32xf32>
    %145 = arith.mulf %140, %144 : vector<8x32xf32>
    %146 = vector.broadcast %125 : vector<1x32xf32> to vector<8x32xf32>
    %147 = arith.mulf %145, %146 : vector<8x32xf32>
    %148 = vector.broadcast %127 : vector<1x32xf32> to vector<8x32xf32>
    %149 = arith.addf %147, %148 : vector<8x32xf32>
    %c0_58 = arith.constant 0 : index
    %c0_59 = arith.constant 0 : index
    %c0_60 = arith.constant 0 : index
    %150 = vector.load %arg11[%c0_58, %c0_59, %c0_60] : memref<4x32x64xf32, #tpu.memory_space<vmem>>, vector<1x32x64xf32>
    %151 = vector.shape_cast %150 : vector<1x32x64xf32> to vector<32x64xf32>
    %cst_61 = arith.constant dense<0.000000e+00> : vector<8x64xf32>
    %152 = tpu.matmul %149, %151, %cst_61 {dimension_numbers = #tpu.dot_dimension_numbers<[1], [0], [0], [1], [0, 0, 1, 1], [], []>} : vector<8x32xf32>, vector<32x64xf32>, vector<8x64xf32> -> vector<8x64xf32>
    %c0_62 = arith.constant 0 : index
    %c0_63 = arith.constant 0 : index
    %c0_64 = arith.constant 0 : index
    %153 = vector.load %arg12[%c0_62, %c0_63, %c0_64] : memref<4x1x64xf32, #tpu.memory_space<vmem>>, vector<1x1x64xf32>
    %154 = vector.shape_cast %153 : vector<1x1x64xf32> to vector<1x64xf32>
    %155 = vector.broadcast %154 : vector<1x64xf32> to vector<8x64xf32>
    %156 = arith.addf %152, %155 : vector<8x64xf32>
    %cst_65 = arith.constant 5.000000e-01 : f32
    %157 = vector.broadcast %cst_65 : f32 to vector<8x64xf32>
    %158 = arith.mulf %157, %156 : vector<8x64xf32>
    %cst_66 = arith.constant 0.707106769 : f32
    %159 = vector.broadcast %cst_66 : f32 to vector<8x64xf32>
    %160 = arith.mulf %156, %159 : vector<8x64xf32>
    %161 = math.erf %160 : vector<8x64xf32>
    %cst_67 = arith.constant 1.000000e+00 : f32
    %162 = vector.broadcast %cst_67 : f32 to vector<8x64xf32>
    %163 = arith.addf %162, %161 : vector<8x64xf32>
    %164 = arith.mulf %158, %163 : vector<8x64xf32>
    %c0_68 = arith.constant 0 : index
    %c0_69 = arith.constant 0 : index
    %c0_70 = arith.constant 0 : index
    %165 = vector.load %arg13[%c0_68, %c0_69, %c0_70] : memref<4x64x32xf32, #tpu.memory_space<vmem>>, vector<1x64x32xf32>
    %166 = vector.shape_cast %165 : vector<1x64x32xf32> to vector<64x32xf32>
    %cst_71 = arith.constant dense<0.000000e+00> : vector<8x32xf32>
    %167 = tpu.matmul %164, %166, %cst_71 {dimension_numbers = #tpu.dot_dimension_numbers<[1], [0], [0], [1], [0, 0, 1, 1], [], []>} : vector<8x64xf32>, vector<64x32xf32>, vector<8x32xf32> -> vector<8x32xf32>
    %c0_72 = arith.constant 0 : index
    %c0_73 = arith.constant 0 : index
    %c0_74 = arith.constant 0 : index
    %168 = vector.load %arg14[%c0_72, %c0_73, %c0_74] : memref<4x1x32xf32, #tpu.memory_space<vmem>>, vector<1x1x32xf32>
    %169 = vector.shape_cast %168 : vector<1x1x32xf32> to vector<1x32xf32>
    %170 = vector.broadcast %169 : vector<1x32xf32> to vector<8x32xf32>
    %171 = arith.addf %167, %170 : vector<8x32xf32>
    %172 = arith.addf %171, %149 : vector<8x32xf32>
    %c0_75 = arith.constant 0 : index
    %c0_76 = arith.constant 0 : index
    %c0_77 = arith.constant 0 : index
    %173 = vector.load %arg15[%c0_75, %c0_76, %c0_77] : memref<4x1x32xf32, #tpu.memory_space<vmem>>, vector<1x1x32xf32>
    %174 = vector.shape_cast %173 : vector<1x1x32xf32> to vector<1x32xf32>
    %c0_78 = arith.constant 0 : index
    %c0_79 = arith.constant 0 : index
    %c0_80 = arith.constant 0 : index
    %175 = vector.load %arg16[%c0_78, %c0_79, %c0_80] : memref<4x1x32xf32, #tpu.memory_space<vmem>>, vector<1x1x32xf32>
    %176 = vector.shape_cast %175 : vector<1x1x32xf32> to vector<1x32xf32>
    %cst_81 = arith.constant dense<0.000000e+00> : vector<8xf32>
    %177 = vector.multi_reduction <add>, %172, %cst_81 [1] : vector<8x32xf32> to vector<8xf32>
    %178 = vector.shape_cast %177 : vector<8xf32> to vector<8x1xf32>
    %cst_82 = arith.constant 3.200000e+01 : f32
    %179 = vector.broadcast %cst_82 : f32 to vector<8x1xf32>
    %180 = arith.divf %178, %179 : vector<8x1xf32>
    %181 = vector.broadcast %180 : vector<8x1xf32> to vector<8x32xf32>
    %182 = arith.subf %172, %181 : vector<8x32xf32>
    %183 = arith.mulf %182, %182 : vector<8x32xf32>
    %cst_83 = arith.constant dense<0.000000e+00> : vector<8xf32>
    %184 = vector.multi_reduction <add>, %183, %cst_83 [1] : vector<8x32xf32> to vector<8xf32>
    %185 = vector.shape_cast %184 : vector<8xf32> to vector<8x1xf32>
    %cst_84 = arith.constant 3.200000e+01 : f32
    %186 = vector.broadcast %cst_84 : f32 to vector<8x1xf32>
    %187 = arith.divf %185, %186 : vector<8x1xf32>
    %188 = vector.broadcast %180 : vector<8x1xf32> to vector<8x32xf32>
    %189 = arith.subf %172, %188 : vector<8x32xf32>
    %cst_85 = arith.constant 9.99999996E-13 : f32
    %190 = vector.broadcast %cst_85 : f32 to vector<8x1xf32>
    %191 = arith.addf %187, %190 : vector<8x1xf32>
    %192 = math.rsqrt %191 : vector<8x1xf32>
    %193 = vector.broadcast %192 : vector<8x1xf32> to vector<8x32xf32>
    %194 = arith.mulf %189, %193 : vector<8x32xf32>
    %195 = vector.broadcast %174 : vector<1x32xf32> to vector<8x32xf32>
    %196 = arith.mulf %194, %195 : vector<8x32xf32>
    %197 = vector.broadcast %176 : vector<1x32xf32> to vector<8x32xf32>
    %198 = arith.addf %196, %197 : vector<8x32xf32>
    %199 = arith.addf %27, %198 : vector<8x32xf32>
    %c1 = arith.constant 1 : index
    %c0_86 = arith.constant 0 : index
    %c0_87 = arith.constant 0 : index
    %200 = vector.load %arg5[%c1, %c0_86, %c0_87] : memref<4x32x96xf32, #tpu.memory_space<vmem>>, vector<1x32x96xf32>
    %201 = vector.shape_cast %200 : vector<1x32x96xf32> to vector<32x96xf32>
    %cst_88 = arith.constant dense<0.000000e+00> : vector<8x96xf32>
    %202 = tpu.matmul %198, %201, %cst_88 {dimension_numbers = #tpu.dot_dimension_numbers<[1], [0], [0], [1], [0, 0, 1, 1], [], []>} : vector<8x32xf32>, vector<32x96xf32>, vector<8x96xf32> -> vector<8x96xf32>
    %c1_89 = arith.constant 1 : index
    %c0_90 = arith.constant 0 : index
    %c0_91 = arith.constant 0 : index
    %203 = vector.load %arg6[%c1_89, %c0_90, %c0_91] : memref<4x1x96xf32, #tpu.memory_space<vmem>>, vector<1x1x96xf32>
    %204 = vector.shape_cast %203 : vector<1x1x96xf32> to vector<1x96xf32>
    %205 = vector.broadcast %204 : vector<1x96xf32> to vector<8x96xf32>
    %206 = arith.addf %202, %205 : vector<8x96xf32>
    %207 = vector.extract_strided_slice %206 {offsets = [0, 0], sizes = [8, 24], strides = [1, 1]} : vector<8x96xf32> to vector<8x24xf32>
    %208 = vector.extract_strided_slice %207 {offsets = [0, 0], sizes = [8, 8], strides = [1, 1]} : vector<8x24xf32> to vector<8x8xf32>
    %209 = vector.extract_strided_slice %207 {offsets = [0, 8], sizes = [8, 8], strides = [1, 1]} : vector<8x24xf32> to vector<8x8xf32>
    %210 = vector.extract_strided_slice %207 {offsets = [0, 16], sizes = [8, 8], strides = [1, 1]} : vector<8x24xf32> to vector<8x8xf32>
    %cst_92 = arith.constant dense<0.000000e+00> : vector<8x8xf32>
    %211 = tpu.matmul %208, %209, %cst_92 {dimension_numbers = #tpu.dot_dimension_numbers<[1], [1], [0], [0], [0, 0, 1, 0], [], []>} : vector<8x8xf32>, vector<8x8xf32>, vector<8x8xf32> -> vector<8x8xf32>
    %cst_93 = arith.constant 0.353553385 : f32
    %212 = vector.broadcast %cst_93 : f32 to vector<8x8xf32>
    %213 = arith.mulf %211, %212 : vector<8x8xf32>
    %214 = vector.broadcast %1 : vector<1x8xf32> to vector<8x8xf32>
    %215 = arith.addf %213, %214 : vector<8x8xf32>
    %cst_94 = arith.constant dense<0xFF800000> : vector<8xf32>
    %216 = vector.multi_reduction <maximumf>, %215, %cst_94 [1] : vector<8x8xf32> to vector<8xf32>
    %217 = vector.shape_cast %216 : vector<8xf32> to vector<8x1xf32>
    %218 = vector.broadcast %217 : vector<8x1xf32> to vector<8x8xf32>
    %219 = arith.subf %215, %218 : vector<8x8xf32>
    %220 = math.exp %219 : vector<8x8xf32>
    %cst_95 = arith.constant dense<0.000000e+00> : vector<8xf32>
    %221 = vector.multi_reduction <add>, %220, %cst_95 [1] : vector<8x8xf32> to vector<8xf32>
    %222 = vector.shape_cast %221 : vector<8xf32> to vector<8x1xf32>
    %223 = tpu.reciprocal %222 {approx = true} : vector<8x1xf32> -> vector<8x1xf32>
    %224 = vector.broadcast %223 : vector<8x1xf32> to vector<8x8xf32>
    %225 = arith.mulf %220, %224 : vector<8x8xf32>
    %cst_96 = arith.constant dense<0.000000e+00> : vector<8x8xf32>
    %226 = tpu.matmul %225, %210, %cst_96 {dimension_numbers = #tpu.dot_dimension_numbers<[1], [0], [0], [1], [0, 0, 1, 1], [], []>} : vector<8x8xf32>, vector<8x8xf32>, vector<8x8xf32> -> vector<8x8xf32>
    %227 = vector.extract_strided_slice %206 {offsets = [0, 24], sizes = [8, 24], strides = [1, 1]} : vector<8x96xf32> to vector<8x24xf32>
    %228 = vector.extract_strided_slice %227 {offsets = [0, 0], sizes = [8, 8], strides = [1, 1]} : vector<8x24xf32> to vector<8x8xf32>
    %229 = vector.extract_strided_slice %227 {offsets = [0, 8], sizes = [8, 8], strides = [1, 1]} : vector<8x24xf32> to vector<8x8xf32>
    %230 = vector.extract_strided_slice %227 {offsets = [0, 16], sizes = [8, 8], strides = [1, 1]} : vector<8x24xf32> to vector<8x8xf32>
    %cst_97 = arith.constant dense<0.000000e+00> : vector<8x8xf32>
    %231 = tpu.matmul %228, %229, %cst_97 {dimension_numbers = #tpu.dot_dimension_numbers<[1], [1], [0], [0], [0, 0, 1, 0], [], []>} : vector<8x8xf32>, vector<8x8xf32>, vector<8x8xf32> -> vector<8x8xf32>
    %cst_98 = arith.constant 0.353553385 : f32
    %232 = vector.broadcast %cst_98 : f32 to vector<8x8xf32>
    %233 = arith.mulf %231, %232 : vector<8x8xf32>
    %234 = vector.broadcast %1 : vector<1x8xf32> to vector<8x8xf32>
    %235 = arith.addf %233, %234 : vector<8x8xf32>
    %cst_99 = arith.constant dense<0xFF800000> : vector<8xf32>
    %236 = vector.multi_reduction <maximumf>, %235, %cst_99 [1] : vector<8x8xf32> to vector<8xf32>
    %237 = vector.shape_cast %236 : vector<8xf32> to vector<8x1xf32>
    %238 = vector.broadcast %237 : vector<8x1xf32> to vector<8x8xf32>
    %239 = arith.subf %235, %238 : vector<8x8xf32>
    %240 = math.exp %239 : vector<8x8xf32>
    %cst_100 = arith.constant dense<0.000000e+00> : vector<8xf32>
    %241 = vector.multi_reduction <add>, %240, %cst_100 [1] : vector<8x8xf32> to vector<8xf32>
    %242 = vector.shape_cast %241 : vector<8xf32> to vector<8x1xf32>
    %243 = tpu.reciprocal %242 {approx = true} : vector<8x1xf32> -> vector<8x1xf32>
    %244 = vector.broadcast %243 : vector<8x1xf32> to vector<8x8xf32>
    %245 = arith.mulf %240, %244 : vector<8x8xf32>
    %cst_101 = arith.constant dense<0.000000e+00> : vector<8x8xf32>
    %246 = tpu.matmul %245, %230, %cst_101 {dimension_numbers = #tpu.dot_dimension_numbers<[1], [0], [0], [1], [0, 0, 1, 1], [], []>} : vector<8x8xf32>, vector<8x8xf32>, vector<8x8xf32> -> vector<8x8xf32>
    %247 = vector.extract_strided_slice %206 {offsets = [0, 48], sizes = [8, 24], strides = [1, 1]} : vector<8x96xf32> to vector<8x24xf32>
    %248 = vector.extract_strided_slice %247 {offsets = [0, 0], sizes = [8, 8], strides = [1, 1]} : vector<8x24xf32> to vector<8x8xf32>
    %249 = vector.extract_strided_slice %247 {offsets = [0, 8], sizes = [8, 8], strides = [1, 1]} : vector<8x24xf32> to vector<8x8xf32>
    %250 = vector.extract_strided_slice %247 {offsets = [0, 16], sizes = [8, 8], strides = [1, 1]} : vector<8x24xf32> to vector<8x8xf32>
    %cst_102 = arith.constant dense<0.000000e+00> : vector<8x8xf32>
    %251 = tpu.matmul %248, %249, %cst_102 {dimension_numbers = #tpu.dot_dimension_numbers<[1], [1], [0], [0], [0, 0, 1, 0], [], []>} : vector<8x8xf32>, vector<8x8xf32>, vector<8x8xf32> -> vector<8x8xf32>
    %cst_103 = arith.constant 0.353553385 : f32
    %252 = vector.broadcast %cst_103 : f32 to vector<8x8xf32>
    %253 = arith.mulf %251, %252 : vector<8x8xf32>
    %254 = vector.broadcast %1 : vector<1x8xf32> to vector<8x8xf32>
    %255 = arith.addf %253, %254 : vector<8x8xf32>
    %cst_104 = arith.constant dense<0xFF800000> : vector<8xf32>
    %256 = vector.multi_reduction <maximumf>, %255, %cst_104 [1] : vector<8x8xf32> to vector<8xf32>
    %257 = vector.shape_cast %256 : vector<8xf32> to vector<8x1xf32>
    %258 = vector.broadcast %257 : vector<8x1xf32> to vector<8x8xf32>
    %259 = arith.subf %255, %258 : vector<8x8xf32>
    %260 = math.exp %259 : vector<8x8xf32>
    %cst_105 = arith.constant dense<0.000000e+00> : vector<8xf32>
    %261 = vector.multi_reduction <add>, %260, %cst_105 [1] : vector<8x8xf32> to vector<8xf32>
    %262 = vector.shape_cast %261 : vector<8xf32> to vector<8x1xf32>
    %263 = tpu.reciprocal %262 {approx = true} : vector<8x1xf32> -> vector<8x1xf32>
    %264 = vector.broadcast %263 : vector<8x1xf32> to vector<8x8xf32>
    %265 = arith.mulf %260, %264 : vector<8x8xf32>
    %cst_106 = arith.constant dense<0.000000e+00> : vector<8x8xf32>
    %266 = tpu.matmul %265, %250, %cst_106 {dimension_numbers = #tpu.dot_dimension_numbers<[1], [0], [0], [1], [0, 0, 1, 1], [], []>} : vector<8x8xf32>, vector<8x8xf32>, vector<8x8xf32> -> vector<8x8xf32>
    %267 = vector.extract_strided_slice %206 {offsets = [0, 72], sizes = [8, 24], strides = [1, 1]} : vector<8x96xf32> to vector<8x24xf32>
    %268 = vector.extract_strided_slice %267 {offsets = [0, 0], sizes = [8, 8], strides = [1, 1]} : vector<8x24xf32> to vector<8x8xf32>
    %269 = vector.extract_strided_slice %267 {offsets = [0, 8], sizes = [8, 8], strides = [1, 1]} : vector<8x24xf32> to vector<8x8xf32>
    %270 = vector.extract_strided_slice %267 {offsets = [0, 16], sizes = [8, 8], strides = [1, 1]} : vector<8x24xf32> to vector<8x8xf32>
    %cst_107 = arith.constant dense<0.000000e+00> : vector<8x8xf32>
    %271 = tpu.matmul %268, %269, %cst_107 {dimension_numbers = #tpu.dot_dimension_numbers<[1], [1], [0], [0], [0, 0, 1, 0], [], []>} : vector<8x8xf32>, vector<8x8xf32>, vector<8x8xf32> -> vector<8x8xf32>
    %cst_108 = arith.constant 0.353553385 : f32
    %272 = vector.broadcast %cst_108 : f32 to vector<8x8xf32>
    %273 = arith.mulf %271, %272 : vector<8x8xf32>
    %274 = vector.broadcast %1 : vector<1x8xf32> to vector<8x8xf32>
    %275 = arith.addf %273, %274 : vector<8x8xf32>
    %cst_109 = arith.constant dense<0xFF800000> : vector<8xf32>
    %276 = vector.multi_reduction <maximumf>, %275, %cst_109 [1] : vector<8x8xf32> to vector<8xf32>
    %277 = vector.shape_cast %276 : vector<8xf32> to vector<8x1xf32>
    %278 = vector.broadcast %277 : vector<8x1xf32> to vector<8x8xf32>
    %279 = arith.subf %275, %278 : vector<8x8xf32>
    %280 = math.exp %279 : vector<8x8xf32>
    %cst_110 = arith.constant dense<0.000000e+00> : vector<8xf32>
    %281 = vector.multi_reduction <add>, %280, %cst_110 [1] : vector<8x8xf32> to vector<8xf32>
    %282 = vector.shape_cast %281 : vector<8xf32> to vector<8x1xf32>
    %283 = tpu.reciprocal %282 {approx = true} : vector<8x1xf32> -> vector<8x1xf32>
    %284 = vector.broadcast %283 : vector<8x1xf32> to vector<8x8xf32>
    %285 = arith.mulf %280, %284 : vector<8x8xf32>
    %cst_111 = arith.constant dense<0.000000e+00> : vector<8x8xf32>
    %286 = tpu.matmul %285, %270, %cst_111 {dimension_numbers = #tpu.dot_dimension_numbers<[1], [0], [0], [1], [0, 0, 1, 1], [], []>} : vector<8x8xf32>, vector<8x8xf32>, vector<8x8xf32> -> vector<8x8xf32>
    %287 = tpu.concatenate %226, %246, %266, %286 in 1 : vector<8x8xf32>, vector<8x8xf32>, vector<8x8xf32>, vector<8x8xf32> -> vector<8x32xf32>
    %c1_112 = arith.constant 1 : index
    %c0_113 = arith.constant 0 : index
    %c0_114 = arith.constant 0 : index
    %288 = vector.load %arg7[%c1_112, %c0_113, %c0_114] : memref<4x32x32xf32, #tpu.memory_space<vmem>>, vector<1x32x32xf32>
    %289 = vector.shape_cast %288 : vector<1x32x32xf32> to vector<32x32xf32>
    %cst_115 = arith.constant dense<0.000000e+00> : vector<8x32xf32>
    %290 = tpu.matmul %287, %289, %cst_115 {dimension_numbers = #tpu.dot_dimension_numbers<[1], [0], [0], [1], [0, 0, 1, 1], [], []>} : vector<8x32xf32>, vector<32x32xf32>, vector<8x32xf32> -> vector<8x32xf32>
    %c1_116 = arith.constant 1 : index
    %c0_117 = arith.constant 0 : index
    %c0_118 = arith.constant 0 : index
    %291 = vector.load %arg8[%c1_116, %c0_117, %c0_118] : memref<4x1x32xf32, #tpu.memory_space<vmem>>, vector<1x1x32xf32>
    %292 = vector.shape_cast %291 : vector<1x1x32xf32> to vector<1x32xf32>
    %293 = vector.broadcast %292 : vector<1x32xf32> to vector<8x32xf32>
    %294 = arith.addf %290, %293 : vector<8x32xf32>
    %295 = arith.addf %294, %198 : vector<8x32xf32>
    %c1_119 = arith.constant 1 : index
    %c0_120 = arith.constant 0 : index
    %c0_121 = arith.constant 0 : index
    %296 = vector.load %arg9[%c1_119, %c0_120, %c0_121] : memref<4x1x32xf32, #tpu.memory_space<vmem>>, vector<1x1x32xf32>
    %297 = vector.shape_cast %296 : vector<1x1x32xf32> to vector<1x32xf32>
    %c1_122 = arith.constant 1 : index
    %c0_123 = arith.constant 0 : index
    %c0_124 = arith.constant 0 : index
    %298 = vector.load %arg10[%c1_122, %c0_123, %c0_124] : memref<4x1x32xf32, #tpu.memory_space<vmem>>, vector<1x1x32xf32>
    %299 = vector.shape_cast %298 : vector<1x1x32xf32> to vector<1x32xf32>
    %cst_125 = arith.constant dense<0.000000e+00> : vector<8xf32>
    %300 = vector.multi_reduction <add>, %295, %cst_125 [1] : vector<8x32xf32> to vector<8xf32>
    %301 = vector.shape_cast %300 : vector<8xf32> to vector<8x1xf32>
    %cst_126 = arith.constant 3.200000e+01 : f32
    %302 = vector.broadcast %cst_126 : f32 to vector<8x1xf32>
    %303 = arith.divf %301, %302 : vector<8x1xf32>
    %304 = vector.broadcast %303 : vector<8x1xf32> to vector<8x32xf32>
    %305 = arith.subf %295, %304 : vector<8x32xf32>
    %306 = arith.mulf %305, %305 : vector<8x32xf32>
    %cst_127 = arith.constant dense<0.000000e+00> : vector<8xf32>
    %307 = vector.multi_reduction <add>, %306, %cst_127 [1] : vector<8x32xf32> to vector<8xf32>
    %308 = vector.shape_cast %307 : vector<8xf32> to vector<8x1xf32>
    %cst_128 = arith.constant 3.200000e+01 : f32
    %309 = vector.broadcast %cst_128 : f32 to vector<8x1xf32>
    %310 = arith.divf %308, %309 : vector<8x1xf32>
    %311 = vector.broadcast %303 : vector<8x1xf32> to vector<8x32xf32>
    %312 = arith.subf %295, %311 : vector<8x32xf32>
    %cst_129 = arith.constant 9.99999996E-13 : f32
    %313 = vector.broadcast %cst_129 : f32 to vector<8x1xf32>
    %314 = arith.addf %310, %313 : vector<8x1xf32>
    %315 = math.rsqrt %314 : vector<8x1xf32>
    %316 = vector.broadcast %315 : vector<8x1xf32> to vector<8x32xf32>
    %317 = arith.mulf %312, %316 : vector<8x32xf32>
    %318 = vector.broadcast %297 : vector<1x32xf32> to vector<8x32xf32>
    %319 = arith.mulf %317, %318 : vector<8x32xf32>
    %320 = vector.broadcast %299 : vector<1x32xf32> to vector<8x32xf32>
    %321 = arith.addf %319, %320 : vector<8x32xf32>
    %c1_130 = arith.constant 1 : index
    %c0_131 = arith.constant 0 : index
    %c0_132 = arith.constant 0 : index
    %322 = vector.load %arg11[%c1_130, %c0_131, %c0_132] : memref<4x32x64xf32, #tpu.memory_space<vmem>>, vector<1x32x64xf32>
    %323 = vector.shape_cast %322 : vector<1x32x64xf32> to vector<32x64xf32>
    %cst_133 = arith.constant dense<0.000000e+00> : vector<8x64xf32>
    %324 = tpu.matmul %321, %323, %cst_133 {dimension_numbers = #tpu.dot_dimension_numbers<[1], [0], [0], [1], [0, 0, 1, 1], [], []>} : vector<8x32xf32>, vector<32x64xf32>, vector<8x64xf32> -> vector<8x64xf32>
    %c1_134 = arith.constant 1 : index
    %c0_135 = arith.constant 0 : index
    %c0_136 = arith.constant 0 : index
    %325 = vector.load %arg12[%c1_134, %c0_135, %c0_136] : memref<4x1x64xf32, #tpu.memory_space<vmem>>, vector<1x1x64xf32>
    %326 = vector.shape_cast %325 : vector<1x1x64xf32> to vector<1x64xf32>
    %327 = vector.broadcast %326 : vector<1x64xf32> to vector<8x64xf32>
    %328 = arith.addf %324, %327 : vector<8x64xf32>
    %cst_137 = arith.constant 5.000000e-01 : f32
    %329 = vector.broadcast %cst_137 : f32 to vector<8x64xf32>
    %330 = arith.mulf %329, %328 : vector<8x64xf32>
    %cst_138 = arith.constant 0.707106769 : f32
    %331 = vector.broadcast %cst_138 : f32 to vector<8x64xf32>
    %332 = arith.mulf %328, %331 : vector<8x64xf32>
    %333 = math.erf %332 : vector<8x64xf32>
    %cst_139 = arith.constant 1.000000e+00 : f32
    %334 = vector.broadcast %cst_139 : f32 to vector<8x64xf32>
    %335 = arith.addf %334, %333 : vector<8x64xf32>
    %336 = arith.mulf %330, %335 : vector<8x64xf32>
    %c1_140 = arith.constant 1 : index
    %c0_141 = arith.constant 0 : index
    %c0_142 = arith.constant 0 : index
    %337 = vector.load %arg13[%c1_140, %c0_141, %c0_142] : memref<4x64x32xf32, #tpu.memory_space<vmem>>, vector<1x64x32xf32>
    %338 = vector.shape_cast %337 : vector<1x64x32xf32> to vector<64x32xf32>
    %cst_143 = arith.constant dense<0.000000e+00> : vector<8x32xf32>
    %339 = tpu.matmul %336, %338, %cst_143 {dimension_numbers = #tpu.dot_dimension_numbers<[1], [0], [0], [1], [0, 0, 1, 1], [], []>} : vector<8x64xf32>, vector<64x32xf32>, vector<8x32xf32> -> vector<8x32xf32>
    %c1_144 = arith.constant 1 : index
    %c0_145 = arith.constant 0 : index
    %c0_146 = arith.constant 0 : index
    %340 = vector.load %arg14[%c1_144, %c0_145, %c0_146] : memref<4x1x32xf32, #tpu.memory_space<vmem>>, vector<1x1x32xf32>
    %341 = vector.shape_cast %340 : vector<1x1x32xf32> to vector<1x32xf32>
    %342 = vector.broadcast %341 : vector<1x32xf32> to vector<8x32xf32>
    %343 = arith.addf %339, %342 : vector<8x32xf32>
    %344 = arith.addf %343, %321 : vector<8x32xf32>
    %c1_147 = arith.constant 1 : index
    %c0_148 = arith.constant 0 : index
    %c0_149 = arith.constant 0 : index
    %345 = vector.load %arg15[%c1_147, %c0_148, %c0_149] : memref<4x1x32xf32, #tpu.memory_space<vmem>>, vector<1x1x32xf32>
    %346 = vector.shape_cast %345 : vector<1x1x32xf32> to vector<1x32xf32>
    %c1_150 = arith.constant 1 : index
    %c0_151 = arith.constant 0 : index
    %c0_152 = arith.constant 0 : index
    %347 = vector.load %arg16[%c1_150, %c0_151, %c0_152] : memref<4x1x32xf32, #tpu.memory_space<vmem>>, vector<1x1x32xf32>
    %348 = vector.shape_cast %347 : vector<1x1x32xf32> to vector<1x32xf32>
    %cst_153 = arith.constant dense<0.000000e+00> : vector<8xf32>
    %349 = vector.multi_reduction <add>, %344, %cst_153 [1] : vector<8x32xf32> to vector<8xf32>
    %350 = vector.shape_cast %349 : vector<8xf32> to vector<8x1xf32>
    %cst_154 = arith.constant 3.200000e+01 : f32
    %351 = vector.broadcast %cst_154 : f32 to vector<8x1xf32>
    %352 = arith.divf %350, %351 : vector<8x1xf32>
    %353 = vector.broadcast %352 : vector<8x1xf32> to vector<8x32xf32>
    %354 = arith.subf %344, %353 : vector<8x32xf32>
    %355 = arith.mulf %354, %354 : vector<8x32xf32>
    %cst_155 = arith.constant dense<0.000000e+00> : vector<8xf32>
    %356 = vector.multi_reduction <add>, %355, %cst_155 [1] : vector<8x32xf32> to vector<8xf32>
    %357 = vector.shape_cast %356 : vector<8xf32> to vector<8x1xf32>
    %cst_156 = arith.constant 3.200000e+01 : f32
    %358 = vector.broadcast %cst_156 : f32 to vector<8x1xf32>
    %359 = arith.divf %357, %358 : vector<8x1xf32>
    %360 = vector.broadcast %352 : vector<8x1xf32> to vector<8x32xf32>
    %361 = arith.subf %344, %360 : vector<8x32xf32>
    %cst_157 = arith.constant 9.99999996E-13 : f32
    %362 = vector.broadcast %cst_157 : f32 to vector<8x1xf32>
    %363 = arith.addf %359, %362 : vector<8x1xf32>
    %364 = math.rsqrt %363 : vector<8x1xf32>
    %365 = vector.broadcast %364 : vector<8x1xf32> to vector<8x32xf32>
    %366 = arith.mulf %361, %365 : vector<8x32xf32>
    %367 = vector.broadcast %346 : vector<1x32xf32> to vector<8x32xf32>
    %368 = arith.mulf %366, %367 : vector<8x32xf32>
    %369 = vector.broadcast %348 : vector<1x32xf32> to vector<8x32xf32>
    %370 = arith.addf %368, %369 : vector<8x32xf32>
    %371 = arith.addf %199, %370 : vector<8x32xf32>
    %c2 = arith.constant 2 : index
    %c0_158 = arith.constant 0 : index
    %c0_159 = arith.constant 0 : index
    %372 = vector.load %arg5[%c2, %c0_158, %c0_159] : memref<4x32x96xf32, #tpu.memory_space<vmem>>, vector<1x32x96xf32>
    %373 = vector.shape_cast %372 : vector<1x32x96xf32> to vector<32x96xf32>
    %cst_160 = arith.constant dense<0.000000e+00> : vector<8x96xf32>
    %374 = tpu.matmul %370, %373, %cst_160 {dimension_numbers = #tpu.dot_dimension_numbers<[1], [0], [0], [1], [0, 0, 1, 1], [], []>} : vector<8x32xf32>, vector<32x96xf32>, vector<8x96xf32> -> vector<8x96xf32>
    %c2_161 = arith.constant 2 : index
    %c0_162 = arith.constant 0 : index
    %c0_163 = arith.constant 0 : index
    %375 = vector.load %arg6[%c2_161, %c0_162, %c0_163] : memref<4x1x96xf32, #tpu.memory_space<vmem>>, vector<1x1x96xf32>
    %376 = vector.shape_cast %375 : vector<1x1x96xf32> to vector<1x96xf32>
    %377 = vector.broadcast %376 : vector<1x96xf32> to vector<8x96xf32>
    %378 = arith.addf %374, %377 : vector<8x96xf32>
    %379 = vector.extract_strided_slice %378 {offsets = [0, 0], sizes = [8, 24], strides = [1, 1]} : vector<8x96xf32> to vector<8x24xf32>
    %380 = vector.extract_strided_slice %379 {offsets = [0, 0], sizes = [8, 8], strides = [1, 1]} : vector<8x24xf32> to vector<8x8xf32>
    %381 = vector.extract_strided_slice %379 {offsets = [0, 8], sizes = [8, 8], strides = [1, 1]} : vector<8x24xf32> to vector<8x8xf32>
    %382 = vector.extract_strided_slice %379 {offsets = [0, 16], sizes = [8, 8], strides = [1, 1]} : vector<8x24xf32> to vector<8x8xf32>
    %cst_164 = arith.constant dense<0.000000e+00> : vector<8x8xf32>
    %383 = tpu.matmul %380, %381, %cst_164 {dimension_numbers = #tpu.dot_dimension_numbers<[1], [1], [0], [0], [0, 0, 1, 0], [], []>} : vector<8x8xf32>, vector<8x8xf32>, vector<8x8xf32> -> vector<8x8xf32>
    %cst_165 = arith.constant 0.353553385 : f32
    %384 = vector.broadcast %cst_165 : f32 to vector<8x8xf32>
    %385 = arith.mulf %383, %384 : vector<8x8xf32>
    %386 = vector.broadcast %1 : vector<1x8xf32> to vector<8x8xf32>
    %387 = arith.addf %385, %386 : vector<8x8xf32>
    %cst_166 = arith.constant dense<0xFF800000> : vector<8xf32>
    %388 = vector.multi_reduction <maximumf>, %387, %cst_166 [1] : vector<8x8xf32> to vector<8xf32>
    %389 = vector.shape_cast %388 : vector<8xf32> to vector<8x1xf32>
    %390 = vector.broadcast %389 : vector<8x1xf32> to vector<8x8xf32>
    %391 = arith.subf %387, %390 : vector<8x8xf32>
    %392 = math.exp %391 : vector<8x8xf32>
    %cst_167 = arith.constant dense<0.000000e+00> : vector<8xf32>
    %393 = vector.multi_reduction <add>, %392, %cst_167 [1] : vector<8x8xf32> to vector<8xf32>
    %394 = vector.shape_cast %393 : vector<8xf32> to vector<8x1xf32>
    %395 = tpu.reciprocal %394 {approx = true} : vector<8x1xf32> -> vector<8x1xf32>
    %396 = vector.broadcast %395 : vector<8x1xf32> to vector<8x8xf32>
    %397 = arith.mulf %392, %396 : vector<8x8xf32>
    %cst_168 = arith.constant dense<0.000000e+00> : vector<8x8xf32>
    %398 = tpu.matmul %397, %382, %cst_168 {dimension_numbers = #tpu.dot_dimension_numbers<[1], [0], [0], [1], [0, 0, 1, 1], [], []>} : vector<8x8xf32>, vector<8x8xf32>, vector<8x8xf32> -> vector<8x8xf32>
    %399 = vector.extract_strided_slice %378 {offsets = [0, 24], sizes = [8, 24], strides = [1, 1]} : vector<8x96xf32> to vector<8x24xf32>
    %400 = vector.extract_strided_slice %399 {offsets = [0, 0], sizes = [8, 8], strides = [1, 1]} : vector<8x24xf32> to vector<8x8xf32>
    %401 = vector.extract_strided_slice %399 {offsets = [0, 8], sizes = [8, 8], strides = [1, 1]} : vector<8x24xf32> to vector<8x8xf32>
    %402 = vector.extract_strided_slice %399 {offsets = [0, 16], sizes = [8, 8], strides = [1, 1]} : vector<8x24xf32> to vector<8x8xf32>
    %cst_169 = arith.constant dense<0.000000e+00> : vector<8x8xf32>
    %403 = tpu.matmul %400, %401, %cst_169 {dimension_numbers = #tpu.dot_dimension_numbers<[1], [1], [0], [0], [0, 0, 1, 0], [], []>} : vector<8x8xf32>, vector<8x8xf32>, vector<8x8xf32> -> vector<8x8xf32>
    %cst_170 = arith.constant 0.353553385 : f32
    %404 = vector.broadcast %cst_170 : f32 to vector<8x8xf32>
    %405 = arith.mulf %403, %404 : vector<8x8xf32>
    %406 = vector.broadcast %1 : vector<1x8xf32> to vector<8x8xf32>
    %407 = arith.addf %405, %406 : vector<8x8xf32>
    %cst_171 = arith.constant dense<0xFF800000> : vector<8xf32>
    %408 = vector.multi_reduction <maximumf>, %407, %cst_171 [1] : vector<8x8xf32> to vector<8xf32>
    %409 = vector.shape_cast %408 : vector<8xf32> to vector<8x1xf32>
    %410 = vector.broadcast %409 : vector<8x1xf32> to vector<8x8xf32>
    %411 = arith.subf %407, %410 : vector<8x8xf32>
    %412 = math.exp %411 : vector<8x8xf32>
    %cst_172 = arith.constant dense<0.000000e+00> : vector<8xf32>
    %413 = vector.multi_reduction <add>, %412, %cst_172 [1] : vector<8x8xf32> to vector<8xf32>
    %414 = vector.shape_cast %413 : vector<8xf32> to vector<8x1xf32>
    %415 = tpu.reciprocal %414 {approx = true} : vector<8x1xf32> -> vector<8x1xf32>
    %416 = vector.broadcast %415 : vector<8x1xf32> to vector<8x8xf32>
    %417 = arith.mulf %412, %416 : vector<8x8xf32>
    %cst_173 = arith.constant dense<0.000000e+00> : vector<8x8xf32>
    %418 = tpu.matmul %417, %402, %cst_173 {dimension_numbers = #tpu.dot_dimension_numbers<[1], [0], [0], [1], [0, 0, 1, 1], [], []>} : vector<8x8xf32>, vector<8x8xf32>, vector<8x8xf32> -> vector<8x8xf32>
    %419 = vector.extract_strided_slice %378 {offsets = [0, 48], sizes = [8, 24], strides = [1, 1]} : vector<8x96xf32> to vector<8x24xf32>
    %420 = vector.extract_strided_slice %419 {offsets = [0, 0], sizes = [8, 8], strides = [1, 1]} : vector<8x24xf32> to vector<8x8xf32>
    %421 = vector.extract_strided_slice %419 {offsets = [0, 8], sizes = [8, 8], strides = [1, 1]} : vector<8x24xf32> to vector<8x8xf32>
    %422 = vector.extract_strided_slice %419 {offsets = [0, 16], sizes = [8, 8], strides = [1, 1]} : vector<8x24xf32> to vector<8x8xf32>
    %cst_174 = arith.constant dense<0.000000e+00> : vector<8x8xf32>
    %423 = tpu.matmul %420, %421, %cst_174 {dimension_numbers = #tpu.dot_dimension_numbers<[1], [1], [0], [0], [0, 0, 1, 0], [], []>} : vector<8x8xf32>, vector<8x8xf32>, vector<8x8xf32> -> vector<8x8xf32>
    %cst_175 = arith.constant 0.353553385 : f32
    %424 = vector.broadcast %cst_175 : f32 to vector<8x8xf32>
    %425 = arith.mulf %423, %424 : vector<8x8xf32>
    %426 = vector.broadcast %1 : vector<1x8xf32> to vector<8x8xf32>
    %427 = arith.addf %425, %426 : vector<8x8xf32>
    %cst_176 = arith.constant dense<0xFF800000> : vector<8xf32>
    %428 = vector.multi_reduction <maximumf>, %427, %cst_176 [1] : vector<8x8xf32> to vector<8xf32>
    %429 = vector.shape_cast %428 : vector<8xf32> to vector<8x1xf32>
    %430 = vector.broadcast %429 : vector<8x1xf32> to vector<8x8xf32>
    %431 = arith.subf %427, %430 : vector<8x8xf32>
    %432 = math.exp %431 : vector<8x8xf32>
    %cst_177 = arith.constant dense<0.000000e+00> : vector<8xf32>
    %433 = vector.multi_reduction <add>, %432, %cst_177 [1] : vector<8x8xf32> to vector<8xf32>
    %434 = vector.shape_cast %433 : vector<8xf32> to vector<8x1xf32>
    %435 = tpu.reciprocal %434 {approx = true} : vector<8x1xf32> -> vector<8x1xf32>
    %436 = vector.broadcast %435 : vector<8x1xf32> to vector<8x8xf32>
    %437 = arith.mulf %432, %436 : vector<8x8xf32>
    %cst_178 = arith.constant dense<0.000000e+00> : vector<8x8xf32>
    %438 = tpu.matmul %437, %422, %cst_178 {dimension_numbers = #tpu.dot_dimension_numbers<[1], [0], [0], [1], [0, 0, 1, 1], [], []>} : vector<8x8xf32>, vector<8x8xf32>, vector<8x8xf32> -> vector<8x8xf32>
    %439 = vector.extract_strided_slice %378 {offsets = [0, 72], sizes = [8, 24], strides = [1, 1]} : vector<8x96xf32> to vector<8x24xf32>
    %440 = vector.extract_strided_slice %439 {offsets = [0, 0], sizes = [8, 8], strides = [1, 1]} : vector<8x24xf32> to vector<8x8xf32>
    %441 = vector.extract_strided_slice %439 {offsets = [0, 8], sizes = [8, 8], strides = [1, 1]} : vector<8x24xf32> to vector<8x8xf32>
    %442 = vector.extract_strided_slice %439 {offsets = [0, 16], sizes = [8, 8], strides = [1, 1]} : vector<8x24xf32> to vector<8x8xf32>
    %cst_179 = arith.constant dense<0.000000e+00> : vector<8x8xf32>
    %443 = tpu.matmul %440, %441, %cst_179 {dimension_numbers = #tpu.dot_dimension_numbers<[1], [1], [0], [0], [0, 0, 1, 0], [], []>} : vector<8x8xf32>, vector<8x8xf32>, vector<8x8xf32> -> vector<8x8xf32>
    %cst_180 = arith.constant 0.353553385 : f32
    %444 = vector.broadcast %cst_180 : f32 to vector<8x8xf32>
    %445 = arith.mulf %443, %444 : vector<8x8xf32>
    %446 = vector.broadcast %1 : vector<1x8xf32> to vector<8x8xf32>
    %447 = arith.addf %445, %446 : vector<8x8xf32>
    %cst_181 = arith.constant dense<0xFF800000> : vector<8xf32>
    %448 = vector.multi_reduction <maximumf>, %447, %cst_181 [1] : vector<8x8xf32> to vector<8xf32>
    %449 = vector.shape_cast %448 : vector<8xf32> to vector<8x1xf32>
    %450 = vector.broadcast %449 : vector<8x1xf32> to vector<8x8xf32>
    %451 = arith.subf %447, %450 : vector<8x8xf32>
    %452 = math.exp %451 : vector<8x8xf32>
    %cst_182 = arith.constant dense<0.000000e+00> : vector<8xf32>
    %453 = vector.multi_reduction <add>, %452, %cst_182 [1] : vector<8x8xf32> to vector<8xf32>
    %454 = vector.shape_cast %453 : vector<8xf32> to vector<8x1xf32>
    %455 = tpu.reciprocal %454 {approx = true} : vector<8x1xf32> -> vector<8x1xf32>
    %456 = vector.broadcast %455 : vector<8x1xf32> to vector<8x8xf32>
    %457 = arith.mulf %452, %456 : vector<8x8xf32>
    %cst_183 = arith.constant dense<0.000000e+00> : vector<8x8xf32>
    %458 = tpu.matmul %457, %442, %cst_183 {dimension_numbers = #tpu.dot_dimension_numbers<[1], [0], [0], [1], [0, 0, 1, 1], [], []>} : vector<8x8xf32>, vector<8x8xf32>, vector<8x8xf32> -> vector<8x8xf32>
    %459 = tpu.concatenate %398, %418, %438, %458 in 1 : vector<8x8xf32>, vector<8x8xf32>, vector<8x8xf32>, vector<8x8xf32> -> vector<8x32xf32>
    %c2_184 = arith.constant 2 : index
    %c0_185 = arith.constant 0 : index
    %c0_186 = arith.constant 0 : index
    %460 = vector.load %arg7[%c2_184, %c0_185, %c0_186] : memref<4x32x32xf32, #tpu.memory_space<vmem>>, vector<1x32x32xf32>
    %461 = vector.shape_cast %460 : vector<1x32x32xf32> to vector<32x32xf32>
    %cst_187 = arith.constant dense<0.000000e+00> : vector<8x32xf32>
    %462 = tpu.matmul %459, %461, %cst_187 {dimension_numbers = #tpu.dot_dimension_numbers<[1], [0], [0], [1], [0, 0, 1, 1], [], []>} : vector<8x32xf32>, vector<32x32xf32>, vector<8x32xf32> -> vector<8x32xf32>
    %c2_188 = arith.constant 2 : index
    %c0_189 = arith.constant 0 : index
    %c0_190 = arith.constant 0 : index
    %463 = vector.load %arg8[%c2_188, %c0_189, %c0_190] : memref<4x1x32xf32, #tpu.memory_space<vmem>>, vector<1x1x32xf32>
    %464 = vector.shape_cast %463 : vector<1x1x32xf32> to vector<1x32xf32>
    %465 = vector.broadcast %464 : vector<1x32xf32> to vector<8x32xf32>
    %466 = arith.addf %462, %465 : vector<8x32xf32>
    %467 = arith.addf %466, %370 : vector<8x32xf32>
    %c2_191 = arith.constant 2 : index
    %c0_192 = arith.constant 0 : index
    %c0_193 = arith.constant 0 : index
    %468 = vector.load %arg9[%c2_191, %c0_192, %c0_193] : memref<4x1x32xf32, #tpu.memory_space<vmem>>, vector<1x1x32xf32>
    %469 = vector.shape_cast %468 : vector<1x1x32xf32> to vector<1x32xf32>
    %c2_194 = arith.constant 2 : index
    %c0_195 = arith.constant 0 : index
    %c0_196 = arith.constant 0 : index
    %470 = vector.load %arg10[%c2_194, %c0_195, %c0_196] : memref<4x1x32xf32, #tpu.memory_space<vmem>>, vector<1x1x32xf32>
    %471 = vector.shape_cast %470 : vector<1x1x32xf32> to vector<1x32xf32>
    %cst_197 = arith.constant dense<0.000000e+00> : vector<8xf32>
    %472 = vector.multi_reduction <add>, %467, %cst_197 [1] : vector<8x32xf32> to vector<8xf32>
    %473 = vector.shape_cast %472 : vector<8xf32> to vector<8x1xf32>
    %cst_198 = arith.constant 3.200000e+01 : f32
    %474 = vector.broadcast %cst_198 : f32 to vector<8x1xf32>
    %475 = arith.divf %473, %474 : vector<8x1xf32>
    %476 = vector.broadcast %475 : vector<8x1xf32> to vector<8x32xf32>
    %477 = arith.subf %467, %476 : vector<8x32xf32>
    %478 = arith.mulf %477, %477 : vector<8x32xf32>
    %cst_199 = arith.constant dense<0.000000e+00> : vector<8xf32>
    %479 = vector.multi_reduction <add>, %478, %cst_199 [1] : vector<8x32xf32> to vector<8xf32>
    %480 = vector.shape_cast %479 : vector<8xf32> to vector<8x1xf32>
    %cst_200 = arith.constant 3.200000e+01 : f32
    %481 = vector.broadcast %cst_200 : f32 to vector<8x1xf32>
    %482 = arith.divf %480, %481 : vector<8x1xf32>
    %483 = vector.broadcast %475 : vector<8x1xf32> to vector<8x32xf32>
    %484 = arith.subf %467, %483 : vector<8x32xf32>
    %cst_201 = arith.constant 9.99999996E-13 : f32
    %485 = vector.broadcast %cst_201 : f32 to vector<8x1xf32>
    %486 = arith.addf %482, %485 : vector<8x1xf32>
    %487 = math.rsqrt %486 : vector<8x1xf32>
    %488 = vector.broadcast %487 : vector<8x1xf32> to vector<8x32xf32>
    %489 = arith.mulf %484, %488 : vector<8x32xf32>
    %490 = vector.broadcast %469 : vector<1x32xf32> to vector<8x32xf32>
    %491 = arith.mulf %489, %490 : vector<8x32xf32>
    %492 = vector.broadcast %471 : vector<1x32xf32> to vector<8x32xf32>
    %493 = arith.addf %491, %492 : vector<8x32xf32>
    %c2_202 = arith.constant 2 : index
    %c0_203 = arith.constant 0 : index
    %c0_204 = arith.constant 0 : index
    %494 = vector.load %arg11[%c2_202, %c0_203, %c0_204] : memref<4x32x64xf32, #tpu.memory_space<vmem>>, vector<1x32x64xf32>
    %495 = vector.shape_cast %494 : vector<1x32x64xf32> to vector<32x64xf32>
    %cst_205 = arith.constant dense<0.000000e+00> : vector<8x64xf32>
    %496 = tpu.matmul %493, %495, %cst_205 {dimension_numbers = #tpu.dot_dimension_numbers<[1], [0], [0], [1], [0, 0, 1, 1], [], []>} : vector<8x32xf32>, vector<32x64xf32>, vector<8x64xf32> -> vector<8x64xf32>
    %c2_206 = arith.constant 2 : index
    %c0_207 = arith.constant 0 : index
    %c0_208 = arith.constant 0 : index
    %497 = vector.load %arg12[%c2_206, %c0_207, %c0_208] : memref<4x1x64xf32, #tpu.memory_space<vmem>>, vector<1x1x64xf32>
    %498 = vector.shape_cast %497 : vector<1x1x64xf32> to vector<1x64xf32>
    %499 = vector.broadcast %498 : vector<1x64xf32> to vector<8x64xf32>
    %500 = arith.addf %496, %499 : vector<8x64xf32>
    %cst_209 = arith.constant 5.000000e-01 : f32
    %501 = vector.broadcast %cst_209 : f32 to vector<8x64xf32>
    %502 = arith.mulf %501, %500 : vector<8x64xf32>
    %cst_210 = arith.constant 0.707106769 : f32
    %503 = vector.broadcast %cst_210 : f32 to vector<8x64xf32>
    %504 = arith.mulf %500, %503 : vector<8x64xf32>
    %505 = math.erf %504 : vector<8x64xf32>
    %cst_211 = arith.constant 1.000000e+00 : f32
    %506 = vector.broadcast %cst_211 : f32 to vector<8x64xf32>
    %507 = arith.addf %506, %505 : vector<8x64xf32>
    %508 = arith.mulf %502, %507 : vector<8x64xf32>
    %c2_212 = arith.constant 2 : index
    %c0_213 = arith.constant 0 : index
    %c0_214 = arith.constant 0 : index
    %509 = vector.load %arg13[%c2_212, %c0_213, %c0_214] : memref<4x64x32xf32, #tpu.memory_space<vmem>>, vector<1x64x32xf32>
    %510 = vector.shape_cast %509 : vector<1x64x32xf32> to vector<64x32xf32>
    %cst_215 = arith.constant dense<0.000000e+00> : vector<8x32xf32>
    %511 = tpu.matmul %508, %510, %cst_215 {dimension_numbers = #tpu.dot_dimension_numbers<[1], [0], [0], [1], [0, 0, 1, 1], [], []>} : vector<8x64xf32>, vector<64x32xf32>, vector<8x32xf32> -> vector<8x32xf32>
    %c2_216 = arith.constant 2 : index
    %c0_217 = arith.constant 0 : index
    %c0_218 = arith.constant 0 : index
    %512 = vector.load %arg14[%c2_216, %c0_217, %c0_218] : memref<4x1x32xf32, #tpu.memory_space<vmem>>, vector<1x1x32xf32>
    %513 = vector.shape_cast %512 : vector<1x1x32xf32> to vector<1x32xf32>
    %514 = vector.broadcast %513 : vector<1x32xf32> to vector<8x32xf32>
    %515 = arith.addf %511, %514 : vector<8x32xf32>
    %516 = arith.addf %515, %493 : vector<8x32xf32>
    %c2_219 = arith.constant 2 : index
    %c0_220 = arith.constant 0 : index
    %c0_221 = arith.constant 0 : index
    %517 = vector.load %arg15[%c2_219, %c0_220, %c0_221] : memref<4x1x32xf32, #tpu.memory_space<vmem>>, vector<1x1x32xf32>
    %518 = vector.shape_cast %517 : vector<1x1x32xf32> to vector<1x32xf32>
    %c2_222 = arith.constant 2 : index
    %c0_223 = arith.constant 0 : index
    %c0_224 = arith.constant 0 : index
    %519 = vector.load %arg16[%c2_222, %c0_223, %c0_224] : memref<4x1x32xf32, #tpu.memory_space<vmem>>, vector<1x1x32xf32>
    %520 = vector.shape_cast %519 : vector<1x1x32xf32> to vector<1x32xf32>
    %cst_225 = arith.constant dense<0.000000e+00> : vector<8xf32>
    %521 = vector.multi_reduction <add>, %516, %cst_225 [1] : vector<8x32xf32> to vector<8xf32>
    %522 = vector.shape_cast %521 : vector<8xf32> to vector<8x1xf32>
    %cst_226 = arith.constant 3.200000e+01 : f32
    %523 = vector.broadcast %cst_226 : f32 to vector<8x1xf32>
    %524 = arith.divf %522, %523 : vector<8x1xf32>
    %525 = vector.broadcast %524 : vector<8x1xf32> to vector<8x32xf32>
    %526 = arith.subf %516, %525 : vector<8x32xf32>
    %527 = arith.mulf %526, %526 : vector<8x32xf32>
    %cst_227 = arith.constant dense<0.000000e+00> : vector<8xf32>
    %528 = vector.multi_reduction <add>, %527, %cst_227 [1] : vector<8x32xf32> to vector<8xf32>
    %529 = vector.shape_cast %528 : vector<8xf32> to vector<8x1xf32>
    %cst_228 = arith.constant 3.200000e+01 : f32
    %530 = vector.broadcast %cst_228 : f32 to vector<8x1xf32>
    %531 = arith.divf %529, %530 : vector<8x1xf32>
    %532 = vector.broadcast %524 : vector<8x1xf32> to vector<8x32xf32>
    %533 = arith.subf %516, %532 : vector<8x32xf32>
    %cst_229 = arith.constant 9.99999996E-13 : f32
    %534 = vector.broadcast %cst_229 : f32 to vector<8x1xf32>
    %535 = arith.addf %531, %534 : vector<8x1xf32>
    %536 = math.rsqrt %535 : vector<8x1xf32>
    %537 = vector.broadcast %536 : vector<8x1xf32> to vector<8x32xf32>
    %538 = arith.mulf %533, %537 : vector<8x32xf32>
    %539 = vector.broadcast %518 : vector<1x32xf32> to vector<8x32xf32>
    %540 = arith.mulf %538, %539 : vector<8x32xf32>
    %541 = vector.broadcast %520 : vector<1x32xf32> to vector<8x32xf32>
    %542 = arith.addf %540, %541 : vector<8x32xf32>
    %543 = arith.addf %371, %542 : vector<8x32xf32>
    %c3 = arith.constant 3 : index
    %c0_230 = arith.constant 0 : index
    %c0_231 = arith.constant 0 : index
    %544 = vector.load %arg5[%c3, %c0_230, %c0_231] : memref<4x32x96xf32, #tpu.memory_space<vmem>>, vector<1x32x96xf32>
    %545 = vector.shape_cast %544 : vector<1x32x96xf32> to vector<32x96xf32>
    %cst_232 = arith.constant dense<0.000000e+00> : vector<8x96xf32>
    %546 = tpu.matmul %542, %545, %cst_232 {dimension_numbers = #tpu.dot_dimension_numbers<[1], [0], [0], [1], [0, 0, 1, 1], [], []>} : vector<8x32xf32>, vector<32x96xf32>, vector<8x96xf32> -> vector<8x96xf32>
    %c3_233 = arith.constant 3 : index
    %c0_234 = arith.constant 0 : index
    %c0_235 = arith.constant 0 : index
    %547 = vector.load %arg6[%c3_233, %c0_234, %c0_235] : memref<4x1x96xf32, #tpu.memory_space<vmem>>, vector<1x1x96xf32>
    %548 = vector.shape_cast %547 : vector<1x1x96xf32> to vector<1x96xf32>
    %549 = vector.broadcast %548 : vector<1x96xf32> to vector<8x96xf32>
    %550 = arith.addf %546, %549 : vector<8x96xf32>
    %551 = vector.extract_strided_slice %550 {offsets = [0, 0], sizes = [8, 24], strides = [1, 1]} : vector<8x96xf32> to vector<8x24xf32>
    %552 = vector.extract_strided_slice %551 {offsets = [0, 0], sizes = [8, 8], strides = [1, 1]} : vector<8x24xf32> to vector<8x8xf32>
    %553 = vector.extract_strided_slice %551 {offsets = [0, 8], sizes = [8, 8], strides = [1, 1]} : vector<8x24xf32> to vector<8x8xf32>
    %554 = vector.extract_strided_slice %551 {offsets = [0, 16], sizes = [8, 8], strides = [1, 1]} : vector<8x24xf32> to vector<8x8xf32>
    %cst_236 = arith.constant dense<0.000000e+00> : vector<8x8xf32>
    %555 = tpu.matmul %552, %553, %cst_236 {dimension_numbers = #tpu.dot_dimension_numbers<[1], [1], [0], [0], [0, 0, 1, 0], [], []>} : vector<8x8xf32>, vector<8x8xf32>, vector<8x8xf32> -> vector<8x8xf32>
    %cst_237 = arith.constant 0.353553385 : f32
    %556 = vector.broadcast %cst_237 : f32 to vector<8x8xf32>
    %557 = arith.mulf %555, %556 : vector<8x8xf32>
    %558 = vector.broadcast %1 : vector<1x8xf32> to vector<8x8xf32>
    %559 = arith.addf %557, %558 : vector<8x8xf32>
    %cst_238 = arith.constant dense<0xFF800000> : vector<8xf32>
    %560 = vector.multi_reduction <maximumf>, %559, %cst_238 [1] : vector<8x8xf32> to vector<8xf32>
    %561 = vector.shape_cast %560 : vector<8xf32> to vector<8x1xf32>
    %562 = vector.broadcast %561 : vector<8x1xf32> to vector<8x8xf32>
    %563 = arith.subf %559, %562 : vector<8x8xf32>
    %564 = math.exp %563 : vector<8x8xf32>
    %cst_239 = arith.constant dense<0.000000e+00> : vector<8xf32>
    %565 = vector.multi_reduction <add>, %564, %cst_239 [1] : vector<8x8xf32> to vector<8xf32>
    %566 = vector.shape_cast %565 : vector<8xf32> to vector<8x1xf32>
    %567 = tpu.reciprocal %566 {approx = true} : vector<8x1xf32> -> vector<8x1xf32>
    %568 = vector.broadcast %567 : vector<8x1xf32> to vector<8x8xf32>
    %569 = arith.mulf %564, %568 : vector<8x8xf32>
    %cst_240 = arith.constant dense<0.000000e+00> : vector<8x8xf32>
    %570 = tpu.matmul %569, %554, %cst_240 {dimension_numbers = #tpu.dot_dimension_numbers<[1], [0], [0], [1], [0, 0, 1, 1], [], []>} : vector<8x8xf32>, vector<8x8xf32>, vector<8x8xf32> -> vector<8x8xf32>
    %571 = vector.extract_strided_slice %550 {offsets = [0, 24], sizes = [8, 24], strides = [1, 1]} : vector<8x96xf32> to vector<8x24xf32>
    %572 = vector.extract_strided_slice %571 {offsets = [0, 0], sizes = [8, 8], strides = [1, 1]} : vector<8x24xf32> to vector<8x8xf32>
    %573 = vector.extract_strided_slice %571 {offsets = [0, 8], sizes = [8, 8], strides = [1, 1]} : vector<8x24xf32> to vector<8x8xf32>
    %574 = vector.extract_strided_slice %571 {offsets = [0, 16], sizes = [8, 8], strides = [1, 1]} : vector<8x24xf32> to vector<8x8xf32>
    %cst_241 = arith.constant dense<0.000000e+00> : vector<8x8xf32>
    %575 = tpu.matmul %572, %573, %cst_241 {dimension_numbers = #tpu.dot_dimension_numbers<[1], [1], [0], [0], [0, 0, 1, 0], [], []>} : vector<8x8xf32>, vector<8x8xf32>, vector<8x8xf32> -> vector<8x8xf32>
    %cst_242 = arith.constant 0.353553385 : f32
    %576 = vector.broadcast %cst_242 : f32 to vector<8x8xf32>
    %577 = arith.mulf %575, %576 : vector<8x8xf32>
    %578 = vector.broadcast %1 : vector<1x8xf32> to vector<8x8xf32>
    %579 = arith.addf %577, %578 : vector<8x8xf32>
    %cst_243 = arith.constant dense<0xFF800000> : vector<8xf32>
    %580 = vector.multi_reduction <maximumf>, %579, %cst_243 [1] : vector<8x8xf32> to vector<8xf32>
    %581 = vector.shape_cast %580 : vector<8xf32> to vector<8x1xf32>
    %582 = vector.broadcast %581 : vector<8x1xf32> to vector<8x8xf32>
    %583 = arith.subf %579, %582 : vector<8x8xf32>
    %584 = math.exp %583 : vector<8x8xf32>
    %cst_244 = arith.constant dense<0.000000e+00> : vector<8xf32>
    %585 = vector.multi_reduction <add>, %584, %cst_244 [1] : vector<8x8xf32> to vector<8xf32>
    %586 = vector.shape_cast %585 : vector<8xf32> to vector<8x1xf32>
    %587 = tpu.reciprocal %586 {approx = true} : vector<8x1xf32> -> vector<8x1xf32>
    %588 = vector.broadcast %587 : vector<8x1xf32> to vector<8x8xf32>
    %589 = arith.mulf %584, %588 : vector<8x8xf32>
    %cst_245 = arith.constant dense<0.000000e+00> : vector<8x8xf32>
    %590 = tpu.matmul %589, %574, %cst_245 {dimension_numbers = #tpu.dot_dimension_numbers<[1], [0], [0], [1], [0, 0, 1, 1], [], []>} : vector<8x8xf32>, vector<8x8xf32>, vector<8x8xf32> -> vector<8x8xf32>
    %591 = vector.extract_strided_slice %550 {offsets = [0, 48], sizes = [8, 24], strides = [1, 1]} : vector<8x96xf32> to vector<8x24xf32>
    %592 = vector.extract_strided_slice %591 {offsets = [0, 0], sizes = [8, 8], strides = [1, 1]} : vector<8x24xf32> to vector<8x8xf32>
    %593 = vector.extract_strided_slice %591 {offsets = [0, 8], sizes = [8, 8], strides = [1, 1]} : vector<8x24xf32> to vector<8x8xf32>
    %594 = vector.extract_strided_slice %591 {offsets = [0, 16], sizes = [8, 8], strides = [1, 1]} : vector<8x24xf32> to vector<8x8xf32>
    %cst_246 = arith.constant dense<0.000000e+00> : vector<8x8xf32>
    %595 = tpu.matmul %592, %593, %cst_246 {dimension_numbers = #tpu.dot_dimension_numbers<[1], [1], [0], [0], [0, 0, 1, 0], [], []>} : vector<8x8xf32>, vector<8x8xf32>, vector<8x8xf32> -> vector<8x8xf32>
    %cst_247 = arith.constant 0.353553385 : f32
    %596 = vector.broadcast %cst_247 : f32 to vector<8x8xf32>
    %597 = arith.mulf %595, %596 : vector<8x8xf32>
    %598 = vector.broadcast %1 : vector<1x8xf32> to vector<8x8xf32>
    %599 = arith.addf %597, %598 : vector<8x8xf32>
    %cst_248 = arith.constant dense<0xFF800000> : vector<8xf32>
    %600 = vector.multi_reduction <maximumf>, %599, %cst_248 [1] : vector<8x8xf32> to vector<8xf32>
    %601 = vector.shape_cast %600 : vector<8xf32> to vector<8x1xf32>
    %602 = vector.broadcast %601 : vector<8x1xf32> to vector<8x8xf32>
    %603 = arith.subf %599, %602 : vector<8x8xf32>
    %604 = math.exp %603 : vector<8x8xf32>
    %cst_249 = arith.constant dense<0.000000e+00> : vector<8xf32>
    %605 = vector.multi_reduction <add>, %604, %cst_249 [1] : vector<8x8xf32> to vector<8xf32>
    %606 = vector.shape_cast %605 : vector<8xf32> to vector<8x1xf32>
    %607 = tpu.reciprocal %606 {approx = true} : vector<8x1xf32> -> vector<8x1xf32>
    %608 = vector.broadcast %607 : vector<8x1xf32> to vector<8x8xf32>
    %609 = arith.mulf %604, %608 : vector<8x8xf32>
    %cst_250 = arith.constant dense<0.000000e+00> : vector<8x8xf32>
    %610 = tpu.matmul %609, %594, %cst_250 {dimension_numbers = #tpu.dot_dimension_numbers<[1], [0], [0], [1], [0, 0, 1, 1], [], []>} : vector<8x8xf32>, vector<8x8xf32>, vector<8x8xf32> -> vector<8x8xf32>
    %611 = vector.extract_strided_slice %550 {offsets = [0, 72], sizes = [8, 24], strides = [1, 1]} : vector<8x96xf32> to vector<8x24xf32>
    %612 = vector.extract_strided_slice %611 {offsets = [0, 0], sizes = [8, 8], strides = [1, 1]} : vector<8x24xf32> to vector<8x8xf32>
    %613 = vector.extract_strided_slice %611 {offsets = [0, 8], sizes = [8, 8], strides = [1, 1]} : vector<8x24xf32> to vector<8x8xf32>
    %614 = vector.extract_strided_slice %611 {offsets = [0, 16], sizes = [8, 8], strides = [1, 1]} : vector<8x24xf32> to vector<8x8xf32>
    %cst_251 = arith.constant dense<0.000000e+00> : vector<8x8xf32>
    %615 = tpu.matmul %612, %613, %cst_251 {dimension_numbers = #tpu.dot_dimension_numbers<[1], [1], [0], [0], [0, 0, 1, 0], [], []>} : vector<8x8xf32>, vector<8x8xf32>, vector<8x8xf32> -> vector<8x8xf32>
    %cst_252 = arith.constant 0.353553385 : f32
    %616 = vector.broadcast %cst_252 : f32 to vector<8x8xf32>
    %617 = arith.mulf %615, %616 : vector<8x8xf32>
    %618 = vector.broadcast %1 : vector<1x8xf32> to vector<8x8xf32>
    %619 = arith.addf %617, %618 : vector<8x8xf32>
    %cst_253 = arith.constant dense<0xFF800000> : vector<8xf32>
    %620 = vector.multi_reduction <maximumf>, %619, %cst_253 [1] : vector<8x8xf32> to vector<8xf32>
    %621 = vector.shape_cast %620 : vector<8xf32> to vector<8x1xf32>
    %622 = vector.broadcast %621 : vector<8x1xf32> to vector<8x8xf32>
    %623 = arith.subf %619, %622 : vector<8x8xf32>
    %624 = math.exp %623 : vector<8x8xf32>
    %cst_254 = arith.constant dense<0.000000e+00> : vector<8xf32>
    %625 = vector.multi_reduction <add>, %624, %cst_254 [1] : vector<8x8xf32> to vector<8xf32>
    %626 = vector.shape_cast %625 : vector<8xf32> to vector<8x1xf32>
    %627 = tpu.reciprocal %626 {approx = true} : vector<8x1xf32> -> vector<8x1xf32>
    %628 = vector.broadcast %627 : vector<8x1xf32> to vector<8x8xf32>
    %629 = arith.mulf %624, %628 : vector<8x8xf32>
    %cst_255 = arith.constant dense<0.000000e+00> : vector<8x8xf32>
    %630 = tpu.matmul %629, %614, %cst_255 {dimension_numbers = #tpu.dot_dimension_numbers<[1], [0], [0], [1], [0, 0, 1, 1], [], []>} : vector<8x8xf32>, vector<8x8xf32>, vector<8x8xf32> -> vector<8x8xf32>
    %631 = tpu.concatenate %570, %590, %610, %630 in 1 : vector<8x8xf32>, vector<8x8xf32>, vector<8x8xf32>, vector<8x8xf32> -> vector<8x32xf32>
    %c3_256 = arith.constant 3 : index
    %c0_257 = arith.constant 0 : index
    %c0_258 = arith.constant 0 : index
    %632 = vector.load %arg7[%c3_256, %c0_257, %c0_258] : memref<4x32x32xf32, #tpu.memory_space<vmem>>, vector<1x32x32xf32>
    %633 = vector.shape_cast %632 : vector<1x32x32xf32> to vector<32x32xf32>
    %cst_259 = arith.constant dense<0.000000e+00> : vector<8x32xf32>
    %634 = tpu.matmul %631, %633, %cst_259 {dimension_numbers = #tpu.dot_dimension_numbers<[1], [0], [0], [1], [0, 0, 1, 1], [], []>} : vector<8x32xf32>, vector<32x32xf32>, vector<8x32xf32> -> vector<8x32xf32>
    %c3_260 = arith.constant 3 : index
    %c0_261 = arith.constant 0 : index
    %c0_262 = arith.constant 0 : index
    %635 = vector.load %arg8[%c3_260, %c0_261, %c0_262] : memref<4x1x32xf32, #tpu.memory_space<vmem>>, vector<1x1x32xf32>
    %636 = vector.shape_cast %635 : vector<1x1x32xf32> to vector<1x32xf32>
    %637 = vector.broadcast %636 : vector<1x32xf32> to vector<8x32xf32>
    %638 = arith.addf %634, %637 : vector<8x32xf32>
    %639 = arith.addf %638, %542 : vector<8x32xf32>
    %c3_263 = arith.constant 3 : index
    %c0_264 = arith.constant 0 : index
    %c0_265 = arith.constant 0 : index
    %640 = vector.load %arg9[%c3_263, %c0_264, %c0_265] : memref<4x1x32xf32, #tpu.memory_space<vmem>>, vector<1x1x32xf32>
    %641 = vector.shape_cast %640 : vector<1x1x32xf32> to vector<1x32xf32>
    %c3_266 = arith.constant 3 : index
    %c0_267 = arith.constant 0 : index
    %c0_268 = arith.constant 0 : index
    %642 = vector.load %arg10[%c3_266, %c0_267, %c0_268] : memref<4x1x32xf32, #tpu.memory_space<vmem>>, vector<1x1x32xf32>
    %643 = vector.shape_cast %642 : vector<1x1x32xf32> to vector<1x32xf32>
    %cst_269 = arith.constant dense<0.000000e+00> : vector<8xf32>
    %644 = vector.multi_reduction <add>, %639, %cst_269 [1] : vector<8x32xf32> to vector<8xf32>
    %645 = vector.shape_cast %644 : vector<8xf32> to vector<8x1xf32>
    %cst_270 = arith.constant 3.200000e+01 : f32
    %646 = vector.broadcast %cst_270 : f32 to vector<8x1xf32>
    %647 = arith.divf %645, %646 : vector<8x1xf32>
    %648 = vector.broadcast %647 : vector<8x1xf32> to vector<8x32xf32>
    %649 = arith.subf %639, %648 : vector<8x32xf32>
    %650 = arith.mulf %649, %649 : vector<8x32xf32>
    %cst_271 = arith.constant dense<0.000000e+00> : vector<8xf32>
    %651 = vector.multi_reduction <add>, %650, %cst_271 [1] : vector<8x32xf32> to vector<8xf32>
    %652 = vector.shape_cast %651 : vector<8xf32> to vector<8x1xf32>
    %cst_272 = arith.constant 3.200000e+01 : f32
    %653 = vector.broadcast %cst_272 : f32 to vector<8x1xf32>
    %654 = arith.divf %652, %653 : vector<8x1xf32>
    %655 = vector.broadcast %647 : vector<8x1xf32> to vector<8x32xf32>
    %656 = arith.subf %639, %655 : vector<8x32xf32>
    %cst_273 = arith.constant 9.99999996E-13 : f32
    %657 = vector.broadcast %cst_273 : f32 to vector<8x1xf32>
    %658 = arith.addf %654, %657 : vector<8x1xf32>
    %659 = math.rsqrt %658 : vector<8x1xf32>
    %660 = vector.broadcast %659 : vector<8x1xf32> to vector<8x32xf32>
    %661 = arith.mulf %656, %660 : vector<8x32xf32>
    %662 = vector.broadcast %641 : vector<1x32xf32> to vector<8x32xf32>
    %663 = arith.mulf %661, %662 : vector<8x32xf32>
    %664 = vector.broadcast %643 : vector<1x32xf32> to vector<8x32xf32>
    %665 = arith.addf %663, %664 : vector<8x32xf32>
    %c3_274 = arith.constant 3 : index
    %c0_275 = arith.constant 0 : index
    %c0_276 = arith.constant 0 : index
    %666 = vector.load %arg11[%c3_274, %c0_275, %c0_276] : memref<4x32x64xf32, #tpu.memory_space<vmem>>, vector<1x32x64xf32>
    %667 = vector.shape_cast %666 : vector<1x32x64xf32> to vector<32x64xf32>
    %cst_277 = arith.constant dense<0.000000e+00> : vector<8x64xf32>
    %668 = tpu.matmul %665, %667, %cst_277 {dimension_numbers = #tpu.dot_dimension_numbers<[1], [0], [0], [1], [0, 0, 1, 1], [], []>} : vector<8x32xf32>, vector<32x64xf32>, vector<8x64xf32> -> vector<8x64xf32>
    %c3_278 = arith.constant 3 : index
    %c0_279 = arith.constant 0 : index
    %c0_280 = arith.constant 0 : index
    %669 = vector.load %arg12[%c3_278, %c0_279, %c0_280] : memref<4x1x64xf32, #tpu.memory_space<vmem>>, vector<1x1x64xf32>
    %670 = vector.shape_cast %669 : vector<1x1x64xf32> to vector<1x64xf32>
    %671 = vector.broadcast %670 : vector<1x64xf32> to vector<8x64xf32>
    %672 = arith.addf %668, %671 : vector<8x64xf32>
    %cst_281 = arith.constant 5.000000e-01 : f32
    %673 = vector.broadcast %cst_281 : f32 to vector<8x64xf32>
    %674 = arith.mulf %673, %672 : vector<8x64xf32>
    %cst_282 = arith.constant 0.707106769 : f32
    %675 = vector.broadcast %cst_282 : f32 to vector<8x64xf32>
    %676 = arith.mulf %672, %675 : vector<8x64xf32>
    %677 = math.erf %676 : vector<8x64xf32>
    %cst_283 = arith.constant 1.000000e+00 : f32
    %678 = vector.broadcast %cst_283 : f32 to vector<8x64xf32>
    %679 = arith.addf %678, %677 : vector<8x64xf32>
    %680 = arith.mulf %674, %679 : vector<8x64xf32>
    %c3_284 = arith.constant 3 : index
    %c0_285 = arith.constant 0 : index
    %c0_286 = arith.constant 0 : index
    %681 = vector.load %arg13[%c3_284, %c0_285, %c0_286] : memref<4x64x32xf32, #tpu.memory_space<vmem>>, vector<1x64x32xf32>
    %682 = vector.shape_cast %681 : vector<1x64x32xf32> to vector<64x32xf32>
    %cst_287 = arith.constant dense<0.000000e+00> : vector<8x32xf32>
    %683 = tpu.matmul %680, %682, %cst_287 {dimension_numbers = #tpu.dot_dimension_numbers<[1], [0], [0], [1], [0, 0, 1, 1], [], []>} : vector<8x64xf32>, vector<64x32xf32>, vector<8x32xf32> -> vector<8x32xf32>
    %c3_288 = arith.constant 3 : index
    %c0_289 = arith.constant 0 : index
    %c0_290 = arith.constant 0 : index
    %684 = vector.load %arg14[%c3_288, %c0_289, %c0_290] : memref<4x1x32xf32, #tpu.memory_space<vmem>>, vector<1x1x32xf32>
    %685 = vector.shape_cast %684 : vector<1x1x32xf32> to vector<1x32xf32>
    %686 = vector.broadcast %685 : vector<1x32xf32> to vector<8x32xf32>
    %687 = arith.addf %683, %686 : vector<8x32xf32>
    %688 = arith.addf %687, %665 : vector<8x32xf32>
    %c3_291 = arith.constant 3 : index
    %c0_292 = arith.constant 0 : index
    %c0_293 = arith.constant 0 : index
    %689 = vector.load %arg15[%c3_291, %c0_292, %c0_293] : memref<4x1x32xf32, #tpu.memory_space<vmem>>, vector<1x1x32xf32>
    %690 = vector.shape_cast %689 : vector<1x1x32xf32> to vector<1x32xf32>
    %c3_294 = arith.constant 3 : index
    %c0_295 = arith.constant 0 : index
    %c0_296 = arith.constant 0 : index
    %691 = vector.load %arg16[%c3_294, %c0_295, %c0_296] : memref<4x1x32xf32, #tpu.memory_space<vmem>>, vector<1x1x32xf32>
    %692 = vector.shape_cast %691 : vector<1x1x32xf32> to vector<1x32xf32>
    %cst_297 = arith.constant dense<0.000000e+00> : vector<8xf32>
    %693 = vector.multi_reduction <add>, %688, %cst_297 [1] : vector<8x32xf32> to vector<8xf32>
    %694 = vector.shape_cast %693 : vector<8xf32> to vector<8x1xf32>
    %cst_298 = arith.constant 3.200000e+01 : f32
    %695 = vector.broadcast %cst_298 : f32 to vector<8x1xf32>
    %696 = arith.divf %694, %695 : vector<8x1xf32>
    %697 = vector.broadcast %696 : vector<8x1xf32> to vector<8x32xf32>
    %698 = arith.subf %688, %697 : vector<8x32xf32>
    %699 = arith.mulf %698, %698 : vector<8x32xf32>
    %cst_299 = arith.constant dense<0.000000e+00> : vector<8xf32>
    %700 = vector.multi_reduction <add>, %699, %cst_299 [1] : vector<8x32xf32> to vector<8xf32>
    %701 = vector.shape_cast %700 : vector<8xf32> to vector<8x1xf32>
    %cst_300 = arith.constant 3.200000e+01 : f32
    %702 = vector.broadcast %cst_300 : f32 to vector<8x1xf32>
    %703 = arith.divf %701, %702 : vector<8x1xf32>
    %704 = vector.broadcast %696 : vector<8x1xf32> to vector<8x32xf32>
    %705 = arith.subf %688, %704 : vector<8x32xf32>
    %cst_301 = arith.constant 9.99999996E-13 : f32
    %706 = vector.broadcast %cst_301 : f32 to vector<8x1xf32>
    %707 = arith.addf %703, %706 : vector<8x1xf32>
    %708 = math.rsqrt %707 : vector<8x1xf32>
    %709 = vector.broadcast %708 : vector<8x1xf32> to vector<8x32xf32>
    %710 = arith.mulf %705, %709 : vector<8x32xf32>
    %711 = vector.broadcast %690 : vector<1x32xf32> to vector<8x32xf32>
    %712 = arith.mulf %710, %711 : vector<8x32xf32>
    %713 = vector.broadcast %692 : vector<1x32xf32> to vector<8x32xf32>
    %714 = arith.addf %712, %713 : vector<8x32xf32>
    %715 = arith.addf %543, %714 : vector<8x32xf32>
    %c0_302 = arith.constant 0 : index
    %c0_303 = arith.constant 0 : index
    %716 = vector.load %arg17[%c0_302, %c0_303] : memref<32x128xf32, #tpu.memory_space<vmem>>, vector<32x128xf32>
    %cst_304 = arith.constant dense<0.000000e+00> : vector<8x128xf32>
    %717 = tpu.matmul %715, %716, %cst_304 {dimension_numbers = #tpu.dot_dimension_numbers<[1], [0], [0], [1], [0, 0, 1, 1], [], []>} : vector<8x32xf32>, vector<32x128xf32>, vector<8x128xf32> -> vector<8x128xf32>
    %c0_305 = arith.constant 0 : index
    %c0_306 = arith.constant 0 : index
    %718 = vector.load %arg18[%c0_305, %c0_306] : memref<1x128xf32, #tpu.memory_space<vmem>>, vector<1x128xf32>
    %719 = vector.broadcast %718 : vector<1x128xf32> to vector<8x128xf32>
    %720 = arith.addf %717, %719 : vector<8x128xf32>
    %c0_307 = arith.constant 0 : index
    %c0_308 = arith.constant 0 : index
    %721 = vector.load %arg19[%c0_307, %c0_308] : memref<8x128xf32, #tpu.memory_space<vmem>>, vector<8x128xf32>
    tpu.vector_store %arg19[%c0_307, %c0_308], %720 {strides = array<i32>} : memref<8x128xf32, #tpu.memory_space<vmem>>, vector<8x128xf32>,
    return
  }
  func.func @transform_0(%arg0: i32) -> (i32, i32) {
    %c0_i32 = arith.constant 0 : i32
    %c0_i32_0 = arith.constant 0 : i32
    return %arg0, %c0_i32 : i32, i32
  }
  func.func @transform_1(%arg0: i32) -> (i32, i32, i32) {
    %c0_i32 = arith.constant 0 : i32
    %c0_i32_0 = arith.constant 0 : i32
    %c0_i32_1 = arith.constant 0 : i32
    return %arg0, %c0_i32, %c0_i32_0 : i32, i32, i32
  }
  func.func @transform_2(%arg0: i32) -> (i32, i32) {
    %c0_i32 = arith.constant 0 : i32
    %c0_i32_0 = arith.constant 0 : i32
    %c0_i32_1 = arith.constant 0 : i32
    return %c0_i32, %c0_i32_0 : i32, i32
  }
  func.func @transform_3(%arg0: i32) -> (i32, i32) {
    %c0_i32 = arith.constant 0 : i32
    %c0_i32_0 = arith.constant 0 : i32
    %c0_i32_1 = arith.constant 0 : i32
    return %c0_i32, %c0_i32_0 : i32, i32
  }
  func.func @transform_4(%arg0: i32) -> (i32, i32, i32) {
    %c0_i32 = arith.constant 0 : i32
    %c0_i32_0 = arith.constant 0 : i32
    %c0_i32_1 = arith.constant 0 : i32
    %c0_i32_2 = arith.constant 0 : i32
    return %c0_i32, %c0_i32_0, %c0_i32_1 : i32, i32, i32
  }
  func.func @transform_5(%arg0: i32) -> (i32, i32, i32) {
    %c0_i32 = arith.constant 0 : i32
    %c0_i32_0 = arith.constant 0 : i32
    %c0_i32_1 = arith.constant 0 : i32
    %c0_i32_2 = arith.constant 0 : i32
    return %c0_i32, %c0_i32_0, %c0_i32_1 : i32, i32, i32
  }
  func.func @transform_6(%arg0: i32) -> (i32, i32, i32) {
    %c0_i32 = arith.constant 0 : i32
    %c0_i32_0 = arith.constant 0 : i32
    %c0_i32_1 = arith.constant 0 : i32
    %c0_i32_2 = arith.constant 0 : i32
    return %c0_i32, %c0_i32_0, %c0_i32_1 : i32, i32, i32
  }
  func.func @transform_7(%arg0: i32) -> (i32, i32, i32) {
    %c0_i32 = arith.constant 0 : i32
    %c0_i32_0 = arith.constant 0 : i32
    %c0_i32_1 = arith.constant 0 : i32
    %c0_i32_2 = arith.constant 0 : i32
    return %c0_i32, %c0_i32_0, %c0_i32_1 : i32, i32, i32
  }
  func.func @transform_8(%arg0: i32) -> (i32, i32, i32) {
    %c0_i32 = arith.constant 0 : i32
    %c0_i32_0 = arith.constant 0 : i32
    %c0_i32_1 = arith.constant 0 : i32
    %c0_i32_2 = arith.constant 0 : i32
    return %c0_i32, %c0_i32_0, %c0_i32_1 : i32, i32, i32
  }
  func.func @transform_9(%arg0: i32) -> (i32, i32, i32) {
    %c0_i32 = arith.constant 0 : i32
    %c0_i32_0 = arith.constant 0 : i32
    %c0_i32_1 = arith.constant 0 : i32
    %c0_i32_2 = arith.constant 0 : i32
    return %c0_i32, %c0_i32_0, %c0_i32_1 : i32, i32, i32
  }
  func.func @transform_10(%arg0: i32) -> (i32, i32, i32) {
    %c0_i32 = arith.constant 0 : i32
    %c0_i32_0 = arith.constant 0 : i32
    %c0_i32_1 = arith.constant 0 : i32
    %c0_i32_2 = arith.constant 0 : i32
    return %c0_i32, %c0_i32_0, %c0_i32_1 : i32, i32, i32
  }
  func.func @transform_11(%arg0: i32) -> (i32, i32, i32) {
    %c0_i32 = arith.constant 0 : i32
    %c0_i32_0 = arith.constant 0 : i32
    %c0_i32_1 = arith.constant 0 : i32
    %c0_i32_2 = arith.constant 0 : i32
    return %c0_i32, %c0_i32_0, %c0_i32_1 : i32, i32, i32
  }
  func.func @transform_12(%arg0: i32) -> (i32, i32, i32) {
    %c0_i32 = arith.constant 0 : i32
    %c0_i32_0 = arith.constant 0 : i32
    %c0_i32_1 = arith.constant 0 : i32
    %c0_i32_2 = arith.constant 0 : i32
    return %c0_i32, %c0_i32_0, %c0_i32_1 : i32, i32, i32
  }
  func.func @transform_13(%arg0: i32) -> (i32, i32, i32) {
    %c0_i32 = arith.constant 0 : i32
    %c0_i32_0 = arith.constant 0 : i32
    %c0_i32_1 = arith.constant 0 : i32
    %c0_i32_2 = arith.constant 0 : i32
    return %c0_i32, %c0_i32_0, %c0_i32_1 : i32, i32, i32
  }
  func.func @transform_14(%arg0: i32) -> (i32, i32, i32) {
    %c0_i32 = arith.constant 0 : i32
    %c0_i32_0 = arith.constant 0 : i32
    %c0_i32_1 = arith.constant 0 : i32
    %c0_i32_2 = arith.constant 0 : i32
    return %c0_i32, %c0_i32_0, %c0_i32_1 : i32, i32, i32
  }
  func.func @transform_15(%arg0: i32) -> (i32, i32, i32) {
    %c0_i32 = arith.constant 0 : i32
    %c0_i32_0 = arith.constant 0 : i32
    %c0_i32_1 = arith.constant 0 : i32
    %c0_i32_2 = arith.constant 0 : i32
    return %c0_i32, %c0_i32_0, %c0_i32_1 : i32, i32, i32
  }
  func.func @transform_16(%arg0: i32) -> (i32, i32) {
    %c0_i32 = arith.constant 0 : i32
    %c0_i32_0 = arith.constant 0 : i32
    %c0_i32_1 = arith.constant 0 : i32
    return %c0_i32, %c0_i32_0 : i32, i32
  }
  func.func @transform_17(%arg0: i32) -> (i32, i32) {
    %c0_i32 = arith.constant 0 : i32
    %c0_i32_0 = arith.constant 0 : i32
    %c0_i32_1 = arith.constant 0 : i32
    return %c0_i32, %c0_i32_0 : i32, i32
  }
  func.func @transform_18(%arg0: i32) -> (i32, i32) {
    %c0_i32 = arith.constant 0 : i32
    %c0_i32_0 = arith.constant 0 : i32
    return %arg0, %c0_i32 : i32, i32
  }
}

</mosaic_0001>

<llo_original>
// kernel: kobert_only_forward.1
$region0: #{kobert_only_forward.1}
  #allocation0 [shape = 'u32[]', space=smem, size = 0x4, offset = 0x4, fixed_abs, tag = 'smem constant byte address 0x4 - core index']
  #allocation1 [shape = 'u32[144,128]{1,0:T(1,128)}', space=vmem, size = 0x12000, scoped, tag = 'internal scratch']
  %s0 = inlined_call_operand.vmem [shape: f32[16,32], index: 0, kind: input, shape index: {}]
  %s1 = inlined_call_operand.vmem [shape: f32[2,1,8], index: 1, kind: input, shape index: {}]
  %s2 = inlined_call_operand.vmem [shape: f32[1,32], index: 2, kind: input, shape index: {}]
  %s3 = inlined_call_operand.vmem [shape: f32[1,32], index: 3, kind: input, shape index: {}]
  %s4 = inlined_call_operand.vmem [shape: f32[4,32,96], index: 4, kind: input, shape index: {}]
  %s5 = inlined_call_operand.vmem [shape: f32[4,1,96], index: 5, kind: input, shape index: {}]
  %s6 = inlined_call_operand.vmem [shape: f32[4,32,32], index: 6, kind: input, shape index: {}]
  %s7 = inlined_call_operand.vmem [shape: f32[4,1,32], index: 7, kind: input, shape index: {}]
  %s8 = inlined_call_operand.vmem [shape: f32[4,1,32], index: 8, kind: input, shape index: {}]
  %s9 = inlined_call_operand.vmem [shape: f32[4,1,32], index: 9, kind: input, shape index: {}]
  %s10 = inlined_call_operand.vmem [shape: f32[4,32,64], index: 10, kind: input, shape index: {}]
  %s11 = inlined_call_operand.vmem [shape: f32[4,1,64], index: 11, kind: input, shape index: {}]
  %s12 = inlined_call_operand.vmem [shape: f32[4,64,32], index: 12, kind: input, shape index: {}]
  %s13 = inlined_call_operand.vmem [shape: f32[4,1,32], index: 13, kind: input, shape index: {}]
  %s14 = inlined_call_operand.vmem [shape: f32[4,1,32], index: 14, kind: input, shape index: {}]
  %s15 = inlined_call_operand.vmem [shape: f32[4,1,32], index: 15, kind: input, shape index: {}]
  %s16 = inlined_call_operand.vmem [shape: f32[32,128], index: 16, kind: input, shape index: {}]
  %s17 = inlined_call_operand.vmem [shape: f32[1,128], index: 17, kind: input, shape index: {}]
  %s18 = inlined_call_operand.vmem [shape: f32[16,128], index: 18, kind: output, shape index: {}]
  %s19 = sld [smem:[#allocation0]]
  $region105: #{kobert_only_forward.1} parent=0
    _
  %s21 = ssub.s32 1, %s19
  %s22 = scalar_select 0, %s21, %s19
  loop: start=0, step=1, limit=4
  $region2: #{kobert_only_forward.1} parent=0 // loop_pre_header
    _
  $region3: #{kobert_only_forward.1} parent=0 // loop_header
    %s24 = sphi 0, %s28
    %p25 = scmp.ge.s32.totalorder %s24, 4
    %s34 = sphi 0, %s36
    %s37 = sphi 0, %s34
    %s38 = sphi 0, %s37
    %s54 = sphi 0, %s38
    %s60 = sphi 0, %s62
    %s63 = sphi 0, %s60
    %s64 = sphi 0, %s63
    %s80 = sphi 0, %s64
    %s84 = sphi 0, %s84
    %s86 = sphi 0, %s84
    %s87 = sphi 0, %s86
    %s101 = sphi 0, %s87
    %s105 = sphi 0, %s105
    %s107 = sphi 0, %s105
    %s108 = sphi 0, %s107
    %s122 = sphi 0, %s108
    %s126 = sphi 0, %s126
    %s128 = sphi 0, %s126
    %s129 = sphi 0, %s128
    %s143 = sphi 0, %s129
    %s147 = sphi 0, %s147
    %s149 = sphi 0, %s147
    %s150 = sphi 0, %s149
    %s164 = sphi 0, %s150
    %s168 = sphi 0, %s168
    %s170 = sphi 0, %s168
    %s171 = sphi 0, %s170
    %s185 = sphi 0, %s171
    %s189 = sphi 0, %s189
    %s191 = sphi 0, %s189
    %s192 = sphi 0, %s191
    %s206 = sphi 0, %s192
    %s210 = sphi 0, %s210
    %s212 = sphi 0, %s210
    %s213 = sphi 0, %s212
    %s227 = sphi 0, %s213
    %s231 = sphi 0, %s231
    %s233 = sphi 0, %s231
    %s234 = sphi 0, %s233
    %s248 = sphi 0, %s234
    %s252 = sphi 0, %s252
    %s254 = sphi 0, %s252
    %s255 = sphi 0, %s254
    %s269 = sphi 0, %s255
    %s273 = sphi 0, %s273
    %s275 = sphi 0, %s273
    %s276 = sphi 0, %s275
    %s290 = sphi 0, %s276
    %s294 = sphi 0, %s294
    %s296 = sphi 0, %s294
    %s297 = sphi 0, %s296
    %s311 = sphi 0, %s297
    %s315 = sphi 0, %s315
    %s317 = sphi 0, %s315
    %s318 = sphi 0, %s317
    %s332 = sphi 0, %s318
    %s336 = sphi 0, %s336
    %s338 = sphi 0, %s336
    %s339 = sphi 0, %s338
    %s353 = sphi 0, %s339
    %s357 = sphi 0, %s357
    %s359 = sphi 0, %s357
    %s360 = sphi 0, %s359
    %s374 = sphi 0, %s360
    %s378 = sphi 0, %s378
    %s380 = sphi 0, %s378
    %s381 = sphi 0, %s380
    %s395 = sphi 0, %s381
    %s399 = sphi 0, %s399
    %s401 = sphi 0, %s399
    %s402 = sphi 0, %s401
    %s416 = sphi 0, %s402
    %s422 = sphi 0, %s424
    %s425 = sphi 0, %s422
    %s426 = sphi 0, %s425
    %s442 = sphi 0, %s426
  $region4: #{kobert_only_forward.1} parent=0 // loop_header_branch
    %27 = sbr.rel (%p25) target = $region8
  $region5: #{kobert_only_forward.1} parent=0 // loop_body
    %s29 = ssub.s32 %s24, 1
    %s30 = ssub.s32 %s24, 2
    %s31 = sadd.s32 %s24, 1
    %s32 = ssub.s32 %s24, %s31
    %p33 = scmp.eq.s32.totalorder %s32, 0
    %s35 = sadd.s32 %s34, 1
    %s36 = scalar_select %p33, %s34, %s35
    %p39 = pneg %p33
    %p40 = scmp.eq.s32.totalorder %s24, 1
    %p41 = por %p39, %p40
    %p42 = scmp.ne.s32.totalorder %s34, %s37
    %p43 = scmp.eq.s32.totalorder %s24, 0
    %p44 = por %p42, %p43
    %p45 = scmp.ne.s32.totalorder %s34, %s37
    %p46 = scmp.eq.s32.totalorder %s29, 1
    %p47 = por %p45, %p46
    %p48 = scmp.ne.s32.totalorder %s37, %s38
    %p49 = scmp.eq.s32.totalorder %s29, 0
    %p50 = por %p48, %p49
    %p51 = scmp.ne.s32.totalorder %s37, %s38
    %p52 = scmp.eq.s32.totalorder %s30, 1
    %p53 = por %p51, %p52
    %p55 = scmp.ne.s32.totalorder %s38, %s54
    %p56 = scmp.eq.s32.totalorder %s30, 0
    %p57 = por %p55, %p56
    %s58 = ssub.s32 %s24, %s31
    %p59 = scmp.eq.s32.totalorder %s58, 0
    %s61 = sadd.s32 %s60, 1
    %s62 = scalar_select %p59, %s60, %s61
    %p65 = pneg %p59
    %p66 = scmp.eq.s32.totalorder %s24, 1
    %p67 = por %p65, %p66
    %p68 = scmp.ne.s32.totalorder %s60, %s63
    %p69 = scmp.eq.s32.totalorder %s24, 0
    %p70 = por %p68, %p69
    %p71 = scmp.ne.s32.totalorder %s60, %s63
    %p72 = scmp.eq.s32.totalorder %s29, 1
    %p73 = por %p71, %p72
    %p74 = scmp.ne.s32.totalorder %s63, %s64
    %p75 = scmp.eq.s32.totalorder %s29, 0
    %p76 = por %p74, %p75
    %p77 = scmp.ne.s32.totalorder %s63, %s64
    %p78 = scmp.eq.s32.totalorder %s30, 1
    %p79 = por %p77, %p78
    %p81 = scmp.ne.s32.totalorder %s64, %s80
    %p82 = scmp.eq.s32.totalorder %s30, 0
    %p83 = por %p81, %p82
    %s85 = sadd.s32 %s84, 1
    %p88 = scmp.eq.s32.totalorder %s24, 1
    %p89 = scmp.ne.s32.totalorder %s84, %s86
    %p90 = scmp.eq.s32.totalorder %s24, 0
    %p91 = por %p89, %p90
    %p92 = scmp.ne.s32.totalorder %s84, %s86
    %p93 = scmp.eq.s32.totalorder %s29, 1
    %p94 = por %p92, %p93
    %p95 = scmp.ne.s32.totalorder %s86, %s87
    %p96 = scmp.eq.s32.totalorder %s29, 0
    %p97 = por %p95, %p96
    %p98 = scmp.ne.s32.totalorder %s86, %s87
    %p99 = scmp.eq.s32.totalorder %s30, 1
    %p100 = por %p98, %p99
    %p102 = scmp.ne.s32.totalorder %s87, %s101
    %p103 = scmp.eq.s32.totalorder %s30, 0
    %p104 = por %p102, %p103
    %s106 = sadd.s32 %s105, 1
    %p109 = scmp.eq.s32.totalorder %s24, 1
    %p110 = scmp.ne.s32.totalorder %s105, %s107
    %p111 = scmp.eq.s32.totalorder %s24, 0
    %p112 = por %p110, %p111
    %p113 = scmp.ne.s32.totalorder %s105, %s107
    %p114 = scmp.eq.s32.totalorder %s29, 1
    %p115 = por %p113, %p114
    %p116 = scmp.ne.s32.totalorder %s107, %s108
    %p117 = scmp.eq.s32.totalorder %s29, 0
    %p118 = por %p116, %p117
    %p119 = scmp.ne.s32.totalorder %s107, %s108
    %p120 = scmp.eq.s32.totalorder %s30, 1
    %p121 = por %p119, %p120
    %p123 = scmp.ne.s32.totalorder %s108, %s122
    %p124 = scmp.eq.s32.totalorder %s30, 0
    %p125 = por %p123, %p124
    %s127 = sadd.s32 %s126, 1
    %p130 = scmp.eq.s32.totalorder %s24, 1
    %p131 = scmp.ne.s32.totalorder %s126, %s128
    %p132 = scmp.eq.s32.totalorder %s24, 0
    %p133 = por %p131, %p132
    %p134 = scmp.ne.s32.totalorder %s126, %s128
    %p135 = scmp.eq.s32.totalorder %s29, 1
    %p136 = por %p134, %p135
    %p137 = scmp.ne.s32.totalorder %s128, %s129
    %p138 = scmp.eq.s32.totalorder %s29, 0
    %p139 = por %p137, %p138
    %p140 = scmp.ne.s32.totalorder %s128, %s129
    %p141 = scmp.eq.s32.totalorder %s30, 1
    %p142 = por %p140, %p141
    %p144 = scmp.ne.s32.totalorder %s129, %s143
    %p145 = scmp.eq.s32.totalorder %s30, 0
    %p146 = por %p144, %p145
    %s148 = sadd.s32 %s147, 1
    %p151 = scmp.eq.s32.totalorder %s24, 1
    %p152 = scmp.ne.s32.totalorder %s147, %s149
    %p153 = scmp.eq.s32.totalorder %s24, 0
    %p154 = por %p152, %p153
    %p155 = scmp.ne.s32.totalorder %s147, %s149
    %p156 = scmp.eq.s32.totalorder %s29, 1
    %p157 = por %p155, %p156
    %p158 = scmp.ne.s32.totalorder %s149, %s150
    %p159 = scmp.eq.s32.totalorder %s29, 0
    %p160 = por %p158, %p159
    %p161 = scmp.ne.s32.totalorder %s149, %s150
    %p162 = scmp.eq.s32.totalorder %s30, 1
    %p163 = por %p161, %p162
    %p165 = scmp.ne.s32.totalorder %s150, %s164
    %p166 = scmp.eq.s32.totalorder %s30, 0
    %p167 = por %p165, %p166
    %s169 = sadd.s32 %s168, 1
    %p172 = scmp.eq.s32.totalorder %s24, 1
    %p173 = scmp.ne.s32.totalorder %s168, %s170
    %p174 = scmp.eq.s32.totalorder %s24, 0
    %p175 = por %p173, %p174
    %p176 = scmp.ne.s32.totalorder %s168, %s170
    %p177 = scmp.eq.s32.totalorder %s29, 1
    %p178 = por %p176, %p177
    %p179 = scmp.ne.s32.totalorder %s170, %s171
    %p180 = scmp.eq.s32.totalorder %s29, 0
    %p181 = por %p179, %p180
    %p182 = scmp.ne.s32.totalorder %s170, %s171
    %p183 = scmp.eq.s32.totalorder %s30, 1
    %p184 = por %p182, %p183
    %p186 = scmp.ne.s32.totalorder %s171, %s185
    %p187 = scmp.eq.s32.totalorder %s30, 0
    %p188 = por %p186, %p187
    %s190 = sadd.s32 %s189, 1
    %p193 = scmp.eq.s32.totalorder %s24, 1
    %p194 = scmp.ne.s32.totalorder %s189, %s191
    %p195 = scmp.eq.s32.totalorder %s24, 0
    %p196 = por %p194, %p195
    %p197 = scmp.ne.s32.totalorder %s189, %s191
    %p198 = scmp.eq.s32.totalorder %s29, 1
    %p199 = por %p197, %p198
    %p200 = scmp.ne.s32.totalorder %s191, %s192
    %p201 = scmp.eq.s32.totalorder %s29, 0
    %p202 = por %p200, %p201
    %p203 = scmp.ne.s32.totalorder %s191, %s192
    %p204 = scmp.eq.s32.totalorder %s30, 1
    %p205 = por %p203, %p204
    %p207 = scmp.ne.s32.totalorder %s192, %s206
    %p208 = scmp.eq.s32.totalorder %s30, 0
    %p209 = por %p207, %p208
    %s211 = sadd.s32 %s210, 1
    %p214 = scmp.eq.s32.totalorder %s24, 1
    %p215 = scmp.ne.s32.totalorder %s210, %s212
    %p216 = scmp.eq.s32.totalorder %s24, 0
    %p217 = por %p215, %p216
    %p218 = scmp.ne.s32.totalorder %s210, %s212
    %p219 = scmp.eq.s32.totalorder %s29, 1
    %p220 = por %p218, %p219
    %p221 = scmp.ne.s32.totalorder %s212, %s213
    %p222 = scmp.eq.s32.totalorder %s29, 0
    %p223 = por %p221, %p222
    %p224 = scmp.ne.s32.totalorder %s212, %s213
    %p225 = scmp.eq.s32.totalorder %s30, 1
    %p226 = por %p224, %p225
    %p228 = scmp.ne.s32.totalorder %s213, %s227
    %p229 = scmp.eq.s32.totalorder %s30, 0
    %p230 = por %p228, %p229
    %s232 = sadd.s32 %s231, 1
    %p235 = scmp.eq.s32.totalorder %s24, 1
    %p236 = scmp.ne.s32.totalorder %s231, %s233
    %p237 = scmp.eq.s32.totalorder %s24, 0
    %p238 = por %p236, %p237
    %p239 = scmp.ne.s32.totalorder %s231, %s233
    %p240 = scmp.eq.s32.totalorder %s29, 1
    %p241 = por %p239, %p240
    %p242 = scmp.ne.s32.totalorder %s233, %s234
    %p243 = scmp.eq.s32.totalorder %s29, 0
    %p244 = por %p242, %p243
    %p245 = scmp.ne.s32.totalorder %s233, %s234
    %p246 = scmp.eq.s32.totalorder %s30, 1
    %p247 = por %p245, %p246
    %p249 = scmp.ne.s32.totalorder %s234, %s248
    %p250 = scmp.eq.s32.totalorder %s30, 0
    %p251 = por %p249, %p250
    %s253 = sadd.s32 %s252, 1
    %p256 = scmp.eq.s32.totalorder %s24, 1
    %p257 = scmp.ne.s32.totalorder %s252, %s254
    %p258 = scmp.eq.s32.totalorder %s24, 0
    %p259 = por %p257, %p258
    %p260 = scmp.ne.s32.totalorder %s252, %s254
    %p261 = scmp.eq.s32.totalorder %s29, 1
    %p262 = por %p260, %p261
    %p263 = scmp.ne.s32.totalorder %s254, %s255
    %p264 = scmp.eq.s32.totalorder %s29, 0
    %p265 = por %p263, %p264
    %p266 = scmp.ne.s32.totalorder %s254, %s255
    %p267 = scmp.eq.s32.totalorder %s30, 1
    %p268 = por %p266, %p267
    %p270 = scmp.ne.s32.totalorder %s255, %s269
    %p271 = scmp.eq.s32.totalorder %s30, 0
    %p272 = por %p270, %p271
    %s274 = sadd.s32 %s273, 1
    %p277 = scmp.eq.s32.totalorder %s24, 1
    %p278 = scmp.ne.s32.totalorder %s273, %s275
    %p279 = scmp.eq.s32.totalorder %s24, 0
    %p280 = por %p278, %p279
    %p281 = scmp.ne.s32.totalorder %s273, %s275
    %p282 = scmp.eq.s32.totalorder %s29, 1
    %p283 = por %p281, %p282
    %p284 = scmp.ne.s32.totalorder %s275, %s276
    %p285 = scmp.eq.s32.totalorder %s29, 0
    %p286 = por %p284, %p285
    %p287 = scmp.ne.s32.totalorder %s275, %s276
    %p288 = scmp.eq.s32.totalorder %s30, 1
    %p289 = por %p287, %p288
    %p291 = scmp.ne.s32.totalorder %s276, %s290
    %p292 = scmp.eq.s32.totalorder %s30, 0
    %p293 = por %p291, %p292
    %s295 = sadd.s32 %s294, 1
    %p298 = scmp.eq.s32.totalorder %s24, 1
    %p299 = scmp.ne.s32.totalorder %s294, %s296
    %p300 = scmp.eq.s32.totalorder %s24, 0
    %p301 = por %p299, %p300
    %p302 = scmp.ne.s32.totalorder %s294, %s296
    %p303 = scmp.eq.s32.totalorder %s29, 1
    %p304 = por %p302, %p303
    %p305 = scmp.ne.s32.totalorder %s296, %s297
    %p306 = scmp.eq.s32.totalorder %s29, 0
    %p307 = por %p305, %p306
    %p308 = scmp.ne.s32.totalorder %s296, %s297
    %p309 = scmp.eq.s32.totalorder %s30, 1
    %p310 = por %p308, %p309
    %p312 = scmp.ne.s32.totalorder %s297, %s311
    %p313 = scmp.eq.s32.totalorder %s30, 0
    %p314 = por %p312, %p313
    %s316 = sadd.s32 %s315, 1
    %p319 = scmp.eq.s32.totalorder %s24, 1
    %p320 = scmp.ne.s32.totalorder %s315, %s317
    %p321 = scmp.eq.s32.totalorder %s24, 0
    %p322 = por %p320, %p321
    %p323 = scmp.ne.s32.totalorder %s315, %s317
    %p324 = scmp.eq.s32.totalorder %s29, 1
    %p325 = por %p323, %p324
    %p326 = scmp.ne.s32.totalorder %s317, %s318
    %p327 = scmp.eq.s32.totalorder %s29, 0
    %p328 = por %p326, %p327
    %p329 = scmp.ne.s32.totalorder %s317, %s318
    %p330 = scmp.eq.s32.totalorder %s30, 1
    %p331 = por %p329, %p330
    %p333 = scmp.ne.s32.totalorder %s318, %s332
    %p334 = scmp.eq.s32.totalorder %s30, 0
    %p335 = por %p333, %p334
    %s337 = sadd.s32 %s336, 1
    %p340 = scmp.eq.s32.totalorder %s24, 1
    %p341 = scmp.ne.s32.totalorder %s336, %s338
    %p342 = scmp.eq.s32.totalorder %s24, 0
    %p343 = por %p341, %p342
    %p344 = scmp.ne.s32.totalorder %s336, %s338
    %p345 = scmp.eq.s32.totalorder %s29, 1
    %p346 = por %p344, %p345
    %p347 = scmp.ne.s32.totalorder %s338, %s339
    %p348 = scmp.eq.s32.totalorder %s29, 0
    %p349 = por %p347, %p348
    %p350 = scmp.ne.s32.totalorder %s338, %s339
    %p351 = scmp.eq.s32.totalorder %s30, 1
    %p352 = por %p350, %p351
    %p354 = scmp.ne.s32.totalorder %s339, %s353
    %p355 = scmp.eq.s32.totalorder %s30, 0
    %p356 = por %p354, %p355
    %s358 = sadd.s32 %s357, 1
    %p361 = scmp.eq.s32.totalorder %s24, 1
    %p362 = scmp.ne.s32.totalorder %s357, %s359
    %p363 = scmp.eq.s32.totalorder %s24, 0
    %p364 = por %p362, %p363
    %p365 = scmp.ne.s32.totalorder %s357, %s359
    %p366 = scmp.eq.s32.totalorder %s29, 1
    %p367 = por %p365, %p366
    %p368 = scmp.ne.s32.totalorder %s359, %s360
    %p369 = scmp.eq.s32.totalorder %s29, 0
    %p370 = por %p368, %p369
    %p371 = scmp.ne.s32.totalorder %s359, %s360
    %p372 = scmp.eq.s32.totalorder %s30, 1
    %p373 = por %p371, %p372
    %p375 = scmp.ne.s32.totalorder %s360, %s374
    %p376 = scmp.eq.s32.totalorder %s30, 0
    %p377 = por %p375, %p376
    %s379 = sadd.s32 %s378, 1
    %p382 = scmp.eq.s32.totalorder %s24, 1
    %p383 = scmp.ne.s32.totalorder %s378, %s380
    %p384 = scmp.eq.s32.totalorder %s24, 0
    %p385 = por %p383, %p384
    %p386 = scmp.ne.s32.totalorder %s378, %s380
    %p387 = scmp.eq.s32.totalorder %s29, 1
    %p388 = por %p386, %p387
    %p389 = scmp.ne.s32.totalorder %s380, %s381
    %p390 = scmp.eq.s32.totalorder %s29, 0
    %p391 = por %p389, %p390
    %p392 = scmp.ne.s32.totalorder %s380, %s381
    %p393 = scmp.eq.s32.totalorder %s30, 1
    %p394 = por %p392, %p393
    %p396 = scmp.ne.s32.totalorder %s381, %s395
    %p397 = scmp.eq.s32.totalorder %s30, 0
    %p398 = por %p396, %p397
    %s400 = sadd.s32 %s399, 1
    %p403 = scmp.eq.s32.totalorder %s24, 1
    %p404 = scmp.ne.s32.totalorder %s399, %s401
    %p405 = scmp.eq.s32.totalorder %s24, 0
    %p406 = por %p404, %p405
    %p407 = scmp.ne.s32.totalorder %s399, %s401
    %p408 = scmp.eq.s32.totalorder %s29, 1
    %p409 = por %p407, %p408
    %p410 = scmp.ne.s32.totalorder %s401, %s402
    %p411 = scmp.eq.s32.totalorder %s29, 0
    %p412 = por %p410, %p411
    %p413 = scmp.ne.s32.totalorder %s401, %s402
    %p414 = scmp.eq.s32.totalorder %s30, 1
    %p415 = por %p413, %p414
    %p417 = scmp.ne.s32.totalorder %s402, %s416
    %p418 = scmp.eq.s32.totalorder %s30, 0
    %p419 = por %p417, %p418
    %s420 = ssub.s32 %s24, %s31
    %p421 = scmp.eq.s32.totalorder %s420, 0
    %s423 = sadd.s32 %s422, 1
    %s424 = scalar_select %p421, %s422, %s423
    %p427 = pneg %p421
    %p428 = scmp.eq.s32.totalorder %s24, 1
    %p429 = por %p427, %p428
    %p430 = scmp.ne.s32.totalorder %s422, %s425
    %p431 = scmp.eq.s32.totalorder %s24, 0
    %p432 = por %p430, %p431
    %p433 = scmp.ne.s32.totalorder %s422, %s425
    %p434 = scmp.eq.s32.totalorder %s29, 1
    %p435 = por %p433, %p434
    %p436 = scmp.ne.s32.totalorder %s425, %s426
    %p437 = scmp.eq.s32.totalorder %s29, 0
    %p438 = por %p436, %p437
    %p439 = scmp.ne.s32.totalorder %s425, %s426
    %p440 = scmp.eq.s32.totalorder %s30, 1
    %p441 = por %p439, %p440
    %p443 = scmp.ne.s32.totalorder %s426, %s442
    %p444 = scmp.eq.s32.totalorder %s30, 0
    %p445 = por %p443, %p444
    %p446 = scmp.le.s32.totalorder 1, %s24
    %p447 = scmp.lt.s32.totalorder %s24, 3
    %p448 = pnand %p446, %p447
    %p449 = pneg %p448
    // Predicated region
    $region9: #{kobert_only_forward.1} parent=5 // pred_check
      _
    $region10: #{kobert_only_forward.1} parent=5 // pred_check_branch
      %451 = sbr.rel (%p448) target = $region12
    $region11: #{kobert_only_forward.1} parent=5 // pred_region
      %s452 = ssub.s32 %s24, 1
      // Predicated region
      $region13: #{kobert_only_forward.1} parent=11 // pred_check
        %p453 = pneg %p97
      $region14: #{kobert_only_forward.1} parent=11 // pred_check_branch
        %455 = sbr.rel (%p453) target = $region16
      $region15: #{kobert_only_forward.1} parent=11 // pred_region
        _
      $region16: #{kobert_only_forward.1} parent=11 // pred_fallthru
        _
      // Predicated region
      $region17: #{kobert_only_forward.1} parent=11 // pred_check
        %p456 = pneg %p118
      $region18: #{kobert_only_forward.1} parent=11 // pred_check_branch
        %458 = sbr.rel (%p456) target = $region20
      $region19: #{kobert_only_forward.1} parent=11 // pred_region
        _
      $region20: #{kobert_only_forward.1} parent=11 // pred_fallthru
        _
      // Predicated region
      $region21: #{kobert_only_forward.1} parent=11 // pred_check
        %p459 = pneg %p139
      $region22: #{kobert_only_forward.1} parent=11 // pred_check_branch
        %461 = sbr.rel (%p459) target = $region24
      $region23: #{kobert_only_forward.1} parent=11 // pred_region
        _
      $region24: #{kobert_only_forward.1} parent=11 // pred_fallthru
        _
      // Predicated region
      $region25: #{kobert_only_forward.1} parent=11 // pred_check
        %p462 = pneg %p160
      $region26: #{kobert_only_forward.1} parent=11 // pred_check_branch
        %464 = sbr.rel (%p462) target = $region28
      $region27: #{kobert_only_forward.1} parent=11 // pred_region
        _
      $region28: #{kobert_only_forward.1} parent=11 // pred_fallthru
        _
      // Predicated region
      $region29: #{kobert_only_forward.1} parent=11 // pred_check
        %p465 = pneg %p181
      $region30: #{kobert_only_forward.1} parent=11 // pred_check_branch
        %467 = sbr.rel (%p465) target = $region32
      $region31: #{kobert_only_forward.1} parent=11 // pred_region
        _
      $region32: #{kobert_only_forward.1} parent=11 // pred_fallthru
        _
      // Predicated region
      $region33: #{kobert_only_forward.1} parent=11 // pred_check
        %p468 = pneg %p202
      $region34: #{kobert_only_forward.1} parent=11 // pred_check_branch
        %470 = sbr.rel (%p468) target = $region36
      $region35: #{kobert_only_forward.1} parent=11 // pred_region
        _
      $region36: #{kobert_only_forward.1} parent=11 // pred_fallthru
        _
      // Predicated region
      $region37: #{kobert_only_forward.1} parent=11 // pred_check
        %p471 = pneg %p223
      $region38: #{kobert_only_forward.1} parent=11 // pred_check_branch
        %473 = sbr.rel (%p471) target = $region40
      $region39: #{kobert_only_forward.1} parent=11 // pred_region
        _
      $region40: #{kobert_only_forward.1} parent=11 // pred_fallthru
        _
      // Predicated region
      $region41: #{kobert_only_forward.1} parent=11 // pred_check
        %p474 = pneg %p244
      $region42: #{kobert_only_forward.1} parent=11 // pred_check_branch
        %476 = sbr.rel (%p474) target = $region44
      $region43: #{kobert_only_forward.1} parent=11 // pred_region
        _
      $region44: #{kobert_only_forward.1} parent=11 // pred_fallthru
        _
      // Predicated region
      $region45: #{kobert_only_forward.1} parent=11 // pred_check
        %p477 = pneg %p265
      $region46: #{kobert_only_forward.1} parent=11 // pred_check_branch
        %479 = sbr.rel (%p477) target = $region48
      $region47: #{kobert_only_forward.1} parent=11 // pred_region
        _
      $region48: #{kobert_only_forward.1} parent=11 // pred_fallthru
        _
      // Predicated region
      $region49: #{kobert_only_forward.1} parent=11 // pred_check
        %p480 = pneg %p286
      $region50: #{kobert_only_forward.1} parent=11 // pred_check_branch
        %482 = sbr.rel (%p480) target = $region52
      $region51: #{kobert_only_forward.1} parent=11 // pred_region
        _
      $region52: #{kobert_only_forward.1} parent=11 // pred_fallthru
        _
      // Predicated region
      $region53: #{kobert_only_forward.1} parent=11 // pred_check
        %p483 = pneg %p307
      $region54: #{kobert_only_forward.1} parent=11 // pred_check_branch
        %485 = sbr.rel (%p483) target = $region56
      $region55: #{kobert_only_forward.1} parent=11 // pred_region
        _
      $region56: #{kobert_only_forward.1} parent=11 // pred_fallthru
        _
      // Predicated region
      $region57: #{kobert_only_forward.1} parent=11 // pred_check
        %p486 = pneg %p328
      $region58: #{kobert_only_forward.1} parent=11 // pred_check_branch
        %488 = sbr.rel (%p486) target = $region60
      $region59: #{kobert_only_forward.1} parent=11 // pred_region
        _
      $region60: #{kobert_only_forward.1} parent=11 // pred_fallthru
        _
      // Predicated region
      $region61: #{kobert_only_forward.1} parent=11 // pred_check
        %p489 = pneg %p349
      $region62: #{kobert_only_forward.1} parent=11 // pred_check_branch
        %491 = sbr.rel (%p489) target = $region64
      $region63: #{kobert_only_forward.1} parent=11 // pred_region
        _
      $region64: #{kobert_only_forward.1} parent=11 // pred_fallthru
        _
      // Predicated region
      $region65: #{kobert_only_forward.1} parent=11 // pred_check
        %p492 = pneg %p370
      $region66: #{kobert_only_forward.1} parent=11 // pred_check_branch
        %494 = sbr.rel (%p492) target = $region68
      $region67: #{kobert_only_forward.1} parent=11 // pred_region
        _
      $region68: #{kobert_only_forward.1} parent=11 // pred_fallthru
        _
      // Predicated region
      $region69: #{kobert_only_forward.1} parent=11 // pred_check
        %p495 = pneg %p391
      $region70: #{kobert_only_forward.1} parent=11 // pred_check_branch
        %497 = sbr.rel (%p495) target = $region72
      $region71: #{kobert_only_forward.1} parent=11 // pred_region
        _
      $region72: #{kobert_only_forward.1} parent=11 // pred_fallthru
        _
      // Predicated region
      $region73: #{kobert_only_forward.1} parent=11 // pred_check
        %p498 = pneg %p412
      $region74: #{kobert_only_forward.1} parent=11 // pred_check_branch
        %500 = sbr.rel (%p498) target = $region76
      $region75: #{kobert_only_forward.1} parent=11 // pred_region
        _
      $region76: #{kobert_only_forward.1} parent=11 // pred_fallthru
        _
    $region12: #{kobert_only_forward.1} parent=5 // pred_fallthru
      _
    %p501 = scmp.lt.s32.totalorder %s24, 2
    // Predicated region
    $region77: #{kobert_only_forward.1} parent=5 // pred_check
      %p502 = pneg %p501
    $region78: #{kobert_only_forward.1} parent=5 // pred_check_branch
      %504 = sbr.rel (%p502) target = $region80
    $region79: #{kobert_only_forward.1} parent=5 // pred_region
      // Predicated region
      $region81: #{kobert_only_forward.1} parent=79 // pred_check
        %p505 = pneg %p44
      $region82: #{kobert_only_forward.1} parent=79 // pred_check_branch
        %507 = sbr.rel (%p505) target = $region84
      $region83: #{kobert_only_forward.1} parent=79 // pred_region
        %p508 = scmp.lt.s32.totalorder %s24, 1
        %s509 = scalar_select %p508, %s24, 1
        %s510 = smul.addr %s509, 8
        %s511 = scalar_lea.vmem %s0, %s510
      $region84: #{kobert_only_forward.1} parent=79 // pred_fallthru
        _
      // Predicated region
      $region85: #{kobert_only_forward.1} parent=79 // pred_check
        %p512 = pneg %p70
      $region86: #{kobert_only_forward.1} parent=79 // pred_check_branch
        %514 = sbr.rel (%p512) target = $region88
      $region87: #{kobert_only_forward.1} parent=79 // pred_region
        %p515 = scmp.lt.s32.totalorder %s24, 1
        %s516 = scalar_select %p515, %s24, 1
        %s517 = scalar_lea.vmem %s1, %s516
      $region88: #{kobert_only_forward.1} parent=79 // pred_fallthru
        _
    $region80: #{kobert_only_forward.1} parent=5 // pred_fallthru
      _
    %p518 = scmp.le.s32.totalorder 1, %s24
    %p519 = scmp.lt.s32.totalorder %s24, 3
    %p520 = pnand %p518, %p519
    %p521 = pneg %p520
    // Predicated region
    $region89: #{kobert_only_forward.1} parent=5 // pred_check
      _
    $region90: #{kobert_only_forward.1} parent=5 // pred_check_branch
      %523 = sbr.rel (%p520) target = $region92
    $region91: #{kobert_only_forward.1} parent=5 // pred_region
      %s524 = ssub.s32 %s24, 1
      %p525 = scmp.lt.s32.totalorder %s29, 1
      %s526 = scalar_select %p525, %s29, 1
      %s527 = smul.addr %s526, 8
      %s528 = scalar_lea.vmem %s0, %s527
      %p529 = pneg %p50
      %p530 = pneg %p47
      %p531 = scmp.lt.s32.totalorder %s29, 1
      %s532 = scalar_select %p531, %s29, 1
      %s533 = scalar_lea.vmem %s1, %s532
      %p534 = pneg %p76
      %p535 = pneg %p73
      %p536 = pneg %p97
      %p537 = pneg %p94
      %p538 = pneg %p118
      %p539 = pneg %p115
      %p540 = pneg %p139
      %p541 = pneg %p136
      %p542 = pneg %p160
      %p543 = pneg %p157
      %p544 = pneg %p181
      %p545 = pneg %p178
      %p546 = pneg %p202
      %p547 = pneg %p199
      %p548 = pneg %p223
      %p549 = pneg %p220
      %p550 = pneg %p244
      %p551 = pneg %p241
      %p552 = pneg %p265
      %p553 = pneg %p262
      %p554 = pneg %p286
      %p555 = pneg %p283
      %p556 = pneg %p307
      %p557 = pneg %p304
      %p558 = pneg %p328
      %p559 = pneg %p325
      %p560 = pneg %p349
      %p561 = pneg %p346
      %p562 = pneg %p370
      %p563 = pneg %p367
      %p564 = pneg %p391
      %p565 = pneg %p388
      %p566 = pneg %p412
      %p567 = pneg %p409
      %p568 = pneg %p438
      %p569 = pneg %p435
      %p570 = scmp.lt.s32.totalorder %s29, 1
      %s571 = scalar_select %p570, %s29, 1
      %s572 = smul.addr %s571, 8
      %s573 = scalar_lea.vmem %s18, %s572
      %p574 = scmp.lt.s32.totalorder %s29, 1
      %s575 = scalar_select %p574, %s29, 1
      %s576 = smul.addr %s575, 8
      %s577 = scalar_lea.vmem %s0, %s576
      %p578 = scmp.lt.s32.totalorder %s29, 1
      %s579 = scalar_select %p578, %s29, 1
      %s580 = scalar_lea.vmem %s1, %s579
      %p581 = scmp.lt.s32.totalorder %s29, 1
      %s582 = scalar_select %p581, %s29, 1
      %s583 = smul.addr %s582, 8
      %s584 = scalar_lea.vmem %s18, %s583
      %v585 = vld [vmem:[%s580] sm:$0x1]
      %v586 = vld [vmem:[%s577] sm:$0xff]
      %v587 = vld [vmem:[%s2] sm:$0x1]
      %v588 = vld [vmem:[%s3] sm:$0x1]
      %vm589 = vcmask 261120
      %v590 = vsel %vm589, %v586, 0.0
      %591 = vadd.xlane.f32.xlu0 %v590
      %v592 = vpop.xlane.xlu0 %591
      %v593 = vrcp.pop 32.0
      %v594 = vmul.f32 %v592, %v593
      %v595 = vsub.f32 %v586, %v594
      %v596 = vmul.f32 %v595, %v595
      %v597 = vsel %vm589, %v596, 0.0
      %598 = vadd.xlane.f32.xlu0 %v597
      %v599 = vpop.xlane.xlu0 %598
      %v600 = vmul.f32 %v599, %v593
      %v601 = vadd.f32 %v600, 1e-12
      %v602 = vrsqrt.pop %v601
      %v603 = vmul.f32 %v595, %v602
      %v605 = vlaneseq
      %v606 = vshrl.u32 %v605, 7
      %v607 = vsub.s32 0, %v606
      %v608 = vrot.slane %v587, %v607
      %v610 = vmul.f32 %v603, %v608
      %v612 = vlaneseq
      %v613 = vshrl.u32 %v612, 7
      %v614 = vsub.s32 0, %v613
      %v615 = vrot.slane %v588, %v614
      %v617 = vadd.f32 %v610, %v615
      %v618 = vld [vmem:[%s4] sm:$0xff]
      %v619 = vld [vmem:[%s4 + $0x8] sm:$0xff]
      %v620 = vld [vmem:[%s4 + $0x10] sm:$0xff]
      %v621 = vld [vmem:[%s4 + $0x18] sm:$0xff]
      %v622 = vld [vmem:[%s5] sm:$0x1]
      %v624 = vlaneseq
      %v625 = vshrl.u32 %v624, 7
      %v626 = vsub.s32 0, %v625
      %v627 = vrot.slane %v622, %v626
      %v630 = vsel %vm589, %v617, 0
      %632 = vmatprep.subr.mxu0 0.0
      %633 = vmatpush1.msra.mxu0 %v618
      %634 = vmatprep.subr.mxu0 0.0
      %635 = vmatpush1.msra.mxu0 %v619
      %636 = vmatprep.subr.mxu0 0.0
      %637 = vmatpush1.msra.mxu0 %v620
      %638 = vmatprep.subr.mxu0 0.0
      %639 = vmatpush1.msra.mxu0 %v621
      %640 = vmatprep.subr.mxu0 0.0
      %641 = vmatpush1.msra.mxu0 0.0
      %642 = vmatprep.subr.mxu0 0.0
      %643 = vmatpush1.msra.mxu0 0.0
      %644 = vmatprep.subr.mxu0 0.0
      %645 = vmatpush1.msra.mxu0 0.0
      %646 = vmatprep.subr.mxu0 0.0
      %647 = vmatpush1.msra.mxu0 0.0
      %648 = vmatprep.subr.mxu0 0.0
      %649 = vmatpush1.msra.mxu0 0.0
      %650 = vmatprep.subr.mxu0 0.0
      %651 = vmatpush1.msra.mxu0 0.0
      %652 = vmatprep.subr.mxu0 0.0
      %653 = vmatpush1.msra.mxu0 0.0
      %654 = vmatprep.subr.mxu0 0.0
      %655 = vmatpush1.msra.mxu0 0.0
      %656 = vmatprep.subr.mxu0 0.0
      %657 = vmatpush1.msra.mxu0 0.0
      %658 = vmatprep.subr.mxu0 0.0
      %659 = vmatpush1.msra.mxu0 0.0
      %660 = vmatprep.subr.mxu0 0.0
      %661 = vmatpush1.msra.mxu0 0.0
      %662 = vmatprep.subr.mxu0 0.0
      %663 = vmatpush1.msra.mxu0 0.0
      %664 = vmatprep.subr.mxu0 0.0
      %665 = vmatpush1.msra.mxu0 0.0
      %666 = vmatprep.subr.mxu0 0.0
      %667 = vmatpush1.msra.mxu0 0.0
      %668 = vmatprep.subr.mxu0 0.0
      %669 = vmatpush1.msra.mxu0 0.0
      %670 = vmatprep.subr.mxu0 0.0
      %671 = vmatpush1.msra.mxu0 0.0
      %672 = vmatprep.subr.mxu0 0.0
      %673 = vmatpush1.msra.mxu0 0.0
      %674 = vmatprep.subr.mxu0 0.0
      %675 = vmatpush1.msra.mxu0 0.0
      %676 = vmatprep.subr.mxu0 0.0
      %677 = vmatpush1.msra.mxu0 0.0
      %678 = vmatprep.subr.mxu0 0.0
      %679 = vmatpush1.msra.mxu0 0.0
      %680 = vmatprep.subr.mxu0 0.0
      %681 = vmatpush1.msra.mxu0 0.0
      %682 = vmatprep.subr.mxu0 0.0
      %683 = vmatpush1.msra.mxu0 0.0
      %684 = vmatprep.subr.mxu0 0.0
      %685 = vmatpush1.msra.mxu0 0.0
      %686 = vmatprep.subr.mxu0 0.0
      %687 = vmatpush1.msra.mxu0 0.0
      %688 = vmatprep.subr.mxu0 0.0
      %689 = vmatpush1.msra.mxu0 0.0
      %690 = vmatprep.subr.mxu0 0.0
      %691 = vmatpush1.msra.mxu0 0.0
      %692 = vmatprep.subr.mxu0 0.0
      %693 = vmatpush1.msra.mxu0 0.0
      %694 = vmatprep.subr.mxu0 0.0
      %695 = vmatpush1.msra.mxu0 0.0
      %696 = vmatprep.mubr.f32.mxu0 0.0
      %697 = vmatmul.mubr.f32.gmra.mrb[0].mxu0 %v630
      %v698 = vpop.f32.mrb[0].mxu0
      %v699 = vadd.f32 %v627, %v698
      %v700 = vpop.f32.mrb[0].mxu0
      %701 = vdwg.mxu0
      %703 = vrot.lane.b32.xlu0 %v699, 120
      %v704 = vpop.permute.xlu0 %703
      %vm705 = vcmask 64512
      %v706 = vsel %vm705, %v699, 0
      %v708 = vsel %vm705, %v704, 0
      %710 = vmatprep.subr.mxu0 0.0
      %711 = vmatpush1.xpose.msra.mxu0 %v708
      %712 = vmatprep.subr.mxu0 0.0
      %713 = vmatpush1.xpose.msra.mxu0 0.0
      %714 = vmatprep.subr.mxu0 0.0
      %715 = vmatpush1.xpose.msra.mxu0 0.0
      %716 = vmatprep.subr.mxu0 0.0
      %717 = vmatpush1.xpose.msra.mxu0 0.0
      %718 = vmatprep.subr.mxu0 0.0
      %719 = vmatpush1.xpose.msra.mxu0 0.0
      %720 = vmatprep.subr.mxu0 0.0
      %721 = vmatpush1.xpose.msra.mxu0 0.0
      %722 = vmatprep.subr.mxu0 0.0
      %723 = vmatpush1.xpose.msra.mxu0 0.0
      %724 = vmatprep.subr.mxu0 0.0
      %725 = vmatpush1.xpose.msra.mxu0 0.0
      %726 = vmatprep.subr.mxu0 0.0
      %727 = vmatpush1.xpose.msra.mxu0 0.0
      %728 = vmatprep.subr.mxu0 0.0
      %729 = vmatpush1.xpose.msra.mxu0 0.0
      %730 = vmatprep.subr.mxu0 0.0
      %731 = vmatpush1.xpose.msra.mxu0 0.0
      %732 = vmatprep.subr.mxu0 0.0
      %733 = vmatpush1.xpose.msra.mxu0 0.0
      %734 = vmatprep.subr.mxu0 0.0
      %735 = vmatpush1.xpose.msra.mxu0 0.0
      %736 = vmatprep.subr.mxu0 0.0
      %737 = vmatpush1.xpose.msra.mxu0 0.0
      %738 = vmatprep.subr.mxu0 0.0
      %739 = vmatpush1.xpose.msra.mxu0 0.0
      %740 = vmatprep.subr.mxu0 0.0
      %741 = vmatpush1.xpose.msra.mxu0 0.0
      %742 = vmatprep.subr.mxu0 0.0
      %743 = vmatpush1.xpose.msra.mxu0 0.0
      %744 = vmatprep.subr.mxu0 0.0
      %745 = vmatpush1.xpose.msra.mxu0 0.0
      %746 = vmatprep.subr.mxu0 0.0
      %747 = vmatpush1.xpose.msra.mxu0 0.0
      %748 = vmatprep.subr.mxu0 0.0
      %749 = vmatpush1.xpose.msra.mxu0 0.0
      %750 = vmatprep.subr.mxu0 0.0
      %751 = vmatpush1.xpose.msra.mxu0 0.0
      %752 = vmatprep.subr.mxu0 0.0
      %753 = vmatpush1.xpose.msra.mxu0 0.0
      %754 = vmatprep.subr.mxu0 0.0
      %755 = vmatpush1.xpose.msra.mxu0 0.0
      %756 = vmatprep.subr.mxu0 0.0
      %757 = vmatpush1.xpose.msra.mxu0 0.0
      %758 = vmatprep.subr.mxu0 0.0
      %759 = vmatpush1.xpose.msra.mxu0 0.0
      %760 = vmatprep.subr.mxu0 0.0
      %761 = vmatpush1.xpose.msra.mxu0 0.0
      %762 = vmatprep.subr.mxu0 0.0
      %763 = vmatpush1.xpose.msra.mxu0 0.0
      %764 = vmatprep.subr.mxu0 0.0
      %765 = vmatpush1.xpose.msra.mxu0 0.0
      %766 = vmatprep.subr.mxu0 0.0
      %767 = vmatpush1.xpose.msra.mxu0 0.0
      %768 = vmatprep.subr.mxu0 0.0
      %769 = vmatpush1.xpose.msra.mxu0 0.0
      %770 = vmatprep.subr.mxu0 0.0
      %771 = vmatpush1.xpose.msra.mxu0 0.0
      %772 = vmatprep.subr.mxu0 0.0
      %773 = vmatpush1.xpose.msra.mxu0 0.0
      %774 = vmatprep.mubr.f32.mxu0 0.0
      %775 = vmatmul.mubr.f32.gmra.mrb[0].mxu0 %v706
      %v776 = vpop.f32.mrb[0].mxu0
      %v777 = vadd.f32 0.0, %v776
      %v778 = vpop.f32.mrb[0].mxu0
      %779 = vdwg.mxu0
      %v780 = vmul.f32 %v777, 0.35355338
      %v782 = vlaneseq
      %v783 = vshrl.u32 %v782, 7
      %v784 = vsub.s32 0, %v783
      %v785 = vrot.slane %v585, %v784
      %v787 = vadd.f32 %v780, %v785
      %v788 = vsel %vm705, %v787, -inf
      %789 = vmax.xlane.f32.xlu0 %v788
      %v790 = vpop.xlane.xlu0 %789
      %v791 = vsub.f32 %v787, %v790
      %v792 = vmul.f32 %v791, 1.442695
      %v793 = vpow.pop %v792
      %v794 = vsel %vm705, %v793, 0.0
      %795 = vadd.xlane.f32.xlu0 %v794
      %v796 = vpop.xlane.xlu0 %795
      %v797 = vrcp.pop %v796
      %v798 = vmul.f32 %v793, %v797
      %799 = vrot.lane.b32.xlu0 %v699, 112
      %v800 = vpop.permute.xlu0 %799
      %v803 = vsel %vm705, %v798, 0
      %805 = vmatprep.subr.mxu0 0.0
      %806 = vmatpush1.msra.mxu0 %v800
      %807 = vmatprep.subr.mxu0 0.0
      %808 = vmatpush1.msra.mxu0 0.0
      %809 = vmatprep.subr.mxu0 0.0
      %810 = vmatpush1.msra.mxu0 0.0
      %811 = vmatprep.subr.mxu0 0.0
      %812 = vmatpush1.msra.mxu0 0.0
      %813 = vmatprep.subr.mxu0 0.0
      %814 = vmatpush1.msra.mxu0 0.0
      %815 = vmatprep.subr.mxu0 0.0
      %816 = vmatpush1.msra.mxu0 0.0
      %817 = vmatprep.subr.mxu0 0.0
      %818 = vmatpush1.msra.mxu0 0.0
      %819 = vmatprep.subr.mxu0 0.0
      %820 = vmatpush1.msra.mxu0 0.0
      %821 = vmatprep.subr.mxu0 0.0
      %822 = vmatpush1.msra.mxu0 0.0
      %823 = vmatprep.subr.mxu0 0.0
      %824 = vmatpush1.msra.mxu0 0.0
      %825 = vmatprep.subr.mxu0 0.0
      %826 = vmatpush1.msra.mxu0 0.0
      %827 = vmatprep.subr.mxu0 0.0
      %828 = vmatpush1.msra.mxu0 0.0
      %829 = vmatprep.subr.mxu0 0.0
      %830 = vmatpush1.msra.mxu0 0.0
      %831 = vmatprep.subr.mxu0 0.0
      %832 = vmatpush1.msra.mxu0 0.0
      %833 = vmatprep.subr.mxu0 0.0
      %834 = vmatpush1.msra.mxu0 0.0
      %835 = vmatprep.subr.mxu0 0.0
      %836 = vmatpush1.msra.mxu0 0.0
      %837 = vmatprep.subr.mxu0 0.0
      %838 = vmatpush1.msra.mxu0 0.0
      %839 = vmatprep.subr.mxu0 0.0
      %840 = vmatpush1.msra.mxu0 0.0
      %841 = vmatprep.subr.mxu0 0.0
      %842 = vmatpush1.msra.mxu0 0.0
      %843 = vmatprep.subr.mxu0 0.0
      %844 = vmatpush1.msra.mxu0 0.0
      %845 = vmatprep.subr.mxu0 0.0
      %846 = vmatpush1.msra.mxu0 0.0
      %847 = vmatprep.subr.mxu0 0.0
      %848 = vmatpush1.msra.mxu0 0.0
      %849 = vmatprep.subr.mxu0 0.0
      %850 = vmatpush1.msra.mxu0 0.0
      %851 = vmatprep.subr.mxu0 0.0
      %852 = vmatpush1.msra.mxu0 0.0
      %853 = vmatprep.subr.mxu0 0.0
      %854 = vmatpush1.msra.mxu0 0.0
      %855 = vmatprep.subr.mxu0 0.0
      %856 = vmatpush1.msra.mxu0 0.0
      %857 = vmatprep.subr.mxu0 0.0
      %858 = vmatpush1.msra.mxu0 0.0
      %859 = vmatprep.subr.mxu0 0.0
      %860 = vmatpush1.msra.mxu0 0.0
      %861 = vmatprep.subr.mxu0 0.0
      %862 = vmatpush1.msra.mxu0 0.0
      %863 = vmatprep.subr.mxu0 0.0
      %864 = vmatpush1.msra.mxu0 0.0
      %865 = vmatprep.subr.mxu0 0.0
      %866 = vmatpush1.msra.mxu0 0.0
      %867 = vmatprep.subr.mxu0 0.0
      %868 = vmatpush1.msra.mxu0 0.0
      %869 = vmatprep.mubr.f32.mxu0 0.0
      %870 = vmatmul.mubr.f32.gmra.mrb[0].mxu0 %v803
      %v871 = vpop.f32.mrb[0].mxu0
      %v872 = vadd.f32 0.0, %v871
      %v873 = vpop.f32.mrb[0].mxu0
      %874 = vdwg.mxu0
      %875 = vrot.lane.b32.xlu0 %v699, 104
      %v876 = vpop.permute.xlu0 %875
      %877 = vrot.lane.b32.xlu0 %v699, 96
      %v878 = vpop.permute.xlu0 %877
      %v879 = vsel %vm705, %v876, 0
      %v881 = vsel %vm705, %v878, 0
      %883 = vmatprep.subr.mxu0 0.0
      %884 = vmatpush1.xpose.msra.mxu0 %v881
      %885 = vmatprep.subr.mxu0 0.0
      %886 = vmatpush1.xpose.msra.mxu0 0.0
      %887 = vmatprep.subr.mxu0 0.0
      %888 = vmatpush1.xpose.msra.mxu0 0.0
      %889 = vmatprep.subr.mxu0 0.0
      %890 = vmatpush1.xpose.msra.mxu0 0.0
      %891 = vmatprep.subr.mxu0 0.0
      %892 = vmatpush1.xpose.msra.mxu0 0.0
      %893 = vmatprep.subr.mxu0 0.0
      %894 = vmatpush1.xpose.msra.mxu0 0.0
      %895 = vmatprep.subr.mxu0 0.0
      %896 = vmatpush1.xpose.msra.mxu0 0.0
      %897 = vmatprep.subr.mxu0 0.0
      %898 = vmatpush1.xpose.msra.mxu0 0.0
      %899 = vmatprep.subr.mxu0 0.0
      %900 = vmatpush1.xpose.msra.mxu0 0.0
      %901 = vmatprep.subr.mxu0 0.0
      %902 = vmatpush1.xpose.msra.mxu0 0.0
      %903 = vmatprep.subr.mxu0 0.0
      %904 = vmatpush1.xpose.msra.mxu0 0.0
      %905 = vmatprep.subr.mxu0 0.0
      %906 = vmatpush1.xpose.msra.mxu0 0.0
      %907 = vmatprep.subr.mxu0 0.0
      %908 = vmatpush1.xpose.msra.mxu0 0.0
      %909 = vmatprep.subr.mxu0 0.0
      %910 = vmatpush1.xpose.msra.mxu0 0.0
      %911 = vmatprep.subr.mxu0 0.0
      %912 = vmatpush1.xpose.msra.mxu0 0.0
      %913 = vmatprep.subr.mxu0 0.0
      %914 = vmatpush1.xpose.msra.mxu0 0.0
      %915 = vmatprep.subr.mxu0 0.0
      %916 = vmatpush1.xpose.msra.mxu0 0.0
      %917 = vmatprep.subr.mxu0 0.0
      %918 = vmatpush1.xpose.msra.mxu0 0.0
      %919 = vmatprep.subr.mxu0 0.0
      %920 = vmatpush1.xpose.msra.mxu0 0.0
      %921 = vmatprep.subr.mxu0 0.0
      %922 = vmatpush1.xpose.msra.mxu0 0.0
      %923 = vmatprep.subr.mxu0 0.0
      %924 = vmatpush1.xpose.msra.mxu0 0.0
      %925 = vmatprep.subr.mxu0 0.0
      %926 = vmatpush1.xpose.msra.mxu0 0.0
      %927 = vmatprep.subr.mxu0 0.0
      %928 = vmatpush1.xpose.msra.mxu0 0.0
      %929 = vmatprep.subr.mxu0 0.0
      %930 = vmatpush1.xpose.msra.mxu0 0.0
      %931 = vmatprep.subr.mxu0 0.0
      %932 = vmatpush1.xpose.msra.mxu0 0.0
      %933 = vmatprep.subr.mxu0 0.0
      %934 = vmatpush1.xpose.msra.mxu0 0.0
      %935 = vmatprep.subr.mxu0 0.0
      %936 = vmatpush1.xpose.msra.mxu0 0.0
      %937 = vmatprep.subr.mxu0 0.0
      %938 = vmatpush1.xpose.msra.mxu0 0.0
      %939 = vmatprep.subr.mxu0 0.0
      %940 = vmatpush1.xpose.msra.mxu0 0.0
      %941 = vmatprep.subr.mxu0 0.0
      %942 = vmatpush1.xpose.msra.mxu0 0.0
      %943 = vmatprep.subr.mxu0 0.0
      %944 = vmatpush1.xpose.msra.mxu0 0.0
      %945 = vmatprep.subr.mxu0 0.0
      %946 = vmatpush1.xpose.msra.mxu0 0.0
      %947 = vmatprep.mubr.f32.mxu0 0.0
      %948 = vmatmul.mubr.f32.gmra.mrb[0].mxu0 %v879
      %v949 = vpop.f32.mrb[0].mxu0
      %v950 = vadd.f32 0.0, %v949
      %v951 = vpop.f32.mrb[0].mxu0
      %952 = vdwg.mxu0
      %v953 = vmul.f32 %v950, 0.35355338
      %v954 = vadd.f32 %v953, %v785
      %v955 = vsel %vm705, %v954, -inf
      %956 = vmax.xlane.f32.xlu0 %v955
      %v957 = vpop.xlane.xlu0 %956
      %v958 = vsub.f32 %v954, %v957
      %v959 = vmul.f32 %v958, 1.442695
      %v960 = vpow.pop %v959
      %v961 = vsel %vm705, %v960, 0.0
      %962 = vadd.xlane.f32.xlu0 %v961
      %v963 = vpop.xlane.xlu0 %962
      %v964 = vrcp.pop %v963
      %v965 = vmul.f32 %v960, %v964
      %966 = vrot.lane.b32.xlu0 %v699, 88
      %v967 = vpop.permute.xlu0 %966
      %v970 = vsel %vm705, %v965, 0
      %972 = vmatprep.subr.mxu0 0.0
      %973 = vmatpush1.msra.mxu0 %v967
      %974 = vmatprep.subr.mxu0 0.0
      %975 = vmatpush1.msra.mxu0 0.0
      %976 = vmatprep.subr.mxu0 0.0
      %977 = vmatpush1.msra.mxu0 0.0
      %978 = vmatprep.subr.mxu0 0.0
      %979 = vmatpush1.msra.mxu0 0.0
      %980 = vmatprep.subr.mxu0 0.0
      %981 = vmatpush1.msra.mxu0 0.0
      %982 = vmatprep.subr.mxu0 0.0
      %983 = vmatpush1.msra.mxu0 0.0
      %984 = vmatprep.subr.mxu0 0.0
      %985 = vmatpush1.msra.mxu0 0.0
      %986 = vmatprep.subr.mxu0 0.0
      %987 = vmatpush1.msra.mxu0 0.0
      %988 = vmatprep.subr.mxu0 0.0
      %989 = vmatpush1.msra.mxu0 0.0
      %990 = vmatprep.subr.mxu0 0.0
      %991 = vmatpush1.msra.mxu0 0.0
      %992 = vmatprep.subr.mxu0 0.0
      %993 = vmatpush1.msra.mxu0 0.0
      %994 = vmatprep.subr.mxu0 0.0
      %995 = vmatpush1.msra.mxu0 0.0
      %996 = vmatprep.subr.mxu0 0.0
      %997 = vmatpush1.msra.mxu0 0.0
      %998 = vmatprep.subr.mxu0 0.0
      %999 = vmatpush1.msra.mxu0 0.0
      %1000 = vmatprep.subr.mxu0 0.0
      %1001 = vmatpush1.msra.mxu0 0.0
      %1002 = vmatprep.subr.mxu0 0.0
      %1003 = vmatpush1.msra.mxu0 0.0
      %1004 = vmatprep.subr.mxu0 0.0
      %1005 = vmatpush1.msra.mxu0 0.0
      %1006 = vmatprep.subr.mxu0 0.0
      %1007 = vmatpush1.msra.mxu0 0.0
      %1008 = vmatprep.subr.mxu0 0.0
      %1009 = vmatpush1.msra.mxu0 0.0
      %1010 = vmatprep.subr.mxu0 0.0
      %1011 = vmatpush1.msra.mxu0 0.0
      %1012 = vmatprep.subr.mxu0 0.0
      %1013 = vmatpush1.msra.mxu0 0.0
      %1014 = vmatprep.subr.mxu0 0.0
      %1015 = vmatpush1.msra.mxu0 0.0
      %1016 = vmatprep.subr.mxu0 0.0
      %1017 = vmatpush1.msra.mxu0 0.0
      %1018 = vmatprep.subr.mxu0 0.0
      %1019 = vmatpush1.msra.mxu0 0.0
      %1020 = vmatprep.subr.mxu0 0.0
      %1021 = vmatpush1.msra.mxu0 0.0
      %1022 = vmatprep.subr.mxu0 0.0
      %1023 = vmatpush1.msra.mxu0 0.0
      %1024 = vmatprep.subr.mxu0 0.0
      %1025 = vmatpush1.msra.mxu0 0.0
      %1026 = vmatprep.subr.mxu0 0.0
      %1027 = vmatpush1.msra.mxu0 0.0
      %1028 = vmatprep.subr.mxu0 0.0
      %1029 = vmatpush1.msra.mxu0 0.0
      %1030 = vmatprep.subr.mxu0 0.0
      %1031 = vmatpush1.msra.mxu0 0.0
      %1032 = vmatprep.subr.mxu0 0.0
      %1033 = vmatpush1.msra.mxu0 0.0
      %1034 = vmatprep.subr.mxu0 0.0
      %1035 = vmatpush1.msra.mxu0 0.0
      %1036 = vmatprep.mubr.f32.mxu0 0.0
      %1037 = vmatmul.mubr.f32.gmra.mrb[0].mxu0 %v970
      %v1038 = vpop.f32.mrb[0].mxu0
      %v1039 = vadd.f32 0.0, %v1038
      %v1040 = vpop.f32.mrb[0].mxu0
      %1041 = vdwg.mxu0
      %1042 = vrot.lane.b32.xlu0 %v699, 80
      %v1043 = vpop.permute.xlu0 %1042
      %1044 = vrot.lane.b32.xlu0 %v699, 72
      %v1045 = vpop.permute.xlu0 %1044
      %v1046 = vsel %vm705, %v1043, 0
      %v1048 = vsel %vm705, %v1045, 0
      %1050 = vmatprep.subr.mxu0 0.0
      %1051 = vmatpush1.xpose.msra.mxu0 %v1048
      %1052 = vmatprep.subr.mxu0 0.0
      %1053 = vmatpush1.xpose.msra.mxu0 0.0
      %1054 = vmatprep.subr.mxu0 0.0
      %1055 = vmatpush1.xpose.msra.mxu0 0.0
      %1056 = vmatprep.subr.mxu0 0.0
      %1057 = vmatpush1.xpose.msra.mxu0 0.0
      %1058 = vmatprep.subr.mxu0 0.0
      %1059 = vmatpush1.xpose.msra.mxu0 0.0
      %1060 = vmatprep.subr.mxu0 0.0
      %1061 = vmatpush1.xpose.msra.mxu0 0.0
      %1062 = vmatprep.subr.mxu0 0.0
      %1063 = vmatpush1.xpose.msra.mxu0 0.0
      %1064 = vmatprep.subr.mxu0 0.0
      %1065 = vmatpush1.xpose.msra.mxu0 0.0
      %1066 = vmatprep.subr.mxu0 0.0
      %1067 = vmatpush1.xpose.msra.mxu0 0.0
      %1068 = vmatprep.subr.mxu0 0.0
      %1069 = vmatpush1.xpose.msra.mxu0 0.0
      %1070 = vmatprep.subr.mxu0 0.0
      %1071 = vmatpush1.xpose.msra.mxu0 0.0
      %1072 = vmatprep.subr.mxu0 0.0
      %1073 = vmatpush1.xpose.msra.mxu0 0.0
      %1074 = vmatprep.subr.mxu0 0.0
      %1075 = vmatpush1.xpose.msra.mxu0 0.0
      %1076 = vmatprep.subr.mxu0 0.0
      %1077 = vmatpush1.xpose.msra.mxu0 0.0
      %1078 = vmatprep.subr.mxu0 0.0
      %1079 = vmatpush1.xpose.msra.mxu0 0.0
      %1080 = vmatprep.subr.mxu0 0.0
      %1081 = vmatpush1.xpose.msra.mxu0 0.0
      %1082 = vmatprep.subr.mxu0 0.0
      %1083 = vmatpush1.xpose.msra.mxu0 0.0
      %1084 = vmatprep.subr.mxu0 0.0
      %1085 = vmatpush1.xpose.msra.mxu0 0.0
      %1086 = vmatprep.subr.mxu0 0.0
      %1087 = vmatpush1.xpose.msra.mxu0 0.0
      %1088 = vmatprep.subr.mxu0 0.0
      %1089 = vmatpush1.xpose.msra.mxu0 0.0
      %1090 = vmatprep.subr.mxu0 0.0
      %1091 = vmatpush1.xpose.msra.mxu0 0.0
      %1092 = vmatprep.subr.mxu0 0.0
      %1093 = vmatpush1.xpose.msra.mxu0 0.0
      %1094 = vmatprep.subr.mxu0 0.0
      %1095 = vmatpush1.xpose.msra.mxu0 0.0
      %1096 = vmatprep.subr.mxu0 0.0
      %1097 = vmatpush1.xpose.msra.mxu0 0.0
      %1098 = vmatprep.subr.mxu0 0.0
      %1099 = vmatpush1.xpose.msra.mxu0 0.0
      %1100 = vmatprep.subr.mxu0 0.0
      %1101 = vmatpush1.xpose.msra.mxu0 0.0
      %1102 = vmatprep.subr.mxu0 0.0
      %1103 = vmatpush1.xpose.msra.mxu0 0.0
      %1104 = vmatprep.subr.mxu0 0.0
      %1105 = vmatpush1.xpose.msra.mxu0 0.0
      %1106 = vmatprep.subr.mxu0 0.0
      %1107 = vmatpush1.xpose.msra.mxu0 0.0
      %1108 = vmatprep.subr.mxu0 0.0
      %1109 = vmatpush1.xpose.msra.mxu0 0.0
      %1110 = vmatprep.subr.mxu0 0.0
      %1111 = vmatpush1.xpose.msra.mxu0 0.0
      %1112 = vmatprep.subr.mxu0 0.0
      %1113 = vmatpush1.xpose.msra.mxu0 0.0
      %1114 = vmatprep.mubr.f32.mxu0 0.0
      %1115 = vmatmul.mubr.f32.gmra.mrb[0].mxu0 %v1046
      %v1116 = vpop.f32.mrb[0].mxu0
      %v1117 = vadd.f32 0.0, %v1116
      %v1118 = vpop.f32.mrb[0].mxu0
      %1119 = vdwg.mxu0
      %v1120 = vmul.f32 %v1117, 0.35355338
      %v1121 = vadd.f32 %v1120, %v785
      %v1122 = vsel %vm705, %v1121, -inf
      %1123 = vmax.xlane.f32.xlu0 %v1122
      %v1124 = vpop.xlane.xlu0 %1123
      %v1125 = vsub.f32 %v1121, %v1124
      %v1126 = vmul.f32 %v1125, 1.442695
      %v1127 = vpow.pop %v1126
      %v1128 = vsel %vm705, %v1127, 0.0
      %1129 = vadd.xlane.f32.xlu0 %v1128
      %v1130 = vpop.xlane.xlu0 %1129
      %v1131 = vrcp.pop %v1130
      %v1132 = vmul.f32 %v1127, %v1131
      %1133 = vrot.lane.b32.xlu0 %v699, 64
      %v1134 = vpop.permute.xlu0 %1133
      %v1137 = vsel %vm705, %v1132, 0
      %1139 = vmatprep.subr.mxu0 0.0
      %1140 = vmatpush1.msra.mxu0 %v1134
      %1141 = vmatprep.subr.mxu0 0.0
      %1142 = vmatpush1.msra.mxu0 0.0
      %1143 = vmatprep.subr.mxu0 0.0
      %1144 = vmatpush1.msra.mxu0 0.0
      %1145 = vmatprep.subr.mxu0 0.0
      %1146 = vmatpush1.msra.mxu0 0.0
      %1147 = vmatprep.subr.mxu0 0.0
      %1148 = vmatpush1.msra.mxu0 0.0
      %1149 = vmatprep.subr.mxu0 0.0
      %1150 = vmatpush1.msra.mxu0 0.0
      %1151 = vmatprep.subr.mxu0 0.0
      %1152 = vmatpush1.msra.mxu0 0.0
      %1153 = vmatprep.subr.mxu0 0.0
      %1154 = vmatpush1.msra.mxu0 0.0
      %1155 = vmatprep.subr.mxu0 0.0
      %1156 = vmatpush1.msra.mxu0 0.0
      %1157 = vmatprep.subr.mxu0 0.0
      %1158 = vmatpush1.msra.mxu0 0.0
      %1159 = vmatprep.subr.mxu0 0.0
      %1160 = vmatpush1.msra.mxu0 0.0
      %1161 = vmatprep.subr.mxu0 0.0
      %1162 = vmatpush1.msra.mxu0 0.0
      %1163 = vmatprep.subr.mxu0 0.0
      %1164 = vmatpush1.msra.mxu0 0.0
      %1165 = vmatprep.subr.mxu0 0.0
      %1166 = vmatpush1.msra.mxu0 0.0
      %1167 = vmatprep.subr.mxu0 0.0
      %1168 = vmatpush1.msra.mxu0 0.0
      %1169 = vmatprep.subr.mxu0 0.0
      %1170 = vmatpush1.msra.mxu0 0.0
      %1171 = vmatprep.subr.mxu0 0.0
      %1172 = vmatpush1.msra.mxu0 0.0
      %1173 = vmatprep.subr.mxu0 0.0
      %1174 = vmatpush1.msra.mxu0 0.0
      %1175 = vmatprep.subr.mxu0 0.0
      %1176 = vmatpush1.msra.mxu0 0.0
      %1177 = vmatprep.subr.mxu0 0.0
      %1178 = vmatpush1.msra.mxu0 0.0
      %1179 = vmatprep.subr.mxu0 0.0
      %1180 = vmatpush1.msra.mxu0 0.0
      %1181 = vmatprep.subr.mxu0 0.0
      %1182 = vmatpush1.msra.mxu0 0.0
      %1183 = vmatprep.subr.mxu0 0.0
      %1184 = vmatpush1.msra.mxu0 0.0
      %1185 = vmatprep.subr.mxu0 0.0
      %1186 = vmatpush1.msra.mxu0 0.0
      %1187 = vmatprep.subr.mxu0 0.0
      %1188 = vmatpush1.msra.mxu0 0.0
      %1189 = vmatprep.subr.mxu0 0.0
      %1190 = vmatpush1.msra.mxu0 0.0
      %1191 = vmatprep.subr.mxu0 0.0
      %1192 = vmatpush1.msra.mxu0 0.0
      %1193 = vmatprep.subr.mxu0 0.0
      %1194 = vmatpush1.msra.mxu0 0.0
      %1195 = vmatprep.subr.mxu0 0.0
      %1196 = vmatpush1.msra.mxu0 0.0
      %1197 = vmatprep.subr.mxu0 0.0
      %1198 = vmatpush1.msra.mxu0 0.0
      %1199 = vmatprep.subr.mxu0 0.0
      %1200 = vmatpush1.msra.mxu0 0.0
      %1201 = vmatprep.subr.mxu0 0.0
      %1202 = vmatpush1.msra.mxu0 0.0
      %1203 = vmatprep.mubr.f32.mxu0 0.0
      %1204 = vmatmul.mubr.f32.gmra.mrb[0].mxu0 %v1137
      %v1205 = vpop.f32.mrb[0].mxu0
      %v1206 = vadd.f32 0.0, %v1205
      %v1207 = vpop.f32.mrb[0].mxu0
      %1208 = vdwg.mxu0
      %1209 = vrot.lane.b32.xlu0 %v699, 56
      %v1210 = vpop.permute.xlu0 %1209
      %1211 = vrot.lane.b32.xlu0 %v699, 48
      %v1212 = vpop.permute.xlu0 %1211
      %v1213 = vsel %vm705, %v1210, 0
      %v1215 = vsel %vm705, %v1212, 0
      %1217 = vmatprep.subr.mxu0 0.0
      %1218 = vmatpush1.xpose.msra.mxu0 %v1215
      %1219 = vmatprep.subr.mxu0 0.0
      %1220 = vmatpush1.xpose.msra.mxu0 0.0
      %1221 = vmatprep.subr.mxu0 0.0
      %1222 = vmatpush1.xpose.msra.mxu0 0.0
      %1223 = vmatprep.subr.mxu0 0.0
      %1224 = vmatpush1.xpose.msra.mxu0 0.0
      %1225 = vmatprep.subr.mxu0 0.0
      %1226 = vmatpush1.xpose.msra.mxu0 0.0
      %1227 = vmatprep.subr.mxu0 0.0
      %1228 = vmatpush1.xpose.msra.mxu0 0.0
      %1229 = vmatprep.subr.mxu0 0.0
      %1230 = vmatpush1.xpose.msra.mxu0 0.0
      %1231 = vmatprep.subr.mxu0 0.0
      %1232 = vmatpush1.xpose.msra.mxu0 0.0
      %1233 = vmatprep.subr.mxu0 0.0
      %1234 = vmatpush1.xpose.msra.mxu0 0.0
      %1235 = vmatprep.subr.mxu0 0.0
      %1236 = vmatpush1.xpose.msra.mxu0 0.0
      %1237 = vmatprep.subr.mxu0 0.0
      %1238 = vmatpush1.xpose.msra.mxu0 0.0
      %1239 = vmatprep.subr.mxu0 0.0
      %1240 = vmatpush1.xpose.msra.mxu0 0.0
      %1241 = vmatprep.subr.mxu0 0.0
      %1242 = vmatpush1.xpose.msra.mxu0 0.0
      %1243 = vmatprep.subr.mxu0 0.0
      %1244 = vmatpush1.xpose.msra.mxu0 0.0
      %1245 = vmatprep.subr.mxu0 0.0
      %1246 = vmatpush1.xpose.msra.mxu0 0.0
      %1247 = vmatprep.subr.mxu0 0.0
      %1248 = vmatpush1.xpose.msra.mxu0 0.0
      %1249 = vmatprep.subr.mxu0 0.0
      %1250 = vmatpush1.xpose.msra.mxu0 0.0
      %1251 = vmatprep.subr.mxu0 0.0
      %1252 = vmatpush1.xpose.msra.mxu0 0.0
      %1253 = vmatprep.subr.mxu0 0.0
      %1254 = vmatpush1.xpose.msra.mxu0 0.0
      %1255 = vmatprep.subr.mxu0 0.0
      %1256 = vmatpush1.xpose.msra.mxu0 0.0
      %1257 = vmatprep.subr.mxu0 0.0
      %1258 = vmatpush1.xpose.msra.mxu0 0.0
      %1259 = vmatprep.subr.mxu0 0.0
      %1260 = vmatpush1.xpose.msra.mxu0 0.0
      %1261 = vmatprep.subr.mxu0 0.0
      %1262 = vmatpush1.xpose.msra.mxu0 0.0
      %1263 = vmatprep.subr.mxu0 0.0
      %1264 = vmatpush1.xpose.msra.mxu0 0.0
      %1265 = vmatprep.subr.mxu0 0.0
      %1266 = vmatpush1.xpose.msra.mxu0 0.0
      %1267 = vmatprep.subr.mxu0 0.0
      %1268 = vmatpush1.xpose.msra.mxu0 0.0
      %1269 = vmatprep.subr.mxu0 0.0
      %1270 = vmatpush1.xpose.msra.mxu0 0.0
      %1271 = vmatprep.subr.mxu0 0.0
      %1272 = vmatpush1.xpose.msra.mxu0 0.0
      %1273 = vmatprep.subr.mxu0 0.0
      %1274 = vmatpush1.xpose.msra.mxu0 0.0
      %1275 = vmatprep.subr.mxu0 0.0
      %1276 = vmatpush1.xpose.msra.mxu0 0.0
      %1277 = vmatprep.subr.mxu0 0.0
      %1278 = vmatpush1.xpose.msra.mxu0 0.0
      %1279 = vmatprep.subr.mxu0 0.0
      %1280 = vmatpush1.xpose.msra.mxu0 0.0
      %1281 = vmatprep.mubr.f32.mxu0 0.0
      %1282 = vmatmul.mubr.f32.gmra.mrb[0].mxu0 %v1213
      %v1283 = vpop.f32.mrb[0].mxu0
      %v1284 = vadd.f32 0.0, %v1283
      %v1285 = vpop.f32.mrb[0].mxu0
      %1286 = vdwg.mxu0
      %v1287 = vmul.f32 %v1284, 0.35355338
      %v1288 = vadd.f32 %v1287, %v785
      %v1289 = vsel %vm705, %v1288, -inf
      %1290 = vmax.xlane.f32.xlu0 %v1289
      %v1291 = vpop.xlane.xlu0 %1290
      %v1292 = vsub.f32 %v1288, %v1291
      %v1293 = vmul.f32 %v1292, 1.442695
      %v1294 = vpow.pop %v1293
      %v1295 = vsel %vm705, %v1294, 0.0
      %1296 = vadd.xlane.f32.xlu0 %v1295
      %v1297 = vpop.xlane.xlu0 %1296
      %v1298 = vrcp.pop %v1297
      %v1299 = vmul.f32 %v1294, %v1298
      %1300 = vrot.lane.b32.xlu0 %v699, 40
      %v1301 = vpop.permute.xlu0 %1300
      %v1304 = vsel %vm705, %v1299, 0
      %1306 = vmatprep.subr.mxu0 0.0
      %1307 = vmatpush1.msra.mxu0 %v1301
      %1308 = vmatprep.subr.mxu0 0.0
      %1309 = vmatpush1.msra.mxu0 0.0
      %1310 = vmatprep.subr.mxu0 0.0
      %1311 = vmatpush1.msra.mxu0 0.0
      %1312 = vmatprep.subr.mxu0 0.0
      %1313 = vmatpush1.msra.mxu0 0.0
      %1314 = vmatprep.subr.mxu0 0.0
      %1315 = vmatpush1.msra.mxu0 0.0
      %1316 = vmatprep.subr.mxu0 0.0
      %1317 = vmatpush1.msra.mxu0 0.0
      %1318 = vmatprep.subr.mxu0 0.0
      %1319 = vmatpush1.msra.mxu0 0.0
      %1320 = vmatprep.subr.mxu0 0.0
      %1321 = vmatpush1.msra.mxu0 0.0
      %1322 = vmatprep.subr.mxu0 0.0
      %1323 = vmatpush1.msra.mxu0 0.0
      %1324 = vmatprep.subr.mxu0 0.0
      %1325 = vmatpush1.msra.mxu0 0.0
      %1326 = vmatprep.subr.mxu0 0.0
      %1327 = vmatpush1.msra.mxu0 0.0
      %1328 = vmatprep.subr.mxu0 0.0
      %1329 = vmatpush1.msra.mxu0 0.0
      %1330 = vmatprep.subr.mxu0 0.0
      %1331 = vmatpush1.msra.mxu0 0.0
      %1332 = vmatprep.subr.mxu0 0.0
      %1333 = vmatpush1.msra.mxu0 0.0
      %1334 = vmatprep.subr.mxu0 0.0
      %1335 = vmatpush1.msra.mxu0 0.0
      %1336 = vmatprep.subr.mxu0 0.0
      %1337 = vmatpush1.msra.mxu0 0.0
      %1338 = vmatprep.subr.mxu0 0.0
      %1339 = vmatpush1.msra.mxu0 0.0
      %1340 = vmatprep.subr.mxu0 0.0
      %1341 = vmatpush1.msra.mxu0 0.0
      %1342 = vmatprep.subr.mxu0 0.0
      %1343 = vmatpush1.msra.mxu0 0.0
      %1344 = vmatprep.subr.mxu0 0.0
      %1345 = vmatpush1.msra.mxu0 0.0
      %1346 = vmatprep.subr.mxu0 0.0
      %1347 = vmatpush1.msra.mxu0 0.0
      %1348 = vmatprep.subr.mxu0 0.0
      %1349 = vmatpush1.msra.mxu0 0.0
      %1350 = vmatprep.subr.mxu0 0.0
      %1351 = vmatpush1.msra.mxu0 0.0
      %1352 = vmatprep.subr.mxu0 0.0
      %1353 = vmatpush1.msra.mxu0 0.0
      %1354 = vmatprep.subr.mxu0 0.0
      %1355 = vmatpush1.msra.mxu0 0.0
      %1356 = vmatprep.subr.mxu0 0.0
      %1357 = vmatpush1.msra.mxu0 0.0
      %1358 = vmatprep.subr.mxu0 0.0
      %1359 = vmatpush1.msra.mxu0 0.0
      %1360 = vmatprep.subr.mxu0 0.0
      %1361 = vmatpush1.msra.mxu0 0.0
      %1362 = vmatprep.subr.mxu0 0.0
      %1363 = vmatpush1.msra.mxu0 0.0
      %1364 = vmatprep.subr.mxu0 0.0
      %1365 = vmatpush1.msra.mxu0 0.0
      %1366 = vmatprep.subr.mxu0 0.0
      %1367 = vmatpush1.msra.mxu0 0.0
      %1368 = vmatprep.subr.mxu0 0.0
      %1369 = vmatpush1.msra.mxu0 0.0
      %1370 = vmatprep.mubr.f32.mxu0 0.0
      %1371 = vmatmul.mubr.f32.gmra.mrb[0].mxu0 %v1304
      %v1372 = vpop.f32.mrb[0].mxu0
      %v1373 = vadd.f32 0.0, %v1372
      %v1374 = vpop.f32.mrb[0].mxu0
      %1375 = vdwg.mxu0
      %1377 = vrot.lane.b32.xlu0 %v1039, 8
      %v1378 = vpop.permute.xlu0 %1377
      %1381 = vrot.lane.b32.xlu0 %v1206, 16
      %v1382 = vpop.permute.xlu0 %1381
      %1385 = vrot.lane.b32.xlu0 %v1373, 24
      %v1386 = vpop.permute.xlu0 %1385
      %v1388 = vsel %vm705, %v872, %v1378
      %vm1389 = vcmask 130048
      %v1390 = vsel %vm1389, %v1388, %v1382
      %vm1391 = vcmask 195584
      %v1392 = vsel %vm1391, %v1390, %v1386
      %v1393 = vld [vmem:[%s6] sm:$0xff]
      %v1394 = vld [vmem:[%s6 + $0x8] sm:$0xff]
      %v1395 = vld [vmem:[%s6 + $0x10] sm:$0xff]
      %v1396 = vld [vmem:[%s6 + $0x18] sm:$0xff]
      %v1397 = vld [vmem:[%s7] sm:$0x1]
      %v1399 = vlaneseq
      %v1400 = vshrl.u32 %v1399, 7
      %v1401 = vsub.s32 0, %v1400
      %v1402 = vrot.slane %v1397, %v1401
      %v1405 = vsel %vm589, %v1392, 0
      %1407 = vmatprep.subr.mxu0 0.0
      %1408 = vmatpush1.msra.mxu0 %v1393
      %1409 = vmatprep.subr.mxu0 0.0
      %1410 = vmatpush1.msra.mxu0 %v1394
      %1411 = vmatprep.subr.mxu0 0.0
      %1412 = vmatpush1.msra.mxu0 %v1395
      %1413 = vmatprep.subr.mxu0 0.0
      %1414 = vmatpush1.msra.mxu0 %v1396
      %1415 = vmatprep.subr.mxu0 0.0
      %1416 = vmatpush1.msra.mxu0 0.0
      %1417 = vmatprep.subr.mxu0 0.0
      %1418 = vmatpush1.msra.mxu0 0.0
      %1419 = vmatprep.subr.mxu0 0.0
      %1420 = vmatpush1.msra.mxu0 0.0
      %1421 = vmatprep.subr.mxu0 0.0
      %1422 = vmatpush1.msra.mxu0 0.0
      %1423 = vmatprep.subr.mxu0 0.0
      %1424 = vmatpush1.msra.mxu0 0.0
      %1425 = vmatprep.subr.mxu0 0.0
      %1426 = vmatpush1.msra.mxu0 0.0
      %1427 = vmatprep.subr.mxu0 0.0
      %1428 = vmatpush1.msra.mxu0 0.0
      %1429 = vmatprep.subr.mxu0 0.0
      %1430 = vmatpush1.msra.mxu0 0.0
      %1431 = vmatprep.subr.mxu0 0.0
      %1432 = vmatpush1.msra.mxu0 0.0
      %1433 = vmatprep.subr.mxu0 0.0
      %1434 = vmatpush1.msra.mxu0 0.0
      %1435 = vmatprep.subr.mxu0 0.0
      %1436 = vmatpush1.msra.mxu0 0.0
      %1437 = vmatprep.subr.mxu0 0.0
      %1438 = vmatpush1.msra.mxu0 0.0
      %1439 = vmatprep.subr.mxu0 0.0
      %1440 = vmatpush1.msra.mxu0 0.0
      %1441 = vmatprep.subr.mxu0 0.0
      %1442 = vmatpush1.msra.mxu0 0.0
      %1443 = vmatprep.subr.mxu0 0.0
      %1444 = vmatpush1.msra.mxu0 0.0
      %1445 = vmatprep.subr.mxu0 0.0
      %1446 = vmatpush1.msra.mxu0 0.0
      %1447 = vmatprep.subr.mxu0 0.0
      %1448 = vmatpush1.msra.mxu0 0.0
      %1449 = vmatprep.subr.mxu0 0.0
      %1450 = vmatpush1.msra.mxu0 0.0
      %1451 = vmatprep.subr.mxu0 0.0
      %1452 = vmatpush1.msra.mxu0 0.0
      %1453 = vmatprep.subr.mxu0 0.0
      %1454 = vmatpush1.msra.mxu0 0.0
      %1455 = vmatprep.subr.mxu0 0.0
      %1456 = vmatpush1.msra.mxu0 0.0
      %1457 = vmatprep.subr.mxu0 0.0
      %1458 = vmatpush1.msra.mxu0 0.0
      %1459 = vmatprep.subr.mxu0 0.0
      %1460 = vmatpush1.msra.mxu0 0.0
      %1461 = vmatprep.subr.mxu0 0.0
      %1462 = vmatpush1.msra.mxu0 0.0
      %1463 = vmatprep.subr.mxu0 0.0
      %1464 = vmatpush1.msra.mxu0 0.0
      %1465 = vmatprep.subr.mxu0 0.0
      %1466 = vmatpush1.msra.mxu0 0.0
      %1467 = vmatprep.subr.mxu0 0.0
      %1468 = vmatpush1.msra.mxu0 0.0
      %1469 = vmatprep.subr.mxu0 0.0
      %1470 = vmatpush1.msra.mxu0 0.0
      %1471 = vmatprep.mubr.f32.mxu0 0.0
      %1472 = vmatmul.mubr.f32.gmra.mrb[0].mxu0 %v1405
      %v1473 = vpop.f32.mrb[0].mxu0
      %v1474 = vadd.f32 %v1402, %v1473
      %v1475 = vpop.f32.mrb[0].mxu0
      %1476 = vdwg.mxu0
      %v1477 = vadd.f32 %v1474, %v617
      %v1478 = vld [vmem:[%s8] sm:$0x1]
      %v1479 = vld [vmem:[%s9] sm:$0x1]
      %v1480 = vsel %vm589, %v1477, 0.0
      %1481 = vadd.xlane.f32.xlu0 %v1480
      %v1482 = vpop.xlane.xlu0 %1481
      %v1483 = vmul.f32 %v1482, %v593
      %v1484 = vsub.f32 %v1477, %v1483
      %v1485 = vmul.f32 %v1484, %v1484
      %v1486 = vsel %vm589, %v1485, 0.0
      %1487 = vadd.xlane.f32.xlu0 %v1486
      %v1488 = vpop.xlane.xlu0 %1487
      %v1489 = vmul.f32 %v1488, %v593
      %v1490 = vadd.f32 %v1489, 1e-12
      %v1491 = vrsqrt.pop %v1490
      %v1492 = vmul.f32 %v1484, %v1491
      %v1494 = vlaneseq
      %v1495 = vshrl.u32 %v1494, 7
      %v1496 = vsub.s32 0, %v1495
      %v1497 = vrot.slane %v1478, %v1496
      %v1499 = vmul.f32 %v1492, %v1497
      %v1501 = vlaneseq
      %v1502 = vshrl.u32 %v1501, 7
      %v1503 = vsub.s32 0, %v1502
      %v1504 = vrot.slane %v1479, %v1503
      %v1506 = vadd.f32 %v1499, %v1504
      %v1507 = vld [vmem:[%s10] sm:$0xff]
      %v1508 = vld [vmem:[%s10 + $0x8] sm:$0xff]
      %v1509 = vld [vmem:[%s10 + $0x10] sm:$0xff]
      %v1510 = vld [vmem:[%s10 + $0x18] sm:$0xff]
      %v1511 = vld [vmem:[%s11] sm:$0x1]
      %v1513 = vlaneseq
      %v1514 = vshrl.u32 %v1513, 7
      %v1515 = vsub.s32 0, %v1514
      %v1516 = vrot.slane %v1511, %v1515
      %v1519 = vsel %vm589, %v1506, 0
      %1521 = vmatprep.subr.mxu0 0.0
      %1522 = vmatpush1.msra.mxu0 %v1507
      %1523 = vmatprep.subr.mxu0 0.0
      %1524 = vmatpush1.msra.mxu0 %v1508
      %1525 = vmatprep.subr.mxu0 0.0
      %1526 = vmatpush1.msra.mxu0 %v1509
      %1527 = vmatprep.subr.mxu0 0.0
      %1528 = vmatpush1.msra.mxu0 %v1510
      %1529 = vmatprep.subr.mxu0 0.0
      %1530 = vmatpush1.msra.mxu0 0.0
      %1531 = vmatprep.subr.mxu0 0.0
      %1532 = vmatpush1.msra.mxu0 0.0
      %1533 = vmatprep.subr.mxu0 0.0
      %1534 = vmatpush1.msra.mxu0 0.0
      %1535 = vmatprep.subr.mxu0 0.0
      %1536 = vmatpush1.msra.mxu0 0.0
      %1537 = vmatprep.subr.mxu0 0.0
      %1538 = vmatpush1.msra.mxu0 0.0
      %1539 = vmatprep.subr.mxu0 0.0
      %1540 = vmatpush1.msra.mxu0 0.0
      %1541 = vmatprep.subr.mxu0 0.0
      %1542 = vmatpush1.msra.mxu0 0.0
      %1543 = vmatprep.subr.mxu0 0.0
      %1544 = vmatpush1.msra.mxu0 0.0
      %1545 = vmatprep.subr.mxu0 0.0
      %1546 = vmatpush1.msra.mxu0 0.0
      %1547 = vmatprep.subr.mxu0 0.0
      %1548 = vmatpush1.msra.mxu0 0.0
      %1549 = vmatprep.subr.mxu0 0.0
      %1550 = vmatpush1.msra.mxu0 0.0
      %1551 = vmatprep.subr.mxu0 0.0
      %1552 = vmatpush1.msra.mxu0 0.0
      %1553 = vmatprep.subr.mxu0 0.0
      %1554 = vmatpush1.msra.mxu0 0.0
      %1555 = vmatprep.subr.mxu0 0.0
      %1556 = vmatpush1.msra.mxu0 0.0
      %1557 = vmatprep.subr.mxu0 0.0
      %1558 = vmatpush1.msra.mxu0 0.0
      %1559 = vmatprep.subr.mxu0 0.0
      %1560 = vmatpush1.msra.mxu0 0.0
      %1561 = vmatprep.subr.mxu0 0.0
      %1562 = vmatpush1.msra.mxu0 0.0
      %1563 = vmatprep.subr.mxu0 0.0
      %1564 = vmatpush1.msra.mxu0 0.0
      %1565 = vmatprep.subr.mxu0 0.0
      %1566 = vmatpush1.msra.mxu0 0.0
      %1567 = vmatprep.subr.mxu0 0.0
      %1568 = vmatpush1.msra.mxu0 0.0
      %1569 = vmatprep.subr.mxu0 0.0
      %1570 = vmatpush1.msra.mxu0 0.0
      %1571 = vmatprep.subr.mxu0 0.0
      %1572 = vmatpush1.msra.mxu0 0.0
      %1573 = vmatprep.subr.mxu0 0.0
      %1574 = vmatpush1.msra.mxu0 0.0
      %1575 = vmatprep.subr.mxu0 0.0
      %1576 = vmatpush1.msra.mxu0 0.0
      %1577 = vmatprep.subr.mxu0 0.0
      %1578 = vmatpush1.msra.mxu0 0.0
      %1579 = vmatprep.subr.mxu0 0.0
      %1580 = vmatpush1.msra.mxu0 0.0
      %1581 = vmatprep.subr.mxu0 0.0
      %1582 = vmatpush1.msra.mxu0 0.0
      %1583 = vmatprep.subr.mxu0 0.0
      %1584 = vmatpush1.msra.mxu0 0.0
      %1585 = vmatprep.mubr.f32.mxu0 0.0
      %1586 = vmatmul.mubr.f32.gmra.mrb[0].mxu0 %v1519
      %v1587 = vpop.f32.mrb[0].mxu0
      %v1588 = vadd.f32 %v1516, %v1587
      %v1589 = vpop.f32.mrb[0].mxu0
      %1590 = vdwg.mxu0
      %v1591 = vmul.f32 %v1588, 0.5
      %v1592 = vmul.f32 %v1588, 0.70710677
      %v1593 = verf.f32.pop %v1592
      %v1594 = vadd.f32 %v1593, 1.0
      %v1595 = vmul.f32 %v1591, %v1594
      %v1596 = vld [vmem:[%s12] sm:$0xff]
      %v1597 = vld [vmem:[%s12 + $0x8] sm:$0xff]
      %v1598 = vld [vmem:[%s12 + $0x10] sm:$0xff]
      %v1599 = vld [vmem:[%s12 + $0x18] sm:$0xff]
      %v1600 = vld [vmem:[%s12 + $0x20] sm:$0xff]
      %v1601 = vld [vmem:[%s12 + $0x28] sm:$0xff]
      %v1602 = vld [vmem:[%s12 + $0x30] sm:$0xff]
      %v1603 = vld [vmem:[%s12 + $0x38] sm:$0xff]
      %v1604 = vld [vmem:[%s13] sm:$0x1]
      %v1606 = vlaneseq
      %v1607 = vshrl.u32 %v1606, 7
      %v1608 = vsub.s32 0, %v1607
      %v1609 = vrot.slane %v1604, %v1608
      %vm1611 = vcmask 523264
      %v1613 = vsel %vm1611, %v1595, 0
      %1615 = vmatprep.subr.mxu0 0.0
      %1616 = vmatpush1.msra.mxu0 %v1596
      %1617 = vmatprep.subr.mxu0 0.0
      %1618 = vmatpush1.msra.mxu0 %v1597
      %1619 = vmatprep.subr.mxu0 0.0
      %1620 = vmatpush1.msra.mxu0 %v1598
      %1621 = vmatprep.subr.mxu0 0.0
      %1622 = vmatpush1.msra.mxu0 %v1599
      %1623 = vmatprep.subr.mxu0 0.0
      %1624 = vmatpush1.msra.mxu0 %v1600
      %1625 = vmatprep.subr.mxu0 0.0
      %1626 = vmatpush1.msra.mxu0 %v1601
      %1627 = vmatprep.subr.mxu0 0.0
      %1628 = vmatpush1.msra.mxu0 %v1602
      %1629 = vmatprep.subr.mxu0 0.0
      %1630 = vmatpush1.msra.mxu0 %v1603
      %1631 = vmatprep.subr.mxu0 0.0
      %1632 = vmatpush1.msra.mxu0 0.0
      %1633 = vmatprep.subr.mxu0 0.0
      %1634 = vmatpush1.msra.mxu0 0.0
      %1635 = vmatprep.subr.mxu0 0.0
      %1636 = vmatpush1.msra.mxu0 0.0
      %1637 = vmatprep.subr.mxu0 0.0
      %1638 = vmatpush1.msra.mxu0 0.0
      %1639 = vmatprep.subr.mxu0 0.0
      %1640 = vmatpush1.msra.mxu0 0.0
      %1641 = vmatprep.subr.mxu0 0.0
      %1642 = vmatpush1.msra.mxu0 0.0
      %1643 = vmatprep.subr.mxu0 0.0
      %1644 = vmatpush1.msra.mxu0 0.0
      %1645 = vmatprep.subr.mxu0 0.0
      %1646 = vmatpush1.msra.mxu0 0.0
      %1647 = vmatprep.subr.mxu0 0.0
      %1648 = vmatpush1.msra.mxu0 0.0
      %1649 = vmatprep.subr.mxu0 0.0
      %1650 = vmatpush1.msra.mxu0 0.0
      %1651 = vmatprep.subr.mxu0 0.0
      %1652 = vmatpush1.msra.mxu0 0.0
      %1653 = vmatprep.subr.mxu0 0.0
      %1654 = vmatpush1.msra.mxu0 0.0
      %1655 = vmatprep.subr.mxu0 0.0
      %1656 = vmatpush1.msra.mxu0 0.0
      %1657 = vmatprep.subr.mxu0 0.0
      %1658 = vmatpush1.msra.mxu0 0.0
      %1659 = vmatprep.subr.mxu0 0.0
      %1660 = vmatpush1.msra.mxu0 0.0
      %1661 = vmatprep.subr.mxu0 0.0
      %1662 = vmatpush1.msra.mxu0 0.0
      %1663 = vmatprep.subr.mxu0 0.0
      %1664 = vmatpush1.msra.mxu0 0.0
      %1665 = vmatprep.subr.mxu0 0.0
      %1666 = vmatpush1.msra.mxu0 0.0
      %1667 = vmatprep.subr.mxu0 0.0
      %1668 = vmatpush1.msra.mxu0 0.0
      %1669 = vmatprep.subr.mxu0 0.0
      %1670 = vmatpush1.msra.mxu0 0.0
      %1671 = vmatprep.subr.mxu0 0.0
      %1672 = vmatpush1.msra.mxu0 0.0
      %1673 = vmatprep.subr.mxu0 0.0
      %1674 = vmatpush1.msra.mxu0 0.0
      %1675 = vmatprep.subr.mxu0 0.0
      %1676 = vmatpush1.msra.mxu0 0.0
      %1677 = vmatprep.subr.mxu0 0.0
      %1678 = vmatpush1.msra.mxu0 0.0
      %1679 = vmatprep.mubr.f32.mxu0 0.0
      %1680 = vmatmul.mubr.f32.gmra.mrb[0].mxu0 %v1613
      %v1681 = vpop.f32.mrb[0].mxu0
      %v1682 = vadd.f32 %v1609, %v1681
      %v1683 = vpop.f32.mrb[0].mxu0
      %1684 = vdwg.mxu0
      %v1685 = vadd.f32 %v1682, %v1506
      %v1686 = vld [vmem:[%s14] sm:$0x1]
      %v1687 = vld [vmem:[%s15] sm:$0x1]
      %v1688 = vsel %vm589, %v1685, 0.0
      %1689 = vadd.xlane.f32.xlu0 %v1688
      %v1690 = vpop.xlane.xlu0 %1689
      %v1691 = vmul.f32 %v1690, %v593
      %v1692 = vsub.f32 %v1685, %v1691
      %v1693 = vmul.f32 %v1692, %v1692
      %v1694 = vsel %vm589, %v1693, 0.0
      %1695 = vadd.xlane.f32.xlu0 %v1694
      %v1696 = vpop.xlane.xlu0 %1695
      %v1697 = vmul.f32 %v1696, %v593
      %v1698 = vadd.f32 %v1697, 1e-12
      %v1699 = vrsqrt.pop %v1698
      %v1700 = vmul.f32 %v1692, %v1699
      %v1702 = vlaneseq
      %v1703 = vshrl.u32 %v1702, 7
      %v1704 = vsub.s32 0, %v1703
      %v1705 = vrot.slane %v1686, %v1704
      %v1707 = vmul.f32 %v1700, %v1705
      %v1709 = vlaneseq
      %v1710 = vshrl.u32 %v1709, 7
      %v1711 = vsub.s32 0, %v1710
      %v1712 = vrot.slane %v1687, %v1711
      %v1714 = vadd.f32 %v1707, %v1712
      %v1715 = vadd.f32 %v1714, 0.0
      %s1716 = scalar_lea.vmem %s4, 32
      %v1717 = vld [vmem:[%s1716] sm:$0xff]
      %v1718 = vld [vmem:[%s1716 + $0x8] sm:$0xff]
      %v1719 = vld [vmem:[%s1716 + $0x10] sm:$0xff]
      %v1720 = vld [vmem:[%s1716 + $0x18] sm:$0xff]
      %s1721 = scalar_lea.vmem %s5, 1
      %v1722 = vld [vmem:[%s1721] sm:$0x1]
      %v1724 = vlaneseq
      %v1725 = vshrl.u32 %v1724, 7
      %v1726 = vsub.s32 0, %v1725
      %v1727 = vrot.slane %v1722, %v1726
      %v1730 = vsel %vm589, %v1714, 0
      %1732 = vmatprep.subr.mxu0 0.0
      %1733 = vmatpush1.msra.mxu0 %v1717
      %1734 = vmatprep.subr.mxu0 0.0
      %1735 = vmatpush1.msra.mxu0 %v1718
      %1736 = vmatprep.subr.mxu0 0.0
      %1737 = vmatpush1.msra.mxu0 %v1719
      %1738 = vmatprep.subr.mxu0 0.0
      %1739 = vmatpush1.msra.mxu0 %v1720
      %1740 = vmatprep.subr.mxu0 0.0
      %1741 = vmatpush1.msra.mxu0 0.0
      %1742 = vmatprep.subr.mxu0 0.0
      %1743 = vmatpush1.msra.mxu0 0.0
      %1744 = vmatprep.subr.mxu0 0.0
      %1745 = vmatpush1.msra.mxu0 0.0
      %1746 = vmatprep.subr.mxu0 0.0
      %1747 = vmatpush1.msra.mxu0 0.0
      %1748 = vmatprep.subr.mxu0 0.0
      %1749 = vmatpush1.msra.mxu0 0.0
      %1750 = vmatprep.subr.mxu0 0.0
      %1751 = vmatpush1.msra.mxu0 0.0
      %1752 = vmatprep.subr.mxu0 0.0
      %1753 = vmatpush1.msra.mxu0 0.0
      %1754 = vmatprep.subr.mxu0 0.0
      %1755 = vmatpush1.msra.mxu0 0.0
      %1756 = vmatprep.subr.mxu0 0.0
      %1757 = vmatpush1.msra.mxu0 0.0
      %1758 = vmatprep.subr.mxu0 0.0
      %1759 = vmatpush1.msra.mxu0 0.0
      %1760 = vmatprep.subr.mxu0 0.0
      %1761 = vmatpush1.msra.mxu0 0.0
      %1762 = vmatprep.subr.mxu0 0.0
      %1763 = vmatpush1.msra.mxu0 0.0
      %1764 = vmatprep.subr.mxu0 0.0
      %1765 = vmatpush1.msra.mxu0 0.0
      %1766 = vmatprep.subr.mxu0 0.0
      %1767 = vmatpush1.msra.mxu0 0.0
      %1768 = vmatprep.subr.mxu0 0.0
      %1769 = vmatpush1.msra.mxu0 0.0
      %1770 = vmatprep.subr.mxu0 0.0
      %1771 = vmatpush1.msra.mxu0 0.0
      %1772 = vmatprep.subr.mxu0 0.0
      %1773 = vmatpush1.msra.mxu0 0.0
      %1774 = vmatprep.subr.mxu0 0.0
      %1775 = vmatpush1.msra.mxu0 0.0
      %1776 = vmatprep.subr.mxu0 0.0
      %1777 = vmatpush1.msra.mxu0 0.0
      %1778 = vmatprep.subr.mxu0 0.0
      %1779 = vmatpush1.msra.mxu0 0.0
      %1780 = vmatprep.subr.mxu0 0.0
      %1781 = vmatpush1.msra.mxu0 0.0
      %1782 = vmatprep.subr.mxu0 0.0
      %1783 = vmatpush1.msra.mxu0 0.0
      %1784 = vmatprep.subr.mxu0 0.0
      %1785 = vmatpush1.msra.mxu0 0.0
      %1786 = vmatprep.subr.mxu0 0.0
      %1787 = vmatpush1.msra.mxu0 0.0
      %1788 = vmatprep.subr.mxu0 0.0
      %1789 = vmatpush1.msra.mxu0 0.0
      %1790 = vmatprep.subr.mxu0 0.0
      %1791 = vmatpush1.msra.mxu0 0.0
      %1792 = vmatprep.subr.mxu0 0.0
      %1793 = vmatpush1.msra.mxu0 0.0
      %1794 = vmatprep.subr.mxu0 0.0
      %1795 = vmatpush1.msra.mxu0 0.0
      %1796 = vmatprep.mubr.f32.mxu0 0.0
      %1797 = vmatmul.mubr.f32.gmra.mrb[0].mxu0 %v1730
      %v1798 = vpop.f32.mrb[0].mxu0
      %v1799 = vadd.f32 %v1727, %v1798
      %v1800 = vpop.f32.mrb[0].mxu0
      %1801 = vdwg.mxu0
      %1803 = vrot.lane.b32.xlu0 %v1799, 120
      %v1804 = vpop.permute.xlu0 %1803
      %v1805 = vsel %vm705, %v1799, 0
      %v1807 = vsel %vm705, %v1804, 0
      %1809 = vmatprep.subr.mxu0 0.0
      %1810 = vmatpush1.xpose.msra.mxu0 %v1807
      %1811 = vmatprep.subr.mxu0 0.0
      %1812 = vmatpush1.xpose.msra.mxu0 0.0
      %1813 = vmatprep.subr.mxu0 0.0
      %1814 = vmatpush1.xpose.msra.mxu0 0.0
      %1815 = vmatprep.subr.mxu0 0.0
      %1816 = vmatpush1.xpose.msra.mxu0 0.0
      %1817 = vmatprep.subr.mxu0 0.0
      %1818 = vmatpush1.xpose.msra.mxu0 0.0
      %1819 = vmatprep.subr.mxu0 0.0
      %1820 = vmatpush1.xpose.msra.mxu0 0.0
      %1821 = vmatprep.subr.mxu0 0.0
      %1822 = vmatpush1.xpose.msra.mxu0 0.0
      %1823 = vmatprep.subr.mxu0 0.0
      %1824 = vmatpush1.xpose.msra.mxu0 0.0
      %1825 = vmatprep.subr.mxu0 0.0
      %1826 = vmatpush1.xpose.msra.mxu0 0.0
      %1827 = vmatprep.subr.mxu0 0.0
      %1828 = vmatpush1.xpose.msra.mxu0 0.0
      %1829 = vmatprep.subr.mxu0 0.0
      %1830 = vmatpush1.xpose.msra.mxu0 0.0
      %1831 = vmatprep.subr.mxu0 0.0
      %1832 = vmatpush1.xpose.msra.mxu0 0.0
      %1833 = vmatprep.subr.mxu0 0.0
      %1834 = vmatpush1.xpose.msra.mxu0 0.0
      %1835 = vmatprep.subr.mxu0 0.0
      %1836 = vmatpush1.xpose.msra.mxu0 0.0
      %1837 = vmatprep.subr.mxu0 0.0
      %1838 = vmatpush1.xpose.msra.mxu0 0.0
      %1839 = vmatprep.subr.mxu0 0.0
      %1840 = vmatpush1.xpose.msra.mxu0 0.0
      %1841 = vmatprep.subr.mxu0 0.0
      %1842 = vmatpush1.xpose.msra.mxu0 0.0
      %1843 = vmatprep.subr.mxu0 0.0
      %1844 = vmatpush1.xpose.msra.mxu0 0.0
      %1845 = vmatprep.subr.mxu0 0.0
      %1846 = vmatpush1.xpose.msra.mxu0 0.0
      %1847 = vmatprep.subr.mxu0 0.0
      %1848 = vmatpush1.xpose.msra.mxu0 0.0
      %1849 = vmatprep.subr.mxu0 0.0
      %1850 = vmatpush1.xpose.msra.mxu0 0.0
      %1851 = vmatprep.subr.mxu0 0.0
      %1852 = vmatpush1.xpose.msra.mxu0 0.0
      %1853 = vmatprep.subr.mxu0 0.0
      %1854 = vmatpush1.xpose.msra.mxu0 0.0
      %1855 = vmatprep.subr.mxu0 0.0
      %1856 = vmatpush1.xpose.msra.mxu0 0.0
      %1857 = vmatprep.subr.mxu0 0.0
      %1858 = vmatpush1.xpose.msra.mxu0 0.0
      %1859 = vmatprep.subr.mxu0 0.0
      %1860 = vmatpush1.xpose.msra.mxu0 0.0
      %1861 = vmatprep.subr.mxu0 0.0
      %1862 = vmatpush1.xpose.msra.mxu0 0.0
      %1863 = vmatprep.subr.mxu0 0.0
      %1864 = vmatpush1.xpose.msra.mxu0 0.0
      %1865 = vmatprep.subr.mxu0 0.0
      %1866 = vmatpush1.xpose.msra.mxu0 0.0
      %1867 = vmatprep.subr.mxu0 0.0
      %1868 = vmatpush1.xpose.msra.mxu0 0.0
      %1869 = vmatprep.subr.mxu0 0.0
      %1870 = vmatpush1.xpose.msra.mxu0 0.0
      %1871 = vmatprep.subr.mxu0 0.0
      %1872 = vmatpush1.xpose.msra.mxu0 0.0
      %1873 = vmatprep.mubr.f32.mxu0 0.0
      %1874 = vmatmul.mubr.f32.gmra.mrb[0].mxu0 %v1805
      %v1875 = vpop.f32.mrb[0].mxu0
      %v1876 = vadd.f32 0.0, %v1875
      %v1877 = vpop.f32.mrb[0].mxu0
      %1878 = vdwg.mxu0
      %v1879 = vmul.f32 %v1876, 0.35355338
      %v1880 = vadd.f32 %v1879, %v785
      %v1881 = vsel %vm705, %v1880, -inf
      %1882 = vmax.xlane.f32.xlu0 %v1881
      %v1883 = vpop.xlane.xlu0 %1882
      %v1884 = vsub.f32 %v1880, %v1883
      %v1885 = vmul.f32 %v1884, 1.442695
      %v1886 = vpow.pop %v1885
      %v1887 = vsel %vm705, %v1886, 0.0
      %1888 = vadd.xlane.f32.xlu0 %v1887
      %v1889 = vpop.xlane.xlu0 %1888
      %v1890 = vrcp.pop %v1889
      %v1891 = vmul.f32 %v1886, %v1890
      %1892 = vrot.lane.b32.xlu0 %v1799, 112
      %v1893 = vpop.permute.xlu0 %1892
      %v1896 = vsel %vm705, %v1891, 0
      %1898 = vmatprep.subr.mxu0 0.0
      %1899 = vmatpush1.msra.mxu0 %v1893
      %1900 = vmatprep.subr.mxu0 0.0
      %1901 = vmatpush1.msra.mxu0 0.0
      %1902 = vmatprep.subr.mxu0 0.0
      %1903 = vmatpush1.msra.mxu0 0.0
      %1904 = vmatprep.subr.mxu0 0.0
      %1905 = vmatpush1.msra.mxu0 0.0
      %1906 = vmatprep.subr.mxu0 0.0
      %1907 = vmatpush1.msra.mxu0 0.0
      %1908 = vmatprep.subr.mxu0 0.0
      %1909 = vmatpush1.msra.mxu0 0.0
      %1910 = vmatprep.subr.mxu0 0.0
      %1911 = vmatpush1.msra.mxu0 0.0
      %1912 = vmatprep.subr.mxu0 0.0
      %1913 = vmatpush1.msra.mxu0 0.0
      %1914 = vmatprep.subr.mxu0 0.0
      %1915 = vmatpush1.msra.mxu0 0.0
      %1916 = vmatprep.subr.mxu0 0.0
      %1917 = vmatpush1.msra.mxu0 0.0
      %1918 = vmatprep.subr.mxu0 0.0
      %1919 = vmatpush1.msra.mxu0 0.0
      %1920 = vmatprep.subr.mxu0 0.0
      %1921 = vmatpush1.msra.mxu0 0.0
      %1922 = vmatprep.subr.mxu0 0.0
      %1923 = vmatpush1.msra.mxu0 0.0
      %1924 = vmatprep.subr.mxu0 0.0
      %1925 = vmatpush1.msra.mxu0 0.0
      %1926 = vmatprep.subr.mxu0 0.0
      %1927 = vmatpush1.msra.mxu0 0.0
      %1928 = vmatprep.subr.mxu0 0.0
      %1929 = vmatpush1.msra.mxu0 0.0
      %1930 = vmatprep.subr.mxu0 0.0
      %1931 = vmatpush1.msra.mxu0 0.0
      %1932 = vmatprep.subr.mxu0 0.0
      %1933 = vmatpush1.msra.mxu0 0.0
      %1934 = vmatprep.subr.mxu0 0.0
      %1935 = vmatpush1.msra.mxu0 0.0
      %1936 = vmatprep.subr.mxu0 0.0
      %1937 = vmatpush1.msra.mxu0 0.0
      %1938 = vmatprep.subr.mxu0 0.0
      %1939 = vmatpush1.msra.mxu0 0.0
      %1940 = vmatprep.subr.mxu0 0.0
      %1941 = vmatpush1.msra.mxu0 0.0
      %1942 = vmatprep.subr.mxu0 0.0
      %1943 = vmatpush1.msra.mxu0 0.0
      %1944 = vmatprep.subr.mxu0 0.0
      %1945 = vmatpush1.msra.mxu0 0.0
      %1946 = vmatprep.subr.mxu0 0.0
      %1947 = vmatpush1.msra.mxu0 0.0
      %1948 = vmatprep.subr.mxu0 0.0
      %1949 = vmatpush1.msra.mxu0 0.0
      %1950 = vmatprep.subr.mxu0 0.0
      %1951 = vmatpush1.msra.mxu0 0.0
      %1952 = vmatprep.subr.mxu0 0.0
      %1953 = vmatpush1.msra.mxu0 0.0
      %1954 = vmatprep.subr.mxu0 0.0
      %1955 = vmatpush1.msra.mxu0 0.0
      %1956 = vmatprep.subr.mxu0 0.0
      %1957 = vmatpush1.msra.mxu0 0.0
      %1958 = vmatprep.subr.mxu0 0.0
      %1959 = vmatpush1.msra.mxu0 0.0
      %1960 = vmatprep.subr.mxu0 0.0
      %1961 = vmatpush1.msra.mxu0 0.0
      %1962 = vmatprep.mubr.f32.mxu0 0.0
      %1963 = vmatmul.mubr.f32.gmra.mrb[0].mxu0 %v1896
      %v1964 = vpop.f32.mrb[0].mxu0
      %v1965 = vadd.f32 0.0, %v1964
      %v1966 = vpop.f32.mrb[0].mxu0
      %1967 = vdwg.mxu0
      %1968 = vrot.lane.b32.xlu0 %v1799, 104
      %v1969 = vpop.permute.xlu0 %1968
      %1970 = vrot.lane.b32.xlu0 %v1799, 96
      %v1971 = vpop.permute.xlu0 %1970
      %v1972 = vsel %vm705, %v1969, 0
      %v1974 = vsel %vm705, %v1971, 0
      %1976 = vmatprep.subr.mxu0 0.0
      %1977 = vmatpush1.xpose.msra.mxu0 %v1974
      %1978 = vmatprep.subr.mxu0 0.0
      %1979 = vmatpush1.xpose.msra.mxu0 0.0
      %1980 = vmatprep.subr.mxu0 0.0
      %1981 = vmatpush1.xpose.msra.mxu0 0.0
      %1982 = vmatprep.subr.mxu0 0.0
      %1983 = vmatpush1.xpose.msra.mxu0 0.0
      %1984 = vmatprep.subr.mxu0 0.0
      %1985 = vmatpush1.xpose.msra.mxu0 0.0
      %1986 = vmatprep.subr.mxu0 0.0
      %1987 = vmatpush1.xpose.msra.mxu0 0.0
      %1988 = vmatprep.subr.mxu0 0.0
      %1989 = vmatpush1.xpose.msra.mxu0 0.0
      %1990 = vmatprep.subr.mxu0 0.0
      %1991 = vmatpush1.xpose.msra.mxu0 0.0
      %1992 = vmatprep.subr.mxu0 0.0
      %1993 = vmatpush1.xpose.msra.mxu0 0.0
      %1994 = vmatprep.subr.mxu0 0.0
      %1995 = vmatpush1.xpose.msra.mxu0 0.0
      %1996 = vmatprep.subr.mxu0 0.0
      %1997 = vmatpush1.xpose.msra.mxu0 0.0
      %1998 = vmatprep.subr.mxu0 0.0
      %1999 = vmatpush1.xpose.msra.mxu0 0.0
      %2000 = vmatprep.subr.mxu0 0.0
      %2001 = vmatpush1.xpose.msra.mxu0 0.0
      %2002 = vmatprep.subr.mxu0 0.0
      %2003 = vmatpush1.xpose.msra.mxu0 0.0
      %2004 = vmatprep.subr.mxu0 0.0
      %2005 = vmatpush1.xpose.msra.mxu0 0.0
      %2006 = vmatprep.subr.mxu0 0.0
      %2007 = vmatpush1.xpose.msra.mxu0 0.0
      %2008 = vmatprep.subr.mxu0 0.0
      %2009 = vmatpush1.xpose.msra.mxu0 0.0
      %2010 = vmatprep.subr.mxu0 0.0
      %2011 = vmatpush1.xpose.msra.mxu0 0.0
      %2012 = vmatprep.subr.mxu0 0.0
      %2013 = vmatpush1.xpose.msra.mxu0 0.0
      %2014 = vmatprep.subr.mxu0 0.0
      %2015 = vmatpush1.xpose.msra.mxu0 0.0
      %2016 = vmatprep.subr.mxu0 0.0
      %2017 = vmatpush1.xpose.msra.mxu0 0.0
      %2018 = vmatprep.subr.mxu0 0.0
      %2019 = vmatpush1.xpose.msra.mxu0 0.0
      %2020 = vmatprep.subr.mxu0 0.0
      %2021 = vmatpush1.xpose.msra.mxu0 0.0
      %2022 = vmatprep.subr.mxu0 0.0
      %2023 = vmatpush1.xpose.msra.mxu0 0.0
      %2024 = vmatprep.subr.mxu0 0.0
      %2025 = vmatpush1.xpose.msra.mxu0 0.0
      %2026 = vmatprep.subr.mxu0 0.0
      %2027 = vmatpush1.xpose.msra.mxu0 0.0
      %2028 = vmatprep.subr.mxu0 0.0
      %2029 = vmatpush1.xpose.msra.mxu0 0.0
      %2030 = vmatprep.subr.mxu0 0.0
      %2031 = vmatpush1.xpose.msra.mxu0 0.0
      %2032 = vmatprep.subr.mxu0 0.0
      %2033 = vmatpush1.xpose.msra.mxu0 0.0
      %2034 = vmatprep.subr.mxu0 0.0
      %2035 = vmatpush1.xpose.msra.mxu0 0.0
      %2036 = vmatprep.subr.mxu0 0.0
      %2037 = vmatpush1.xpose.msra.mxu0 0.0
      %2038 = vmatprep.subr.mxu0 0.0
      %2039 = vmatpush1.xpose.msra.mxu0 0.0
      %2040 = vmatprep.mubr.f32.mxu0 0.0
      %2041 = vmatmul.mubr.f32.gmra.mrb[0].mxu0 %v1972
      %v2042 = vpop.f32.mrb[0].mxu0
      %v2043 = vadd.f32 0.0, %v2042
      %v2044 = vpop.f32.mrb[0].mxu0
      %2045 = vdwg.mxu0
      %v2046 = vmul.f32 %v2043, 0.35355338
      %v2047 = vadd.f32 %v2046, %v785
      %v2048 = vsel %vm705, %v2047, -inf
      %2049 = vmax.xlane.f32.xlu0 %v2048
      %v2050 = vpop.xlane.xlu0 %2049
      %v2051 = vsub.f32 %v2047, %v2050
      %v2052 = vmul.f32 %v2051, 1.442695
      %v2053 = vpow.pop %v2052
      %v2054 = vsel %vm705, %v2053, 0.0
      %2055 = vadd.xlane.f32.xlu0 %v2054
      %v2056 = vpop.xlane.xlu0 %2055
      %v2057 = vrcp.pop %v2056
      %v2058 = vmul.f32 %v2053, %v2057
      %2059 = vrot.lane.b32.xlu0 %v1799, 88
      %v2060 = vpop.permute.xlu0 %2059
      %v2063 = vsel %vm705, %v2058, 0
      %2065 = vmatprep.subr.mxu0 0.0
      %2066 = vmatpush1.msra.mxu0 %v2060
      %2067 = vmatprep.subr.mxu0 0.0
      %2068 = vmatpush1.msra.mxu0 0.0
      %2069 = vmatprep.subr.mxu0 0.0
      %2070 = vmatpush1.msra.mxu0 0.0
      %2071 = vmatprep.subr.mxu0 0.0
      %2072 = vmatpush1.msra.mxu0 0.0
      %2073 = vmatprep.subr.mxu0 0.0
      %2074 = vmatpush1.msra.mxu0 0.0
      %2075 = vmatprep.subr.mxu0 0.0
      %2076 = vmatpush1.msra.mxu0 0.0
      %2077 = vmatprep.subr.mxu0 0.0
      %2078 = vmatpush1.msra.mxu0 0.0
      %2079 = vmatprep.subr.mxu0 0.0
      %2080 = vmatpush1.msra.mxu0 0.0
      %2081 = vmatprep.subr.mxu0 0.0
      %2082 = vmatpush1.msra.mxu0 0.0
      %2083 = vmatprep.subr.mxu0 0.0
      %2084 = vmatpush1.msra.mxu0 0.0
      %2085 = vmatprep.subr.mxu0 0.0
      %2086 = vmatpush1.msra.mxu0 0.0
      %2087 = vmatprep.subr.mxu0 0.0
      %2088 = vmatpush1.msra.mxu0 0.0
      %2089 = vmatprep.subr.mxu0 0.0
      %2090 = vmatpush1.msra.mxu0 0.0
      %2091 = vmatprep.subr.mxu0 0.0
      %2092 = vmatpush1.msra.mxu0 0.0
      %2093 = vmatprep.subr.mxu0 0.0
      %2094 = vmatpush1.msra.mxu0 0.0
      %2095 = vmatprep.subr.mxu0 0.0
      %2096 = vmatpush1.msra.mxu0 0.0
      %2097 = vmatprep.subr.mxu0 0.0
      %2098 = vmatpush1.msra.mxu0 0.0
      %2099 = vmatprep.subr.mxu0 0.0
      %2100 = vmatpush1.msra.mxu0 0.0
      %2101 = vmatprep.subr.mxu0 0.0
      %2102 = vmatpush1.msra.mxu0 0.0
      %2103 = vmatprep.subr.mxu0 0.0
      %2104 = vmatpush1.msra.mxu0 0.0
      %2105 = vmatprep.subr.mxu0 0.0
      %2106 = vmatpush1.msra.mxu0 0.0
      %2107 = vmatprep.subr.mxu0 0.0
      %2108 = vmatpush1.msra.mxu0 0.0
      %2109 = vmatprep.subr.mxu0 0.0
      %2110 = vmatpush1.msra.mxu0 0.0
      %2111 = vmatprep.subr.mxu0 0.0
      %2112 = vmatpush1.msra.mxu0 0.0
      %2113 = vmatprep.subr.mxu0 0.0
      %2114 = vmatpush1.msra.mxu0 0.0
      %2115 = vmatprep.subr.mxu0 0.0
      %2116 = vmatpush1.msra.mxu0 0.0
      %2117 = vmatprep.subr.mxu0 0.0
      %2118 = vmatpush1.msra.mxu0 0.0
      %2119 = vmatprep.subr.mxu0 0.0
      %2120 = vmatpush1.msra.mxu0 0.0
      %2121 = vmatprep.subr.mxu0 0.0
      %2122 = vmatpush1.msra.mxu0 0.0
      %2123 = vmatprep.subr.mxu0 0.0
      %2124 = vmatpush1.msra.mxu0 0.0
      %2125 = vmatprep.subr.mxu0 0.0
      %2126 = vmatpush1.msra.mxu0 0.0
      %2127 = vmatprep.subr.mxu0 0.0
      %2128 = vmatpush1.msra.mxu0 0.0
      %2129 = vmatprep.mubr.f32.mxu0 0.0
      %2130 = vmatmul.mubr.f32.gmra.mrb[0].mxu0 %v2063
      %v2131 = vpop.f32.mrb[0].mxu0
      %v2132 = vadd.f32 0.0, %v2131
      %v2133 = vpop.f32.mrb[0].mxu0
      %2134 = vdwg.mxu0
      %2135 = vrot.lane.b32.xlu0 %v1799, 80
      %v2136 = vpop.permute.xlu0 %2135
      %2137 = vrot.lane.b32.xlu0 %v1799, 72
      %v2138 = vpop.permute.xlu0 %2137
      %v2139 = vsel %vm705, %v2136, 0
      %v2141 = vsel %vm705, %v2138, 0
      %2143 = vmatprep.subr.mxu0 0.0
      %2144 = vmatpush1.xpose.msra.mxu0 %v2141
      %2145 = vmatprep.subr.mxu0 0.0
      %2146 = vmatpush1.xpose.msra.mxu0 0.0
      %2147 = vmatprep.subr.mxu0 0.0
      %2148 = vmatpush1.xpose.msra.mxu0 0.0
      %2149 = vmatprep.subr.mxu0 0.0
      %2150 = vmatpush1.xpose.msra.mxu0 0.0
      %2151 = vmatprep.subr.mxu0 0.0
      %2152 = vmatpush1.xpose.msra.mxu0 0.0
      %2153 = vmatprep.subr.mxu0 0.0
      %2154 = vmatpush1.xpose.msra.mxu0 0.0
      %2155 = vmatprep.subr.mxu0 0.0
      %2156 = vmatpush1.xpose.msra.mxu0 0.0
      %2157 = vmatprep.subr.mxu0 0.0
      %2158 = vmatpush1.xpose.msra.mxu0 0.0
      %2159 = vmatprep.subr.mxu0 0.0
      %2160 = vmatpush1.xpose.msra.mxu0 0.0
      %2161 = vmatprep.subr.mxu0 0.0
      %2162 = vmatpush1.xpose.msra.mxu0 0.0
      %2163 = vmatprep.subr.mxu0 0.0
      %2164 = vmatpush1.xpose.msra.mxu0 0.0
      %2165 = vmatprep.subr.mxu0 0.0
      %2166 = vmatpush1.xpose.msra.mxu0 0.0
      %2167 = vmatprep.subr.mxu0 0.0
      %2168 = vmatpush1.xpose.msra.mxu0 0.0
      %2169 = vmatprep.subr.mxu0 0.0
      %2170 = vmatpush1.xpose.msra.mxu0 0.0
      %2171 = vmatprep.subr.mxu0 0.0
      %2172 = vmatpush1.xpose.msra.mxu0 0.0
      %2173 = vmatprep.subr.mxu0 0.0
      %2174 = vmatpush1.xpose.msra.mxu0 0.0
      %2175 = vmatprep.subr.mxu0 0.0
      %2176 = vmatpush1.xpose.msra.mxu0 0.0
      %2177 = vmatprep.subr.mxu0 0.0
      %2178 = vmatpush1.xpose.msra.mxu0 0.0
      %2179 = vmatprep.subr.mxu0 0.0
      %2180 = vmatpush1.xpose.msra.mxu0 0.0
      %2181 = vmatprep.subr.mxu0 0.0
      %2182 = vmatpush1.xpose.msra.mxu0 0.0
      %2183 = vmatprep.subr.mxu0 0.0
      %2184 = vmatpush1.xpose.msra.mxu0 0.0
      %2185 = vmatprep.subr.mxu0 0.0
      %2186 = vmatpush1.xpose.msra.mxu0 0.0
      %2187 = vmatprep.subr.mxu0 0.0
      %2188 = vmatpush1.xpose.msra.mxu0 0.0
      %2189 = vmatprep.subr.mxu0 0.0
      %2190 = vmatpush1.xpose.msra.mxu0 0.0
      %2191 = vmatprep.subr.mxu0 0.0
      %2192 = vmatpush1.xpose.msra.mxu0 0.0
      %2193 = vmatprep.subr.mxu0 0.0
      %2194 = vmatpush1.xpose.msra.mxu0 0.0
      %2195 = vmatprep.subr.mxu0 0.0
      %2196 = vmatpush1.xpose.msra.mxu0 0.0
      %2197 = vmatprep.subr.mxu0 0.0
      %2198 = vmatpush1.xpose.msra.mxu0 0.0
      %2199 = vmatprep.subr.mxu0 0.0
      %2200 = vmatpush1.xpose.msra.mxu0 0.0
      %2201 = vmatprep.subr.mxu0 0.0
      %2202 = vmatpush1.xpose.msra.mxu0 0.0
      %2203 = vmatprep.subr.mxu0 0.0
      %2204 = vmatpush1.xpose.msra.mxu0 0.0
      %2205 = vmatprep.subr.mxu0 0.0
      %2206 = vmatpush1.xpose.msra.mxu0 0.0
      %2207 = vmatprep.mubr.f32.mxu0 0.0
      %2208 = vmatmul.mubr.f32.gmra.mrb[0].mxu0 %v2139
      %v2209 = vpop.f32.mrb[0].mxu0
      %v2210 = vadd.f32 0.0, %v2209
      %v2211 = vpop.f32.mrb[0].mxu0
      %2212 = vdwg.mxu0
      %v2213 = vmul.f32 %v2210, 0.35355338
      %v2214 = vadd.f32 %v2213, %v785
      %v2215 = vsel %vm705, %v2214, -inf
      %2216 = vmax.xlane.f32.xlu0 %v2215
      %v2217 = vpop.xlane.xlu0 %2216
      %v2218 = vsub.f32 %v2214, %v2217
      %v2219 = vmul.f32 %v2218, 1.442695
      %v2220 = vpow.pop %v2219
      %v2221 = vsel %vm705, %v2220, 0.0
      %2222 = vadd.xlane.f32.xlu0 %v2221
      %v2223 = vpop.xlane.xlu0 %2222
      %v2224 = vrcp.pop %v2223
      %v2225 = vmul.f32 %v2220, %v2224
      %2226 = vrot.lane.b32.xlu0 %v1799, 64
      %v2227 = vpop.permute.xlu0 %2226
      %v2230 = vsel %vm705, %v2225, 0
      %2232 = vmatprep.subr.mxu0 0.0
      %2233 = vmatpush1.msra.mxu0 %v2227
      %2234 = vmatprep.subr.mxu0 0.0
      %2235 = vmatpush1.msra.mxu0 0.0
      %2236 = vmatprep.subr.mxu0 0.0
      %2237 = vmatpush1.msra.mxu0 0.0
      %2238 = vmatprep.subr.mxu0 0.0
      %2239 = vmatpush1.msra.mxu0 0.0
      %2240 = vmatprep.subr.mxu0 0.0
      %2241 = vmatpush1.msra.mxu0 0.0
      %2242 = vmatprep.subr.mxu0 0.0
      %2243 = vmatpush1.msra.mxu0 0.0
      %2244 = vmatprep.subr.mxu0 0.0
      %2245 = vmatpush1.msra.mxu0 0.0
      %2246 = vmatprep.subr.mxu0 0.0
      %2247 = vmatpush1.msra.mxu0 0.0
      %2248 = vmatprep.subr.mxu0 0.0
      %2249 = vmatpush1.msra.mxu0 0.0
      %2250 = vmatprep.subr.mxu0 0.0
      %2251 = vmatpush1.msra.mxu0 0.0
      %2252 = vmatprep.subr.mxu0 0.0
      %2253 = vmatpush1.msra.mxu0 0.0
      %2254 = vmatprep.subr.mxu0 0.0
      %2255 = vmatpush1.msra.mxu0 0.0
      %2256 = vmatprep.subr.mxu0 0.0
      %2257 = vmatpush1.msra.mxu0 0.0
      %2258 = vmatprep.subr.mxu0 0.0
      %2259 = vmatpush1.msra.mxu0 0.0
      %2260 = vmatprep.subr.mxu0 0.0
      %2261 = vmatpush1.msra.mxu0 0.0
      %2262 = vmatprep.subr.mxu0 0.0
      %2263 = vmatpush1.msra.mxu0 0.0
      %2264 = vmatprep.subr.mxu0 0.0
      %2265 = vmatpush1.msra.mxu0 0.0
      %2266 = vmatprep.subr.mxu0 0.0
      %2267 = vmatpush1.msra.mxu0 0.0
      %2268 = vmatprep.subr.mxu0 0.0
      %2269 = vmatpush1.msra.mxu0 0.0
      %2270 = vmatprep.subr.mxu0 0.0
      %2271 = vmatpush1.msra.mxu0 0.0
      %2272 = vmatprep.subr.mxu0 0.0
      %2273 = vmatpush1.msra.mxu0 0.0
      %2274 = vmatprep.subr.mxu0 0.0
      %2275 = vmatpush1.msra.mxu0 0.0
      %2276 = vmatprep.subr.mxu0 0.0
      %2277 = vmatpush1.msra.mxu0 0.0
      %2278 = vmatprep.subr.mxu0 0.0
      %2279 = vmatpush1.msra.mxu0 0.0
      %2280 = vmatprep.subr.mxu0 0.0
      %2281 = vmatpush1.msra.mxu0 0.0
      %2282 = vmatprep.subr.mxu0 0.0
      %2283 = vmatpush1.msra.mxu0 0.0
      %2284 = vmatprep.subr.mxu0 0.0
      %2285 = vmatpush1.msra.mxu0 0.0
      %2286 = vmatprep.subr.mxu0 0.0
      %2287 = vmatpush1.msra.mxu0 0.0
      %2288 = vmatprep.subr.mxu0 0.0
      %2289 = vmatpush1.msra.mxu0 0.0
      %2290 = vmatprep.subr.mxu0 0.0
      %2291 = vmatpush1.msra.mxu0 0.0
      %2292 = vmatprep.subr.mxu0 0.0
      %2293 = vmatpush1.msra.mxu0 0.0
      %2294 = vmatprep.subr.mxu0 0.0
      %2295 = vmatpush1.msra.mxu0 0.0
      %2296 = vmatprep.mubr.f32.mxu0 0.0
      %2297 = vmatmul.mubr.f32.gmra.mrb[0].mxu0 %v2230
      %v2298 = vpop.f32.mrb[0].mxu0
      %v2299 = vadd.f32 0.0, %v2298
      %v2300 = vpop.f32.mrb[0].mxu0
      %2301 = vdwg.mxu0
      %2302 = vrot.lane.b32.xlu0 %v1799, 56
      %v2303 = vpop.permute.xlu0 %2302
      %2304 = vrot.lane.b32.xlu0 %v1799, 48
      %v2305 = vpop.permute.xlu0 %2304
      %v2306 = vsel %vm705, %v2303, 0
      %v2308 = vsel %vm705, %v2305, 0
      %2310 = vmatprep.subr.mxu0 0.0
      %2311 = vmatpush1.xpose.msra.mxu0 %v2308
      %2312 = vmatprep.subr.mxu0 0.0
      %2313 = vmatpush1.xpose.msra.mxu0 0.0
      %2314 = vmatprep.subr.mxu0 0.0
      %2315 = vmatpush1.xpose.msra.mxu0 0.0
      %2316 = vmatprep.subr.mxu0 0.0
      %2317 = vmatpush1.xpose.msra.mxu0 0.0
      %2318 = vmatprep.subr.mxu0 0.0
      %2319 = vmatpush1.xpose.msra.mxu0 0.0
      %2320 = vmatprep.subr.mxu0 0.0
      %2321 = vmatpush1.xpose.msra.mxu0 0.0
      %2322 = vmatprep.subr.mxu0 0.0
      %2323 = vmatpush1.xpose.msra.mxu0 0.0
      %2324 = vmatprep.subr.mxu0 0.0
      %2325 = vmatpush1.xpose.msra.mxu0 0.0
      %2326 = vmatprep.subr.mxu0 0.0
      %2327 = vmatpush1.xpose.msra.mxu0 0.0
      %2328 = vmatprep.subr.mxu0 0.0
      %2329 = vmatpush1.xpose.msra.mxu0 0.0
      %2330 = vmatprep.subr.mxu0 0.0
      %2331 = vmatpush1.xpose.msra.mxu0 0.0
      %2332 = vmatprep.subr.mxu0 0.0
      %2333 = vmatpush1.xpose.msra.mxu0 0.0
      %2334 = vmatprep.subr.mxu0 0.0
      %2335 = vmatpush1.xpose.msra.mxu0 0.0
      %2336 = vmatprep.subr.mxu0 0.0
      %2337 = vmatpush1.xpose.msra.mxu0 0.0
      %2338 = vmatprep.subr.mxu0 0.0
      %2339 = vmatpush1.xpose.msra.mxu0 0.0
      %2340 = vmatprep.subr.mxu0 0.0
      %2341 = vmatpush1.xpose.msra.mxu0 0.0
      %2342 = vmatprep.subr.mxu0 0.0
      %2343 = vmatpush1.xpose.msra.mxu0 0.0
      %2344 = vmatprep.subr.mxu0 0.0
      %2345 = vmatpush1.xpose.msra.mxu0 0.0
      %2346 = vmatprep.subr.mxu0 0.0
      %2347 = vmatpush1.xpose.msra.mxu0 0.0
      %2348 = vmatprep.subr.mxu0 0.0
      %2349 = vmatpush1.xpose.msra.mxu0 0.0
      %2350 = vmatprep.subr.mxu0 0.0
      %2351 = vmatpush1.xpose.msra.mxu0 0.0
      %2352 = vmatprep.subr.mxu0 0.0
      %2353 = vmatpush1.xpose.msra.mxu0 0.0
      %2354 = vmatprep.subr.mxu0 0.0
      %2355 = vmatpush1.xpose.msra.mxu0 0.0
      %2356 = vmatprep.subr.mxu0 0.0
      %2357 = vmatpush1.xpose.msra.mxu0 0.0
      %2358 = vmatprep.subr.mxu0 0.0
      %2359 = vmatpush1.xpose.msra.mxu0 0.0
      %2360 = vmatprep.subr.mxu0 0.0
      %2361 = vmatpush1.xpose.msra.mxu0 0.0
      %2362 = vmatprep.subr.mxu0 0.0
      %2363 = vmatpush1.xpose.msra.mxu0 0.0
      %2364 = vmatprep.subr.mxu0 0.0
      %2365 = vmatpush1.xpose.msra.mxu0 0.0
      %2366 = vmatprep.subr.mxu0 0.0
      %2367 = vmatpush1.xpose.msra.mxu0 0.0
      %2368 = vmatprep.subr.mxu0 0.0
      %2369 = vmatpush1.xpose.msra.mxu0 0.0
      %2370 = vmatprep.subr.mxu0 0.0
      %2371 = vmatpush1.xpose.msra.mxu0 0.0
      %2372 = vmatprep.subr.mxu0 0.0
      %2373 = vmatpush1.xpose.msra.mxu0 0.0
      %2374 = vmatprep.mubr.f32.mxu0 0.0
      %2375 = vmatmul.mubr.f32.gmra.mrb[0].mxu0 %v2306
      %v2376 = vpop.f32.mrb[0].mxu0
      %v2377 = vadd.f32 0.0, %v2376
      %v2378 = vpop.f32.mrb[0].mxu0
      %2379 = vdwg.mxu0
      %v2380 = vmul.f32 %v2377, 0.35355338
      %v2381 = vadd.f32 %v2380, %v785
      %v2382 = vsel %vm705, %v2381, -inf
      %2383 = vmax.xlane.f32.xlu0 %v2382
      %v2384 = vpop.xlane.xlu0 %2383
      %v2385 = vsub.f32 %v2381, %v2384
      %v2386 = vmul.f32 %v2385, 1.442695
      %v2387 = vpow.pop %v2386
      %v2388 = vsel %vm705, %v2387, 0.0
      %2389 = vadd.xlane.f32.xlu0 %v2388
      %v2390 = vpop.xlane.xlu0 %2389
      %v2391 = vrcp.pop %v2390
      %v2392 = vmul.f32 %v2387, %v2391
      %2393 = vrot.lane.b32.xlu0 %v1799, 40
      %v2394 = vpop.permute.xlu0 %2393
      %v2397 = vsel %vm705, %v2392, 0
      %2399 = vmatprep.subr.mxu0 0.0
      %2400 = vmatpush1.msra.mxu0 %v2394
      %2401 = vmatprep.subr.mxu0 0.0
      %2402 = vmatpush1.msra.mxu0 0.0
      %2403 = vmatprep.subr.mxu0 0.0
      %2404 = vmatpush1.msra.mxu0 0.0
      %2405 = vmatprep.subr.mxu0 0.0
      %2406 = vmatpush1.msra.mxu0 0.0
      %2407 = vmatprep.subr.mxu0 0.0
      %2408 = vmatpush1.msra.mxu0 0.0
      %2409 = vmatprep.subr.mxu0 0.0
      %2410 = vmatpush1.msra.mxu0 0.0
      %2411 = vmatprep.subr.mxu0 0.0
      %2412 = vmatpush1.msra.mxu0 0.0
      %2413 = vmatprep.subr.mxu0 0.0
      %2414 = vmatpush1.msra.mxu0 0.0
      %2415 = vmatprep.subr.mxu0 0.0
      %2416 = vmatpush1.msra.mxu0 0.0
      %2417 = vmatprep.subr.mxu0 0.0
      %2418 = vmatpush1.msra.mxu0 0.0
      %2419 = vmatprep.subr.mxu0 0.0
      %2420 = vmatpush1.msra.mxu0 0.0
      %2421 = vmatprep.subr.mxu0 0.0
      %2422 = vmatpush1.msra.mxu0 0.0
      %2423 = vmatprep.subr.mxu0 0.0
      %2424 = vmatpush1.msra.mxu0 0.0
      %2425 = vmatprep.subr.mxu0 0.0
      %2426 = vmatpush1.msra.mxu0 0.0
      %2427 = vmatprep.subr.mxu0 0.0
      %2428 = vmatpush1.msra.mxu0 0.0
      %2429 = vmatprep.subr.mxu0 0.0
      %2430 = vmatpush1.msra.mxu0 0.0
      %2431 = vmatprep.subr.mxu0 0.0
      %2432 = vmatpush1.msra.mxu0 0.0
      %2433 = vmatprep.subr.mxu0 0.0
      %2434 = vmatpush1.msra.mxu0 0.0
      %2435 = vmatprep.subr.mxu0 0.0
      %2436 = vmatpush1.msra.mxu0 0.0
      %2437 = vmatprep.subr.mxu0 0.0
      %2438 = vmatpush1.msra.mxu0 0.0
      %2439 = vmatprep.subr.mxu0 0.0
      %2440 = vmatpush1.msra.mxu0 0.0
      %2441 = vmatprep.subr.mxu0 0.0
      %2442 = vmatpush1.msra.mxu0 0.0
      %2443 = vmatprep.subr.mxu0 0.0
      %2444 = vmatpush1.msra.mxu0 0.0
      %2445 = vmatprep.subr.mxu0 0.0
      %2446 = vmatpush1.msra.mxu0 0.0
      %2447 = vmatprep.subr.mxu0 0.0
      %2448 = vmatpush1.msra.mxu0 0.0
      %2449 = vmatprep.subr.mxu0 0.0
      %2450 = vmatpush1.msra.mxu0 0.0
      %2451 = vmatprep.subr.mxu0 0.0
      %2452 = vmatpush1.msra.mxu0 0.0
      %2453 = vmatprep.subr.mxu0 0.0
      %2454 = vmatpush1.msra.mxu0 0.0
      %2455 = vmatprep.subr.mxu0 0.0
      %2456 = vmatpush1.msra.mxu0 0.0
      %2457 = vmatprep.subr.mxu0 0.0
      %2458 = vmatpush1.msra.mxu0 0.0
      %2459 = vmatprep.subr.mxu0 0.0
      %2460 = vmatpush1.msra.mxu0 0.0
      %2461 = vmatprep.subr.mxu0 0.0
      %2462 = vmatpush1.msra.mxu0 0.0
      %2463 = vmatprep.mubr.f32.mxu0 0.0
      %2464 = vmatmul.mubr.f32.gmra.mrb[0].mxu0 %v2397
      %v2465 = vpop.f32.mrb[0].mxu0
      %v2466 = vadd.f32 0.0, %v2465
      %v2467 = vpop.f32.mrb[0].mxu0
      %2468 = vdwg.mxu0
      %2470 = vrot.lane.b32.xlu0 %v2132, 8
      %v2471 = vpop.permute.xlu0 %2470
      %2474 = vrot.lane.b32.xlu0 %v2299, 16
      %v2475 = vpop.permute.xlu0 %2474
      %2478 = vrot.lane.b32.xlu0 %v2466, 24
      %v2479 = vpop.permute.xlu0 %2478
      %v2481 = vsel %vm705, %v1965, %v2471
      %v2482 = vsel %vm1389, %v2481, %v2475
      %v2483 = vsel %vm1391, %v2482, %v2479
      %s2484 = scalar_lea.vmem %s6, 32
      %v2485 = vld [vmem:[%s2484] sm:$0xff]
      %v2486 = vld [vmem:[%s2484 + $0x8] sm:$0xff]
      %v2487 = vld [vmem:[%s2484 + $0x10] sm:$0xff]
      %v2488 = vld [vmem:[%s2484 + $0x18] sm:$0xff]
      %s2489 = scalar_lea.vmem %s7, 1
      %v2490 = vld [vmem:[%s2489] sm:$0x1]
      %v2492 = vlaneseq
      %v2493 = vshrl.u32 %v2492, 7
      %v2494 = vsub.s32 0, %v2493
      %v2495 = vrot.slane %v2490, %v2494
      %v2498 = vsel %vm589, %v2483, 0
      %2500 = vmatprep.subr.mxu0 0.0
      %2501 = vmatpush1.msra.mxu0 %v2485
      %2502 = vmatprep.subr.mxu0 0.0
      %2503 = vmatpush1.msra.mxu0 %v2486
      %2504 = vmatprep.subr.mxu0 0.0
      %2505 = vmatpush1.msra.mxu0 %v2487
      %2506 = vmatprep.subr.mxu0 0.0
      %2507 = vmatpush1.msra.mxu0 %v2488
      %2508 = vmatprep.subr.mxu0 0.0
      %2509 = vmatpush1.msra.mxu0 0.0
      %2510 = vmatprep.subr.mxu0 0.0
      %2511 = vmatpush1.msra.mxu0 0.0
      %2512 = vmatprep.subr.mxu0 0.0
      %2513 = vmatpush1.msra.mxu0 0.0
      %2514 = vmatprep.subr.mxu0 0.0
      %2515 = vmatpush1.msra.mxu0 0.0
      %2516 = vmatprep.subr.mxu0 0.0
      %2517 = vmatpush1.msra.mxu0 0.0
      %2518 = vmatprep.subr.mxu0 0.0
      %2519 = vmatpush1.msra.mxu0 0.0
      %2520 = vmatprep.subr.mxu0 0.0
      %2521 = vmatpush1.msra.mxu0 0.0
      %2522 = vmatprep.subr.mxu0 0.0
      %2523 = vmatpush1.msra.mxu0 0.0
      %2524 = vmatprep.subr.mxu0 0.0
      %2525 = vmatpush1.msra.mxu0 0.0
      %2526 = vmatprep.subr.mxu0 0.0
      %2527 = vmatpush1.msra.mxu0 0.0
      %2528 = vmatprep.subr.mxu0 0.0
      %2529 = vmatpush1.msra.mxu0 0.0
      %2530 = vmatprep.subr.mxu0 0.0
      %2531 = vmatpush1.msra.mxu0 0.0
      %2532 = vmatprep.subr.mxu0 0.0
      %2533 = vmatpush1.msra.mxu0 0.0
      %2534 = vmatprep.subr.mxu0 0.0
      %2535 = vmatpush1.msra.mxu0 0.0
      %2536 = vmatprep.subr.mxu0 0.0
      %2537 = vmatpush1.msra.mxu0 0.0
      %2538 = vmatprep.subr.mxu0 0.0
      %2539 = vmatpush1.msra.mxu0 0.0
      %2540 = vmatprep.subr.mxu0 0.0
      %2541 = vmatpush1.msra.mxu0 0.0
      %2542 = vmatprep.subr.mxu0 0.0
      %2543 = vmatpush1.msra.mxu0 0.0
      %2544 = vmatprep.subr.mxu0 0.0
      %2545 = vmatpush1.msra.mxu0 0.0
      %2546 = vmatprep.subr.mxu0 0.0
      %2547 = vmatpush1.msra.mxu0 0.0
      %2548 = vmatprep.subr.mxu0 0.0
      %2549 = vmatpush1.msra.mxu0 0.0
      %2550 = vmatprep.subr.mxu0 0.0
      %2551 = vmatpush1.msra.mxu0 0.0
      %2552 = vmatprep.subr.mxu0 0.0
      %2553 = vmatpush1.msra.mxu0 0.0
      %2554 = vmatprep.subr.mxu0 0.0
      %2555 = vmatpush1.msra.mxu0 0.0
      %2556 = vmatprep.subr.mxu0 0.0
      %2557 = vmatpush1.msra.mxu0 0.0
      %2558 = vmatprep.subr.mxu0 0.0
      %2559 = vmatpush1.msra.mxu0 0.0
      %2560 = vmatprep.subr.mxu0 0.0
      %2561 = vmatpush1.msra.mxu0 0.0
      %2562 = vmatprep.subr.mxu0 0.0
      %2563 = vmatpush1.msra.mxu0 0.0
      %2564 = vmatprep.mubr.f32.mxu0 0.0
      %2565 = vmatmul.mubr.f32.gmra.mrb[0].mxu0 %v2498
      %v2566 = vpop.f32.mrb[0].mxu0
      %v2567 = vadd.f32 %v2495, %v2566
      %v2568 = vpop.f32.mrb[0].mxu0
      %2569 = vdwg.mxu0
      %v2570 = vadd.f32 %v2567, %v1714
      %s2571 = scalar_lea.vmem %s8, 1
      %v2572 = vld [vmem:[%s2571] sm:$0x1]
      %s2573 = scalar_lea.vmem %s9, 1
      %v2574 = vld [vmem:[%s2573] sm:$0x1]
      %v2575 = vsel %vm589, %v2570, 0.0
      %2576 = vadd.xlane.f32.xlu0 %v2575
      %v2577 = vpop.xlane.xlu0 %2576
      %v2578 = vmul.f32 %v2577, %v593
      %v2579 = vsub.f32 %v2570, %v2578
      %v2580 = vmul.f32 %v2579, %v2579
      %v2581 = vsel %vm589, %v2580, 0.0
      %2582 = vadd.xlane.f32.xlu0 %v2581
      %v2583 = vpop.xlane.xlu0 %2582
      %v2584 = vmul.f32 %v2583, %v593
      %v2585 = vadd.f32 %v2584, 1e-12
      %v2586 = vrsqrt.pop %v2585
      %v2587 = vmul.f32 %v2579, %v2586
      %v2589 = vlaneseq
      %v2590 = vshrl.u32 %v2589, 7
      %v2591 = vsub.s32 0, %v2590
      %v2592 = vrot.slane %v2572, %v2591
      %v2594 = vmul.f32 %v2587, %v2592
      %v2596 = vlaneseq
      %v2597 = vshrl.u32 %v2596, 7
      %v2598 = vsub.s32 0, %v2597
      %v2599 = vrot.slane %v2574, %v2598
      %v2601 = vadd.f32 %v2594, %v2599
      %s2602 = scalar_lea.vmem %s10, 32
      %v2603 = vld [vmem:[%s2602] sm:$0xff]
      %v2604 = vld [vmem:[%s2602 + $0x8] sm:$0xff]
      %v2605 = vld [vmem:[%s2602 + $0x10] sm:$0xff]
      %v2606 = vld [vmem:[%s2602 + $0x18] sm:$0xff]
      %s2607 = scalar_lea.vmem %s11, 1
      %v2608 = vld [vmem:[%s2607] sm:$0x1]
      %v2610 = vlaneseq
      %v2611 = vshrl.u32 %v2610, 7
      %v2612 = vsub.s32 0, %v2611
      %v2613 = vrot.slane %v2608, %v2612
      %v2616 = vsel %vm589, %v2601, 0
      %2618 = vmatprep.subr.mxu0 0.0
      %2619 = vmatpush1.msra.mxu0 %v2603
      %2620 = vmatprep.subr.mxu0 0.0
      %2621 = vmatpush1.msra.mxu0 %v2604
      %2622 = vmatprep.subr.mxu0 0.0
      %2623 = vmatpush1.msra.mxu0 %v2605
      %2624 = vmatprep.subr.mxu0 0.0
      %2625 = vmatpush1.msra.mxu0 %v2606
      %2626 = vmatprep.subr.mxu0 0.0
      %2627 = vmatpush1.msra.mxu0 0.0
      %2628 = vmatprep.subr.mxu0 0.0
      %2629 = vmatpush1.msra.mxu0 0.0
      %2630 = vmatprep.subr.mxu0 0.0
      %2631 = vmatpush1.msra.mxu0 0.0
      %2632 = vmatprep.subr.mxu0 0.0
      %2633 = vmatpush1.msra.mxu0 0.0
      %2634 = vmatprep.subr.mxu0 0.0
      %2635 = vmatpush1.msra.mxu0 0.0
      %2636 = vmatprep.subr.mxu0 0.0
      %2637 = vmatpush1.msra.mxu0 0.0
      %2638 = vmatprep.subr.mxu0 0.0
      %2639 = vmatpush1.msra.mxu0 0.0
      %2640 = vmatprep.subr.mxu0 0.0
      %2641 = vmatpush1.msra.mxu0 0.0
      %2642 = vmatprep.subr.mxu0 0.0
      %2643 = vmatpush1.msra.mxu0 0.0
      %2644 = vmatprep.subr.mxu0 0.0
      %2645 = vmatpush1.msra.mxu0 0.0
      %2646 = vmatprep.subr.mxu0 0.0
      %2647 = vmatpush1.msra.mxu0 0.0
      %2648 = vmatprep.subr.mxu0 0.0
      %2649 = vmatpush1.msra.mxu0 0.0
      %2650 = vmatprep.subr.mxu0 0.0
      %2651 = vmatpush1.msra.mxu0 0.0
      %2652 = vmatprep.subr.mxu0 0.0
      %2653 = vmatpush1.msra.mxu0 0.0
      %2654 = vmatprep.subr.mxu0 0.0
      %2655 = vmatpush1.msra.mxu0 0.0
      %2656 = vmatprep.subr.mxu0 0.0
      %2657 = vmatpush1.msra.mxu0 0.0
      %2658 = vmatprep.subr.mxu0 0.0
      %2659 = vmatpush1.msra.mxu0 0.0
      %2660 = vmatprep.subr.mxu0 0.0
      %2661 = vmatpush1.msra.mxu0 0.0
      %2662 = vmatprep.subr.mxu0 0.0
      %2663 = vmatpush1.msra.mxu0 0.0
      %2664 = vmatprep.subr.mxu0 0.0
      %2665 = vmatpush1.msra.mxu0 0.0
      %2666 = vmatprep.subr.mxu0 0.0
      %2667 = vmatpush1.msra.mxu0 0.0
      %2668 = vmatprep.subr.mxu0 0.0
      %2669 = vmatpush1.msra.mxu0 0.0
      %2670 = vmatprep.subr.mxu0 0.0
      %2671 = vmatpush1.msra.mxu0 0.0
      %2672 = vmatprep.subr.mxu0 0.0
      %2673 = vmatpush1.msra.mxu0 0.0
      %2674 = vmatprep.subr.mxu0 0.0
      %2675 = vmatpush1.msra.mxu0 0.0
      %2676 = vmatprep.subr.mxu0 0.0
      %2677 = vmatpush1.msra.mxu0 0.0
      %2678 = vmatprep.subr.mxu0 0.0
      %2679 = vmatpush1.msra.mxu0 0.0
      %2680 = vmatprep.subr.mxu0 0.0
      %2681 = vmatpush1.msra.mxu0 0.0
      %2682 = vmatprep.mubr.f32.mxu0 0.0
      %2683 = vmatmul.mubr.f32.gmra.mrb[0].mxu0 %v2616
      %v2684 = vpop.f32.mrb[0].mxu0
      %v2685 = vadd.f32 %v2613, %v2684
      %v2686 = vpop.f32.mrb[0].mxu0
      %2687 = vdwg.mxu0
      %v2688 = vmul.f32 %v2685, 0.5
      %v2689 = vmul.f32 %v2685, 0.70710677
      %v2690 = verf.f32.pop %v2689
      %v2691 = vadd.f32 %v2690, 1.0
      %v2692 = vmul.f32 %v2688, %v2691
      %s2693 = scalar_lea.vmem %s12, 64
      %v2694 = vld [vmem:[%s2693] sm:$0xff]
      %v2695 = vld [vmem:[%s2693 + $0x8] sm:$0xff]
      %v2696 = vld [vmem:[%s2693 + $0x10] sm:$0xff]
      %v2697 = vld [vmem:[%s2693 + $0x18] sm:$0xff]
      %v2698 = vld [vmem:[%s2693 + $0x20] sm:$0xff]
      %v2699 = vld [vmem:[%s2693 + $0x28] sm:$0xff]
      %v2700 = vld [vmem:[%s2693 + $0x30] sm:$0xff]
      %v2701 = vld [vmem:[%s2693 + $0x38] sm:$0xff]
      %s2702 = scalar_lea.vmem %s13, 1
      %v2703 = vld [vmem:[%s2702] sm:$0x1]
      %v2705 = vlaneseq
      %v2706 = vshrl.u32 %v2705, 7
      %v2707 = vsub.s32 0, %v2706
      %v2708 = vrot.slane %v2703, %v2707
      %v2711 = vsel %vm1611, %v2692, 0
      %2713 = vmatprep.subr.mxu0 0.0
      %2714 = vmatpush1.msra.mxu0 %v2694
      %2715 = vmatprep.subr.mxu0 0.0
      %2716 = vmatpush1.msra.mxu0 %v2695
      %2717 = vmatprep.subr.mxu0 0.0
      %2718 = vmatpush1.msra.mxu0 %v2696
      %2719 = vmatprep.subr.mxu0 0.0
      %2720 = vmatpush1.msra.mxu0 %v2697
      %2721 = vmatprep.subr.mxu0 0.0
      %2722 = vmatpush1.msra.mxu0 %v2698
      %2723 = vmatprep.subr.mxu0 0.0
      %2724 = vmatpush1.msra.mxu0 %v2699
      %2725 = vmatprep.subr.mxu0 0.0
      %2726 = vmatpush1.msra.mxu0 %v2700
      %2727 = vmatprep.subr.mxu0 0.0
      %2728 = vmatpush1.msra.mxu0 %v2701
      %2729 = vmatprep.subr.mxu0 0.0
      %2730 = vmatpush1.msra.mxu0 0.0
      %2731 = vmatprep.subr.mxu0 0.0
      %2732 = vmatpush1.msra.mxu0 0.0
      %2733 = vmatprep.subr.mxu0 0.0
      %2734 = vmatpush1.msra.mxu0 0.0
      %2735 = vmatprep.subr.mxu0 0.0
      %2736 = vmatpush1.msra.mxu0 0.0
      %2737 = vmatprep.subr.mxu0 0.0
      %2738 = vmatpush1.msra.mxu0 0.0
      %2739 = vmatprep.subr.mxu0 0.0
      %2740 = vmatpush1.msra.mxu0 0.0
      %2741 = vmatprep.subr.mxu0 0.0
      %2742 = vmatpush1.msra.mxu0 0.0
      %2743 = vmatprep.subr.mxu0 0.0
      %2744 = vmatpush1.msra.mxu0 0.0
      %2745 = vmatprep.subr.mxu0 0.0
      %2746 = vmatpush1.msra.mxu0 0.0
      %2747 = vmatprep.subr.mxu0 0.0
      %2748 = vmatpush1.msra.mxu0 0.0
      %2749 = vmatprep.subr.mxu0 0.0
      %2750 = vmatpush1.msra.mxu0 0.0
      %2751 = vmatprep.subr.mxu0 0.0
      %2752 = vmatpush1.msra.mxu0 0.0
      %2753 = vmatprep.subr.mxu0 0.0
      %2754 = vmatpush1.msra.mxu0 0.0
      %2755 = vmatprep.subr.mxu0 0.0
      %2756 = vmatpush1.msra.mxu0 0.0
      %2757 = vmatprep.subr.mxu0 0.0
      %2758 = vmatpush1.msra.mxu0 0.0
      %2759 = vmatprep.subr.mxu0 0.0
      %2760 = vmatpush1.msra.mxu0 0.0
      %2761 = vmatprep.subr.mxu0 0.0
      %2762 = vmatpush1.msra.mxu0 0.0
      %2763 = vmatprep.subr.mxu0 0.0
      %2764 = vmatpush1.msra.mxu0 0.0
      %2765 = vmatprep.subr.mxu0 0.0
      %2766 = vmatpush1.msra.mxu0 0.0
      %2767 = vmatprep.subr.mxu0 0.0
      %2768 = vmatpush1.msra.mxu0 0.0
      %2769 = vmatprep.subr.mxu0 0.0
      %2770 = vmatpush1.msra.mxu0 0.0
      %2771 = vmatprep.subr.mxu0 0.0
      %2772 = vmatpush1.msra.mxu0 0.0
      %2773 = vmatprep.subr.mxu0 0.0
      %2774 = vmatpush1.msra.mxu0 0.0
      %2775 = vmatprep.subr.mxu0 0.0
      %2776 = vmatpush1.msra.mxu0 0.0
      %2777 = vmatprep.mubr.f32.mxu0 0.0
      %2778 = vmatmul.mubr.f32.gmra.mrb[0].mxu0 %v2711
      %v2779 = vpop.f32.mrb[0].mxu0
      %v2780 = vadd.f32 %v2708, %v2779
      %v2781 = vpop.f32.mrb[0].mxu0
      %2782 = vdwg.mxu0
      %v2783 = vadd.f32 %v2780, %v2601
      %s2784 = scalar_lea.vmem %s14, 1
      %v2785 = vld [vmem:[%s2784] sm:$0x1]
      %s2786 = scalar_lea.vmem %s15, 1
      %v2787 = vld [vmem:[%s2786] sm:$0x1]
      %v2788 = vsel %vm589, %v2783, 0.0
      %2789 = vadd.xlane.f32.xlu0 %v2788
      %v2790 = vpop.xlane.xlu0 %2789
      %v2791 = vmul.f32 %v2790, %v593
      %v2792 = vsub.f32 %v2783, %v2791
      %v2793 = vmul.f32 %v2792, %v2792
      %v2794 = vsel %vm589, %v2793, 0.0
      %2795 = vadd.xlane.f32.xlu0 %v2794
      %v2796 = vpop.xlane.xlu0 %2795
      %v2797 = vmul.f32 %v2796, %v593
      %v2798 = vadd.f32 %v2797, 1e-12
      %v2799 = vrsqrt.pop %v2798
      %v2800 = vmul.f32 %v2792, %v2799
      %v2802 = vlaneseq
      %v2803 = vshrl.u32 %v2802, 7
      %v2804 = vsub.s32 0, %v2803
      %v2805 = vrot.slane %v2785, %v2804
      %v2807 = vmul.f32 %v2800, %v2805
      %v2809 = vlaneseq
      %v2810 = vshrl.u32 %v2809, 7
      %v2811 = vsub.s32 0, %v2810
      %v2812 = vrot.slane %v2787, %v2811
      %v2814 = vadd.f32 %v2807, %v2812
      %v2815 = vadd.f32 %v1715, %v2814
      %s2816 = scalar_lea.vmem %s4, 64
      %v2817 = vld [vmem:[%s2816] sm:$0xff]
      %v2818 = vld [vmem:[%s2816 + $0x8] sm:$0xff]
      %v2819 = vld [vmem:[%s2816 + $0x10] sm:$0xff]
      %v2820 = vld [vmem:[%s2816 + $0x18] sm:$0xff]
      %s2821 = scalar_lea.vmem %s5, 2
      %v2822 = vld [vmem:[%s2821] sm:$0x1]
      %v2824 = vlaneseq
      %v2825 = vshrl.u32 %v2824, 7
      %v2826 = vsub.s32 0, %v2825
      %v2827 = vrot.slane %v2822, %v2826
      %v2830 = vsel %vm589, %v2814, 0
      %2832 = vmatprep.subr.mxu0 0.0
      %2833 = vmatpush1.msra.mxu0 %v2817
      %2834 = vmatprep.subr.mxu0 0.0
      %2835 = vmatpush1.msra.mxu0 %v2818
      %2836 = vmatprep.subr.mxu0 0.0
      %2837 = vmatpush1.msra.mxu0 %v2819
      %2838 = vmatprep.subr.mxu0 0.0
      %2839 = vmatpush1.msra.mxu0 %v2820
      %2840 = vmatprep.subr.mxu0 0.0
      %2841 = vmatpush1.msra.mxu0 0.0
      %2842 = vmatprep.subr.mxu0 0.0
      %2843 = vmatpush1.msra.mxu0 0.0
      %2844 = vmatprep.subr.mxu0 0.0
      %2845 = vmatpush1.msra.mxu0 0.0
      %2846 = vmatprep.subr.mxu0 0.0
      %2847 = vmatpush1.msra.mxu0 0.0
      %2848 = vmatprep.subr.mxu0 0.0
      %2849 = vmatpush1.msra.mxu0 0.0
      %2850 = vmatprep.subr.mxu0 0.0
      %2851 = vmatpush1.msra.mxu0 0.0
      %2852 = vmatprep.subr.mxu0 0.0
      %2853 = vmatpush1.msra.mxu0 0.0
      %2854 = vmatprep.subr.mxu0 0.0
      %2855 = vmatpush1.msra.mxu0 0.0
      %2856 = vmatprep.subr.mxu0 0.0
      %2857 = vmatpush1.msra.mxu0 0.0
      %2858 = vmatprep.subr.mxu0 0.0
      %2859 = vmatpush1.msra.mxu0 0.0
      %2860 = vmatprep.subr.mxu0 0.0
      %2861 = vmatpush1.msra.mxu0 0.0
      %2862 = vmatprep.subr.mxu0 0.0
      %2863 = vmatpush1.msra.mxu0 0.0
      %2864 = vmatprep.subr.mxu0 0.0
      %2865 = vmatpush1.msra.mxu0 0.0
      %2866 = vmatprep.subr.mxu0 0.0
      %2867 = vmatpush1.msra.mxu0 0.0
      %2868 = vmatprep.subr.mxu0 0.0
      %2869 = vmatpush1.msra.mxu0 0.0
      %2870 = vmatprep.subr.mxu0 0.0
      %2871 = vmatpush1.msra.mxu0 0.0
      %2872 = vmatprep.subr.mxu0 0.0
      %2873 = vmatpush1.msra.mxu0 0.0
      %2874 = vmatprep.subr.mxu0 0.0
      %2875 = vmatpush1.msra.mxu0 0.0
      %2876 = vmatprep.subr.mxu0 0.0
      %2877 = vmatpush1.msra.mxu0 0.0
      %2878 = vmatprep.subr.mxu0 0.0
      %2879 = vmatpush1.msra.mxu0 0.0
      %2880 = vmatprep.subr.mxu0 0.0
      %2881 = vmatpush1.msra.mxu0 0.0
      %2882 = vmatprep.subr.mxu0 0.0
      %2883 = vmatpush1.msra.mxu0 0.0
      %2884 = vmatprep.subr.mxu0 0.0
      %2885 = vmatpush1.msra.mxu0 0.0
      %2886 = vmatprep.subr.mxu0 0.0
      %2887 = vmatpush1.msra.mxu0 0.0
      %2888 = vmatprep.subr.mxu0 0.0
      %2889 = vmatpush1.msra.mxu0 0.0
      %2890 = vmatprep.subr.mxu0 0.0
      %2891 = vmatpush1.msra.mxu0 0.0
      %2892 = vmatprep.subr.mxu0 0.0
      %2893 = vmatpush1.msra.mxu0 0.0
      %2894 = vmatprep.subr.mxu0 0.0
      %2895 = vmatpush1.msra.mxu0 0.0
      %2896 = vmatprep.mubr.f32.mxu0 0.0
      %2897 = vmatmul.mubr.f32.gmra.mrb[0].mxu0 %v2830
      %v2898 = vpop.f32.mrb[0].mxu0
      %v2899 = vadd.f32 %v2827, %v2898
      %v2900 = vpop.f32.mrb[0].mxu0
      %2901 = vdwg.mxu0
      %2903 = vrot.lane.b32.xlu0 %v2899, 120
      %v2904 = vpop.permute.xlu0 %2903
      %v2905 = vsel %vm705, %v2899, 0
      %v2907 = vsel %vm705, %v2904, 0
      %2909 = vmatprep.subr.mxu0 0.0
      %2910 = vmatpush1.xpose.msra.mxu0 %v2907
      %2911 = vmatprep.subr.mxu0 0.0
      %2912 = vmatpush1.xpose.msra.mxu0 0.0
      %2913 = vmatprep.subr.mxu0 0.0
      %2914 = vmatpush1.xpose.msra.mxu0 0.0
      %2915 = vmatprep.subr.mxu0 0.0
      %2916 = vmatpush1.xpose.msra.mxu0 0.0
      %2917 = vmatprep.subr.mxu0 0.0
      %2918 = vmatpush1.xpose.msra.mxu0 0.0
      %2919 = vmatprep.subr.mxu0 0.0
      %2920 = vmatpush1.xpose.msra.mxu0 0.0
      %2921 = vmatprep.subr.mxu0 0.0
      %2922 = vmatpush1.xpose.msra.mxu0 0.0
      %2923 = vmatprep.subr.mxu0 0.0
      %2924 = vmatpush1.xpose.msra.mxu0 0.0
      %2925 = vmatprep.subr.mxu0 0.0
      %2926 = vmatpush1.xpose.msra.mxu0 0.0
      %2927 = vmatprep.subr.mxu0 0.0
      %2928 = vmatpush1.xpose.msra.mxu0 0.0
      %2929 = vmatprep.subr.mxu0 0.0
      %2930 = vmatpush1.xpose.msra.mxu0 0.0
      %2931 = vmatprep.subr.mxu0 0.0
      %2932 = vmatpush1.xpose.msra.mxu0 0.0
      %2933 = vmatprep.subr.mxu0 0.0
      %2934 = vmatpush1.xpose.msra.mxu0 0.0
      %2935 = vmatprep.subr.mxu0 0.0
      %2936 = vmatpush1.xpose.msra.mxu0 0.0
      %2937 = vmatprep.subr.mxu0 0.0
      %2938 = vmatpush1.xpose.msra.mxu0 0.0
      %2939 = vmatprep.subr.mxu0 0.0
      %2940 = vmatpush1.xpose.msra.mxu0 0.0
      %2941 = vmatprep.subr.mxu0 0.0
      %2942 = vmatpush1.xpose.msra.mxu0 0.0
      %2943 = vmatprep.subr.mxu0 0.0
      %2944 = vmatpush1.xpose.msra.mxu0 0.0
      %2945 = vmatprep.subr.mxu0 0.0
      %2946 = vmatpush1.xpose.msra.mxu0 0.0
      %2947 = vmatprep.subr.mxu0 0.0
      %2948 = vmatpush1.xpose.msra.mxu0 0.0
      %2949 = vmatprep.subr.mxu0 0.0
      %2950 = vmatpush1.xpose.msra.mxu0 0.0
      %2951 = vmatprep.subr.mxu0 0.0
      %2952 = vmatpush1.xpose.msra.mxu0 0.0
      %2953 = vmatprep.subr.mxu0 0.0
      %2954 = vmatpush1.xpose.msra.mxu0 0.0
      %2955 = vmatprep.subr.mxu0 0.0
      %2956 = vmatpush1.xpose.msra.mxu0 0.0
      %2957 = vmatprep.subr.mxu0 0.0
      %2958 = vmatpush1.xpose.msra.mxu0 0.0
      %2959 = vmatprep.subr.mxu0 0.0
      %2960 = vmatpush1.xpose.msra.mxu0 0.0
      %2961 = vmatprep.subr.mxu0 0.0
      %2962 = vmatpush1.xpose.msra.mxu0 0.0
      %2963 = vmatprep.subr.mxu0 0.0
      %2964 = vmatpush1.xpose.msra.mxu0 0.0
      %2965 = vmatprep.subr.mxu0 0.0
      %2966 = vmatpush1.xpose.msra.mxu0 0.0
      %2967 = vmatprep.subr.mxu0 0.0
      %2968 = vmatpush1.xpose.msra.mxu0 0.0
      %2969 = vmatprep.subr.mxu0 0.0
      %2970 = vmatpush1.xpose.msra.mxu0 0.0
      %2971 = vmatprep.subr.mxu0 0.0
      %2972 = vmatpush1.xpose.msra.mxu0 0.0
      %2973 = vmatprep.mubr.f32.mxu0 0.0
      %2974 = vmatmul.mubr.f32.gmra.mrb[0].mxu0 %v2905
      %v2975 = vpop.f32.mrb[0].mxu0
      %v2976 = vadd.f32 0.0, %v2975
      %v2977 = vpop.f32.mrb[0].mxu0
      %2978 = vdwg.mxu0
      %v2979 = vmul.f32 %v2976, 0.35355338
      %v2980 = vadd.f32 %v2979, %v785
      %v2981 = vsel %vm705, %v2980, -inf
      %2982 = vmax.xlane.f32.xlu0 %v2981
      %v2983 = vpop.xlane.xlu0 %2982
      %v2984 = vsub.f32 %v2980, %v2983
      %v2985 = vmul.f32 %v2984, 1.442695
      %v2986 = vpow.pop %v2985
      %v2987 = vsel %vm705, %v2986, 0.0
      %2988 = vadd.xlane.f32.xlu0 %v2987
      %v2989 = vpop.xlane.xlu0 %2988
      %v2990 = vrcp.pop %v2989
      %v2991 = vmul.f32 %v2986, %v2990
      %2992 = vrot.lane.b32.xlu0 %v2899, 112
      %v2993 = vpop.permute.xlu0 %2992
      %v2996 = vsel %vm705, %v2991, 0
      %2998 = vmatprep.subr.mxu0 0.0
      %2999 = vmatpush1.msra.mxu0 %v2993
      %3000 = vmatprep.subr.mxu0 0.0
      %3001 = vmatpush1.msra.mxu0 0.0
      %3002 = vmatprep.subr.mxu0 0.0
      %3003 = vmatpush1.msra.mxu0 0.0
      %3004 = vmatprep.subr.mxu0 0.0
      %3005 = vmatpush1.msra.mxu0 0.0
      %3006 = vmatprep.subr.mxu0 0.0
      %3007 = vmatpush1.msra.mxu0 0.0
      %3008 = vmatprep.subr.mxu0 0.0
      %3009 = vmatpush1.msra.mxu0 0.0
      %3010 = vmatprep.subr.mxu0 0.0
      %3011 = vmatpush1.msra.mxu0 0.0
      %3012 = vmatprep.subr.mxu0 0.0
      %3013 = vmatpush1.msra.mxu0 0.0
      %3014 = vmatprep.subr.mxu0 0.0
      %3015 = vmatpush1.msra.mxu0 0.0
      %3016 = vmatprep.subr.mxu0 0.0
      %3017 = vmatpush1.msra.mxu0 0.0
      %3018 = vmatprep.subr.mxu0 0.0
      %3019 = vmatpush1.msra.mxu0 0.0
      %3020 = vmatprep.subr.mxu0 0.0
      %3021 = vmatpush1.msra.mxu0 0.0
      %3022 = vmatprep.subr.mxu0 0.0
      %3023 = vmatpush1.msra.mxu0 0.0
      %3024 = vmatprep.subr.mxu0 0.0
      %3025 = vmatpush1.msra.mxu0 0.0
      %3026 = vmatprep.subr.mxu0 0.0
      %3027 = vmatpush1.msra.mxu0 0.0
      %3028 = vmatprep.subr.mxu0 0.0
      %3029 = vmatpush1.msra.mxu0 0.0
      %3030 = vmatprep.subr.mxu0 0.0
      %3031 = vmatpush1.msra.mxu0 0.0
      %3032 = vmatprep.subr.mxu0 0.0
      %3033 = vmatpush1.msra.mxu0 0.0
      %3034 = vmatprep.subr.mxu0 0.0
      %3035 = vmatpush1.msra.mxu0 0.0
      %3036 = vmatprep.subr.mxu0 0.0
      %3037 = vmatpush1.msra.mxu0 0.0
      %3038 = vmatprep.subr.mxu0 0.0
      %3039 = vmatpush1.msra.mxu0 0.0
      %3040 = vmatprep.subr.mxu0 0.0
      %3041 = vmatpush1.msra.mxu0 0.0
      %3042 = vmatprep.subr.mxu0 0.0
      %3043 = vmatpush1.msra.mxu0 0.0
      %3044 = vmatprep.subr.mxu0 0.0
      %3045 = vmatpush1.msra.mxu0 0.0
      %3046 = vmatprep.subr.mxu0 0.0
      %3047 = vmatpush1.msra.mxu0 0.0
      %3048 = vmatprep.subr.mxu0 0.0
      %3049 = vmatpush1.msra.mxu0 0.0
      %3050 = vmatprep.subr.mxu0 0.0
      %3051 = vmatpush1.msra.mxu0 0.0
      %3052 = vmatprep.subr.mxu0 0.0
      %3053 = vmatpush1.msra.mxu0 0.0
      %3054 = vmatprep.subr.mxu0 0.0
      %3055 = vmatpush1.msra.mxu0 0.0
      %3056 = vmatprep.subr.mxu0 0.0
      %3057 = vmatpush1.msra.mxu0 0.0
      %3058 = vmatprep.subr.mxu0 0.0
      %3059 = vmatpush1.msra.mxu0 0.0
      %3060 = vmatprep.subr.mxu0 0.0
      %3061 = vmatpush1.msra.mxu0 0.0
      %3062 = vmatprep.mubr.f32.mxu0 0.0
      %3063 = vmatmul.mubr.f32.gmra.mrb[0].mxu0 %v2996
      %v3064 = vpop.f32.mrb[0].mxu0
      %v3065 = vadd.f32 0.0, %v3064
      %v3066 = vpop.f32.mrb[0].mxu0
      %3067 = vdwg.mxu0
      %3068 = vrot.lane.b32.xlu0 %v2899, 104
      %v3069 = vpop.permute.xlu0 %3068
      %3070 = vrot.lane.b32.xlu0 %v2899, 96
      %v3071 = vpop.permute.xlu0 %3070
      %v3072 = vsel %vm705, %v3069, 0
      %v3074 = vsel %vm705, %v3071, 0
      %3076 = vmatprep.subr.mxu0 0.0
      %3077 = vmatpush1.xpose.msra.mxu0 %v3074
      %3078 = vmatprep.subr.mxu0 0.0
      %3079 = vmatpush1.xpose.msra.mxu0 0.0
      %3080 = vmatprep.subr.mxu0 0.0
      %3081 = vmatpush1.xpose.msra.mxu0 0.0
      %3082 = vmatprep.subr.mxu0 0.0
      %3083 = vmatpush1.xpose.msra.mxu0 0.0
      %3084 = vmatprep.subr.mxu0 0.0
      %3085 = vmatpush1.xpose.msra.mxu0 0.0
      %3086 = vmatprep.subr.mxu0 0.0
      %3087 = vmatpush1.xpose.msra.mxu0 0.0
      %3088 = vmatprep.subr.mxu0 0.0
      %3089 = vmatpush1.xpose.msra.mxu0 0.0
      %3090 = vmatprep.subr.mxu0 0.0
      %3091 = vmatpush1.xpose.msra.mxu0 0.0
      %3092 = vmatprep.subr.mxu0 0.0
      %3093 = vmatpush1.xpose.msra.mxu0 0.0
      %3094 = vmatprep.subr.mxu0 0.0
      %3095 = vmatpush1.xpose.msra.mxu0 0.0
      %3096 = vmatprep.subr.mxu0 0.0
      %3097 = vmatpush1.xpose.msra.mxu0 0.0
      %3098 = vmatprep.subr.mxu0 0.0
      %3099 = vmatpush1.xpose.msra.mxu0 0.0
      %3100 = vmatprep.subr.mxu0 0.0
      %3101 = vmatpush1.xpose.msra.mxu0 0.0
      %3102 = vmatprep.subr.mxu0 0.0
      %3103 = vmatpush1.xpose.msra.mxu0 0.0
      %3104 = vmatprep.subr.mxu0 0.0
      %3105 = vmatpush1.xpose.msra.mxu0 0.0
      %3106 = vmatprep.subr.mxu0 0.0
      %3107 = vmatpush1.xpose.msra.mxu0 0.0
      %3108 = vmatprep.subr.mxu0 0.0
      %3109 = vmatpush1.xpose.msra.mxu0 0.0
      %3110 = vmatprep.subr.mxu0 0.0
      %3111 = vmatpush1.xpose.msra.mxu0 0.0
      %3112 = vmatprep.subr.mxu0 0.0
      %3113 = vmatpush1.xpose.msra.mxu0 0.0
      %3114 = vmatprep.subr.mxu0 0.0
      %3115 = vmatpush1.xpose.msra.mxu0 0.0
      %3116 = vmatprep.subr.mxu0 0.0
      %3117 = vmatpush1.xpose.msra.mxu0 0.0
      %3118 = vmatprep.subr.mxu0 0.0
      %3119 = vmatpush1.xpose.msra.mxu0 0.0
      %3120 = vmatprep.subr.mxu0 0.0
      %3121 = vmatpush1.xpose.msra.mxu0 0.0
      %3122 = vmatprep.subr.mxu0 0.0
      %3123 = vmatpush1.xpose.msra.mxu0 0.0
      %3124 = vmatprep.subr.mxu0 0.0
      %3125 = vmatpush1.xpose.msra.mxu0 0.0
      %3126 = vmatprep.subr.mxu0 0.0
      %3127 = vmatpush1.xpose.msra.mxu0 0.0
      %3128 = vmatprep.subr.mxu0 0.0
      %3129 = vmatpush1.xpose.msra.mxu0 0.0
      %3130 = vmatprep.subr.mxu0 0.0
      %3131 = vmatpush1.xpose.msra.mxu0 0.0
      %3132 = vmatprep.subr.mxu0 0.0
      %3133 = vmatpush1.xpose.msra.mxu0 0.0
      %3134 = vmatprep.subr.mxu0 0.0
      %3135 = vmatpush1.xpose.msra.mxu0 0.0
      %3136 = vmatprep.subr.mxu0 0.0
      %3137 = vmatpush1.xpose.msra.mxu0 0.0
      %3138 = vmatprep.subr.mxu0 0.0
      %3139 = vmatpush1.xpose.msra.mxu0 0.0
      %3140 = vmatprep.mubr.f32.mxu0 0.0
      %3141 = vmatmul.mubr.f32.gmra.mrb[0].mxu0 %v3072
      %v3142 = vpop.f32.mrb[0].mxu0
      %v3143 = vadd.f32 0.0, %v3142
      %v3144 = vpop.f32.mrb[0].mxu0
      %3145 = vdwg.mxu0
      %v3146 = vmul.f32 %v3143, 0.35355338
      %v3147 = vadd.f32 %v3146, %v785
      %v3148 = vsel %vm705, %v3147, -inf
      %3149 = vmax.xlane.f32.xlu0 %v3148
      %v3150 = vpop.xlane.xlu0 %3149
      %v3151 = vsub.f32 %v3147, %v3150
      %v3152 = vmul.f32 %v3151, 1.442695
      %v3153 = vpow.pop %v3152
      %v3154 = vsel %vm705, %v3153, 0.0
      %3155 = vadd.xlane.f32.xlu0 %v3154
      %v3156 = vpop.xlane.xlu0 %3155
      %v3157 = vrcp.pop %v3156
      %v3158 = vmul.f32 %v3153, %v3157
      %3159 = vrot.lane.b32.xlu0 %v2899, 88
      %v3160 = vpop.permute.xlu0 %3159
      %v3163 = vsel %vm705, %v3158, 0
      %3165 = vmatprep.subr.mxu0 0.0
      %3166 = vmatpush1.msra.mxu0 %v3160
      %3167 = vmatprep.subr.mxu0 0.0
      %3168 = vmatpush1.msra.mxu0 0.0
      %3169 = vmatprep.subr.mxu0 0.0
      %3170 = vmatpush1.msra.mxu0 0.0
      %3171 = vmatprep.subr.mxu0 0.0
      %3172 = vmatpush1.msra.mxu0 0.0
      %3173 = vmatprep.subr.mxu0 0.0
      %3174 = vmatpush1.msra.mxu0 0.0
      %3175 = vmatprep.subr.mxu0 0.0
      %3176 = vmatpush1.msra.mxu0 0.0
      %3177 = vmatprep.subr.mxu0 0.0
      %3178 = vmatpush1.msra.mxu0 0.0
      %3179 = vmatprep.subr.mxu0 0.0
      %3180 = vmatpush1.msra.mxu0 0.0
      %3181 = vmatprep.subr.mxu0 0.0
      %3182 = vmatpush1.msra.mxu0 0.0
      %3183 = vmatprep.subr.mxu0 0.0
      %3184 = vmatpush1.msra.mxu0 0.0
      %3185 = vmatprep.subr.mxu0 0.0
      %3186 = vmatpush1.msra.mxu0 0.0
      %3187 = vmatprep.subr.mxu0 0.0
      %3188 = vmatpush1.msra.mxu0 0.0
      %3189 = vmatprep.subr.mxu0 0.0
      %3190 = vmatpush1.msra.mxu0 0.0
      %3191 = vmatprep.subr.mxu0 0.0
      %3192 = vmatpush1.msra.mxu0 0.0
      %3193 = vmatprep.subr.mxu0 0.0
      %3194 = vmatpush1.msra.mxu0 0.0
      %3195 = vmatprep.subr.mxu0 0.0
      %3196 = vmatpush1.msra.mxu0 0.0
      %3197 = vmatprep.subr.mxu0 0.0
      %3198 = vmatpush1.msra.mxu0 0.0
      %3199 = vmatprep.subr.mxu0 0.0
      %3200 = vmatpush1.msra.mxu0 0.0
      %3201 = vmatprep.subr.mxu0 0.0
      %3202 = vmatpush1.msra.mxu0 0.0
      %3203 = vmatprep.subr.mxu0 0.0
      %3204 = vmatpush1.msra.mxu0 0.0
      %3205 = vmatprep.subr.mxu0 0.0
      %3206 = vmatpush1.msra.mxu0 0.0
      %3207 = vmatprep.subr.mxu0 0.0
      %3208 = vmatpush1.msra.mxu0 0.0
      %3209 = vmatprep.subr.mxu0 0.0
      %3210 = vmatpush1.msra.mxu0 0.0
      %3211 = vmatprep.subr.mxu0 0.0
      %3212 = vmatpush1.msra.mxu0 0.0
      %3213 = vmatprep.subr.mxu0 0.0
      %3214 = vmatpush1.msra.mxu0 0.0
      %3215 = vmatprep.subr.mxu0 0.0
      %3216 = vmatpush1.msra.mxu0 0.0
      %3217 = vmatprep.subr.mxu0 0.0
      %3218 = vmatpush1.msra.mxu0 0.0
      %3219 = vmatprep.subr.mxu0 0.0
      %3220 = vmatpush1.msra.mxu0 0.0
      %3221 = vmatprep.subr.mxu0 0.0
      %3222 = vmatpush1.msra.mxu0 0.0
      %3223 = vmatprep.subr.mxu0 0.0
      %3224 = vmatpush1.msra.mxu0 0.0
      %3225 = vmatprep.subr.mxu0 0.0
      %3226 = vmatpush1.msra.mxu0 0.0
      %3227 = vmatprep.subr.mxu0 0.0
      %3228 = vmatpush1.msra.mxu0 0.0
      %3229 = vmatprep.mubr.f32.mxu0 0.0
      %3230 = vmatmul.mubr.f32.gmra.mrb[0].mxu0 %v3163
      %v3231 = vpop.f32.mrb[0].mxu0
      %v3232 = vadd.f32 0.0, %v3231
      %v3233 = vpop.f32.mrb[0].mxu0
      %3234 = vdwg.mxu0
      %3235 = vrot.lane.b32.xlu0 %v2899, 80
      %v3236 = vpop.permute.xlu0 %3235
      %3237 = vrot.lane.b32.xlu0 %v2899, 72
      %v3238 = vpop.permute.xlu0 %3237
      %v3239 = vsel %vm705, %v3236, 0
      %v3241 = vsel %vm705, %v3238, 0
      %3243 = vmatprep.subr.mxu0 0.0
      %3244 = vmatpush1.xpose.msra.mxu0 %v3241
      %3245 = vmatprep.subr.mxu0 0.0
      %3246 = vmatpush1.xpose.msra.mxu0 0.0
      %3247 = vmatprep.subr.mxu0 0.0
      %3248 = vmatpush1.xpose.msra.mxu0 0.0
      %3249 = vmatprep.subr.mxu0 0.0
      %3250 = vmatpush1.xpose.msra.mxu0 0.0
      %3251 = vmatprep.subr.mxu0 0.0
      %3252 = vmatpush1.xpose.msra.mxu0 0.0
      %3253 = vmatprep.subr.mxu0 0.0
      %3254 = vmatpush1.xpose.msra.mxu0 0.0
      %3255 = vmatprep.subr.mxu0 0.0
      %3256 = vmatpush1.xpose.msra.mxu0 0.0
      %3257 = vmatprep.subr.mxu0 0.0
      %3258 = vmatpush1.xpose.msra.mxu0 0.0
      %3259 = vmatprep.subr.mxu0 0.0
      %3260 = vmatpush1.xpose.msra.mxu0 0.0
      %3261 = vmatprep.subr.mxu0 0.0
      %3262 = vmatpush1.xpose.msra.mxu0 0.0
      %3263 = vmatprep.subr.mxu0 0.0
      %3264 = vmatpush1.xpose.msra.mxu0 0.0
      %3265 = vmatprep.subr.mxu0 0.0
      %3266 = vmatpush1.xpose.msra.mxu0 0.0
      %3267 = vmatprep.subr.mxu0 0.0
      %3268 = vmatpush1.xpose.msra.mxu0 0.0
      %3269 = vmatprep.subr.mxu0 0.0
      %3270 = vmatpush1.xpose.msra.mxu0 0.0
      %3271 = vmatprep.subr.mxu0 0.0
      %3272 = vmatpush1.xpose.msra.mxu0 0.0
      %3273 = vmatprep.subr.mxu0 0.0
      %3274 = vmatpush1.xpose.msra.mxu0 0.0
      %3275 = vmatprep.subr.mxu0 0.0
      %3276 = vmatpush1.xpose.msra.mxu0 0.0
      %3277 = vmatprep.subr.mxu0 0.0
      %3278 = vmatpush1.xpose.msra.mxu0 0.0
      %3279 = vmatprep.subr.mxu0 0.0
      %3280 = vmatpush1.xpose.msra.mxu0 0.0
      %3281 = vmatprep.subr.mxu0 0.0
      %3282 = vmatpush1.xpose.msra.mxu0 0.0
      %3283 = vmatprep.subr.mxu0 0.0
      %3284 = vmatpush1.xpose.msra.mxu0 0.0
      %3285 = vmatprep.subr.mxu0 0.0
      %3286 = vmatpush1.xpose.msra.mxu0 0.0
      %3287 = vmatprep.subr.mxu0 0.0
      %3288 = vmatpush1.xpose.msra.mxu0 0.0
      %3289 = vmatprep.subr.mxu0 0.0
      %3290 = vmatpush1.xpose.msra.mxu0 0.0
      %3291 = vmatprep.subr.mxu0 0.0
      %3292 = vmatpush1.xpose.msra.mxu0 0.0
      %3293 = vmatprep.subr.mxu0 0.0
      %3294 = vmatpush1.xpose.msra.mxu0 0.0
      %3295 = vmatprep.subr.mxu0 0.0
      %3296 = vmatpush1.xpose.msra.mxu0 0.0
      %3297 = vmatprep.subr.mxu0 0.0
      %3298 = vmatpush1.xpose.msra.mxu0 0.0
      %3299 = vmatprep.subr.mxu0 0.0
      %3300 = vmatpush1.xpose.msra.mxu0 0.0
      %3301 = vmatprep.subr.mxu0 0.0
      %3302 = vmatpush1.xpose.msra.mxu0 0.0
      %3303 = vmatprep.subr.mxu0 0.0
      %3304 = vmatpush1.xpose.msra.mxu0 0.0
      %3305 = vmatprep.subr.mxu0 0.0
      %3306 = vmatpush1.xpose.msra.mxu0 0.0
      %3307 = vmatprep.mubr.f32.mxu0 0.0
      %3308 = vmatmul.mubr.f32.gmra.mrb[0].mxu0 %v3239
      %v3309 = vpop.f32.mrb[0].mxu0
      %v3310 = vadd.f32 0.0, %v3309
      %v3311 = vpop.f32.mrb[0].mxu0
      %3312 = vdwg.mxu0
      %v3313 = vmul.f32 %v3310, 0.35355338
      %v3314 = vadd.f32 %v3313, %v785
      %v3315 = vsel %vm705, %v3314, -inf
      %3316 = vmax.xlane.f32.xlu0 %v3315
      %v3317 = vpop.xlane.xlu0 %3316
      %v3318 = vsub.f32 %v3314, %v3317
      %v3319 = vmul.f32 %v3318, 1.442695
      %v3320 = vpow.pop %v3319
      %v3321 = vsel %vm705, %v3320, 0.0
      %3322 = vadd.xlane.f32.xlu0 %v3321
      %v3323 = vpop.xlane.xlu0 %3322
      %v3324 = vrcp.pop %v3323
      %v3325 = vmul.f32 %v3320, %v3324
      %3326 = vrot.lane.b32.xlu0 %v2899, 64
      %v3327 = vpop.permute.xlu0 %3326
      %v3330 = vsel %vm705, %v3325, 0
      %3332 = vmatprep.subr.mxu0 0.0
      %3333 = vmatpush1.msra.mxu0 %v3327
      %3334 = vmatprep.subr.mxu0 0.0
      %3335 = vmatpush1.msra.mxu0 0.0
      %3336 = vmatprep.subr.mxu0 0.0
      %3337 = vmatpush1.msra.mxu0 0.0
      %3338 = vmatprep.subr.mxu0 0.0
      %3339 = vmatpush1.msra.mxu0 0.0
      %3340 = vmatprep.subr.mxu0 0.0
      %3341 = vmatpush1.msra.mxu0 0.0
      %3342 = vmatprep.subr.mxu0 0.0
      %3343 = vmatpush1.msra.mxu0 0.0
      %3344 = vmatprep.subr.mxu0 0.0
      %3345 = vmatpush1.msra.mxu0 0.0
      %3346 = vmatprep.subr.mxu0 0.0
      %3347 = vmatpush1.msra.mxu0 0.0
      %3348 = vmatprep.subr.mxu0 0.0
      %3349 = vmatpush1.msra.mxu0 0.0
      %3350 = vmatprep.subr.mxu0 0.0
      %3351 = vmatpush1.msra.mxu0 0.0
      %3352 = vmatprep.subr.mxu0 0.0
      %3353 = vmatpush1.msra.mxu0 0.0
      %3354 = vmatprep.subr.mxu0 0.0
      %3355 = vmatpush1.msra.mxu0 0.0
      %3356 = vmatprep.subr.mxu0 0.0
      %3357 = vmatpush1.msra.mxu0 0.0
      %3358 = vmatprep.subr.mxu0 0.0
      %3359 = vmatpush1.msra.mxu0 0.0
      %3360 = vmatprep.subr.mxu0 0.0
      %3361 = vmatpush1.msra.mxu0 0.0
      %3362 = vmatprep.subr.mxu0 0.0
      %3363 = vmatpush1.msra.mxu0 0.0
      %3364 = vmatprep.subr.mxu0 0.0
      %3365 = vmatpush1.msra.mxu0 0.0
      %3366 = vmatprep.subr.mxu0 0.0
      %3367 = vmatpush1.msra.mxu0 0.0
      %3368 = vmatprep.subr.mxu0 0.0
      %3369 = vmatpush1.msra.mxu0 0.0
      %3370 = vmatprep.subr.mxu0 0.0
      %3371 = vmatpush1.msra.mxu0 0.0
      %3372 = vmatprep.subr.mxu0 0.0
      %3373 = vmatpush1.msra.mxu0 0.0
      %3374 = vmatprep.subr.mxu0 0.0
      %3375 = vmatpush1.msra.mxu0 0.0
      %3376 = vmatprep.subr.mxu0 0.0
      %3377 = vmatpush1.msra.mxu0 0.0
      %3378 = vmatprep.subr.mxu0 0.0
      %3379 = vmatpush1.msra.mxu0 0.0
      %3380 = vmatprep.subr.mxu0 0.0
      %3381 = vmatpush1.msra.mxu0 0.0
      %3382 = vmatprep.subr.mxu0 0.0
      %3383 = vmatpush1.msra.mxu0 0.0
      %3384 = vmatprep.subr.mxu0 0.0
      %3385 = vmatpush1.msra.mxu0 0.0
      %3386 = vmatprep.subr.mxu0 0.0
      %3387 = vmatpush1.msra.mxu0 0.0
      %3388 = vmatprep.subr.mxu0 0.0
      %3389 = vmatpush1.msra.mxu0 0.0
      %3390 = vmatprep.subr.mxu0 0.0
      %3391 = vmatpush1.msra.mxu0 0.0
      %3392 = vmatprep.subr.mxu0 0.0
      %3393 = vmatpush1.msra.mxu0 0.0
      %3394 = vmatprep.subr.mxu0 0.0
      %3395 = vmatpush1.msra.mxu0 0.0
      %3396 = vmatprep.mubr.f32.mxu0 0.0
      %3397 = vmatmul.mubr.f32.gmra.mrb[0].mxu0 %v3330
      %v3398 = vpop.f32.mrb[0].mxu0
      %v3399 = vadd.f32 0.0, %v3398
      %v3400 = vpop.f32.mrb[0].mxu0
      %3401 = vdwg.mxu0
      %3402 = vrot.lane.b32.xlu0 %v2899, 56
      %v3403 = vpop.permute.xlu0 %3402
      %3404 = vrot.lane.b32.xlu0 %v2899, 48
      %v3405 = vpop.permute.xlu0 %3404
      %v3406 = vsel %vm705, %v3403, 0
      %v3408 = vsel %vm705, %v3405, 0
      %3410 = vmatprep.subr.mxu0 0.0
      %3411 = vmatpush1.xpose.msra.mxu0 %v3408
      %3412 = vmatprep.subr.mxu0 0.0
      %3413 = vmatpush1.xpose.msra.mxu0 0.0
      %3414 = vmatprep.subr.mxu0 0.0
      %3415 = vmatpush1.xpose.msra.mxu0 0.0
      %3416 = vmatprep.subr.mxu0 0.0
      %3417 = vmatpush1.xpose.msra.mxu0 0.0
      %3418 = vmatprep.subr.mxu0 0.0
      %3419 = vmatpush1.xpose.msra.mxu0 0.0
      %3420 = vmatprep.subr.mxu0 0.0
      %3421 = vmatpush1.xpose.msra.mxu0 0.0
      %3422 = vmatprep.subr.mxu0 0.0
      %3423 = vmatpush1.xpose.msra.mxu0 0.0
      %3424 = vmatprep.subr.mxu0 0.0
      %3425 = vmatpush1.xpose.msra.mxu0 0.0
      %3426 = vmatprep.subr.mxu0 0.0
      %3427 = vmatpush1.xpose.msra.mxu0 0.0
      %3428 = vmatprep.subr.mxu0 0.0
      %3429 = vmatpush1.xpose.msra.mxu0 0.0
      %3430 = vmatprep.subr.mxu0 0.0
      %3431 = vmatpush1.xpose.msra.mxu0 0.0
      %3432 = vmatprep.subr.mxu0 0.0
      %3433 = vmatpush1.xpose.msra.mxu0 0.0
      %3434 = vmatprep.subr.mxu0 0.0
      %3435 = vmatpush1.xpose.msra.mxu0 0.0
      %3436 = vmatprep.subr.mxu0 0.0
      %3437 = vmatpush1.xpose.msra.mxu0 0.0
      %3438 = vmatprep.subr.mxu0 0.0
      %3439 = vmatpush1.xpose.msra.mxu0 0.0
      %3440 = vmatprep.subr.mxu0 0.0
      %3441 = vmatpush1.xpose.msra.mxu0 0.0
      %3442 = vmatprep.subr.mxu0 0.0
      %3443 = vmatpush1.xpose.msra.mxu0 0.0
      %3444 = vmatprep.subr.mxu0 0.0
      %3445 = vmatpush1.xpose.msra.mxu0 0.0
      %3446 = vmatprep.subr.mxu0 0.0
      %3447 = vmatpush1.xpose.msra.mxu0 0.0
      %3448 = vmatprep.subr.mxu0 0.0
      %3449 = vmatpush1.xpose.msra.mxu0 0.0
      %3450 = vmatprep.subr.mxu0 0.0
      %3451 = vmatpush1.xpose.msra.mxu0 0.0
      %3452 = vmatprep.subr.mxu0 0.0
      %3453 = vmatpush1.xpose.msra.mxu0 0.0
      %3454 = vmatprep.subr.mxu0 0.0
      %3455 = vmatpush1.xpose.msra.mxu0 0.0
      %3456 = vmatprep.subr.mxu0 0.0
      %3457 = vmatpush1.xpose.msra.mxu0 0.0
      %3458 = vmatprep.subr.mxu0 0.0
      %3459 = vmatpush1.xpose.msra.mxu0 0.0
      %3460 = vmatprep.subr.mxu0 0.0
      %3461 = vmatpush1.xpose.msra.mxu0 0.0
      %3462 = vmatprep.subr.mxu0 0.0
      %3463 = vmatpush1.xpose.msra.mxu0 0.0
      %3464 = vmatprep.subr.mxu0 0.0
      %3465 = vmatpush1.xpose.msra.mxu0 0.0
      %3466 = vmatprep.subr.mxu0 0.0
      %3467 = vmatpush1.xpose.msra.mxu0 0.0
      %3468 = vmatprep.subr.mxu0 0.0
      %3469 = vmatpush1.xpose.msra.mxu0 0.0
      %3470 = vmatprep.subr.mxu0 0.0
      %3471 = vmatpush1.xpose.msra.mxu0 0.0
      %3472 = vmatprep.subr.mxu0 0.0
      %3473 = vmatpush1.xpose.msra.mxu0 0.0
      %3474 = vmatprep.mubr.f32.mxu0 0.0
      %3475 = vmatmul.mubr.f32.gmra.mrb[0].mxu0 %v3406
      %v3476 = vpop.f32.mrb[0].mxu0
      %v3477 = vadd.f32 0.0, %v3476
      %v3478 = vpop.f32.mrb[0].mxu0
      %3479 = vdwg.mxu0
      %v3480 = vmul.f32 %v3477, 0.35355338
      %v3481 = vadd.f32 %v3480, %v785
      %v3482 = vsel %vm705, %v3481, -inf
      %3483 = vmax.xlane.f32.xlu0 %v3482
      %v3484 = vpop.xlane.xlu0 %3483
      %v3485 = vsub.f32 %v3481, %v3484
      %v3486 = vmul.f32 %v3485, 1.442695
      %v3487 = vpow.pop %v3486
      %v3488 = vsel %vm705, %v3487, 0.0
      %3489 = vadd.xlane.f32.xlu0 %v3488
      %v3490 = vpop.xlane.xlu0 %3489
      %v3491 = vrcp.pop %v3490
      %v3492 = vmul.f32 %v3487, %v3491
      %3493 = vrot.lane.b32.xlu0 %v2899, 40
      %v3494 = vpop.permute.xlu0 %3493
      %v3497 = vsel %vm705, %v3492, 0
      %3499 = vmatprep.subr.mxu0 0.0
      %3500 = vmatpush1.msra.mxu0 %v3494
      %3501 = vmatprep.subr.mxu0 0.0
      %3502 = vmatpush1.msra.mxu0 0.0
      %3503 = vmatprep.subr.mxu0 0.0
      %3504 = vmatpush1.msra.mxu0 0.0
      %3505 = vmatprep.subr.mxu0 0.0
      %3506 = vmatpush1.msra.mxu0 0.0
      %3507 = vmatprep.subr.mxu0 0.0
      %3508 = vmatpush1.msra.mxu0 0.0
      %3509 = vmatprep.subr.mxu0 0.0
      %3510 = vmatpush1.msra.mxu0 0.0
      %3511 = vmatprep.subr.mxu0 0.0
      %3512 = vmatpush1.msra.mxu0 0.0
      %3513 = vmatprep.subr.mxu0 0.0
      %3514 = vmatpush1.msra.mxu0 0.0
      %3515 = vmatprep.subr.mxu0 0.0
      %3516 = vmatpush1.msra.mxu0 0.0
      %3517 = vmatprep.subr.mxu0 0.0
      %3518 = vmatpush1.msra.mxu0 0.0
      %3519 = vmatprep.subr.mxu0 0.0
      %3520 = vmatpush1.msra.mxu0 0.0
      %3521 = vmatprep.subr.mxu0 0.0
      %3522 = vmatpush1.msra.mxu0 0.0
      %3523 = vmatprep.subr.mxu0 0.0
      %3524 = vmatpush1.msra.mxu0 0.0
      %3525 = vmatprep.subr.mxu0 0.0
      %3526 = vmatpush1.msra.mxu0 0.0
      %3527 = vmatprep.subr.mxu0 0.0
      %3528 = vmatpush1.msra.mxu0 0.0
      %3529 = vmatprep.subr.mxu0 0.0
      %3530 = vmatpush1.msra.mxu0 0.0
      %3531 = vmatprep.subr.mxu0 0.0
      %3532 = vmatpush1.msra.mxu0 0.0
      %3533 = vmatprep.subr.mxu0 0.0
      %3534 = vmatpush1.msra.mxu0 0.0
      %3535 = vmatprep.subr.mxu0 0.0
      %3536 = vmatpush1.msra.mxu0 0.0
      %3537 = vmatprep.subr.mxu0 0.0
      %3538 = vmatpush1.msra.mxu0 0.0
      %3539 = vmatprep.subr.mxu0 0.0
      %3540 = vmatpush1.msra.mxu0 0.0
      %3541 = vmatprep.subr.mxu0 0.0
      %3542 = vmatpush1.msra.mxu0 0.0
      %3543 = vmatprep.subr.mxu0 0.0
      %3544 = vmatpush1.msra.mxu0 0.0
      %3545 = vmatprep.subr.mxu0 0.0
      %3546 = vmatpush1.msra.mxu0 0.0
      %3547 = vmatprep.subr.mxu0 0.0
      %3548 = vmatpush1.msra.mxu0 0.0
      %3549 = vmatprep.subr.mxu0 0.0
      %3550 = vmatpush1.msra.mxu0 0.0
      %3551 = vmatprep.subr.mxu0 0.0
      %3552 = vmatpush1.msra.mxu0 0.0
      %3553 = vmatprep.subr.mxu0 0.0
      %3554 = vmatpush1.msra.mxu0 0.0
      %3555 = vmatprep.subr.mxu0 0.0
      %3556 = vmatpush1.msra.mxu0 0.0
      %3557 = vmatprep.subr.mxu0 0.0
      %3558 = vmatpush1.msra.mxu0 0.0
      %3559 = vmatprep.subr.mxu0 0.0
      %3560 = vmatpush1.msra.mxu0 0.0
      %3561 = vmatprep.subr.mxu0 0.0
      %3562 = vmatpush1.msra.mxu0 0.0
      %3563 = vmatprep.mubr.f32.mxu0 0.0
      %3564 = vmatmul.mubr.f32.gmra.mrb[0].mxu0 %v3497
      %v3565 = vpop.f32.mrb[0].mxu0
      %v3566 = vadd.f32 0.0, %v3565
      %v3567 = vpop.f32.mrb[0].mxu0
      %3568 = vdwg.mxu0
      %3570 = vrot.lane.b32.xlu0 %v3232, 8
      %v3571 = vpop.permute.xlu0 %3570
      %3574 = vrot.lane.b32.xlu0 %v3399, 16
      %v3575 = vpop.permute.xlu0 %3574
      %3578 = vrot.lane.b32.xlu0 %v3566, 24
      %v3579 = vpop.permute.xlu0 %3578
      %v3581 = vsel %vm705, %v3065, %v3571
      %v3582 = vsel %vm1389, %v3581, %v3575
      %v3583 = vsel %vm1391, %v3582, %v3579
      %s3584 = scalar_lea.vmem %s6, 64
      %v3585 = vld [vmem:[%s3584] sm:$0xff]
      %v3586 = vld [vmem:[%s3584 + $0x8] sm:$0xff]
      %v3587 = vld [vmem:[%s3584 + $0x10] sm:$0xff]
      %v3588 = vld [vmem:[%s3584 + $0x18] sm:$0xff]
      %s3589 = scalar_lea.vmem %s7, 2
      %v3590 = vld [vmem:[%s3589] sm:$0x1]
      %v3592 = vlaneseq
      %v3593 = vshrl.u32 %v3592, 7
      %v3594 = vsub.s32 0, %v3593
      %v3595 = vrot.slane %v3590, %v3594
      %v3598 = vsel %vm589, %v3583, 0
      %3600 = vmatprep.subr.mxu0 0.0
      %3601 = vmatpush1.msra.mxu0 %v3585
      %3602 = vmatprep.subr.mxu0 0.0
      %3603 = vmatpush1.msra.mxu0 %v3586
      %3604 = vmatprep.subr.mxu0 0.0
      %3605 = vmatpush1.msra.mxu0 %v3587
      %3606 = vmatprep.subr.mxu0 0.0
      %3607 = vmatpush1.msra.mxu0 %v3588
      %3608 = vmatprep.subr.mxu0 0.0
      %3609 = vmatpush1.msra.mxu0 0.0
      %3610 = vmatprep.subr.mxu0 0.0
      %3611 = vmatpush1.msra.mxu0 0.0
      %3612 = vmatprep.subr.mxu0 0.0
      %3613 = vmatpush1.msra.mxu0 0.0
      %3614 = vmatprep.subr.mxu0 0.0
      %3615 = vmatpush1.msra.mxu0 0.0
      %3616 = vmatprep.subr.mxu0 0.0
      %3617 = vmatpush1.msra.mxu0 0.0
      %3618 = vmatprep.subr.mxu0 0.0
      %3619 = vmatpush1.msra.mxu0 0.0
      %3620 = vmatprep.subr.mxu0 0.0
      %3621 = vmatpush1.msra.mxu0 0.0
      %3622 = vmatprep.subr.mxu0 0.0
      %3623 = vmatpush1.msra.mxu0 0.0
      %3624 = vmatprep.subr.mxu0 0.0
      %3625 = vmatpush1.msra.mxu0 0.0
      %3626 = vmatprep.subr.mxu0 0.0
      %3627 = vmatpush1.msra.mxu0 0.0
      %3628 = vmatprep.subr.mxu0 0.0
      %3629 = vmatpush1.msra.mxu0 0.0
      %3630 = vmatprep.subr.mxu0 0.0
      %3631 = vmatpush1.msra.mxu0 0.0
      %3632 = vmatprep.subr.mxu0 0.0
      %3633 = vmatpush1.msra.mxu0 0.0
      %3634 = vmatprep.subr.mxu0 0.0
      %3635 = vmatpush1.msra.mxu0 0.0
      %3636 = vmatprep.subr.mxu0 0.0
      %3637 = vmatpush1.msra.mxu0 0.0
      %3638 = vmatprep.subr.mxu0 0.0
      %3639 = vmatpush1.msra.mxu0 0.0
      %3640 = vmatprep.subr.mxu0 0.0
      %3641 = vmatpush1.msra.mxu0 0.0
      %3642 = vmatprep.subr.mxu0 0.0
      %3643 = vmatpush1.msra.mxu0 0.0
      %3644 = vmatprep.subr.mxu0 0.0
      %3645 = vmatpush1.msra.mxu0 0.0
      %3646 = vmatprep.subr.mxu0 0.0
      %3647 = vmatpush1.msra.mxu0 0.0
      %3648 = vmatprep.subr.mxu0 0.0
      %3649 = vmatpush1.msra.mxu0 0.0
      %3650 = vmatprep.subr.mxu0 0.0
      %3651 = vmatpush1.msra.mxu0 0.0
      %3652 = vmatprep.subr.mxu0 0.0
      %3653 = vmatpush1.msra.mxu0 0.0
      %3654 = vmatprep.subr.mxu0 0.0
      %3655 = vmatpush1.msra.mxu0 0.0
      %3656 = vmatprep.subr.mxu0 0.0
      %3657 = vmatpush1.msra.mxu0 0.0
      %3658 = vmatprep.subr.mxu0 0.0
      %3659 = vmatpush1.msra.mxu0 0.0
      %3660 = vmatprep.subr.mxu0 0.0
      %3661 = vmatpush1.msra.mxu0 0.0
      %3662 = vmatprep.subr.mxu0 0.0
      %3663 = vmatpush1.msra.mxu0 0.0
      %3664 = vmatprep.mubr.f32.mxu0 0.0
      %3665 = vmatmul.mubr.f32.gmra.mrb[0].mxu0 %v3598
      %v3666 = vpop.f32.mrb[0].mxu0
      %v3667 = vadd.f32 %v3595, %v3666
      %v3668 = vpop.f32.mrb[0].mxu0
      %3669 = vdwg.mxu0
      %v3670 = vadd.f32 %v3667, %v2814
      %s3671 = scalar_lea.vmem %s8, 2
      %v3672 = vld [vmem:[%s3671] sm:$0x1]
      %s3673 = scalar_lea.vmem %s9, 2
      %v3674 = vld [vmem:[%s3673] sm:$0x1]
      %v3675 = vsel %vm589, %v3670, 0.0
      %3676 = vadd.xlane.f32.xlu0 %v3675
      %v3677 = vpop.xlane.xlu0 %3676
      %v3678 = vmul.f32 %v3677, %v593
      %v3679 = vsub.f32 %v3670, %v3678
      %v3680 = vmul.f32 %v3679, %v3679
      %v3681 = vsel %vm589, %v3680, 0.0
      %3682 = vadd.xlane.f32.xlu0 %v3681
      %v3683 = vpop.xlane.xlu0 %3682
      %v3684 = vmul.f32 %v3683, %v593
      %v3685 = vadd.f32 %v3684, 1e-12
      %v3686 = vrsqrt.pop %v3685
      %v3687 = vmul.f32 %v3679, %v3686
      %v3689 = vlaneseq
      %v3690 = vshrl.u32 %v3689, 7
      %v3691 = vsub.s32 0, %v3690
      %v3692 = vrot.slane %v3672, %v3691
      %v3694 = vmul.f32 %v3687, %v3692
      %v3696 = vlaneseq
      %v3697 = vshrl.u32 %v3696, 7
      %v3698 = vsub.s32 0, %v3697
      %v3699 = vrot.slane %v3674, %v3698
      %v3701 = vadd.f32 %v3694, %v3699
      %s3702 = scalar_lea.vmem %s10, 64
      %v3703 = vld [vmem:[%s3702] sm:$0xff]
      %v3704 = vld [vmem:[%s3702 + $0x8] sm:$0xff]
      %v3705 = vld [vmem:[%s3702 + $0x10] sm:$0xff]
      %v3706 = vld [vmem:[%s3702 + $0x18] sm:$0xff]
      %s3707 = scalar_lea.vmem %s11, 2
      %v3708 = vld [vmem:[%s3707] sm:$0x1]
      %v3710 = vlaneseq
      %v3711 = vshrl.u32 %v3710, 7
      %v3712 = vsub.s32 0, %v3711
      %v3713 = vrot.slane %v3708, %v3712
      %v3716 = vsel %vm589, %v3701, 0
      %3718 = vmatprep.subr.mxu0 0.0
      %3719 = vmatpush1.msra.mxu0 %v3703
      %3720 = vmatprep.subr.mxu0 0.0
      %3721 = vmatpush1.msra.mxu0 %v3704
      %3722 = vmatprep.subr.mxu0 0.0
      %3723 = vmatpush1.msra.mxu0 %v3705
      %3724 = vmatprep.subr.mxu0 0.0
      %3725 = vmatpush1.msra.mxu0 %v3706
      %3726 = vmatprep.subr.mxu0 0.0
      %3727 = vmatpush1.msra.mxu0 0.0
      %3728 = vmatprep.subr.mxu0 0.0
      %3729 = vmatpush1.msra.mxu0 0.0
      %3730 = vmatprep.subr.mxu0 0.0
      %3731 = vmatpush1.msra.mxu0 0.0
      %3732 = vmatprep.subr.mxu0 0.0
      %3733 = vmatpush1.msra.mxu0 0.0
      %3734 = vmatprep.subr.mxu0 0.0
      %3735 = vmatpush1.msra.mxu0 0.0
      %3736 = vmatprep.subr.mxu0 0.0
      %3737 = vmatpush1.msra.mxu0 0.0
      %3738 = vmatprep.subr.mxu0 0.0
      %3739 = vmatpush1.msra.mxu0 0.0
      %3740 = vmatprep.subr.mxu0 0.0
      %3741 = vmatpush1.msra.mxu0 0.0
      %3742 = vmatprep.subr.mxu0 0.0
      %3743 = vmatpush1.msra.mxu0 0.0
      %3744 = vmatprep.subr.mxu0 0.0
      %3745 = vmatpush1.msra.mxu0 0.0
      %3746 = vmatprep.subr.mxu0 0.0
      %3747 = vmatpush1.msra.mxu0 0.0
      %3748 = vmatprep.subr.mxu0 0.0
      %3749 = vmatpush1.msra.mxu0 0.0
      %3750 = vmatprep.subr.mxu0 0.0
      %3751 = vmatpush1.msra.mxu0 0.0
      %3752 = vmatprep.subr.mxu0 0.0
      %3753 = vmatpush1.msra.mxu0 0.0
      %3754 = vmatprep.subr.mxu0 0.0
      %3755 = vmatpush1.msra.mxu0 0.0
      %3756 = vmatprep.subr.mxu0 0.0
      %3757 = vmatpush1.msra.mxu0 0.0
      %3758 = vmatprep.subr.mxu0 0.0
      %3759 = vmatpush1.msra.mxu0 0.0
      %3760 = vmatprep.subr.mxu0 0.0
      %3761 = vmatpush1.msra.mxu0 0.0
      %3762 = vmatprep.subr.mxu0 0.0
      %3763 = vmatpush1.msra.mxu0 0.0
      %3764 = vmatprep.subr.mxu0 0.0
      %3765 = vmatpush1.msra.mxu0 0.0
      %3766 = vmatprep.subr.mxu0 0.0
      %3767 = vmatpush1.msra.mxu0 0.0
      %3768 = vmatprep.subr.mxu0 0.0
      %3769 = vmatpush1.msra.mxu0 0.0
      %3770 = vmatprep.subr.mxu0 0.0
      %3771 = vmatpush1.msra.mxu0 0.0
      %3772 = vmatprep.subr.mxu0 0.0
      %3773 = vmatpush1.msra.mxu0 0.0
      %3774 = vmatprep.subr.mxu0 0.0
      %3775 = vmatpush1.msra.mxu0 0.0
      %3776 = vmatprep.subr.mxu0 0.0
      %3777 = vmatpush1.msra.mxu0 0.0
      %3778 = vmatprep.subr.mxu0 0.0
      %3779 = vmatpush1.msra.mxu0 0.0
      %3780 = vmatprep.subr.mxu0 0.0
      %3781 = vmatpush1.msra.mxu0 0.0
      %3782 = vmatprep.mubr.f32.mxu0 0.0
      %3783 = vmatmul.mubr.f32.gmra.mrb[0].mxu0 %v3716
      %v3784 = vpop.f32.mrb[0].mxu0
      %v3785 = vadd.f32 %v3713, %v3784
      %v3786 = vpop.f32.mrb[0].mxu0
      %3787 = vdwg.mxu0
      %v3788 = vmul.f32 %v3785, 0.5
      %v3789 = vmul.f32 %v3785, 0.70710677
      %v3790 = verf.f32.pop %v3789
      %v3791 = vadd.f32 %v3790, 1.0
      %v3792 = vmul.f32 %v3788, %v3791
      %s3793 = scalar_lea.vmem %s12, 128
      %v3794 = vld [vmem:[%s3793] sm:$0xff]
      %v3795 = vld [vmem:[%s3793 + $0x8] sm:$0xff]
      %v3796 = vld [vmem:[%s3793 + $0x10] sm:$0xff]
      %v3797 = vld [vmem:[%s3793 + $0x18] sm:$0xff]
      %v3798 = vld [vmem:[%s3793 + $0x20] sm:$0xff]
      %v3799 = vld [vmem:[%s3793 + $0x28] sm:$0xff]
      %v3800 = vld [vmem:[%s3793 + $0x30] sm:$0xff]
      %v3801 = vld [vmem:[%s3793 + $0x38] sm:$0xff]
      %s3802 = scalar_lea.vmem %s13, 2
      %v3803 = vld [vmem:[%s3802] sm:$0x1]
      %v3805 = vlaneseq
      %v3806 = vshrl.u32 %v3805, 7
      %v3807 = vsub.s32 0, %v3806
      %v3808 = vrot.slane %v3803, %v3807
      %v3811 = vsel %vm1611, %v3792, 0
      %3813 = vmatprep.subr.mxu0 0.0
      %3814 = vmatpush1.msra.mxu0 %v3794
      %3815 = vmatprep.subr.mxu0 0.0
      %3816 = vmatpush1.msra.mxu0 %v3795
      %3817 = vmatprep.subr.mxu0 0.0
      %3818 = vmatpush1.msra.mxu0 %v3796
      %3819 = vmatprep.subr.mxu0 0.0
      %3820 = vmatpush1.msra.mxu0 %v3797
      %3821 = vmatprep.subr.mxu0 0.0
      %3822 = vmatpush1.msra.mxu0 %v3798
      %3823 = vmatprep.subr.mxu0 0.0
      %3824 = vmatpush1.msra.mxu0 %v3799
      %3825 = vmatprep.subr.mxu0 0.0
      %3826 = vmatpush1.msra.mxu0 %v3800
      %3827 = vmatprep.subr.mxu0 0.0
      %3828 = vmatpush1.msra.mxu0 %v3801
      %3829 = vmatprep.subr.mxu0 0.0
      %3830 = vmatpush1.msra.mxu0 0.0
      %3831 = vmatprep.subr.mxu0 0.0
      %3832 = vmatpush1.msra.mxu0 0.0
      %3833 = vmatprep.subr.mxu0 0.0
      %3834 = vmatpush1.msra.mxu0 0.0
      %3835 = vmatprep.subr.mxu0 0.0
      %3836 = vmatpush1.msra.mxu0 0.0
      %3837 = vmatprep.subr.mxu0 0.0
      %3838 = vmatpush1.msra.mxu0 0.0
      %3839 = vmatprep.subr.mxu0 0.0
      %3840 = vmatpush1.msra.mxu0 0.0
      %3841 = vmatprep.subr.mxu0 0.0
      %3842 = vmatpush1.msra.mxu0 0.0
      %3843 = vmatprep.subr.mxu0 0.0
      %3844 = vmatpush1.msra.mxu0 0.0
      %3845 = vmatprep.subr.mxu0 0.0
      %3846 = vmatpush1.msra.mxu0 0.0
      %3847 = vmatprep.subr.mxu0 0.0
      %3848 = vmatpush1.msra.mxu0 0.0
      %3849 = vmatprep.subr.mxu0 0.0
      %3850 = vmatpush1.msra.mxu0 0.0
      %3851 = vmatprep.subr.mxu0 0.0
      %3852 = vmatpush1.msra.mxu0 0.0
      %3853 = vmatprep.subr.mxu0 0.0
      %3854 = vmatpush1.msra.mxu0 0.0
      %3855 = vmatprep.subr.mxu0 0.0
      %3856 = vmatpush1.msra.mxu0 0.0
      %3857 = vmatprep.subr.mxu0 0.0
      %3858 = vmatpush1.msra.mxu0 0.0
      %3859 = vmatprep.subr.mxu0 0.0
      %3860 = vmatpush1.msra.mxu0 0.0
      %3861 = vmatprep.subr.mxu0 0.0
      %3862 = vmatpush1.msra.mxu0 0.0
      %3863 = vmatprep.subr.mxu0 0.0
      %3864 = vmatpush1.msra.mxu0 0.0
      %3865 = vmatprep.subr.mxu0 0.0
      %3866 = vmatpush1.msra.mxu0 0.0
      %3867 = vmatprep.subr.mxu0 0.0
      %3868 = vmatpush1.msra.mxu0 0.0
      %3869 = vmatprep.subr.mxu0 0.0
      %3870 = vmatpush1.msra.mxu0 0.0
      %3871 = vmatprep.subr.mxu0 0.0
      %3872 = vmatpush1.msra.mxu0 0.0
      %3873 = vmatprep.subr.mxu0 0.0
      %3874 = vmatpush1.msra.mxu0 0.0
      %3875 = vmatprep.subr.mxu0 0.0
      %3876 = vmatpush1.msra.mxu0 0.0
      %3877 = vmatprep.mubr.f32.mxu0 0.0
      %3878 = vmatmul.mubr.f32.gmra.mrb[0].mxu0 %v3811
      %v3879 = vpop.f32.mrb[0].mxu0
      %v3880 = vadd.f32 %v3808, %v3879
      %v3881 = vpop.f32.mrb[0].mxu0
      %3882 = vdwg.mxu0
      %v3883 = vadd.f32 %v3880, %v3701
      %s3884 = scalar_lea.vmem %s14, 2
      %v3885 = vld [vmem:[%s3884] sm:$0x1]
      %s3886 = scalar_lea.vmem %s15, 2
      %v3887 = vld [vmem:[%s3886] sm:$0x1]
      %v3888 = vsel %vm589, %v3883, 0.0
      %3889 = vadd.xlane.f32.xlu0 %v3888
      %v3890 = vpop.xlane.xlu0 %3889
      %v3891 = vmul.f32 %v3890, %v593
      %v3892 = vsub.f32 %v3883, %v3891
      %v3893 = vmul.f32 %v3892, %v3892
      %v3894 = vsel %vm589, %v3893, 0.0
      %3895 = vadd.xlane.f32.xlu0 %v3894
      %v3896 = vpop.xlane.xlu0 %3895
      %v3897 = vmul.f32 %v3896, %v593
      %v3898 = vadd.f32 %v3897, 1e-12
      %v3899 = vrsqrt.pop %v3898
      %v3900 = vmul.f32 %v3892, %v3899
      %v3902 = vlaneseq
      %v3903 = vshrl.u32 %v3902, 7
      %v3904 = vsub.s32 0, %v3903
      %v3905 = vrot.slane %v3885, %v3904
      %v3907 = vmul.f32 %v3900, %v3905
      %v3909 = vlaneseq
      %v3910 = vshrl.u32 %v3909, 7
      %v3911 = vsub.s32 0, %v3910
      %v3912 = vrot.slane %v3887, %v3911
      %v3914 = vadd.f32 %v3907, %v3912
      %v3915 = vadd.f32 %v2815, %v3914
      %s3916 = scalar_lea.vmem %s4, 96
      %v3917 = vld [vmem:[%s3916] sm:$0xff]
      %v3918 = vld [vmem:[%s3916 + $0x8] sm:$0xff]
      %v3919 = vld [vmem:[%s3916 + $0x10] sm:$0xff]
      %v3920 = vld [vmem:[%s3916 + $0x18] sm:$0xff]
      %s3921 = scalar_lea.vmem %s5, 3
      %v3922 = vld [vmem:[%s3921] sm:$0x1]
      %v3924 = vlaneseq
      %v3925 = vshrl.u32 %v3924, 7
      %v3926 = vsub.s32 0, %v3925
      %v3927 = vrot.slane %v3922, %v3926
      %v3930 = vsel %vm589, %v3914, 0
      %3932 = vmatprep.subr.mxu0 0.0
      %3933 = vmatpush1.msra.mxu0 %v3917
      %3934 = vmatprep.subr.mxu0 0.0
      %3935 = vmatpush1.msra.mxu0 %v3918
      %3936 = vmatprep.subr.mxu0 0.0
      %3937 = vmatpush1.msra.mxu0 %v3919
      %3938 = vmatprep.subr.mxu0 0.0
      %3939 = vmatpush1.msra.mxu0 %v3920
      %3940 = vmatprep.subr.mxu0 0.0
      %3941 = vmatpush1.msra.mxu0 0.0
      %3942 = vmatprep.subr.mxu0 0.0
      %3943 = vmatpush1.msra.mxu0 0.0
      %3944 = vmatprep.subr.mxu0 0.0
      %3945 = vmatpush1.msra.mxu0 0.0
      %3946 = vmatprep.subr.mxu0 0.0
      %3947 = vmatpush1.msra.mxu0 0.0
      %3948 = vmatprep.subr.mxu0 0.0
      %3949 = vmatpush1.msra.mxu0 0.0
      %3950 = vmatprep.subr.mxu0 0.0
      %3951 = vmatpush1.msra.mxu0 0.0
      %3952 = vmatprep.subr.mxu0 0.0
      %3953 = vmatpush1.msra.mxu0 0.0
      %3954 = vmatprep.subr.mxu0 0.0
      %3955 = vmatpush1.msra.mxu0 0.0
      %3956 = vmatprep.subr.mxu0 0.0
      %3957 = vmatpush1.msra.mxu0 0.0
      %3958 = vmatprep.subr.mxu0 0.0
      %3959 = vmatpush1.msra.mxu0 0.0
      %3960 = vmatprep.subr.mxu0 0.0
      %3961 = vmatpush1.msra.mxu0 0.0
      %3962 = vmatprep.subr.mxu0 0.0
      %3963 = vmatpush1.msra.mxu0 0.0
      %3964 = vmatprep.subr.mxu0 0.0
      %3965 = vmatpush1.msra.mxu0 0.0
      %3966 = vmatprep.subr.mxu0 0.0
      %3967 = vmatpush1.msra.mxu0 0.0
      %3968 = vmatprep.subr.mxu0 0.0
      %3969 = vmatpush1.msra.mxu0 0.0
      %3970 = vmatprep.subr.mxu0 0.0
      %3971 = vmatpush1.msra.mxu0 0.0
      %3972 = vmatprep.subr.mxu0 0.0
      %3973 = vmatpush1.msra.mxu0 0.0
      %3974 = vmatprep.subr.mxu0 0.0
      %3975 = vmatpush1.msra.mxu0 0.0
      %3976 = vmatprep.subr.mxu0 0.0
      %3977 = vmatpush1.msra.mxu0 0.0
      %3978 = vmatprep.subr.mxu0 0.0
      %3979 = vmatpush1.msra.mxu0 0.0
      %3980 = vmatprep.subr.mxu0 0.0
      %3981 = vmatpush1.msra.mxu0 0.0
      %3982 = vmatprep.subr.mxu0 0.0
      %3983 = vmatpush1.msra.mxu0 0.0
      %3984 = vmatprep.subr.mxu0 0.0
      %3985 = vmatpush1.msra.mxu0 0.0
      %3986 = vmatprep.subr.mxu0 0.0
      %3987 = vmatpush1.msra.mxu0 0.0
      %3988 = vmatprep.subr.mxu0 0.0
      %3989 = vmatpush1.msra.mxu0 0.0
      %3990 = vmatprep.subr.mxu0 0.0
      %3991 = vmatpush1.msra.mxu0 0.0
      %3992 = vmatprep.subr.mxu0 0.0
      %3993 = vmatpush1.msra.mxu0 0.0
      %3994 = vmatprep.subr.mxu0 0.0
      %3995 = vmatpush1.msra.mxu0 0.0
      %3996 = vmatprep.mubr.f32.mxu0 0.0
      %3997 = vmatmul.mubr.f32.gmra.mrb[0].mxu0 %v3930
      %v3998 = vpop.f32.mrb[0].mxu0
      %v3999 = vadd.f32 %v3927, %v3998
      %v4000 = vpop.f32.mrb[0].mxu0
      %4001 = vdwg.mxu0
      %4003 = vrot.lane.b32.xlu0 %v3999, 120
      %v4004 = vpop.permute.xlu0 %4003
      %v4005 = vsel %vm705, %v3999, 0
      %v4007 = vsel %vm705, %v4004, 0
      %4009 = vmatprep.subr.mxu0 0.0
      %4010 = vmatpush1.xpose.msra.mxu0 %v4007
      %4011 = vmatprep.subr.mxu0 0.0
      %4012 = vmatpush1.xpose.msra.mxu0 0.0
      %4013 = vmatprep.subr.mxu0 0.0
      %4014 = vmatpush1.xpose.msra.mxu0 0.0
      %4015 = vmatprep.subr.mxu0 0.0
      %4016 = vmatpush1.xpose.msra.mxu0 0.0
      %4017 = vmatprep.subr.mxu0 0.0
      %4018 = vmatpush1.xpose.msra.mxu0 0.0
      %4019 = vmatprep.subr.mxu0 0.0
      %4020 = vmatpush1.xpose.msra.mxu0 0.0
      %4021 = vmatprep.subr.mxu0 0.0
      %4022 = vmatpush1.xpose.msra.mxu0 0.0
      %4023 = vmatprep.subr.mxu0 0.0
      %4024 = vmatpush1.xpose.msra.mxu0 0.0
      %4025 = vmatprep.subr.mxu0 0.0
      %4026 = vmatpush1.xpose.msra.mxu0 0.0
      %4027 = vmatprep.subr.mxu0 0.0
      %4028 = vmatpush1.xpose.msra.mxu0 0.0
      %4029 = vmatprep.subr.mxu0 0.0
      %4030 = vmatpush1.xpose.msra.mxu0 0.0
      %4031 = vmatprep.subr.mxu0 0.0
      %4032 = vmatpush1.xpose.msra.mxu0 0.0
      %4033 = vmatprep.subr.mxu0 0.0
      %4034 = vmatpush1.xpose.msra.mxu0 0.0
      %4035 = vmatprep.subr.mxu0 0.0
      %4036 = vmatpush1.xpose.msra.mxu0 0.0
      %4037 = vmatprep.subr.mxu0 0.0
      %4038 = vmatpush1.xpose.msra.mxu0 0.0
      %4039 = vmatprep.subr.mxu0 0.0
      %4040 = vmatpush1.xpose.msra.mxu0 0.0
      %4041 = vmatprep.subr.mxu0 0.0
      %4042 = vmatpush1.xpose.msra.mxu0 0.0
      %4043 = vmatprep.subr.mxu0 0.0
      %4044 = vmatpush1.xpose.msra.mxu0 0.0
      %4045 = vmatprep.subr.mxu0 0.0
      %4046 = vmatpush1.xpose.msra.mxu0 0.0
      %4047 = vmatprep.subr.mxu0 0.0
      %4048 = vmatpush1.xpose.msra.mxu0 0.0
      %4049 = vmatprep.subr.mxu0 0.0
      %4050 = vmatpush1.xpose.msra.mxu0 0.0
      %4051 = vmatprep.subr.mxu0 0.0
      %4052 = vmatpush1.xpose.msra.mxu0 0.0
      %4053 = vmatprep.subr.mxu0 0.0
      %4054 = vmatpush1.xpose.msra.mxu0 0.0
      %4055 = vmatprep.subr.mxu0 0.0
      %4056 = vmatpush1.xpose.msra.mxu0 0.0
      %4057 = vmatprep.subr.mxu0 0.0
      %4058 = vmatpush1.xpose.msra.mxu0 0.0
      %4059 = vmatprep.subr.mxu0 0.0
      %4060 = vmatpush1.xpose.msra.mxu0 0.0
      %4061 = vmatprep.subr.mxu0 0.0
      %4062 = vmatpush1.xpose.msra.mxu0 0.0
      %4063 = vmatprep.subr.mxu0 0.0
      %4064 = vmatpush1.xpose.msra.mxu0 0.0
      %4065 = vmatprep.subr.mxu0 0.0
      %4066 = vmatpush1.xpose.msra.mxu0 0.0
      %4067 = vmatprep.subr.mxu0 0.0
      %4068 = vmatpush1.xpose.msra.mxu0 0.0
      %4069 = vmatprep.subr.mxu0 0.0
      %4070 = vmatpush1.xpose.msra.mxu0 0.0
      %4071 = vmatprep.subr.mxu0 0.0
      %4072 = vmatpush1.xpose.msra.mxu0 0.0
      %4073 = vmatprep.mubr.f32.mxu0 0.0
      %4074 = vmatmul.mubr.f32.gmra.mrb[0].mxu0 %v4005
      %v4075 = vpop.f32.mrb[0].mxu0
      %v4076 = vadd.f32 0.0, %v4075
      %v4077 = vpop.f32.mrb[0].mxu0
      %4078 = vdwg.mxu0
      %v4079 = vmul.f32 %v4076, 0.35355338
      %v4080 = vadd.f32 %v4079, %v785
      %v4081 = vsel %vm705, %v4080, -inf
      %4082 = vmax.xlane.f32.xlu0 %v4081
      %v4083 = vpop.xlane.xlu0 %4082
      %v4084 = vsub.f32 %v4080, %v4083
      %v4085 = vmul.f32 %v4084, 1.442695
      %v4086 = vpow.pop %v4085
      %v4087 = vsel %vm705, %v4086, 0.0
      %4088 = vadd.xlane.f32.xlu0 %v4087
      %v4089 = vpop.xlane.xlu0 %4088
      %v4090 = vrcp.pop %v4089
      %v4091 = vmul.f32 %v4086, %v4090
      %4092 = vrot.lane.b32.xlu0 %v3999, 112
      %v4093 = vpop.permute.xlu0 %4092
      %v4096 = vsel %vm705, %v4091, 0
      %4098 = vmatprep.subr.mxu0 0.0
      %4099 = vmatpush1.msra.mxu0 %v4093
      %4100 = vmatprep.subr.mxu0 0.0
      %4101 = vmatpush1.msra.mxu0 0.0
      %4102 = vmatprep.subr.mxu0 0.0
      %4103 = vmatpush1.msra.mxu0 0.0
      %4104 = vmatprep.subr.mxu0 0.0
      %4105 = vmatpush1.msra.mxu0 0.0
      %4106 = vmatprep.subr.mxu0 0.0
      %4107 = vmatpush1.msra.mxu0 0.0
      %4108 = vmatprep.subr.mxu0 0.0
      %4109 = vmatpush1.msra.mxu0 0.0
      %4110 = vmatprep.subr.mxu0 0.0
      %4111 = vmatpush1.msra.mxu0 0.0
      %4112 = vmatprep.subr.mxu0 0.0
      %4113 = vmatpush1.msra.mxu0 0.0
      %4114 = vmatprep.subr.mxu0 0.0
      %4115 = vmatpush1.msra.mxu0 0.0
      %4116 = vmatprep.subr.mxu0 0.0
      %4117 = vmatpush1.msra.mxu0 0.0
      %4118 = vmatprep.subr.mxu0 0.0
      %4119 = vmatpush1.msra.mxu0 0.0
      %4120 = vmatprep.subr.mxu0 0.0
      %4121 = vmatpush1.msra.mxu0 0.0
      %4122 = vmatprep.subr.mxu0 0.0
      %4123 = vmatpush1.msra.mxu0 0.0
      %4124 = vmatprep.subr.mxu0 0.0
      %4125 = vmatpush1.msra.mxu0 0.0
      %4126 = vmatprep.subr.mxu0 0.0
      %4127 = vmatpush1.msra.mxu0 0.0
      %4128 = vmatprep.subr.mxu0 0.0
      %4129 = vmatpush1.msra.mxu0 0.0
      %4130 = vmatprep.subr.mxu0 0.0
      %4131 = vmatpush1.msra.mxu0 0.0
      %4132 = vmatprep.subr.mxu0 0.0
      %4133 = vmatpush1.msra.mxu0 0.0
      %4134 = vmatprep.subr.mxu0 0.0
      %4135 = vmatpush1.msra.mxu0 0.0
      %4136 = vmatprep.subr.mxu0 0.0
      %4137 = vmatpush1.msra.mxu0 0.0
      %4138 = vmatprep.subr.mxu0 0.0
      %4139 = vmatpush1.msra.mxu0 0.0
      %4140 = vmatprep.subr.mxu0 0.0
      %4141 = vmatpush1.msra.mxu0 0.0
      %4142 = vmatprep.subr.mxu0 0.0
      %4143 = vmatpush1.msra.mxu0 0.0
      %4144 = vmatprep.subr.mxu0 0.0
      %4145 = vmatpush1.msra.mxu0 0.0
      %4146 = vmatprep.subr.mxu0 0.0
      %4147 = vmatpush1.msra.mxu0 0.0
      %4148 = vmatprep.subr.mxu0 0.0
      %4149 = vmatpush1.msra.mxu0 0.0
      %4150 = vmatprep.subr.mxu0 0.0
      %4151 = vmatpush1.msra.mxu0 0.0
      %4152 = vmatprep.subr.mxu0 0.0
      %4153 = vmatpush1.msra.mxu0 0.0
      %4154 = vmatprep.subr.mxu0 0.0
      %4155 = vmatpush1.msra.mxu0 0.0
      %4156 = vmatprep.subr.mxu0 0.0
      %4157 = vmatpush1.msra.mxu0 0.0
      %4158 = vmatprep.subr.mxu0 0.0
      %4159 = vmatpush1.msra.mxu0 0.0
      %4160 = vmatprep.subr.mxu0 0.0
      %4161 = vmatpush1.msra.mxu0 0.0
      %4162 = vmatprep.mubr.f32.mxu0 0.0
      %4163 = vmatmul.mubr.f32.gmra.mrb[0].mxu0 %v4096
      %v4164 = vpop.f32.mrb[0].mxu0
      %v4165 = vadd.f32 0.0, %v4164
      %v4166 = vpop.f32.mrb[0].mxu0
      %4167 = vdwg.mxu0
      %4168 = vrot.lane.b32.xlu0 %v3999, 104
      %v4169 = vpop.permute.xlu0 %4168
      %4170 = vrot.lane.b32.xlu0 %v3999, 96
      %v4171 = vpop.permute.xlu0 %4170
      %v4172 = vsel %vm705, %v4169, 0
      %v4174 = vsel %vm705, %v4171, 0
      %4176 = vmatprep.subr.mxu0 0.0
      %4177 = vmatpush1.xpose.msra.mxu0 %v4174
      %4178 = vmatprep.subr.mxu0 0.0
      %4179 = vmatpush1.xpose.msra.mxu0 0.0
      %4180 = vmatprep.subr.mxu0 0.0
      %4181 = vmatpush1.xpose.msra.mxu0 0.0
      %4182 = vmatprep.subr.mxu0 0.0
      %4183 = vmatpush1.xpose.msra.mxu0 0.0
      %4184 = vmatprep.subr.mxu0 0.0
      %4185 = vmatpush1.xpose.msra.mxu0 0.0
      %4186 = vmatprep.subr.mxu0 0.0
      %4187 = vmatpush1.xpose.msra.mxu0 0.0
      %4188 = vmatprep.subr.mxu0 0.0
      %4189 = vmatpush1.xpose.msra.mxu0 0.0
      %4190 = vmatprep.subr.mxu0 0.0
      %4191 = vmatpush1.xpose.msra.mxu0 0.0
      %4192 = vmatprep.subr.mxu0 0.0
      %4193 = vmatpush1.xpose.msra.mxu0 0.0
      %4194 = vmatprep.subr.mxu0 0.0
      %4195 = vmatpush1.xpose.msra.mxu0 0.0
      %4196 = vmatprep.subr.mxu0 0.0
      %4197 = vmatpush1.xpose.msra.mxu0 0.0
      %4198 = vmatprep.subr.mxu0 0.0
      %4199 = vmatpush1.xpose.msra.mxu0 0.0
      %4200 = vmatprep.subr.mxu0 0.0
      %4201 = vmatpush1.xpose.msra.mxu0 0.0
      %4202 = vmatprep.subr.mxu0 0.0
      %4203 = vmatpush1.xpose.msra.mxu0 0.0
      %4204 = vmatprep.subr.mxu0 0.0
      %4205 = vmatpush1.xpose.msra.mxu0 0.0
      %4206 = vmatprep.subr.mxu0 0.0
      %4207 = vmatpush1.xpose.msra.mxu0 0.0
      %4208 = vmatprep.subr.mxu0 0.0
      %4209 = vmatpush1.xpose.msra.mxu0 0.0
      %4210 = vmatprep.subr.mxu0 0.0
      %4211 = vmatpush1.xpose.msra.mxu0 0.0
      %4212 = vmatprep.subr.mxu0 0.0
      %4213 = vmatpush1.xpose.msra.mxu0 0.0
      %4214 = vmatprep.subr.mxu0 0.0
      %4215 = vmatpush1.xpose.msra.mxu0 0.0
      %4216 = vmatprep.subr.mxu0 0.0
      %4217 = vmatpush1.xpose.msra.mxu0 0.0
      %4218 = vmatprep.subr.mxu0 0.0
      %4219 = vmatpush1.xpose.msra.mxu0 0.0
      %4220 = vmatprep.subr.mxu0 0.0
      %4221 = vmatpush1.xpose.msra.mxu0 0.0
      %4222 = vmatprep.subr.mxu0 0.0
      %4223 = vmatpush1.xpose.msra.mxu0 0.0
      %4224 = vmatprep.subr.mxu0 0.0
      %4225 = vmatpush1.xpose.msra.mxu0 0.0
      %4226 = vmatprep.subr.mxu0 0.0
      %4227 = vmatpush1.xpose.msra.mxu0 0.0
      %4228 = vmatprep.subr.mxu0 0.0
      %4229 = vmatpush1.xpose.msra.mxu0 0.0
      %4230 = vmatprep.subr.mxu0 0.0
      %4231 = vmatpush1.xpose.msra.mxu0 0.0
      %4232 = vmatprep.subr.mxu0 0.0
      %4233 = vmatpush1.xpose.msra.mxu0 0.0
      %4234 = vmatprep.subr.mxu0 0.0
      %4235 = vmatpush1.xpose.msra.mxu0 0.0
      %4236 = vmatprep.subr.mxu0 0.0
      %4237 = vmatpush1.xpose.msra.mxu0 0.0
      %4238 = vmatprep.subr.mxu0 0.0
      %4239 = vmatpush1.xpose.msra.mxu0 0.0
      %4240 = vmatprep.mubr.f32.mxu0 0.0
      %4241 = vmatmul.mubr.f32.gmra.mrb[0].mxu0 %v4172
      %v4242 = vpop.f32.mrb[0].mxu0
      %v4243 = vadd.f32 0.0, %v4242
      %v4244 = vpop.f32.mrb[0].mxu0
      %4245 = vdwg.mxu0
      %v4246 = vmul.f32 %v4243, 0.35355338
      %v4247 = vadd.f32 %v4246, %v785
      %v4248 = vsel %vm705, %v4247, -inf
      %4249 = vmax.xlane.f32.xlu0 %v4248
      %v4250 = vpop.xlane.xlu0 %4249
      %v4251 = vsub.f32 %v4247, %v4250
      %v4252 = vmul.f32 %v4251, 1.442695
      %v4253 = vpow.pop %v4252
      %v4254 = vsel %vm705, %v4253, 0.0
      %4255 = vadd.xlane.f32.xlu0 %v4254
      %v4256 = vpop.xlane.xlu0 %4255
      %v4257 = vrcp.pop %v4256
      %v4258 = vmul.f32 %v4253, %v4257
      %4259 = vrot.lane.b32.xlu0 %v3999, 88
      %v4260 = vpop.permute.xlu0 %4259
      %v4263 = vsel %vm705, %v4258, 0
      %4265 = vmatprep.subr.mxu0 0.0
      %4266 = vmatpush1.msra.mxu0 %v4260
      %4267 = vmatprep.subr.mxu0 0.0
      %4268 = vmatpush1.msra.mxu0 0.0
      %4269 = vmatprep.subr.mxu0 0.0
      %4270 = vmatpush1.msra.mxu0 0.0
      %4271 = vmatprep.subr.mxu0 0.0
      %4272 = vmatpush1.msra.mxu0 0.0
      %4273 = vmatprep.subr.mxu0 0.0
      %4274 = vmatpush1.msra.mxu0 0.0
      %4275 = vmatprep.subr.mxu0 0.0
      %4276 = vmatpush1.msra.mxu0 0.0
      %4277 = vmatprep.subr.mxu0 0.0
      %4278 = vmatpush1.msra.mxu0 0.0
      %4279 = vmatprep.subr.mxu0 0.0
      %4280 = vmatpush1.msra.mxu0 0.0
      %4281 = vmatprep.subr.mxu0 0.0
      %4282 = vmatpush1.msra.mxu0 0.0
      %4283 = vmatprep.subr.mxu0 0.0
      %4284 = vmatpush1.msra.mxu0 0.0
      %4285 = vmatprep.subr.mxu0 0.0
      %4286 = vmatpush1.msra.mxu0 0.0
      %4287 = vmatprep.subr.mxu0 0.0
      %4288 = vmatpush1.msra.mxu0 0.0
      %4289 = vmatprep.subr.mxu0 0.0
      %4290 = vmatpush1.msra.mxu0 0.0
      %4291 = vmatprep.subr.mxu0 0.0
      %4292 = vmatpush1.msra.mxu0 0.0
      %4293 = vmatprep.subr.mxu0 0.0
      %4294 = vmatpush1.msra.mxu0 0.0
      %4295 = vmatprep.subr.mxu0 0.0
      %4296 = vmatpush1.msra.mxu0 0.0
      %4297 = vmatprep.subr.mxu0 0.0
      %4298 = vmatpush1.msra.mxu0 0.0
      %4299 = vmatprep.subr.mxu0 0.0
      %4300 = vmatpush1.msra.mxu0 0.0
      %4301 = vmatprep.subr.mxu0 0.0
      %4302 = vmatpush1.msra.mxu0 0.0
      %4303 = vmatprep.subr.mxu0 0.0
      %4304 = vmatpush1.msra.mxu0 0.0
      %4305 = vmatprep.subr.mxu0 0.0
      %4306 = vmatpush1.msra.mxu0 0.0
      %4307 = vmatprep.subr.mxu0 0.0
      %4308 = vmatpush1.msra.mxu0 0.0
      %4309 = vmatprep.subr.mxu0 0.0
      %4310 = vmatpush1.msra.mxu0 0.0
      %4311 = vmatprep.subr.mxu0 0.0
      %4312 = vmatpush1.msra.mxu0 0.0
      %4313 = vmatprep.subr.mxu0 0.0
      %4314 = vmatpush1.msra.mxu0 0.0
      %4315 = vmatprep.subr.mxu0 0.0
      %4316 = vmatpush1.msra.mxu0 0.0
      %4317 = vmatprep.subr.mxu0 0.0
      %4318 = vmatpush1.msra.mxu0 0.0
      %4319 = vmatprep.subr.mxu0 0.0
      %4320 = vmatpush1.msra.mxu0 0.0
      %4321 = vmatprep.subr.mxu0 0.0
      %4322 = vmatpush1.msra.mxu0 0.0
      %4323 = vmatprep.subr.mxu0 0.0
      %4324 = vmatpush1.msra.mxu0 0.0
      %4325 = vmatprep.subr.mxu0 0.0
      %4326 = vmatpush1.msra.mxu0 0.0
      %4327 = vmatprep.subr.mxu0 0.0
      %4328 = vmatpush1.msra.mxu0 0.0
      %4329 = vmatprep.mubr.f32.mxu0 0.0
      %4330 = vmatmul.mubr.f32.gmra.mrb[0].mxu0 %v4263
      %v4331 = vpop.f32.mrb[0].mxu0
      %v4332 = vadd.f32 0.0, %v4331
      %v4333 = vpop.f32.mrb[0].mxu0
      %4334 = vdwg.mxu0
      %4335 = vrot.lane.b32.xlu0 %v3999, 80
      %v4336 = vpop.permute.xlu0 %4335
      %4337 = vrot.lane.b32.xlu0 %v3999, 72
      %v4338 = vpop.permute.xlu0 %4337
      %v4339 = vsel %vm705, %v4336, 0
      %v4341 = vsel %vm705, %v4338, 0
      %4343 = vmatprep.subr.mxu0 0.0
      %4344 = vmatpush1.xpose.msra.mxu0 %v4341
      %4345 = vmatprep.subr.mxu0 0.0
      %4346 = vmatpush1.xpose.msra.mxu0 0.0
      %4347 = vmatprep.subr.mxu0 0.0
      %4348 = vmatpush1.xpose.msra.mxu0 0.0
      %4349 = vmatprep.subr.mxu0 0.0
      %4350 = vmatpush1.xpose.msra.mxu0 0.0
      %4351 = vmatprep.subr.mxu0 0.0
      %4352 = vmatpush1.xpose.msra.mxu0 0.0
      %4353 = vmatprep.subr.mxu0 0.0
      %4354 = vmatpush1.xpose.msra.mxu0 0.0
      %4355 = vmatprep.subr.mxu0 0.0
      %4356 = vmatpush1.xpose.msra.mxu0 0.0
      %4357 = vmatprep.subr.mxu0 0.0
      %4358 = vmatpush1.xpose.msra.mxu0 0.0
      %4359 = vmatprep.subr.mxu0 0.0
      %4360 = vmatpush1.xpose.msra.mxu0 0.0
      %4361 = vmatprep.subr.mxu0 0.0
      %4362 = vmatpush1.xpose.msra.mxu0 0.0
      %4363 = vmatprep.subr.mxu0 0.0
      %4364 = vmatpush1.xpose.msra.mxu0 0.0
      %4365 = vmatprep.subr.mxu0 0.0
      %4366 = vmatpush1.xpose.msra.mxu0 0.0
      %4367 = vmatprep.subr.mxu0 0.0
      %4368 = vmatpush1.xpose.msra.mxu0 0.0
      %4369 = vmatprep.subr.mxu0 0.0
      %4370 = vmatpush1.xpose.msra.mxu0 0.0
      %4371 = vmatprep.subr.mxu0 0.0
      %4372 = vmatpush1.xpose.msra.mxu0 0.0
      %4373 = vmatprep.subr.mxu0 0.0
      %4374 = vmatpush1.xpose.msra.mxu0 0.0
      %4375 = vmatprep.subr.mxu0 0.0
      %4376 = vmatpush1.xpose.msra.mxu0 0.0
      %4377 = vmatprep.subr.mxu0 0.0
      %4378 = vmatpush1.xpose.msra.mxu0 0.0
      %4379 = vmatprep.subr.mxu0 0.0
      %4380 = vmatpush1.xpose.msra.mxu0 0.0
      %4381 = vmatprep.subr.mxu0 0.0
      %4382 = vmatpush1.xpose.msra.mxu0 0.0
      %4383 = vmatprep.subr.mxu0 0.0
      %4384 = vmatpush1.xpose.msra.mxu0 0.0
      %4385 = vmatprep.subr.mxu0 0.0
      %4386 = vmatpush1.xpose.msra.mxu0 0.0
      %4387 = vmatprep.subr.mxu0 0.0
      %4388 = vmatpush1.xpose.msra.mxu0 0.0
      %4389 = vmatprep.subr.mxu0 0.0
      %4390 = vmatpush1.xpose.msra.mxu0 0.0
      %4391 = vmatprep.subr.mxu0 0.0
      %4392 = vmatpush1.xpose.msra.mxu0 0.0
      %4393 = vmatprep.subr.mxu0 0.0
      %4394 = vmatpush1.xpose.msra.mxu0 0.0
      %4395 = vmatprep.subr.mxu0 0.0
      %4396 = vmatpush1.xpose.msra.mxu0 0.0
      %4397 = vmatprep.subr.mxu0 0.0
      %4398 = vmatpush1.xpose.msra.mxu0 0.0
      %4399 = vmatprep.subr.mxu0 0.0
      %4400 = vmatpush1.xpose.msra.mxu0 0.0
      %4401 = vmatprep.subr.mxu0 0.0
      %4402 = vmatpush1.xpose.msra.mxu0 0.0
      %4403 = vmatprep.subr.mxu0 0.0
      %4404 = vmatpush1.xpose.msra.mxu0 0.0
      %4405 = vmatprep.subr.mxu0 0.0
      %4406 = vmatpush1.xpose.msra.mxu0 0.0
      %4407 = vmatprep.mubr.f32.mxu0 0.0
      %4408 = vmatmul.mubr.f32.gmra.mrb[0].mxu0 %v4339
      %v4409 = vpop.f32.mrb[0].mxu0
      %v4410 = vadd.f32 0.0, %v4409
      %v4411 = vpop.f32.mrb[0].mxu0
      %4412 = vdwg.mxu0
      %v4413 = vmul.f32 %v4410, 0.35355338
      %v4414 = vadd.f32 %v4413, %v785
      %v4415 = vsel %vm705, %v4414, -inf
      %4416 = vmax.xlane.f32.xlu0 %v4415
      %v4417 = vpop.xlane.xlu0 %4416
      %v4418 = vsub.f32 %v4414, %v4417
      %v4419 = vmul.f32 %v4418, 1.442695
      %v4420 = vpow.pop %v4419
      %v4421 = vsel %vm705, %v4420, 0.0
      %4422 = vadd.xlane.f32.xlu0 %v4421
      %v4423 = vpop.xlane.xlu0 %4422
      %v4424 = vrcp.pop %v4423
      %v4425 = vmul.f32 %v4420, %v4424
      %4426 = vrot.lane.b32.xlu0 %v3999, 64
      %v4427 = vpop.permute.xlu0 %4426
      %v4430 = vsel %vm705, %v4425, 0
      %4432 = vmatprep.subr.mxu0 0.0
      %4433 = vmatpush1.msra.mxu0 %v4427
      %4434 = vmatprep.subr.mxu0 0.0
      %4435 = vmatpush1.msra.mxu0 0.0
      %4436 = vmatprep.subr.mxu0 0.0
      %4437 = vmatpush1.msra.mxu0 0.0
      %4438 = vmatprep.subr.mxu0 0.0
      %4439 = vmatpush1.msra.mxu0 0.0
      %4440 = vmatprep.subr.mxu0 0.0
      %4441 = vmatpush1.msra.mxu0 0.0
      %4442 = vmatprep.subr.mxu0 0.0
      %4443 = vmatpush1.msra.mxu0 0.0
      %4444 = vmatprep.subr.mxu0 0.0
      %4445 = vmatpush1.msra.mxu0 0.0
      %4446 = vmatprep.subr.mxu0 0.0
      %4447 = vmatpush1.msra.mxu0 0.0
      %4448 = vmatprep.subr.mxu0 0.0
      %4449 = vmatpush1.msra.mxu0 0.0
      %4450 = vmatprep.subr.mxu0 0.0
      %4451 = vmatpush1.msra.mxu0 0.0
      %4452 = vmatprep.subr.mxu0 0.0
      %4453 = vmatpush1.msra.mxu0 0.0
      %4454 = vmatprep.subr.mxu0 0.0
      %4455 = vmatpush1.msra.mxu0 0.0
      %4456 = vmatprep.subr.mxu0 0.0
      %4457 = vmatpush1.msra.mxu0 0.0
      %4458 = vmatprep.subr.mxu0 0.0
      %4459 = vmatpush1.msra.mxu0 0.0
      %4460 = vmatprep.subr.mxu0 0.0
      %4461 = vmatpush1.msra.mxu0 0.0
      %4462 = vmatprep.subr.mxu0 0.0
      %4463 = vmatpush1.msra.mxu0 0.0
      %4464 = vmatprep.subr.mxu0 0.0
      %4465 = vmatpush1.msra.mxu0 0.0
      %4466 = vmatprep.subr.mxu0 0.0
      %4467 = vmatpush1.msra.mxu0 0.0
      %4468 = vmatprep.subr.mxu0 0.0
      %4469 = vmatpush1.msra.mxu0 0.0
      %4470 = vmatprep.subr.mxu0 0.0
      %4471 = vmatpush1.msra.mxu0 0.0
      %4472 = vmatprep.subr.mxu0 0.0
      %4473 = vmatpush1.msra.mxu0 0.0
      %4474 = vmatprep.subr.mxu0 0.0
      %4475 = vmatpush1.msra.mxu0 0.0
      %4476 = vmatprep.subr.mxu0 0.0
      %4477 = vmatpush1.msra.mxu0 0.0
      %4478 = vmatprep.subr.mxu0 0.0
      %4479 = vmatpush1.msra.mxu0 0.0
      %4480 = vmatprep.subr.mxu0 0.0
      %4481 = vmatpush1.msra.mxu0 0.0
      %4482 = vmatprep.subr.mxu0 0.0
      %4483 = vmatpush1.msra.mxu0 0.0
      %4484 = vmatprep.subr.mxu0 0.0
      %4485 = vmatpush1.msra.mxu0 0.0
      %4486 = vmatprep.subr.mxu0 0.0
      %4487 = vmatpush1.msra.mxu0 0.0
      %4488 = vmatprep.subr.mxu0 0.0
      %4489 = vmatpush1.msra.mxu0 0.0
      %4490 = vmatprep.subr.mxu0 0.0
      %4491 = vmatpush1.msra.mxu0 0.0
      %4492 = vmatprep.subr.mxu0 0.0
      %4493 = vmatpush1.msra.mxu0 0.0
      %4494 = vmatprep.subr.mxu0 0.0
      %4495 = vmatpush1.msra.mxu0 0.0
      %4496 = vmatprep.mubr.f32.mxu0 0.0
      %4497 = vmatmul.mubr.f32.gmra.mrb[0].mxu0 %v4430
      %v4498 = vpop.f32.mrb[0].mxu0
      %v4499 = vadd.f32 0.0, %v4498
      %v4500 = vpop.f32.mrb[0].mxu0
      %4501 = vdwg.mxu0
      %4502 = vrot.lane.b32.xlu0 %v3999, 56
      %v4503 = vpop.permute.xlu0 %4502
      %4504 = vrot.lane.b32.xlu0 %v3999, 48
      %v4505 = vpop.permute.xlu0 %4504
      %v4506 = vsel %vm705, %v4503, 0
      %v4508 = vsel %vm705, %v4505, 0
      %4510 = vmatprep.subr.mxu0 0.0
      %4511 = vmatpush1.xpose.msra.mxu0 %v4508
      %4512 = vmatprep.subr.mxu0 0.0
      %4513 = vmatpush1.xpose.msra.mxu0 0.0
      %4514 = vmatprep.subr.mxu0 0.0
      %4515 = vmatpush1.xpose.msra.mxu0 0.0
      %4516 = vmatprep.subr.mxu0 0.0
      %4517 = vmatpush1.xpose.msra.mxu0 0.0
      %4518 = vmatprep.subr.mxu0 0.0
      %4519 = vmatpush1.xpose.msra.mxu0 0.0
      %4520 = vmatprep.subr.mxu0 0.0
      %4521 = vmatpush1.xpose.msra.mxu0 0.0
      %4522 = vmatprep.subr.mxu0 0.0
      %4523 = vmatpush1.xpose.msra.mxu0 0.0
      %4524 = vmatprep.subr.mxu0 0.0
      %4525 = vmatpush1.xpose.msra.mxu0 0.0
      %4526 = vmatprep.subr.mxu0 0.0
      %4527 = vmatpush1.xpose.msra.mxu0 0.0
      %4528 = vmatprep.subr.mxu0 0.0
      %4529 = vmatpush1.xpose.msra.mxu0 0.0
      %4530 = vmatprep.subr.mxu0 0.0
      %4531 = vmatpush1.xpose.msra.mxu0 0.0
      %4532 = vmatprep.subr.mxu0 0.0
      %4533 = vmatpush1.xpose.msra.mxu0 0.0
      %4534 = vmatprep.subr.mxu0 0.0
      %4535 = vmatpush1.xpose.msra.mxu0 0.0
      %4536 = vmatprep.subr.mxu0 0.0
      %4537 = vmatpush1.xpose.msra.mxu0 0.0
      %4538 = vmatprep.subr.mxu0 0.0
      %4539 = vmatpush1.xpose.msra.mxu0 0.0
      %4540 = vmatprep.subr.mxu0 0.0
      %4541 = vmatpush1.xpose.msra.mxu0 0.0
      %4542 = vmatprep.subr.mxu0 0.0
      %4543 = vmatpush1.xpose.msra.mxu0 0.0
      %4544 = vmatprep.subr.mxu0 0.0
      %4545 = vmatpush1.xpose.msra.mxu0 0.0
      %4546 = vmatprep.subr.mxu0 0.0
      %4547 = vmatpush1.xpose.msra.mxu0 0.0
      %4548 = vmatprep.subr.mxu0 0.0
      %4549 = vmatpush1.xpose.msra.mxu0 0.0
      %4550 = vmatprep.subr.mxu0 0.0
      %4551 = vmatpush1.xpose.msra.mxu0 0.0
      %4552 = vmatprep.subr.mxu0 0.0
      %4553 = vmatpush1.xpose.msra.mxu0 0.0
      %4554 = vmatprep.subr.mxu0 0.0
      %4555 = vmatpush1.xpose.msra.mxu0 0.0
      %4556 = vmatprep.subr.mxu0 0.0
      %4557 = vmatpush1.xpose.msra.mxu0 0.0
      %4558 = vmatprep.subr.mxu0 0.0
      %4559 = vmatpush1.xpose.msra.mxu0 0.0
      %4560 = vmatprep.subr.mxu0 0.0
      %4561 = vmatpush1.xpose.msra.mxu0 0.0
      %4562 = vmatprep.subr.mxu0 0.0
      %4563 = vmatpush1.xpose.msra.mxu0 0.0
      %4564 = vmatprep.subr.mxu0 0.0
      %4565 = vmatpush1.xpose.msra.mxu0 0.0
      %4566 = vmatprep.subr.mxu0 0.0
      %4567 = vmatpush1.xpose.msra.mxu0 0.0
      %4568 = vmatprep.subr.mxu0 0.0
      %4569 = vmatpush1.xpose.msra.mxu0 0.0
      %4570 = vmatprep.subr.mxu0 0.0
      %4571 = vmatpush1.xpose.msra.mxu0 0.0
      %4572 = vmatprep.subr.mxu0 0.0
      %4573 = vmatpush1.xpose.msra.mxu0 0.0
      %4574 = vmatprep.mubr.f32.mxu0 0.0
      %4575 = vmatmul.mubr.f32.gmra.mrb[0].mxu0 %v4506
      %v4576 = vpop.f32.mrb[0].mxu0
      %v4577 = vadd.f32 0.0, %v4576
      %v4578 = vpop.f32.mrb[0].mxu0
      %4579 = vdwg.mxu0
      %v4580 = vmul.f32 %v4577, 0.35355338
      %v4581 = vadd.f32 %v4580, %v785
      %v4582 = vsel %vm705, %v4581, -inf
      %4583 = vmax.xlane.f32.xlu0 %v4582
      %v4584 = vpop.xlane.xlu0 %4583
      %v4585 = vsub.f32 %v4581, %v4584
      %v4586 = vmul.f32 %v4585, 1.442695
      %v4587 = vpow.pop %v4586
      %v4588 = vsel %vm705, %v4587, 0.0
      %4589 = vadd.xlane.f32.xlu0 %v4588
      %v4590 = vpop.xlane.xlu0 %4589
      %v4591 = vrcp.pop %v4590
      %v4592 = vmul.f32 %v4587, %v4591
      %4593 = vrot.lane.b32.xlu0 %v3999, 40
      %v4594 = vpop.permute.xlu0 %4593
      %v4597 = vsel %vm705, %v4592, 0
      %4599 = vmatprep.subr.mxu0 0.0
      %4600 = vmatpush1.msra.mxu0 %v4594
      %4601 = vmatprep.subr.mxu0 0.0
      %4602 = vmatpush1.msra.mxu0 0.0
      %4603 = vmatprep.subr.mxu0 0.0
      %4604 = vmatpush1.msra.mxu0 0.0
      %4605 = vmatprep.subr.mxu0 0.0
      %4606 = vmatpush1.msra.mxu0 0.0
      %4607 = vmatprep.subr.mxu0 0.0
      %4608 = vmatpush1.msra.mxu0 0.0
      %4609 = vmatprep.subr.mxu0 0.0
      %4610 = vmatpush1.msra.mxu0 0.0
      %4611 = vmatprep.subr.mxu0 0.0
      %4612 = vmatpush1.msra.mxu0 0.0
      %4613 = vmatprep.subr.mxu0 0.0
      %4614 = vmatpush1.msra.mxu0 0.0
      %4615 = vmatprep.subr.mxu0 0.0
      %4616 = vmatpush1.msra.mxu0 0.0
      %4617 = vmatprep.subr.mxu0 0.0
      %4618 = vmatpush1.msra.mxu0 0.0
      %4619 = vmatprep.subr.mxu0 0.0
      %4620 = vmatpush1.msra.mxu0 0.0
      %4621 = vmatprep.subr.mxu0 0.0
      %4622 = vmatpush1.msra.mxu0 0.0
      %4623 = vmatprep.subr.mxu0 0.0
      %4624 = vmatpush1.msra.mxu0 0.0
      %4625 = vmatprep.subr.mxu0 0.0
      %4626 = vmatpush1.msra.mxu0 0.0
      %4627 = vmatprep.subr.mxu0 0.0
      %4628 = vmatpush1.msra.mxu0 0.0
      %4629 = vmatprep.subr.mxu0 0.0
      %4630 = vmatpush1.msra.mxu0 0.0
      %4631 = vmatprep.subr.mxu0 0.0
      %4632 = vmatpush1.msra.mxu0 0.0
      %4633 = vmatprep.subr.mxu0 0.0
      %4634 = vmatpush1.msra.mxu0 0.0
      %4635 = vmatprep.subr.mxu0 0.0
      %4636 = vmatpush1.msra.mxu0 0.0
      %4637 = vmatprep.subr.mxu0 0.0
      %4638 = vmatpush1.msra.mxu0 0.0
      %4639 = vmatprep.subr.mxu0 0.0
      %4640 = vmatpush1.msra.mxu0 0.0
      %4641 = vmatprep.subr.mxu0 0.0
      %4642 = vmatpush1.msra.mxu0 0.0
      %4643 = vmatprep.subr.mxu0 0.0
      %4644 = vmatpush1.msra.mxu0 0.0
      %4645 = vmatprep.subr.mxu0 0.0
      %4646 = vmatpush1.msra.mxu0 0.0
      %4647 = vmatprep.subr.mxu0 0.0
      %4648 = vmatpush1.msra.mxu0 0.0
      %4649 = vmatprep.subr.mxu0 0.0
      %4650 = vmatpush1.msra.mxu0 0.0
      %4651 = vmatprep.subr.mxu0 0.0
      %4652 = vmatpush1.msra.mxu0 0.0
      %4653 = vmatprep.subr.mxu0 0.0
      %4654 = vmatpush1.msra.mxu0 0.0
      %4655 = vmatprep.subr.mxu0 0.0
      %4656 = vmatpush1.msra.mxu0 0.0
      %4657 = vmatprep.subr.mxu0 0.0
      %4658 = vmatpush1.msra.mxu0 0.0
      %4659 = vmatprep.subr.mxu0 0.0
      %4660 = vmatpush1.msra.mxu0 0.0
      %4661 = vmatprep.subr.mxu0 0.0
      %4662 = vmatpush1.msra.mxu0 0.0
      %4663 = vmatprep.mubr.f32.mxu0 0.0
      %4664 = vmatmul.mubr.f32.gmra.mrb[0].mxu0 %v4597
      %v4665 = vpop.f32.mrb[0].mxu0
      %v4666 = vadd.f32 0.0, %v4665
      %v4667 = vpop.f32.mrb[0].mxu0
      %4668 = vdwg.mxu0
      %4670 = vrot.lane.b32.xlu0 %v4332, 8
      %v4671 = vpop.permute.xlu0 %4670
      %4674 = vrot.lane.b32.xlu0 %v4499, 16
      %v4675 = vpop.permute.xlu0 %4674
      %4678 = vrot.lane.b32.xlu0 %v4666, 24
      %v4679 = vpop.permute.xlu0 %4678
      %v4681 = vsel %vm705, %v4165, %v4671
      %v4682 = vsel %vm1389, %v4681, %v4675
      %v4683 = vsel %vm1391, %v4682, %v4679
      %s4684 = scalar_lea.vmem %s6, 96
      %v4685 = vld [vmem:[%s4684] sm:$0xff]
      %v4686 = vld [vmem:[%s4684 + $0x8] sm:$0xff]
      %v4687 = vld [vmem:[%s4684 + $0x10] sm:$0xff]
      %v4688 = vld [vmem:[%s4684 + $0x18] sm:$0xff]
      %s4689 = scalar_lea.vmem %s7, 3
      %v4690 = vld [vmem:[%s4689] sm:$0x1]
      %v4692 = vlaneseq
      %v4693 = vshrl.u32 %v4692, 7
      %v4694 = vsub.s32 0, %v4693
      %v4695 = vrot.slane %v4690, %v4694
      %v4698 = vsel %vm589, %v4683, 0
      %4700 = vmatprep.subr.mxu0 0.0
      %4701 = vmatpush1.msra.mxu0 %v4685
      %4702 = vmatprep.subr.mxu0 0.0
      %4703 = vmatpush1.msra.mxu0 %v4686
      %4704 = vmatprep.subr.mxu0 0.0
      %4705 = vmatpush1.msra.mxu0 %v4687
      %4706 = vmatprep.subr.mxu0 0.0
      %4707 = vmatpush1.msra.mxu0 %v4688
      %4708 = vmatprep.subr.mxu0 0.0
      %4709 = vmatpush1.msra.mxu0 0.0
      %4710 = vmatprep.subr.mxu0 0.0
      %4711 = vmatpush1.msra.mxu0 0.0
      %4712 = vmatprep.subr.mxu0 0.0
      %4713 = vmatpush1.msra.mxu0 0.0
      %4714 = vmatprep.subr.mxu0 0.0
      %4715 = vmatpush1.msra.mxu0 0.0
      %4716 = vmatprep.subr.mxu0 0.0
      %4717 = vmatpush1.msra.mxu0 0.0
      %4718 = vmatprep.subr.mxu0 0.0
      %4719 = vmatpush1.msra.mxu0 0.0
      %4720 = vmatprep.subr.mxu0 0.0
      %4721 = vmatpush1.msra.mxu0 0.0
      %4722 = vmatprep.subr.mxu0 0.0
      %4723 = vmatpush1.msra.mxu0 0.0
      %4724 = vmatprep.subr.mxu0 0.0
      %4725 = vmatpush1.msra.mxu0 0.0
      %4726 = vmatprep.subr.mxu0 0.0
      %4727 = vmatpush1.msra.mxu0 0.0
      %4728 = vmatprep.subr.mxu0 0.0
      %4729 = vmatpush1.msra.mxu0 0.0
      %4730 = vmatprep.subr.mxu0 0.0
      %4731 = vmatpush1.msra.mxu0 0.0
      %4732 = vmatprep.subr.mxu0 0.0
      %4733 = vmatpush1.msra.mxu0 0.0
      %4734 = vmatprep.subr.mxu0 0.0
      %4735 = vmatpush1.msra.mxu0 0.0
      %4736 = vmatprep.subr.mxu0 0.0
      %4737 = vmatpush1.msra.mxu0 0.0
      %4738 = vmatprep.subr.mxu0 0.0
      %4739 = vmatpush1.msra.mxu0 0.0
      %4740 = vmatprep.subr.mxu0 0.0
      %4741 = vmatpush1.msra.mxu0 0.0
      %4742 = vmatprep.subr.mxu0 0.0
      %4743 = vmatpush1.msra.mxu0 0.0
      %4744 = vmatprep.subr.mxu0 0.0
      %4745 = vmatpush1.msra.mxu0 0.0
      %4746 = vmatprep.subr.mxu0 0.0
      %4747 = vmatpush1.msra.mxu0 0.0
      %4748 = vmatprep.subr.mxu0 0.0
      %4749 = vmatpush1.msra.mxu0 0.0
      %4750 = vmatprep.subr.mxu0 0.0
      %4751 = vmatpush1.msra.mxu0 0.0
      %4752 = vmatprep.subr.mxu0 0.0
      %4753 = vmatpush1.msra.mxu0 0.0
      %4754 = vmatprep.subr.mxu0 0.0
      %4755 = vmatpush1.msra.mxu0 0.0
      %4756 = vmatprep.subr.mxu0 0.0
      %4757 = vmatpush1.msra.mxu0 0.0
      %4758 = vmatprep.subr.mxu0 0.0
      %4759 = vmatpush1.msra.mxu0 0.0
      %4760 = vmatprep.subr.mxu0 0.0
      %4761 = vmatpush1.msra.mxu0 0.0
      %4762 = vmatprep.subr.mxu0 0.0
      %4763 = vmatpush1.msra.mxu0 0.0
      %4764 = vmatprep.mubr.f32.mxu0 0.0
      %4765 = vmatmul.mubr.f32.gmra.mrb[0].mxu0 %v4698
      %v4766 = vpop.f32.mrb[0].mxu0
      %v4767 = vadd.f32 %v4695, %v4766
      %v4768 = vpop.f32.mrb[0].mxu0
      %4769 = vdwg.mxu0
      %v4770 = vadd.f32 %v4767, %v3914
      %s4771 = scalar_lea.vmem %s8, 3
      %v4772 = vld [vmem:[%s4771] sm:$0x1]
      %s4773 = scalar_lea.vmem %s9, 3
      %v4774 = vld [vmem:[%s4773] sm:$0x1]
      %v4775 = vsel %vm589, %v4770, 0.0
      %4776 = vadd.xlane.f32.xlu0 %v4775
      %v4777 = vpop.xlane.xlu0 %4776
      %v4778 = vmul.f32 %v4777, %v593
      %v4779 = vsub.f32 %v4770, %v4778
      %v4780 = vmul.f32 %v4779, %v4779
      %v4781 = vsel %vm589, %v4780, 0.0
      %4782 = vadd.xlane.f32.xlu0 %v4781
      %v4783 = vpop.xlane.xlu0 %4782
      %v4784 = vmul.f32 %v4783, %v593
      %v4785 = vadd.f32 %v4784, 1e-12
      %v4786 = vrsqrt.pop %v4785
      %v4787 = vmul.f32 %v4779, %v4786
      %v4789 = vlaneseq
      %v4790 = vshrl.u32 %v4789, 7
      %v4791 = vsub.s32 0, %v4790
      %v4792 = vrot.slane %v4772, %v4791
      %v4794 = vmul.f32 %v4787, %v4792
      %v4796 = vlaneseq
      %v4797 = vshrl.u32 %v4796, 7
      %v4798 = vsub.s32 0, %v4797
      %v4799 = vrot.slane %v4774, %v4798
      %v4801 = vadd.f32 %v4794, %v4799
      %s4802 = scalar_lea.vmem %s10, 96
      %v4803 = vld [vmem:[%s4802] sm:$0xff]
      %v4804 = vld [vmem:[%s4802 + $0x8] sm:$0xff]
      %v4805 = vld [vmem:[%s4802 + $0x10] sm:$0xff]
      %v4806 = vld [vmem:[%s4802 + $0x18] sm:$0xff]
      %s4807 = scalar_lea.vmem %s11, 3
      %v4808 = vld [vmem:[%s4807] sm:$0x1]
      %v4810 = vlaneseq
      %v4811 = vshrl.u32 %v4810, 7
      %v4812 = vsub.s32 0, %v4811
      %v4813 = vrot.slane %v4808, %v4812
      %v4816 = vsel %vm589, %v4801, 0
      %4818 = vmatprep.subr.mxu0 0.0
      %4819 = vmatpush1.msra.mxu0 %v4803
      %4820 = vmatprep.subr.mxu0 0.0
      %4821 = vmatpush1.msra.mxu0 %v4804
      %4822 = vmatprep.subr.mxu0 0.0
      %4823 = vmatpush1.msra.mxu0 %v4805
      %4824 = vmatprep.subr.mxu0 0.0
      %4825 = vmatpush1.msra.mxu0 %v4806
      %4826 = vmatprep.subr.mxu0 0.0
      %4827 = vmatpush1.msra.mxu0 0.0
      %4828 = vmatprep.subr.mxu0 0.0
      %4829 = vmatpush1.msra.mxu0 0.0
      %4830 = vmatprep.subr.mxu0 0.0
      %4831 = vmatpush1.msra.mxu0 0.0
      %4832 = vmatprep.subr.mxu0 0.0
      %4833 = vmatpush1.msra.mxu0 0.0
      %4834 = vmatprep.subr.mxu0 0.0
      %4835 = vmatpush1.msra.mxu0 0.0
      %4836 = vmatprep.subr.mxu0 0.0
      %4837 = vmatpush1.msra.mxu0 0.0
      %4838 = vmatprep.subr.mxu0 0.0
      %4839 = vmatpush1.msra.mxu0 0.0
      %4840 = vmatprep.subr.mxu0 0.0
      %4841 = vmatpush1.msra.mxu0 0.0
      %4842 = vmatprep.subr.mxu0 0.0
      %4843 = vmatpush1.msra.mxu0 0.0
      %4844 = vmatprep.subr.mxu0 0.0
      %4845 = vmatpush1.msra.mxu0 0.0
      %4846 = vmatprep.subr.mxu0 0.0
      %4847 = vmatpush1.msra.mxu0 0.0
      %4848 = vmatprep.subr.mxu0 0.0
      %4849 = vmatpush1.msra.mxu0 0.0
      %4850 = vmatprep.subr.mxu0 0.0
      %4851 = vmatpush1.msra.mxu0 0.0
      %4852 = vmatprep.subr.mxu0 0.0
      %4853 = vmatpush1.msra.mxu0 0.0
      %4854 = vmatprep.subr.mxu0 0.0
      %4855 = vmatpush1.msra.mxu0 0.0
      %4856 = vmatprep.subr.mxu0 0.0
      %4857 = vmatpush1.msra.mxu0 0.0
      %4858 = vmatprep.subr.mxu0 0.0
      %4859 = vmatpush1.msra.mxu0 0.0
      %4860 = vmatprep.subr.mxu0 0.0
      %4861 = vmatpush1.msra.mxu0 0.0
      %4862 = vmatprep.subr.mxu0 0.0
      %4863 = vmatpush1.msra.mxu0 0.0
      %4864 = vmatprep.subr.mxu0 0.0
      %4865 = vmatpush1.msra.mxu0 0.0
      %4866 = vmatprep.subr.mxu0 0.0
      %4867 = vmatpush1.msra.mxu0 0.0
      %4868 = vmatprep.subr.mxu0 0.0
      %4869 = vmatpush1.msra.mxu0 0.0
      %4870 = vmatprep.subr.mxu0 0.0
      %4871 = vmatpush1.msra.mxu0 0.0
      %4872 = vmatprep.subr.mxu0 0.0
      %4873 = vmatpush1.msra.mxu0 0.0
      %4874 = vmatprep.subr.mxu0 0.0
      %4875 = vmatpush1.msra.mxu0 0.0
      %4876 = vmatprep.subr.mxu0 0.0
      %4877 = vmatpush1.msra.mxu0 0.0
      %4878 = vmatprep.subr.mxu0 0.0
      %4879 = vmatpush1.msra.mxu0 0.0
      %4880 = vmatprep.subr.mxu0 0.0
      %4881 = vmatpush1.msra.mxu0 0.0
      %4882 = vmatprep.mubr.f32.mxu0 0.0
      %4883 = vmatmul.mubr.f32.gmra.mrb[0].mxu0 %v4816
      %v4884 = vpop.f32.mrb[0].mxu0
      %v4885 = vadd.f32 %v4813, %v4884
      %v4886 = vpop.f32.mrb[0].mxu0
      %4887 = vdwg.mxu0
      %v4888 = vmul.f32 %v4885, 0.5
      %v4889 = vmul.f32 %v4885, 0.70710677
      %v4890 = verf.f32.pop %v4889
      %v4891 = vadd.f32 %v4890, 1.0
      %v4892 = vmul.f32 %v4888, %v4891
      %s4893 = scalar_lea.vmem %s12, 192
      %v4894 = vld [vmem:[%s4893] sm:$0xff]
      %v4895 = vld [vmem:[%s4893 + $0x8] sm:$0xff]
      %v4896 = vld [vmem:[%s4893 + $0x10] sm:$0xff]
      %v4897 = vld [vmem:[%s4893 + $0x18] sm:$0xff]
      %v4898 = vld [vmem:[%s4893 + $0x20] sm:$0xff]
      %v4899 = vld [vmem:[%s4893 + $0x28] sm:$0xff]
      %v4900 = vld [vmem:[%s4893 + $0x30] sm:$0xff]
      %v4901 = vld [vmem:[%s4893 + $0x38] sm:$0xff]
      %s4902 = scalar_lea.vmem %s13, 3
      %v4903 = vld [vmem:[%s4902] sm:$0x1]
      %v4905 = vlaneseq
      %v4906 = vshrl.u32 %v4905, 7
      %v4907 = vsub.s32 0, %v4906
      %v4908 = vrot.slane %v4903, %v4907
      %v4911 = vsel %vm1611, %v4892, 0
      %4913 = vmatprep.subr.mxu0 0.0
      %4914 = vmatpush1.msra.mxu0 %v4894
      %4915 = vmatprep.subr.mxu0 0.0
      %4916 = vmatpush1.msra.mxu0 %v4895
      %4917 = vmatprep.subr.mxu0 0.0
      %4918 = vmatpush1.msra.mxu0 %v4896
      %4919 = vmatprep.subr.mxu0 0.0
      %4920 = vmatpush1.msra.mxu0 %v4897
      %4921 = vmatprep.subr.mxu0 0.0
      %4922 = vmatpush1.msra.mxu0 %v4898
      %4923 = vmatprep.subr.mxu0 0.0
      %4924 = vmatpush1.msra.mxu0 %v4899
      %4925 = vmatprep.subr.mxu0 0.0
      %4926 = vmatpush1.msra.mxu0 %v4900
      %4927 = vmatprep.subr.mxu0 0.0
      %4928 = vmatpush1.msra.mxu0 %v4901
      %4929 = vmatprep.subr.mxu0 0.0
      %4930 = vmatpush1.msra.mxu0 0.0
      %4931 = vmatprep.subr.mxu0 0.0
      %4932 = vmatpush1.msra.mxu0 0.0
      %4933 = vmatprep.subr.mxu0 0.0
      %4934 = vmatpush1.msra.mxu0 0.0
      %4935 = vmatprep.subr.mxu0 0.0
      %4936 = vmatpush1.msra.mxu0 0.0
      %4937 = vmatprep.subr.mxu0 0.0
      %4938 = vmatpush1.msra.mxu0 0.0
      %4939 = vmatprep.subr.mxu0 0.0
      %4940 = vmatpush1.msra.mxu0 0.0
      %4941 = vmatprep.subr.mxu0 0.0
      %4942 = vmatpush1.msra.mxu0 0.0
      %4943 = vmatprep.subr.mxu0 0.0
      %4944 = vmatpush1.msra.mxu0 0.0
      %4945 = vmatprep.subr.mxu0 0.0
      %4946 = vmatpush1.msra.mxu0 0.0
      %4947 = vmatprep.subr.mxu0 0.0
      %4948 = vmatpush1.msra.mxu0 0.0
      %4949 = vmatprep.subr.mxu0 0.0
      %4950 = vmatpush1.msra.mxu0 0.0
      %4951 = vmatprep.subr.mxu0 0.0
      %4952 = vmatpush1.msra.mxu0 0.0
      %4953 = vmatprep.subr.mxu0 0.0
      %4954 = vmatpush1.msra.mxu0 0.0
      %4955 = vmatprep.subr.mxu0 0.0
      %4956 = vmatpush1.msra.mxu0 0.0
      %4957 = vmatprep.subr.mxu0 0.0
      %4958 = vmatpush1.msra.mxu0 0.0
      %4959 = vmatprep.subr.mxu0 0.0
      %4960 = vmatpush1.msra.mxu0 0.0
      %4961 = vmatprep.subr.mxu0 0.0
      %4962 = vmatpush1.msra.mxu0 0.0
      %4963 = vmatprep.subr.mxu0 0.0
      %4964 = vmatpush1.msra.mxu0 0.0
      %4965 = vmatprep.subr.mxu0 0.0
      %4966 = vmatpush1.msra.mxu0 0.0
      %4967 = vmatprep.subr.mxu0 0.0
      %4968 = vmatpush1.msra.mxu0 0.0
      %4969 = vmatprep.subr.mxu0 0.0
      %4970 = vmatpush1.msra.mxu0 0.0
      %4971 = vmatprep.subr.mxu0 0.0
      %4972 = vmatpush1.msra.mxu0 0.0
      %4973 = vmatprep.subr.mxu0 0.0
      %4974 = vmatpush1.msra.mxu0 0.0
      %4975 = vmatprep.subr.mxu0 0.0
      %4976 = vmatpush1.msra.mxu0 0.0
      %4977 = vmatprep.mubr.f32.mxu0 0.0
      %4978 = vmatmul.mubr.f32.gmra.mrb[0].mxu0 %v4911
      %v4979 = vpop.f32.mrb[0].mxu0
      %v4980 = vadd.f32 %v4908, %v4979
      %v4981 = vpop.f32.mrb[0].mxu0
      %4982 = vdwg.mxu0
      %v4983 = vadd.f32 %v4980, %v4801
      %s4984 = scalar_lea.vmem %s14, 3
      %v4985 = vld [vmem:[%s4984] sm:$0x1]
      %s4986 = scalar_lea.vmem %s15, 3
      %v4987 = vld [vmem:[%s4986] sm:$0x1]
      %v4988 = vsel %vm589, %v4983, 0.0
      %4989 = vadd.xlane.f32.xlu0 %v4988
      %v4990 = vpop.xlane.xlu0 %4989
      %v4991 = vmul.f32 %v4990, %v593
      %v4992 = vsub.f32 %v4983, %v4991
      %v4993 = vmul.f32 %v4992, %v4992
      %v4994 = vsel %vm589, %v4993, 0.0
      %4995 = vadd.xlane.f32.xlu0 %v4994
      %v4996 = vpop.xlane.xlu0 %4995
      %v4997 = vmul.f32 %v4996, %v593
      %v4998 = vadd.f32 %v4997, 1e-12
      %v4999 = vrsqrt.pop %v4998
      %v5000 = vmul.f32 %v4992, %v4999
      %v5002 = vlaneseq
      %v5003 = vshrl.u32 %v5002, 7
      %v5004 = vsub.s32 0, %v5003
      %v5005 = vrot.slane %v4985, %v5004
      %v5007 = vmul.f32 %v5000, %v5005
      %v5009 = vlaneseq
      %v5010 = vshrl.u32 %v5009, 7
      %v5011 = vsub.s32 0, %v5010
      %v5012 = vrot.slane %v4987, %v5011
      %v5014 = vadd.f32 %v5007, %v5012
      %v5015 = vadd.f32 %v3915, %v5014
      %v5016 = vld [vmem:[%s16] sm:$0xff]
      %v5017 = vld [vmem:[%s16 + $0x8] sm:$0xff]
      %v5018 = vld [vmem:[%s16 + $0x10] sm:$0xff]
      %v5019 = vld [vmem:[%s16 + $0x18] sm:$0xff]
      %v5020 = vld [vmem:[%s17] sm:$0x1]
      %v5022 = vlaneseq
      %v5023 = vshrl.u32 %v5022, 7
      %v5024 = vsub.s32 0, %v5023
      %v5025 = vrot.slane %v5020, %v5024
      %v5028 = vsel %vm589, %v5015, 0
      %5030 = vmatprep.subr.mxu0 0.0
      %5031 = vmatpush1.msra.mxu0 %v5016
      %5032 = vmatprep.subr.mxu0 0.0
      %5033 = vmatpush1.msra.mxu0 %v5017
      %5034 = vmatprep.subr.mxu0 0.0
      %5035 = vmatpush1.msra.mxu0 %v5018
      %5036 = vmatprep.subr.mxu0 0.0
      %5037 = vmatpush1.msra.mxu0 %v5019
      %5038 = vmatprep.subr.mxu0 0.0
      %5039 = vmatpush1.msra.mxu0 0.0
      %5040 = vmatprep.subr.mxu0 0.0
      %5041 = vmatpush1.msra.mxu0 0.0
      %5042 = vmatprep.subr.mxu0 0.0
      %5043 = vmatpush1.msra.mxu0 0.0
      %5044 = vmatprep.subr.mxu0 0.0
      %5045 = vmatpush1.msra.mxu0 0.0
      %5046 = vmatprep.subr.mxu0 0.0
      %5047 = vmatpush1.msra.mxu0 0.0
      %5048 = vmatprep.subr.mxu0 0.0
      %5049 = vmatpush1.msra.mxu0 0.0
      %5050 = vmatprep.subr.mxu0 0.0
      %5051 = vmatpush1.msra.mxu0 0.0
      %5052 = vmatprep.subr.mxu0 0.0
      %5053 = vmatpush1.msra.mxu0 0.0
      %5054 = vmatprep.subr.mxu0 0.0
      %5055 = vmatpush1.msra.mxu0 0.0
      %5056 = vmatprep.subr.mxu0 0.0
      %5057 = vmatpush1.msra.mxu0 0.0
      %5058 = vmatprep.subr.mxu0 0.0
      %5059 = vmatpush1.msra.mxu0 0.0
      %5060 = vmatprep.subr.mxu0 0.0
      %5061 = vmatpush1.msra.mxu0 0.0
      %5062 = vmatprep.subr.mxu0 0.0
      %5063 = vmatpush1.msra.mxu0 0.0
      %5064 = vmatprep.subr.mxu0 0.0
      %5065 = vmatpush1.msra.mxu0 0.0
      %5066 = vmatprep.subr.mxu0 0.0
      %5067 = vmatpush1.msra.mxu0 0.0
      %5068 = vmatprep.subr.mxu0 0.0
      %5069 = vmatpush1.msra.mxu0 0.0
      %5070 = vmatprep.subr.mxu0 0.0
      %5071 = vmatpush1.msra.mxu0 0.0
      %5072 = vmatprep.subr.mxu0 0.0
      %5073 = vmatpush1.msra.mxu0 0.0
      %5074 = vmatprep.subr.mxu0 0.0
      %5075 = vmatpush1.msra.mxu0 0.0
      %5076 = vmatprep.subr.mxu0 0.0
      %5077 = vmatpush1.msra.mxu0 0.0
      %5078 = vmatprep.subr.mxu0 0.0
      %5079 = vmatpush1.msra.mxu0 0.0
      %5080 = vmatprep.subr.mxu0 0.0
      %5081 = vmatpush1.msra.mxu0 0.0
      %5082 = vmatprep.subr.mxu0 0.0
      %5083 = vmatpush1.msra.mxu0 0.0
      %5084 = vmatprep.subr.mxu0 0.0
      %5085 = vmatpush1.msra.mxu0 0.0
      %5086 = vmatprep.subr.mxu0 0.0
      %5087 = vmatpush1.msra.mxu0 0.0
      %5088 = vmatprep.subr.mxu0 0.0
      %5089 = vmatpush1.msra.mxu0 0.0
      %5090 = vmatprep.subr.mxu0 0.0
      %5091 = vmatpush1.msra.mxu0 0.0
      %5092 = vmatprep.subr.mxu0 0.0
      %5093 = vmatpush1.msra.mxu0 0.0
      %5094 = vmatprep.mubr.f32.mxu0 0.0
      %5095 = vmatmul.mubr.f32.gmra.mrb[0].mxu0 %v5028
      %v5096 = vpop.f32.mrb[0].mxu0
      %v5097 = vadd.f32 %v5025, %v5096
      %v5098 = vpop.f32.mrb[0].mxu0
      %5099 = vdwg.mxu0
      %5100 = vst [vmem:[%s584] sm:$0xff] %v5097
      %p5101 = scmp.lt.s32.totalorder %s29, 1
      %s5102 = scalar_select %p5101, %s29, 1
      %s5103 = smul.addr %s5102, 8
      %s5104 = scalar_lea.vmem %s18, %s5103
      // Predicated region
      $region93: #{kobert_only_forward.1} parent=91 // pred_check
        %p5105 = pneg %p435
      $region94: #{kobert_only_forward.1} parent=91 // pred_check_branch
        %5107 = sbr.rel (%p5105) target = $region96
      $region95: #{kobert_only_forward.1} parent=91 // pred_region
        _
      $region96: #{kobert_only_forward.1} parent=91 // pred_fallthru
        _
    $region92: #{kobert_only_forward.1} parent=5 // pred_fallthru
      _
    %p5108 = scmp.le.s32.totalorder 2, %s24
    // Predicated region
    $region97: #{kobert_only_forward.1} parent=5 // pred_check
      %p5109 = pneg %p5108
    $region98: #{kobert_only_forward.1} parent=5 // pred_check_branch
      %5111 = sbr.rel (%p5109) target = $region100
    $region99: #{kobert_only_forward.1} parent=5 // pred_region
      %s5112 = ssub.s32 %s24, 2
      // Predicated region
      $region101: #{kobert_only_forward.1} parent=99 // pred_check
        %p5113 = pneg %p441
      $region102: #{kobert_only_forward.1} parent=99 // pred_check_branch
        %5115 = sbr.rel (%p5113) target = $region104
      $region103: #{kobert_only_forward.1} parent=99 // pred_region
        %p5116 = scmp.lt.s32.totalorder %s30, 1
        %s5117 = scalar_select %p5116, %s30, 1
        %s5118 = smul.addr %s5117, 8
        %s5119 = scalar_lea.vmem %s18, %s5118
      $region104: #{kobert_only_forward.1} parent=99 // pred_fallthru
        _
    $region100: #{kobert_only_forward.1} parent=5 // pred_fallthru
      _
  $region6: #{kobert_only_forward.1} parent=0 // loop_footer
    %s28 = sadd.s32 1, %s24
  $region7: #{kobert_only_forward.1} parent=0 // loop_footer_branch
    %23 = sbr.rel target = $region3
  $region8: #{kobert_only_forward.1} parent=0 // loop_exit
    _

</llo_original>
